<compile_context>
chip_gen: v7x
topology: tpu7x:2x2x1
jax: 0.10.0
libtpu: 0.0.40
codegen_flags: <defaults>
</compile_context>

<pallas_src>
import jax
import jax.numpy as jnp
import numpy as np
from jax.experimental import pallas as pl
from jax.experimental.pallas import tpu as pltpu

IN_CH = 4        # in_channel
OUT_CH = 8       # out_channel
L0 = 288         # input length: conv1->287 -> pool->143 -> conv2->142 -> pool->71 == fc in_features
L1 = L0 - 1      # 287
P1 = L1 // 2     # 143
L2 = P1 - 1      # 142
P2 = L2 // 2     # 71
Q = L0 // 4      # 72  (length of each mod-4 phase of the input)
LANE_B = 128     # samples per grid step (batch mapped onto the 128-lane axis)


def cnn_kernel(x_ref, w1_ref, b1_ref, w2_ref, b2_ref,
               fw1_ref, fb1_ref, fw2_ref, fb2_ref,
               fw3_ref, fb3_ref, fw4_ref, fb4_ref, o_ref):
    f32 = jnp.float32

    # Accumulators for conv2 output at even / odd positions, shape (P2, B) = (71, B).
    acc_e = None
    acc_o = None

    for oc in range(OUT_CH):                       # conv1 output channel == conv2 input channel
        # conv1 output y1[l], split by phase l = 4q + r, for this output channel.
        y_r0 = y_r1 = y_r2 = y_r3 = None
        for c in range(IN_CH):
            wa = w1_ref[oc, 2 * c]                 # conv1 tap k=0 (scalar from SMEM)
            wb = w1_ref[oc, 2 * c + 1]             # conv1 tap k=1
            x0 = x_ref[4 * c + 0]                  # (Q, B): x[c, 4q+0]
            x1 = x_ref[4 * c + 1]                  # x[c, 4q+1]
            x2 = x_ref[4 * c + 2]                  # x[c, 4q+2]
            x3 = x_ref[4 * c + 3]                  # x[c, 4q+3]
            t0 = wa * x0 + wb * x1                               # y1[4q+0], q=0..71
            t1 = wa * x1 + wb * x2                               # y1[4q+1], q=0..71
            t2 = wa * x2 + wb * x3                               # y1[4q+2], q=0..71
            t3 = wa * x3[0:Q - 1] + wb * x0[1:Q]                 # y1[4q+3], q=0..70
            y_r0 = t0 if y_r0 is None else y_r0 + t0
            y_r1 = t1 if y_r1 is None else y_r1 + t1
            y_r2 = t2 if y_r2 is None else y_r2 + t2
            y_r3 = t3 if y_r3 is None else y_r3 + t3

        bo = b1_ref[oc]
        a0 = jnp.maximum(y_r0 + bo, 0.0)
        a1 = jnp.maximum(y_r1 + bo, 0.0)
        a2 = jnp.maximum(y_r2 + bo, 0.0)
        a3 = jnp.maximum(y_r3 + bo, 0.0)
        # MaxPool1d(2) of the relu'd conv1 output, split into even/odd pooled positions:
        p_even = jnp.maximum(a0, a1)               # p1[2q],   q = 0..71   (72, B)
        p_odd = jnp.maximum(a2[0:Q - 1], a3)       # p1[2q+1], q = 0..70   (71, B)

        # conv2 (k=2) contribution of this channel, again split by even/odd output pos.
        v0 = w2_ref[oc, 0]
        v1 = w2_ref[oc, 1]
        ae = v0 * p_even[0:P2] + v1 * p_odd        # y2[2q],   q = 0..70
        ao = v0 * p_odd + v1 * p_even[1:Q]         # y2[2q+1], q = 0..70
        acc_e = ae if acc_e is None else acc_e + ae
        acc_o = ao if acc_o is None else acc_o + ao

    b2v = b2_ref[0]
    y2e = jnp.maximum(acc_e + b2v, 0.0)
    y2o = jnp.maximum(acc_o + b2v, 0.0)
    feat = jnp.maximum(y2e, y2o)                   # (71, B) -- flattened conv features

    # MLP head: lane-dense MXU matmuls with batch on the output lanes.
    h = jnp.maximum(jnp.dot(fw1_ref[...], feat, preferred_element_type=jnp.float32)
                    + fb1_ref[...], 0.0)
    h = jnp.maximum(jnp.dot(fw2_ref[...], h, preferred_element_type=jnp.float32)
                    + fb2_ref[...], 0.0)
    h = jnp.maximum(jnp.dot(fw3_ref[...], h, preferred_element_type=jnp.float32)
                    + fb3_ref[...], 0.0)
    out = jnp.dot(fw4_ref[...], h, preferred_element_type=jnp.float32) + fb4_ref[...]
    o_ref[...] = out                               # (1, B) lane-dense output slab


def cnn_forward(x_ncl, params, block_b=LANE_B):
    (w1, b1, w2, b2, fw1, fb1, fw2, fb2, fw3, fb3, fw4, fb4) = params
    n = x_ncl.shape[0]
    g = -(-n // block_b)
    n_pad = g * block_b

    x = x_ncl.astype(jnp.float32)
    if n_pad != n:
        x = jnp.pad(x, ((0, n_pad - n), (0, 0), (0, 0)))

    # Split length into 4 interleaved phases and put batch on the last (lane) axis:
    #   x[n, c, 4q + r]  ->  x_ph[c*4 + r, q, n]
    x_ph = x.reshape(n_pad, IN_CH, Q, 4)
    x_ph = jnp.transpose(x_ph, (1, 3, 2, 0)).reshape(IN_CH * 4, Q, n_pad)

    # Conv weights/biases as SMEM scalar tables.
    w1s = jnp.asarray(w1, jnp.float32).reshape(OUT_CH, IN_CH * 2)   # [o, c*2 + k]
    b1s = jnp.asarray(b1, jnp.float32)                              # (8,)
    w2s = jnp.asarray(w2, jnp.float32).reshape(OUT_CH, 2)           # [c, k]
    b2s = jnp.asarray(b2, jnp.float32)                              # (1,)

    fw1f = jnp.asarray(fw1, jnp.float32)
    fw2f = jnp.asarray(fw2, jnp.float32)
    fw3f = jnp.asarray(fw3, jnp.float32)
    fw4f = jnp.asarray(fw4, jnp.float32)
    fb1c = jnp.asarray(fb1, jnp.float32).reshape(-1, 1)
    fb2c = jnp.asarray(fb2, jnp.float32).reshape(-1, 1)
    fb3c = jnp.asarray(fb3, jnp.float32).reshape(-1, 1)
    fb4c = jnp.asarray(fb4, jnp.float32).reshape(-1, 1)

    smem = pl.BlockSpec(memory_space=pltpu.MemorySpace.SMEM)

    def vmem_full(shape):
        return pl.BlockSpec(shape, lambda i, _n=len(shape): (0,) * _n)

    in_specs = [
        pl.BlockSpec((IN_CH * 4, Q, block_b), lambda i: (0, 0, i)),   # x phases, B samples/step
        smem, smem, smem, smem,                                       # conv weights / biases
        vmem_full(fw1f.shape), vmem_full(fb1c.shape),
        vmem_full(fw2f.shape), vmem_full(fb2c.shape),
        vmem_full(fw3f.shape), vmem_full(fb3c.shape),
        vmem_full(fw4f.shape), vmem_full(fb4c.shape),
    ]

    out = pl.pallas_call(
        cnn_kernel,
        out_shape=jax.ShapeDtypeStruct((g, 1, block_b), jnp.float32),
        grid=(g,),
        in_specs=in_specs,
        out_specs=pl.BlockSpec((None, 1, block_b), lambda i: (i, 0, 0)),
        compiler_params=pltpu.CompilerParams(dimension_semantics=("parallel",)),
    )(x_ph, w1s, b1s, w2s, b2s,
      fw1f, fb1c, fw2f, fb2c, fw3f, fb3c, fw4f, fb4c)

    return out.reshape(n_pad, 1)[:n]


def init_params(key):
    ks = jax.random.split(key, 12)

    def uniform(k, shape, fan_in):
        bound = 1.0 / np.sqrt(fan_in)
        return jax.random.uniform(k, shape, jnp.float32, -bound, bound)

    w1 = uniform(ks[0], (OUT_CH, IN_CH, 2), IN_CH * 2)
    b1 = uniform(ks[1], (OUT_CH,), IN_CH * 2)
    w2 = uniform(ks[2], (1, OUT_CH, 2), OUT_CH * 2)
    b2 = uniform(ks[3], (1,), OUT_CH * 2)
    fw1 = uniform(ks[4], (60, 71), 71)
    fb1 = uniform(ks[5], (60,), 71)
    fw2 = uniform(ks[6], (40, 60), 60)
    fb2 = uniform(ks[7], (40,), 60)
    fw3 = uniform(ks[8], (20, 40), 40)
    fb3 = uniform(ks[9], (20,), 40)
    fw4 = uniform(ks[10], (1, 20), 20)
    fb4 = uniform(ks[11], (1,), 20)
    return (w1, b1, w2, b2, fw1, fb1, fw2, fb2, fw3, fb3, fw4, fb4)


def ref_forward(x_ncl, params):
    """Pure numpy float64 reference mirroring the PyTorch forward pass (NCL layout)."""
    p = [np.asarray(t, np.float64) for t in params]
    w1, b1, w2, b2, fw1, fb1, fw2, fb2, fw3, fb3, fw4, fb4 = p
    x = np.asarray(x_ncl, np.float64)
    outs = []
    for n in range(x.shape[0]):
        xi = x[n]                                                      # (Cin, L0)
        y1 = np.zeros((OUT_CH, L1))
        for k in range(2):
            y1 += w1[:, :, k] @ xi[:, k:k + L1]
        y1 = np.maximum(y1 + b1[:, None], 0.0)
        p1 = np.maximum(y1[:, 0:2 * P1:2], y1[:, 1:2 * P1:2])          # (Cout, 143)
        y2 = np.zeros((1, L2))
        for k in range(2):
            y2 += w2[:, :, k] @ p1[:, k:k + L2]
        y2 = np.maximum(y2 + b2[:, None], 0.0)
        p2 = np.maximum(y2[:, 0:2 * P2:2], y2[:, 1:2 * P2:2])          # (1, 71)
        h = p2.reshape(-1)
        h = np.maximum(fw1 @ h + fb1, 0.0)
        h = np.maximum(fw2 @ h + fb2, 0.0)
        h = np.maximum(fw3 @ h + fb3, 0.0)
        outs.append(fw4 @ h + fb4)
    return np.stack(outs)                                              # (N, 1)


if __name__ == "__main__":
    key = jax.random.PRNGKey(0)
    kx, kp = jax.random.split(key)
    N = 2
    # PyTorch-convention input: (batch, in_channel, length) = NCL
    x = jax.random.normal(kx, (N, IN_CH, L0), dtype=jnp.float32)
    params = init_params(kp)

    out = jax.jit(cnn_forward)(x, params)
    out = jax.block_until_ready(out)

    ref = ref_forward(np.asarray(x), params)
    assert out.shape == (N, 1), out.shape
    np.testing.assert_allclose(np.asarray(out), ref, rtol=2e-3, atol=2e-3)
    print("KERNEL_OK")
</pallas_src>

<mosaic_0001>
module attributes {stable_mosaic.version = 11 : i64} {
  func.func @cnn_kernel(%arg0: i32, %arg1: memref<16x72x128xf32, #tpu.memory_space<vmem>>, %arg2: memref<8x8xf32, #tpu.memory_space<smem>>, %arg3: memref<8xf32, #tpu.memory_space<smem>>, %arg4: memref<8x2xf32, #tpu.memory_space<smem>>, %arg5: memref<1xf32, #tpu.memory_space<smem>>, %arg6: memref<60x71xf32, #tpu.memory_space<vmem>>, %arg7: memref<60x1xf32, #tpu.memory_space<vmem>>, %arg8: memref<40x60xf32, #tpu.memory_space<vmem>>, %arg9: memref<40x1xf32, #tpu.memory_space<vmem>>, %arg10: memref<20x40xf32, #tpu.memory_space<vmem>>, %arg11: memref<20x1xf32, #tpu.memory_space<vmem>>, %arg12: memref<1x20xf32, #tpu.memory_space<vmem>>, %arg13: memref<1x1xf32, #tpu.memory_space<vmem>>, %arg14: memref<1x1x128xf32, #tpu.memory_space<vmem>>) attributes {dimension_semantics = [#tpu.dimension_semantics<parallel>], iteration_bounds = array<i64: 1>, scalar_prefetch = 0 : i64, scratch_operands = 0 : i64, tpu.core_type = #tpu.core_type<tc>, window_params = [{transform_indices = @transform_0, window_bounds = array<i64: 16, 72, 128>}, {transform_indices = @transform_1, window_bounds = array<i64: 8, 8>}, {transform_indices = @transform_2, window_bounds = array<i64: 8>}, {transform_indices = @transform_3, window_bounds = array<i64: 8, 2>}, {transform_indices = @transform_4, window_bounds = array<i64: 1>}, {pipeline_mode = #tpu.pipeline_mode<synchronous>, transform_indices = @transform_5, window_bounds = array<i64: 60, 71>}, {pipeline_mode = #tpu.pipeline_mode<synchronous>, transform_indices = @transform_6, window_bounds = array<i64: 60, 1>}, {pipeline_mode = #tpu.pipeline_mode<synchronous>, transform_indices = @transform_7, window_bounds = array<i64: 40, 60>}, {pipeline_mode = #tpu.pipeline_mode<synchronous>, transform_indices = @transform_8, window_bounds = array<i64: 40, 1>}, {pipeline_mode = #tpu.pipeline_mode<synchronous>, transform_indices = @transform_9, window_bounds = array<i64: 20, 40>}, {pipeline_mode = #tpu.pipeline_mode<synchronous>, transform_indices = @transform_10, window_bounds = array<i64: 20, 1>}, {pipeline_mode = #tpu.pipeline_mode<synchronous>, transform_indices = @transform_11, window_bounds = array<i64: 1, 20>}, {pipeline_mode = #tpu.pipeline_mode<synchronous>, transform_indices = @transform_12, window_bounds = array<i64: 1, 1>}, {transform_indices = @transform_13, window_bounds = array<i64: 1, 1, 128>}]} {
    %c0 = arith.constant 0 : index
    %c0_0 = arith.constant 0 : index
    %0 = memref.load %arg2[%c0, %c0_0] : memref<8x8xf32, #tpu.memory_space<smem>>
    %c0_1 = arith.constant 0 : index
    %c1 = arith.constant 1 : index
    %1 = memref.load %arg2[%c0_1, %c1] : memref<8x8xf32, #tpu.memory_space<smem>>
    %c0_2 = arith.constant 0 : index
    %c0_3 = arith.constant 0 : index
    %c0_4 = arith.constant 0 : index
    %2 = vector.load %arg1[%c0_2, %c0_3, %c0_4] : memref<16x72x128xf32, #tpu.memory_space<vmem>>, vector<1x72x128xf32>
    %3 = vector.shape_cast %2 : vector<1x72x128xf32> to vector<72x128xf32>
    %c1_5 = arith.constant 1 : index
    %c0_6 = arith.constant 0 : index
    %c0_7 = arith.constant 0 : index
    %4 = vector.load %arg1[%c1_5, %c0_6, %c0_7] : memref<16x72x128xf32, #tpu.memory_space<vmem>>, vector<1x72x128xf32>
    %5 = vector.shape_cast %4 : vector<1x72x128xf32> to vector<72x128xf32>
    %c2 = arith.constant 2 : index
    %c0_8 = arith.constant 0 : index
    %c0_9 = arith.constant 0 : index
    %6 = vector.load %arg1[%c2, %c0_8, %c0_9] : memref<16x72x128xf32, #tpu.memory_space<vmem>>, vector<1x72x128xf32>
    %7 = vector.shape_cast %6 : vector<1x72x128xf32> to vector<72x128xf32>
    %c3 = arith.constant 3 : index
    %c0_10 = arith.constant 0 : index
    %c0_11 = arith.constant 0 : index
    %8 = vector.load %arg1[%c3, %c0_10, %c0_11] : memref<16x72x128xf32, #tpu.memory_space<vmem>>, vector<1x72x128xf32>
    %9 = vector.shape_cast %8 : vector<1x72x128xf32> to vector<72x128xf32>
    %10 = vector.broadcast %0 : f32 to vector<72x128xf32>
    %11 = arith.mulf %10, %3 : vector<72x128xf32>
    %12 = vector.broadcast %1 : f32 to vector<72x128xf32>
    %13 = arith.mulf %12, %5 : vector<72x128xf32>
    %14 = arith.addf %11, %13 : vector<72x128xf32>
    %15 = vector.broadcast %0 : f32 to vector<72x128xf32>
    %16 = arith.mulf %15, %5 : vector<72x128xf32>
    %17 = vector.broadcast %1 : f32 to vector<72x128xf32>
    %18 = arith.mulf %17, %7 : vector<72x128xf32>
    %19 = arith.addf %16, %18 : vector<72x128xf32>
    %20 = vector.broadcast %0 : f32 to vector<72x128xf32>
    %21 = arith.mulf %20, %7 : vector<72x128xf32>
    %22 = vector.broadcast %1 : f32 to vector<72x128xf32>
    %23 = arith.mulf %22, %9 : vector<72x128xf32>
    %24 = arith.addf %21, %23 : vector<72x128xf32>
    %25 = vector.extract_strided_slice %9 {offsets = [0, 0], sizes = [71, 128], strides = [1, 1]} : vector<72x128xf32> to vector<71x128xf32>
    %26 = vector.broadcast %0 : f32 to vector<71x128xf32>
    %27 = arith.mulf %26, %25 : vector<71x128xf32>
    %28 = vector.extract_strided_slice %3 {offsets = [1, 0], sizes = [71, 128], strides = [1, 1]} : vector<72x128xf32> to vector<71x128xf32>
    %29 = vector.broadcast %1 : f32 to vector<71x128xf32>
    %30 = arith.mulf %29, %28 : vector<71x128xf32>
    %31 = arith.addf %27, %30 : vector<71x128xf32>
    %c0_12 = arith.constant 0 : index
    %c2_13 = arith.constant 2 : index
    %32 = memref.load %arg2[%c0_12, %c2_13] : memref<8x8xf32, #tpu.memory_space<smem>>
    %c0_14 = arith.constant 0 : index
    %c3_15 = arith.constant 3 : index
    %33 = memref.load %arg2[%c0_14, %c3_15] : memref<8x8xf32, #tpu.memory_space<smem>>
    %c4 = arith.constant 4 : index
    %c0_16 = arith.constant 0 : index
    %c0_17 = arith.constant 0 : index
    %34 = vector.load %arg1[%c4, %c0_16, %c0_17] : memref<16x72x128xf32, #tpu.memory_space<vmem>>, vector<1x72x128xf32>
    %35 = vector.shape_cast %34 : vector<1x72x128xf32> to vector<72x128xf32>
    %c5 = arith.constant 5 : index
    %c0_18 = arith.constant 0 : index
    %c0_19 = arith.constant 0 : index
    %36 = vector.load %arg1[%c5, %c0_18, %c0_19] : memref<16x72x128xf32, #tpu.memory_space<vmem>>, vector<1x72x128xf32>
    %37 = vector.shape_cast %36 : vector<1x72x128xf32> to vector<72x128xf32>
    %c6 = arith.constant 6 : index
    %c0_20 = arith.constant 0 : index
    %c0_21 = arith.constant 0 : index
    %38 = vector.load %arg1[%c6, %c0_20, %c0_21] : memref<16x72x128xf32, #tpu.memory_space<vmem>>, vector<1x72x128xf32>
    %39 = vector.shape_cast %38 : vector<1x72x128xf32> to vector<72x128xf32>
    %c7 = arith.constant 7 : index
    %c0_22 = arith.constant 0 : index
    %c0_23 = arith.constant 0 : index
    %40 = vector.load %arg1[%c7, %c0_22, %c0_23] : memref<16x72x128xf32, #tpu.memory_space<vmem>>, vector<1x72x128xf32>
    %41 = vector.shape_cast %40 : vector<1x72x128xf32> to vector<72x128xf32>
    %42 = vector.broadcast %32 : f32 to vector<72x128xf32>
    %43 = arith.mulf %42, %35 : vector<72x128xf32>
    %44 = vector.broadcast %33 : f32 to vector<72x128xf32>
    %45 = arith.mulf %44, %37 : vector<72x128xf32>
    %46 = arith.addf %43, %45 : vector<72x128xf32>
    %47 = vector.broadcast %32 : f32 to vector<72x128xf32>
    %48 = arith.mulf %47, %37 : vector<72x128xf32>
    %49 = vector.broadcast %33 : f32 to vector<72x128xf32>
    %50 = arith.mulf %49, %39 : vector<72x128xf32>
    %51 = arith.addf %48, %50 : vector<72x128xf32>
    %52 = vector.broadcast %32 : f32 to vector<72x128xf32>
    %53 = arith.mulf %52, %39 : vector<72x128xf32>
    %54 = vector.broadcast %33 : f32 to vector<72x128xf32>
    %55 = arith.mulf %54, %41 : vector<72x128xf32>
    %56 = arith.addf %53, %55 : vector<72x128xf32>
    %57 = vector.extract_strided_slice %41 {offsets = [0, 0], sizes = [71, 128], strides = [1, 1]} : vector<72x128xf32> to vector<71x128xf32>
    %58 = vector.broadcast %32 : f32 to vector<71x128xf32>
    %59 = arith.mulf %58, %57 : vector<71x128xf32>
    %60 = vector.extract_strided_slice %35 {offsets = [1, 0], sizes = [71, 128], strides = [1, 1]} : vector<72x128xf32> to vector<71x128xf32>
    %61 = vector.broadcast %33 : f32 to vector<71x128xf32>
    %62 = arith.mulf %61, %60 : vector<71x128xf32>
    %63 = arith.addf %59, %62 : vector<71x128xf32>
    %64 = arith.addf %14, %46 : vector<72x128xf32>
    %65 = arith.addf %19, %51 : vector<72x128xf32>
    %66 = arith.addf %24, %56 : vector<72x128xf32>
    %67 = arith.addf %31, %63 : vector<71x128xf32>
    %c0_24 = arith.constant 0 : index
    %c4_25 = arith.constant 4 : index
    %68 = memref.load %arg2[%c0_24, %c4_25] : memref<8x8xf32, #tpu.memory_space<smem>>
    %c0_26 = arith.constant 0 : index
    %c5_27 = arith.constant 5 : index
    %69 = memref.load %arg2[%c0_26, %c5_27] : memref<8x8xf32, #tpu.memory_space<smem>>
    %c8 = arith.constant 8 : index
    %c0_28 = arith.constant 0 : index
    %c0_29 = arith.constant 0 : index
    %70 = vector.load %arg1[%c8, %c0_28, %c0_29] : memref<16x72x128xf32, #tpu.memory_space<vmem>>, vector<1x72x128xf32>
    %71 = vector.shape_cast %70 : vector<1x72x128xf32> to vector<72x128xf32>
    %c9 = arith.constant 9 : index
    %c0_30 = arith.constant 0 : index
    %c0_31 = arith.constant 0 : index
    %72 = vector.load %arg1[%c9, %c0_30, %c0_31] : memref<16x72x128xf32, #tpu.memory_space<vmem>>, vector<1x72x128xf32>
    %73 = vector.shape_cast %72 : vector<1x72x128xf32> to vector<72x128xf32>
    %c10 = arith.constant 10 : index
    %c0_32 = arith.constant 0 : index
    %c0_33 = arith.constant 0 : index
    %74 = vector.load %arg1[%c10, %c0_32, %c0_33] : memref<16x72x128xf32, #tpu.memory_space<vmem>>, vector<1x72x128xf32>
    %75 = vector.shape_cast %74 : vector<1x72x128xf32> to vector<72x128xf32>
    %c11 = arith.constant 11 : index
    %c0_34 = arith.constant 0 : index
    %c0_35 = arith.constant 0 : index
    %76 = vector.load %arg1[%c11, %c0_34, %c0_35] : memref<16x72x128xf32, #tpu.memory_space<vmem>>, vector<1x72x128xf32>
    %77 = vector.shape_cast %76 : vector<1x72x128xf32> to vector<72x128xf32>
    %78 = vector.broadcast %68 : f32 to vector<72x128xf32>
    %79 = arith.mulf %78, %71 : vector<72x128xf32>
    %80 = vector.broadcast %69 : f32 to vector<72x128xf32>
    %81 = arith.mulf %80, %73 : vector<72x128xf32>
    %82 = arith.addf %79, %81 : vector<72x128xf32>
    %83 = vector.broadcast %68 : f32 to vector<72x128xf32>
    %84 = arith.mulf %83, %73 : vector<72x128xf32>
    %85 = vector.broadcast %69 : f32 to vector<72x128xf32>
    %86 = arith.mulf %85, %75 : vector<72x128xf32>
    %87 = arith.addf %84, %86 : vector<72x128xf32>
    %88 = vector.broadcast %68 : f32 to vector<72x128xf32>
    %89 = arith.mulf %88, %75 : vector<72x128xf32>
    %90 = vector.broadcast %69 : f32 to vector<72x128xf32>
    %91 = arith.mulf %90, %77 : vector<72x128xf32>
    %92 = arith.addf %89, %91 : vector<72x128xf32>
    %93 = vector.extract_strided_slice %77 {offsets = [0, 0], sizes = [71, 128], strides = [1, 1]} : vector<72x128xf32> to vector<71x128xf32>
    %94 = vector.broadcast %68 : f32 to vector<71x128xf32>
    %95 = arith.mulf %94, %93 : vector<71x128xf32>
    %96 = vector.extract_strided_slice %71 {offsets = [1, 0], sizes = [71, 128], strides = [1, 1]} : vector<72x128xf32> to vector<71x128xf32>
    %97 = vector.broadcast %69 : f32 to vector<71x128xf32>
    %98 = arith.mulf %97, %96 : vector<71x128xf32>
    %99 = arith.addf %95, %98 : vector<71x128xf32>
    %100 = arith.addf %64, %82 : vector<72x128xf32>
    %101 = arith.addf %65, %87 : vector<72x128xf32>
    %102 = arith.addf %66, %92 : vector<72x128xf32>
    %103 = arith.addf %67, %99 : vector<71x128xf32>
    %c0_36 = arith.constant 0 : index
    %c6_37 = arith.constant 6 : index
    %104 = memref.load %arg2[%c0_36, %c6_37] : memref<8x8xf32, #tpu.memory_space<smem>>
    %c0_38 = arith.constant 0 : index
    %c7_39 = arith.constant 7 : index
    %105 = memref.load %arg2[%c0_38, %c7_39] : memref<8x8xf32, #tpu.memory_space<smem>>
    %c12 = arith.constant 12 : index
    %c0_40 = arith.constant 0 : index
    %c0_41 = arith.constant 0 : index
    %106 = vector.load %arg1[%c12, %c0_40, %c0_41] : memref<16x72x128xf32, #tpu.memory_space<vmem>>, vector<1x72x128xf32>
    %107 = vector.shape_cast %106 : vector<1x72x128xf32> to vector<72x128xf32>
    %c13 = arith.constant 13 : index
    %c0_42 = arith.constant 0 : index
    %c0_43 = arith.constant 0 : index
    %108 = vector.load %arg1[%c13, %c0_42, %c0_43] : memref<16x72x128xf32, #tpu.memory_space<vmem>>, vector<1x72x128xf32>
    %109 = vector.shape_cast %108 : vector<1x72x128xf32> to vector<72x128xf32>
    %c14 = arith.constant 14 : index
    %c0_44 = arith.constant 0 : index
    %c0_45 = arith.constant 0 : index
    %110 = vector.load %arg1[%c14, %c0_44, %c0_45] : memref<16x72x128xf32, #tpu.memory_space<vmem>>, vector<1x72x128xf32>
    %111 = vector.shape_cast %110 : vector<1x72x128xf32> to vector<72x128xf32>
    %c15 = arith.constant 15 : index
    %c0_46 = arith.constant 0 : index
    %c0_47 = arith.constant 0 : index
    %112 = vector.load %arg1[%c15, %c0_46, %c0_47] : memref<16x72x128xf32, #tpu.memory_space<vmem>>, vector<1x72x128xf32>
    %113 = vector.shape_cast %112 : vector<1x72x128xf32> to vector<72x128xf32>
    %114 = vector.broadcast %104 : f32 to vector<72x128xf32>
    %115 = arith.mulf %114, %107 : vector<72x128xf32>
    %116 = vector.broadcast %105 : f32 to vector<72x128xf32>
    %117 = arith.mulf %116, %109 : vector<72x128xf32>
    %118 = arith.addf %115, %117 : vector<72x128xf32>
    %119 = vector.broadcast %104 : f32 to vector<72x128xf32>
    %120 = arith.mulf %119, %109 : vector<72x128xf32>
    %121 = vector.broadcast %105 : f32 to vector<72x128xf32>
    %122 = arith.mulf %121, %111 : vector<72x128xf32>
    %123 = arith.addf %120, %122 : vector<72x128xf32>
    %124 = vector.broadcast %104 : f32 to vector<72x128xf32>
    %125 = arith.mulf %124, %111 : vector<72x128xf32>
    %126 = vector.broadcast %105 : f32 to vector<72x128xf32>
    %127 = arith.mulf %126, %113 : vector<72x128xf32>
    %128 = arith.addf %125, %127 : vector<72x128xf32>
    %129 = vector.extract_strided_slice %113 {offsets = [0, 0], sizes = [71, 128], strides = [1, 1]} : vector<72x128xf32> to vector<71x128xf32>
    %130 = vector.broadcast %104 : f32 to vector<71x128xf32>
    %131 = arith.mulf %130, %129 : vector<71x128xf32>
    %132 = vector.extract_strided_slice %107 {offsets = [1, 0], sizes = [71, 128], strides = [1, 1]} : vector<72x128xf32> to vector<71x128xf32>
    %133 = vector.broadcast %105 : f32 to vector<71x128xf32>
    %134 = arith.mulf %133, %132 : vector<71x128xf32>
    %135 = arith.addf %131, %134 : vector<71x128xf32>
    %136 = arith.addf %100, %118 : vector<72x128xf32>
    %137 = arith.addf %101, %123 : vector<72x128xf32>
    %138 = arith.addf %102, %128 : vector<72x128xf32>
    %139 = arith.addf %103, %135 : vector<71x128xf32>
    %c0_48 = arith.constant 0 : index
    %140 = memref.load %arg3[%c0_48] : memref<8xf32, #tpu.memory_space<smem>>
    %141 = vector.broadcast %140 : f32 to vector<72x128xf32>
    %142 = arith.addf %136, %141 : vector<72x128xf32>
    %cst = arith.constant 0.000000e+00 : f32
    %143 = vector.broadcast %cst : f32 to vector<72x128xf32>
    %144 = arith.maximumf %142, %143 : vector<72x128xf32>
    %145 = vector.broadcast %140 : f32 to vector<72x128xf32>
    %146 = arith.addf %137, %145 : vector<72x128xf32>
    %cst_49 = arith.constant 0.000000e+00 : f32
    %147 = vector.broadcast %cst_49 : f32 to vector<72x128xf32>
    %148 = arith.maximumf %146, %147 : vector<72x128xf32>
    %149 = vector.broadcast %140 : f32 to vector<72x128xf32>
    %150 = arith.addf %138, %149 : vector<72x128xf32>
    %cst_50 = arith.constant 0.000000e+00 : f32
    %151 = vector.broadcast %cst_50 : f32 to vector<72x128xf32>
    %152 = arith.maximumf %150, %151 : vector<72x128xf32>
    %153 = vector.broadcast %140 : f32 to vector<71x128xf32>
    %154 = arith.addf %139, %153 : vector<71x128xf32>
    %cst_51 = arith.constant 0.000000e+00 : f32
    %155 = vector.broadcast %cst_51 : f32 to vector<71x128xf32>
    %156 = arith.maximumf %154, %155 : vector<71x128xf32>
    %157 = arith.maximumf %144, %148 : vector<72x128xf32>
    %158 = vector.extract_strided_slice %152 {offsets = [0, 0], sizes = [71, 128], strides = [1, 1]} : vector<72x128xf32> to vector<71x128xf32>
    %159 = arith.maximumf %158, %156 : vector<71x128xf32>
    %c0_52 = arith.constant 0 : index
    %c0_53 = arith.constant 0 : index
    %160 = memref.load %arg4[%c0_52, %c0_53] : memref<8x2xf32, #tpu.memory_space<smem>>
    %c0_54 = arith.constant 0 : index
    %c1_55 = arith.constant 1 : index
    %161 = memref.load %arg4[%c0_54, %c1_55] : memref<8x2xf32, #tpu.memory_space<smem>>
    %162 = vector.extract_strided_slice %157 {offsets = [0, 0], sizes = [71, 128], strides = [1, 1]} : vector<72x128xf32> to vector<71x128xf32>
    %163 = vector.broadcast %160 : f32 to vector<71x128xf32>
    %164 = arith.mulf %163, %162 : vector<71x128xf32>
    %165 = vector.broadcast %161 : f32 to vector<71x128xf32>
    %166 = arith.mulf %165, %159 : vector<71x128xf32>
    %167 = arith.addf %164, %166 : vector<71x128xf32>
    %168 = vector.broadcast %160 : f32 to vector<71x128xf32>
    %169 = arith.mulf %168, %159 : vector<71x128xf32>
    %170 = vector.extract_strided_slice %157 {offsets = [1, 0], sizes = [71, 128], strides = [1, 1]} : vector<72x128xf32> to vector<71x128xf32>
    %171 = vector.broadcast %161 : f32 to vector<71x128xf32>
    %172 = arith.mulf %171, %170 : vector<71x128xf32>
    %173 = arith.addf %169, %172 : vector<71x128xf32>
    %c1_56 = arith.constant 1 : index
    %c0_57 = arith.constant 0 : index
    %174 = memref.load %arg2[%c1_56, %c0_57] : memref<8x8xf32, #tpu.memory_space<smem>>
    %c1_58 = arith.constant 1 : index
    %c1_59 = arith.constant 1 : index
    %175 = memref.load %arg2[%c1_58, %c1_59] : memref<8x8xf32, #tpu.memory_space<smem>>
    %c0_60 = arith.constant 0 : index
    %c0_61 = arith.constant 0 : index
    %c0_62 = arith.constant 0 : index
    %176 = vector.load %arg1[%c0_60, %c0_61, %c0_62] : memref<16x72x128xf32, #tpu.memory_space<vmem>>, vector<1x72x128xf32>
    %177 = vector.shape_cast %176 : vector<1x72x128xf32> to vector<72x128xf32>
    %c1_63 = arith.constant 1 : index
    %c0_64 = arith.constant 0 : index
    %c0_65 = arith.constant 0 : index
    %178 = vector.load %arg1[%c1_63, %c0_64, %c0_65] : memref<16x72x128xf32, #tpu.memory_space<vmem>>, vector<1x72x128xf32>
    %179 = vector.shape_cast %178 : vector<1x72x128xf32> to vector<72x128xf32>
    %c2_66 = arith.constant 2 : index
    %c0_67 = arith.constant 0 : index
    %c0_68 = arith.constant 0 : index
    %180 = vector.load %arg1[%c2_66, %c0_67, %c0_68] : memref<16x72x128xf32, #tpu.memory_space<vmem>>, vector<1x72x128xf32>
    %181 = vector.shape_cast %180 : vector<1x72x128xf32> to vector<72x128xf32>
    %c3_69 = arith.constant 3 : index
    %c0_70 = arith.constant 0 : index
    %c0_71 = arith.constant 0 : index
    %182 = vector.load %arg1[%c3_69, %c0_70, %c0_71] : memref<16x72x128xf32, #tpu.memory_space<vmem>>, vector<1x72x128xf32>
    %183 = vector.shape_cast %182 : vector<1x72x128xf32> to vector<72x128xf32>
    %184 = vector.broadcast %174 : f32 to vector<72x128xf32>
    %185 = arith.mulf %184, %177 : vector<72x128xf32>
    %186 = vector.broadcast %175 : f32 to vector<72x128xf32>
    %187 = arith.mulf %186, %179 : vector<72x128xf32>
    %188 = arith.addf %185, %187 : vector<72x128xf32>
    %189 = vector.broadcast %174 : f32 to vector<72x128xf32>
    %190 = arith.mulf %189, %179 : vector<72x128xf32>
    %191 = vector.broadcast %175 : f32 to vector<72x128xf32>
    %192 = arith.mulf %191, %181 : vector<72x128xf32>
    %193 = arith.addf %190, %192 : vector<72x128xf32>
    %194 = vector.broadcast %174 : f32 to vector<72x128xf32>
    %195 = arith.mulf %194, %181 : vector<72x128xf32>
    %196 = vector.broadcast %175 : f32 to vector<72x128xf32>
    %197 = arith.mulf %196, %183 : vector<72x128xf32>
    %198 = arith.addf %195, %197 : vector<72x128xf32>
    %199 = vector.extract_strided_slice %183 {offsets = [0, 0], sizes = [71, 128], strides = [1, 1]} : vector<72x128xf32> to vector<71x128xf32>
    %200 = vector.broadcast %174 : f32 to vector<71x128xf32>
    %201 = arith.mulf %200, %199 : vector<71x128xf32>
    %202 = vector.extract_strided_slice %177 {offsets = [1, 0], sizes = [71, 128], strides = [1, 1]} : vector<72x128xf32> to vector<71x128xf32>
    %203 = vector.broadcast %175 : f32 to vector<71x128xf32>
    %204 = arith.mulf %203, %202 : vector<71x128xf32>
    %205 = arith.addf %201, %204 : vector<71x128xf32>
    %c1_72 = arith.constant 1 : index
    %c2_73 = arith.constant 2 : index
    %206 = memref.load %arg2[%c1_72, %c2_73] : memref<8x8xf32, #tpu.memory_space<smem>>
    %c1_74 = arith.constant 1 : index
    %c3_75 = arith.constant 3 : index
    %207 = memref.load %arg2[%c1_74, %c3_75] : memref<8x8xf32, #tpu.memory_space<smem>>
    %c4_76 = arith.constant 4 : index
    %c0_77 = arith.constant 0 : index
    %c0_78 = arith.constant 0 : index
    %208 = vector.load %arg1[%c4_76, %c0_77, %c0_78] : memref<16x72x128xf32, #tpu.memory_space<vmem>>, vector<1x72x128xf32>
    %209 = vector.shape_cast %208 : vector<1x72x128xf32> to vector<72x128xf32>
    %c5_79 = arith.constant 5 : index
    %c0_80 = arith.constant 0 : index
    %c0_81 = arith.constant 0 : index
    %210 = vector.load %arg1[%c5_79, %c0_80, %c0_81] : memref<16x72x128xf32, #tpu.memory_space<vmem>>, vector<1x72x128xf32>
    %211 = vector.shape_cast %210 : vector<1x72x128xf32> to vector<72x128xf32>
    %c6_82 = arith.constant 6 : index
    %c0_83 = arith.constant 0 : index
    %c0_84 = arith.constant 0 : index
    %212 = vector.load %arg1[%c6_82, %c0_83, %c0_84] : memref<16x72x128xf32, #tpu.memory_space<vmem>>, vector<1x72x128xf32>
    %213 = vector.shape_cast %212 : vector<1x72x128xf32> to vector<72x128xf32>
    %c7_85 = arith.constant 7 : index
    %c0_86 = arith.constant 0 : index
    %c0_87 = arith.constant 0 : index
    %214 = vector.load %arg1[%c7_85, %c0_86, %c0_87] : memref<16x72x128xf32, #tpu.memory_space<vmem>>, vector<1x72x128xf32>
    %215 = vector.shape_cast %214 : vector<1x72x128xf32> to vector<72x128xf32>
    %216 = vector.broadcast %206 : f32 to vector<72x128xf32>
    %217 = arith.mulf %216, %209 : vector<72x128xf32>
    %218 = vector.broadcast %207 : f32 to vector<72x128xf32>
    %219 = arith.mulf %218, %211 : vector<72x128xf32>
    %220 = arith.addf %217, %219 : vector<72x128xf32>
    %221 = vector.broadcast %206 : f32 to vector<72x128xf32>
    %222 = arith.mulf %221, %211 : vector<72x128xf32>
    %223 = vector.broadcast %207 : f32 to vector<72x128xf32>
    %224 = arith.mulf %223, %213 : vector<72x128xf32>
    %225 = arith.addf %222, %224 : vector<72x128xf32>
    %226 = vector.broadcast %206 : f32 to vector<72x128xf32>
    %227 = arith.mulf %226, %213 : vector<72x128xf32>
    %228 = vector.broadcast %207 : f32 to vector<72x128xf32>
    %229 = arith.mulf %228, %215 : vector<72x128xf32>
    %230 = arith.addf %227, %229 : vector<72x128xf32>
    %231 = vector.extract_strided_slice %215 {offsets = [0, 0], sizes = [71, 128], strides = [1, 1]} : vector<72x128xf32> to vector<71x128xf32>
    %232 = vector.broadcast %206 : f32 to vector<71x128xf32>
    %233 = arith.mulf %232, %231 : vector<71x128xf32>
    %234 = vector.extract_strided_slice %209 {offsets = [1, 0], sizes = [71, 128], strides = [1, 1]} : vector<72x128xf32> to vector<71x128xf32>
    %235 = vector.broadcast %207 : f32 to vector<71x128xf32>
    %236 = arith.mulf %235, %234 : vector<71x128xf32>
    %237 = arith.addf %233, %236 : vector<71x128xf32>
    %238 = arith.addf %188, %220 : vector<72x128xf32>
    %239 = arith.addf %193, %225 : vector<72x128xf32>
    %240 = arith.addf %198, %230 : vector<72x128xf32>
    %241 = arith.addf %205, %237 : vector<71x128xf32>
    %c1_88 = arith.constant 1 : index
    %c4_89 = arith.constant 4 : index
    %242 = memref.load %arg2[%c1_88, %c4_89] : memref<8x8xf32, #tpu.memory_space<smem>>
    %c1_90 = arith.constant 1 : index
    %c5_91 = arith.constant 5 : index
    %243 = memref.load %arg2[%c1_90, %c5_91] : memref<8x8xf32, #tpu.memory_space<smem>>
    %c8_92 = arith.constant 8 : index
    %c0_93 = arith.constant 0 : index
    %c0_94 = arith.constant 0 : index
    %244 = vector.load %arg1[%c8_92, %c0_93, %c0_94] : memref<16x72x128xf32, #tpu.memory_space<vmem>>, vector<1x72x128xf32>
    %245 = vector.shape_cast %244 : vector<1x72x128xf32> to vector<72x128xf32>
    %c9_95 = arith.constant 9 : index
    %c0_96 = arith.constant 0 : index
    %c0_97 = arith.constant 0 : index
    %246 = vector.load %arg1[%c9_95, %c0_96, %c0_97] : memref<16x72x128xf32, #tpu.memory_space<vmem>>, vector<1x72x128xf32>
    %247 = vector.shape_cast %246 : vector<1x72x128xf32> to vector<72x128xf32>
    %c10_98 = arith.constant 10 : index
    %c0_99 = arith.constant 0 : index
    %c0_100 = arith.constant 0 : index
    %248 = vector.load %arg1[%c10_98, %c0_99, %c0_100] : memref<16x72x128xf32, #tpu.memory_space<vmem>>, vector<1x72x128xf32>
    %249 = vector.shape_cast %248 : vector<1x72x128xf32> to vector<72x128xf32>
    %c11_101 = arith.constant 11 : index
    %c0_102 = arith.constant 0 : index
    %c0_103 = arith.constant 0 : index
    %250 = vector.load %arg1[%c11_101, %c0_102, %c0_103] : memref<16x72x128xf32, #tpu.memory_space<vmem>>, vector<1x72x128xf32>
    %251 = vector.shape_cast %250 : vector<1x72x128xf32> to vector<72x128xf32>
    %252 = vector.broadcast %242 : f32 to vector<72x128xf32>
    %253 = arith.mulf %252, %245 : vector<72x128xf32>
    %254 = vector.broadcast %243 : f32 to vector<72x128xf32>
    %255 = arith.mulf %254, %247 : vector<72x128xf32>
    %256 = arith.addf %253, %255 : vector<72x128xf32>
    %257 = vector.broadcast %242 : f32 to vector<72x128xf32>
    %258 = arith.mulf %257, %247 : vector<72x128xf32>
    %259 = vector.broadcast %243 : f32 to vector<72x128xf32>
    %260 = arith.mulf %259, %249 : vector<72x128xf32>
    %261 = arith.addf %258, %260 : vector<72x128xf32>
    %262 = vector.broadcast %242 : f32 to vector<72x128xf32>
    %263 = arith.mulf %262, %249 : vector<72x128xf32>
    %264 = vector.broadcast %243 : f32 to vector<72x128xf32>
    %265 = arith.mulf %264, %251 : vector<72x128xf32>
    %266 = arith.addf %263, %265 : vector<72x128xf32>
    %267 = vector.extract_strided_slice %251 {offsets = [0, 0], sizes = [71, 128], strides = [1, 1]} : vector<72x128xf32> to vector<71x128xf32>
    %268 = vector.broadcast %242 : f32 to vector<71x128xf32>
    %269 = arith.mulf %268, %267 : vector<71x128xf32>
    %270 = vector.extract_strided_slice %245 {offsets = [1, 0], sizes = [71, 128], strides = [1, 1]} : vector<72x128xf32> to vector<71x128xf32>
    %271 = vector.broadcast %243 : f32 to vector<71x128xf32>
    %272 = arith.mulf %271, %270 : vector<71x128xf32>
    %273 = arith.addf %269, %272 : vector<71x128xf32>
    %274 = arith.addf %238, %256 : vector<72x128xf32>
    %275 = arith.addf %239, %261 : vector<72x128xf32>
    %276 = arith.addf %240, %266 : vector<72x128xf32>
    %277 = arith.addf %241, %273 : vector<71x128xf32>
    %c1_104 = arith.constant 1 : index
    %c6_105 = arith.constant 6 : index
    %278 = memref.load %arg2[%c1_104, %c6_105] : memref<8x8xf32, #tpu.memory_space<smem>>
    %c1_106 = arith.constant 1 : index
    %c7_107 = arith.constant 7 : index
    %279 = memref.load %arg2[%c1_106, %c7_107] : memref<8x8xf32, #tpu.memory_space<smem>>
    %c12_108 = arith.constant 12 : index
    %c0_109 = arith.constant 0 : index
    %c0_110 = arith.constant 0 : index
    %280 = vector.load %arg1[%c12_108, %c0_109, %c0_110] : memref<16x72x128xf32, #tpu.memory_space<vmem>>, vector<1x72x128xf32>
    %281 = vector.shape_cast %280 : vector<1x72x128xf32> to vector<72x128xf32>
    %c13_111 = arith.constant 13 : index
    %c0_112 = arith.constant 0 : index
    %c0_113 = arith.constant 0 : index
    %282 = vector.load %arg1[%c13_111, %c0_112, %c0_113] : memref<16x72x128xf32, #tpu.memory_space<vmem>>, vector<1x72x128xf32>
    %283 = vector.shape_cast %282 : vector<1x72x128xf32> to vector<72x128xf32>
    %c14_114 = arith.constant 14 : index
    %c0_115 = arith.constant 0 : index
    %c0_116 = arith.constant 0 : index
    %284 = vector.load %arg1[%c14_114, %c0_115, %c0_116] : memref<16x72x128xf32, #tpu.memory_space<vmem>>, vector<1x72x128xf32>
    %285 = vector.shape_cast %284 : vector<1x72x128xf32> to vector<72x128xf32>
    %c15_117 = arith.constant 15 : index
    %c0_118 = arith.constant 0 : index
    %c0_119 = arith.constant 0 : index
    %286 = vector.load %arg1[%c15_117, %c0_118, %c0_119] : memref<16x72x128xf32, #tpu.memory_space<vmem>>, vector<1x72x128xf32>
    %287 = vector.shape_cast %286 : vector<1x72x128xf32> to vector<72x128xf32>
    %288 = vector.broadcast %278 : f32 to vector<72x128xf32>
    %289 = arith.mulf %288, %281 : vector<72x128xf32>
    %290 = vector.broadcast %279 : f32 to vector<72x128xf32>
    %291 = arith.mulf %290, %283 : vector<72x128xf32>
    %292 = arith.addf %289, %291 : vector<72x128xf32>
    %293 = vector.broadcast %278 : f32 to vector<72x128xf32>
    %294 = arith.mulf %293, %283 : vector<72x128xf32>
    %295 = vector.broadcast %279 : f32 to vector<72x128xf32>
    %296 = arith.mulf %295, %285 : vector<72x128xf32>
    %297 = arith.addf %294, %296 : vector<72x128xf32>
    %298 = vector.broadcast %278 : f32 to vector<72x128xf32>
    %299 = arith.mulf %298, %285 : vector<72x128xf32>
    %300 = vector.broadcast %279 : f32 to vector<72x128xf32>
    %301 = arith.mulf %300, %287 : vector<72x128xf32>
    %302 = arith.addf %299, %301 : vector<72x128xf32>
    %303 = vector.extract_strided_slice %287 {offsets = [0, 0], sizes = [71, 128], strides = [1, 1]} : vector<72x128xf32> to vector<71x128xf32>
    %304 = vector.broadcast %278 : f32 to vector<71x128xf32>
    %305 = arith.mulf %304, %303 : vector<71x128xf32>
    %306 = vector.extract_strided_slice %281 {offsets = [1, 0], sizes = [71, 128], strides = [1, 1]} : vector<72x128xf32> to vector<71x128xf32>
    %307 = vector.broadcast %279 : f32 to vector<71x128xf32>
    %308 = arith.mulf %307, %306 : vector<71x128xf32>
    %309 = arith.addf %305, %308 : vector<71x128xf32>
    %310 = arith.addf %274, %292 : vector<72x128xf32>
    %311 = arith.addf %275, %297 : vector<72x128xf32>
    %312 = arith.addf %276, %302 : vector<72x128xf32>
    %313 = arith.addf %277, %309 : vector<71x128xf32>
    %c1_120 = arith.constant 1 : index
    %314 = memref.load %arg3[%c1_120] : memref<8xf32, #tpu.memory_space<smem>>
    %315 = vector.broadcast %314 : f32 to vector<72x128xf32>
    %316 = arith.addf %310, %315 : vector<72x128xf32>
    %cst_121 = arith.constant 0.000000e+00 : f32
    %317 = vector.broadcast %cst_121 : f32 to vector<72x128xf32>
    %318 = arith.maximumf %316, %317 : vector<72x128xf32>
    %319 = vector.broadcast %314 : f32 to vector<72x128xf32>
    %320 = arith.addf %311, %319 : vector<72x128xf32>
    %cst_122 = arith.constant 0.000000e+00 : f32
    %321 = vector.broadcast %cst_122 : f32 to vector<72x128xf32>
    %322 = arith.maximumf %320, %321 : vector<72x128xf32>
    %323 = vector.broadcast %314 : f32 to vector<72x128xf32>
    %324 = arith.addf %312, %323 : vector<72x128xf32>
    %cst_123 = arith.constant 0.000000e+00 : f32
    %325 = vector.broadcast %cst_123 : f32 to vector<72x128xf32>
    %326 = arith.maximumf %324, %325 : vector<72x128xf32>
    %327 = vector.broadcast %314 : f32 to vector<71x128xf32>
    %328 = arith.addf %313, %327 : vector<71x128xf32>
    %cst_124 = arith.constant 0.000000e+00 : f32
    %329 = vector.broadcast %cst_124 : f32 to vector<71x128xf32>
    %330 = arith.maximumf %328, %329 : vector<71x128xf32>
    %331 = arith.maximumf %318, %322 : vector<72x128xf32>
    %332 = vector.extract_strided_slice %326 {offsets = [0, 0], sizes = [71, 128], strides = [1, 1]} : vector<72x128xf32> to vector<71x128xf32>
    %333 = arith.maximumf %332, %330 : vector<71x128xf32>
    %c1_125 = arith.constant 1 : index
    %c0_126 = arith.constant 0 : index
    %334 = memref.load %arg4[%c1_125, %c0_126] : memref<8x2xf32, #tpu.memory_space<smem>>
    %c1_127 = arith.constant 1 : index
    %c1_128 = arith.constant 1 : index
    %335 = memref.load %arg4[%c1_127, %c1_128] : memref<8x2xf32, #tpu.memory_space<smem>>
    %336 = vector.extract_strided_slice %331 {offsets = [0, 0], sizes = [71, 128], strides = [1, 1]} : vector<72x128xf32> to vector<71x128xf32>
    %337 = vector.broadcast %334 : f32 to vector<71x128xf32>
    %338 = arith.mulf %337, %336 : vector<71x128xf32>
    %339 = vector.broadcast %335 : f32 to vector<71x128xf32>
    %340 = arith.mulf %339, %333 : vector<71x128xf32>
    %341 = arith.addf %338, %340 : vector<71x128xf32>
    %342 = vector.broadcast %334 : f32 to vector<71x128xf32>
    %343 = arith.mulf %342, %333 : vector<71x128xf32>
    %344 = vector.extract_strided_slice %331 {offsets = [1, 0], sizes = [71, 128], strides = [1, 1]} : vector<72x128xf32> to vector<71x128xf32>
    %345 = vector.broadcast %335 : f32 to vector<71x128xf32>
    %346 = arith.mulf %345, %344 : vector<71x128xf32>
    %347 = arith.addf %343, %346 : vector<71x128xf32>
    %348 = arith.addf %167, %341 : vector<71x128xf32>
    %349 = arith.addf %173, %347 : vector<71x128xf32>
    %c2_129 = arith.constant 2 : index
    %c0_130 = arith.constant 0 : index
    %350 = memref.load %arg2[%c2_129, %c0_130] : memref<8x8xf32, #tpu.memory_space<smem>>
    %c2_131 = arith.constant 2 : index
    %c1_132 = arith.constant 1 : index
    %351 = memref.load %arg2[%c2_131, %c1_132] : memref<8x8xf32, #tpu.memory_space<smem>>
    %c0_133 = arith.constant 0 : index
    %c0_134 = arith.constant 0 : index
    %c0_135 = arith.constant 0 : index
    %352 = vector.load %arg1[%c0_133, %c0_134, %c0_135] : memref<16x72x128xf32, #tpu.memory_space<vmem>>, vector<1x72x128xf32>
    %353 = vector.shape_cast %352 : vector<1x72x128xf32> to vector<72x128xf32>
    %c1_136 = arith.constant 1 : index
    %c0_137 = arith.constant 0 : index
    %c0_138 = arith.constant 0 : index
    %354 = vector.load %arg1[%c1_136, %c0_137, %c0_138] : memref<16x72x128xf32, #tpu.memory_space<vmem>>, vector<1x72x128xf32>
    %355 = vector.shape_cast %354 : vector<1x72x128xf32> to vector<72x128xf32>
    %c2_139 = arith.constant 2 : index
    %c0_140 = arith.constant 0 : index
    %c0_141 = arith.constant 0 : index
    %356 = vector.load %arg1[%c2_139, %c0_140, %c0_141] : memref<16x72x128xf32, #tpu.memory_space<vmem>>, vector<1x72x128xf32>
    %357 = vector.shape_cast %356 : vector<1x72x128xf32> to vector<72x128xf32>
    %c3_142 = arith.constant 3 : index
    %c0_143 = arith.constant 0 : index
    %c0_144 = arith.constant 0 : index
    %358 = vector.load %arg1[%c3_142, %c0_143, %c0_144] : memref<16x72x128xf32, #tpu.memory_space<vmem>>, vector<1x72x128xf32>
    %359 = vector.shape_cast %358 : vector<1x72x128xf32> to vector<72x128xf32>
    %360 = vector.broadcast %350 : f32 to vector<72x128xf32>
    %361 = arith.mulf %360, %353 : vector<72x128xf32>
    %362 = vector.broadcast %351 : f32 to vector<72x128xf32>
    %363 = arith.mulf %362, %355 : vector<72x128xf32>
    %364 = arith.addf %361, %363 : vector<72x128xf32>
    %365 = vector.broadcast %350 : f32 to vector<72x128xf32>
    %366 = arith.mulf %365, %355 : vector<72x128xf32>
    %367 = vector.broadcast %351 : f32 to vector<72x128xf32>
    %368 = arith.mulf %367, %357 : vector<72x128xf32>
    %369 = arith.addf %366, %368 : vector<72x128xf32>
    %370 = vector.broadcast %350 : f32 to vector<72x128xf32>
    %371 = arith.mulf %370, %357 : vector<72x128xf32>
    %372 = vector.broadcast %351 : f32 to vector<72x128xf32>
    %373 = arith.mulf %372, %359 : vector<72x128xf32>
    %374 = arith.addf %371, %373 : vector<72x128xf32>
    %375 = vector.extract_strided_slice %359 {offsets = [0, 0], sizes = [71, 128], strides = [1, 1]} : vector<72x128xf32> to vector<71x128xf32>
    %376 = vector.broadcast %350 : f32 to vector<71x128xf32>
    %377 = arith.mulf %376, %375 : vector<71x128xf32>
    %378 = vector.extract_strided_slice %353 {offsets = [1, 0], sizes = [71, 128], strides = [1, 1]} : vector<72x128xf32> to vector<71x128xf32>
    %379 = vector.broadcast %351 : f32 to vector<71x128xf32>
    %380 = arith.mulf %379, %378 : vector<71x128xf32>
    %381 = arith.addf %377, %380 : vector<71x128xf32>
    %c2_145 = arith.constant 2 : index
    %c2_146 = arith.constant 2 : index
    %382 = memref.load %arg2[%c2_145, %c2_146] : memref<8x8xf32, #tpu.memory_space<smem>>
    %c2_147 = arith.constant 2 : index
    %c3_148 = arith.constant 3 : index
    %383 = memref.load %arg2[%c2_147, %c3_148] : memref<8x8xf32, #tpu.memory_space<smem>>
    %c4_149 = arith.constant 4 : index
    %c0_150 = arith.constant 0 : index
    %c0_151 = arith.constant 0 : index
    %384 = vector.load %arg1[%c4_149, %c0_150, %c0_151] : memref<16x72x128xf32, #tpu.memory_space<vmem>>, vector<1x72x128xf32>
    %385 = vector.shape_cast %384 : vector<1x72x128xf32> to vector<72x128xf32>
    %c5_152 = arith.constant 5 : index
    %c0_153 = arith.constant 0 : index
    %c0_154 = arith.constant 0 : index
    %386 = vector.load %arg1[%c5_152, %c0_153, %c0_154] : memref<16x72x128xf32, #tpu.memory_space<vmem>>, vector<1x72x128xf32>
    %387 = vector.shape_cast %386 : vector<1x72x128xf32> to vector<72x128xf32>
    %c6_155 = arith.constant 6 : index
    %c0_156 = arith.constant 0 : index
    %c0_157 = arith.constant 0 : index
    %388 = vector.load %arg1[%c6_155, %c0_156, %c0_157] : memref<16x72x128xf32, #tpu.memory_space<vmem>>, vector<1x72x128xf32>
    %389 = vector.shape_cast %388 : vector<1x72x128xf32> to vector<72x128xf32>
    %c7_158 = arith.constant 7 : index
    %c0_159 = arith.constant 0 : index
    %c0_160 = arith.constant 0 : index
    %390 = vector.load %arg1[%c7_158, %c0_159, %c0_160] : memref<16x72x128xf32, #tpu.memory_space<vmem>>, vector<1x72x128xf32>
    %391 = vector.shape_cast %390 : vector<1x72x128xf32> to vector<72x128xf32>
    %392 = vector.broadcast %382 : f32 to vector<72x128xf32>
    %393 = arith.mulf %392, %385 : vector<72x128xf32>
    %394 = vector.broadcast %383 : f32 to vector<72x128xf32>
    %395 = arith.mulf %394, %387 : vector<72x128xf32>
    %396 = arith.addf %393, %395 : vector<72x128xf32>
    %397 = vector.broadcast %382 : f32 to vector<72x128xf32>
    %398 = arith.mulf %397, %387 : vector<72x128xf32>
    %399 = vector.broadcast %383 : f32 to vector<72x128xf32>
    %400 = arith.mulf %399, %389 : vector<72x128xf32>
    %401 = arith.addf %398, %400 : vector<72x128xf32>
    %402 = vector.broadcast %382 : f32 to vector<72x128xf32>
    %403 = arith.mulf %402, %389 : vector<72x128xf32>
    %404 = vector.broadcast %383 : f32 to vector<72x128xf32>
    %405 = arith.mulf %404, %391 : vector<72x128xf32>
    %406 = arith.addf %403, %405 : vector<72x128xf32>
    %407 = vector.extract_strided_slice %391 {offsets = [0, 0], sizes = [71, 128], strides = [1, 1]} : vector<72x128xf32> to vector<71x128xf32>
    %408 = vector.broadcast %382 : f32 to vector<71x128xf32>
    %409 = arith.mulf %408, %407 : vector<71x128xf32>
    %410 = vector.extract_strided_slice %385 {offsets = [1, 0], sizes = [71, 128], strides = [1, 1]} : vector<72x128xf32> to vector<71x128xf32>
    %411 = vector.broadcast %383 : f32 to vector<71x128xf32>
    %412 = arith.mulf %411, %410 : vector<71x128xf32>
    %413 = arith.addf %409, %412 : vector<71x128xf32>
    %414 = arith.addf %364, %396 : vector<72x128xf32>
    %415 = arith.addf %369, %401 : vector<72x128xf32>
    %416 = arith.addf %374, %406 : vector<72x128xf32>
    %417 = arith.addf %381, %413 : vector<71x128xf32>
    %c2_161 = arith.constant 2 : index
    %c4_162 = arith.constant 4 : index
    %418 = memref.load %arg2[%c2_161, %c4_162] : memref<8x8xf32, #tpu.memory_space<smem>>
    %c2_163 = arith.constant 2 : index
    %c5_164 = arith.constant 5 : index
    %419 = memref.load %arg2[%c2_163, %c5_164] : memref<8x8xf32, #tpu.memory_space<smem>>
    %c8_165 = arith.constant 8 : index
    %c0_166 = arith.constant 0 : index
    %c0_167 = arith.constant 0 : index
    %420 = vector.load %arg1[%c8_165, %c0_166, %c0_167] : memref<16x72x128xf32, #tpu.memory_space<vmem>>, vector<1x72x128xf32>
    %421 = vector.shape_cast %420 : vector<1x72x128xf32> to vector<72x128xf32>
    %c9_168 = arith.constant 9 : index
    %c0_169 = arith.constant 0 : index
    %c0_170 = arith.constant 0 : index
    %422 = vector.load %arg1[%c9_168, %c0_169, %c0_170] : memref<16x72x128xf32, #tpu.memory_space<vmem>>, vector<1x72x128xf32>
    %423 = vector.shape_cast %422 : vector<1x72x128xf32> to vector<72x128xf32>
    %c10_171 = arith.constant 10 : index
    %c0_172 = arith.constant 0 : index
    %c0_173 = arith.constant 0 : index
    %424 = vector.load %arg1[%c10_171, %c0_172, %c0_173] : memref<16x72x128xf32, #tpu.memory_space<vmem>>, vector<1x72x128xf32>
    %425 = vector.shape_cast %424 : vector<1x72x128xf32> to vector<72x128xf32>
    %c11_174 = arith.constant 11 : index
    %c0_175 = arith.constant 0 : index
    %c0_176 = arith.constant 0 : index
    %426 = vector.load %arg1[%c11_174, %c0_175, %c0_176] : memref<16x72x128xf32, #tpu.memory_space<vmem>>, vector<1x72x128xf32>
    %427 = vector.shape_cast %426 : vector<1x72x128xf32> to vector<72x128xf32>
    %428 = vector.broadcast %418 : f32 to vector<72x128xf32>
    %429 = arith.mulf %428, %421 : vector<72x128xf32>
    %430 = vector.broadcast %419 : f32 to vector<72x128xf32>
    %431 = arith.mulf %430, %423 : vector<72x128xf32>
    %432 = arith.addf %429, %431 : vector<72x128xf32>
    %433 = vector.broadcast %418 : f32 to vector<72x128xf32>
    %434 = arith.mulf %433, %423 : vector<72x128xf32>
    %435 = vector.broadcast %419 : f32 to vector<72x128xf32>
    %436 = arith.mulf %435, %425 : vector<72x128xf32>
    %437 = arith.addf %434, %436 : vector<72x128xf32>
    %438 = vector.broadcast %418 : f32 to vector<72x128xf32>
    %439 = arith.mulf %438, %425 : vector<72x128xf32>
    %440 = vector.broadcast %419 : f32 to vector<72x128xf32>
    %441 = arith.mulf %440, %427 : vector<72x128xf32>
    %442 = arith.addf %439, %441 : vector<72x128xf32>
    %443 = vector.extract_strided_slice %427 {offsets = [0, 0], sizes = [71, 128], strides = [1, 1]} : vector<72x128xf32> to vector<71x128xf32>
    %444 = vector.broadcast %418 : f32 to vector<71x128xf32>
    %445 = arith.mulf %444, %443 : vector<71x128xf32>
    %446 = vector.extract_strided_slice %421 {offsets = [1, 0], sizes = [71, 128], strides = [1, 1]} : vector<72x128xf32> to vector<71x128xf32>
    %447 = vector.broadcast %419 : f32 to vector<71x128xf32>
    %448 = arith.mulf %447, %446 : vector<71x128xf32>
    %449 = arith.addf %445, %448 : vector<71x128xf32>
    %450 = arith.addf %414, %432 : vector<72x128xf32>
    %451 = arith.addf %415, %437 : vector<72x128xf32>
    %452 = arith.addf %416, %442 : vector<72x128xf32>
    %453 = arith.addf %417, %449 : vector<71x128xf32>
    %c2_177 = arith.constant 2 : index
    %c6_178 = arith.constant 6 : index
    %454 = memref.load %arg2[%c2_177, %c6_178] : memref<8x8xf32, #tpu.memory_space<smem>>
    %c2_179 = arith.constant 2 : index
    %c7_180 = arith.constant 7 : index
    %455 = memref.load %arg2[%c2_179, %c7_180] : memref<8x8xf32, #tpu.memory_space<smem>>
    %c12_181 = arith.constant 12 : index
    %c0_182 = arith.constant 0 : index
    %c0_183 = arith.constant 0 : index
    %456 = vector.load %arg1[%c12_181, %c0_182, %c0_183] : memref<16x72x128xf32, #tpu.memory_space<vmem>>, vector<1x72x128xf32>
    %457 = vector.shape_cast %456 : vector<1x72x128xf32> to vector<72x128xf32>
    %c13_184 = arith.constant 13 : index
    %c0_185 = arith.constant 0 : index
    %c0_186 = arith.constant 0 : index
    %458 = vector.load %arg1[%c13_184, %c0_185, %c0_186] : memref<16x72x128xf32, #tpu.memory_space<vmem>>, vector<1x72x128xf32>
    %459 = vector.shape_cast %458 : vector<1x72x128xf32> to vector<72x128xf32>
    %c14_187 = arith.constant 14 : index
    %c0_188 = arith.constant 0 : index
    %c0_189 = arith.constant 0 : index
    %460 = vector.load %arg1[%c14_187, %c0_188, %c0_189] : memref<16x72x128xf32, #tpu.memory_space<vmem>>, vector<1x72x128xf32>
    %461 = vector.shape_cast %460 : vector<1x72x128xf32> to vector<72x128xf32>
    %c15_190 = arith.constant 15 : index
    %c0_191 = arith.constant 0 : index
    %c0_192 = arith.constant 0 : index
    %462 = vector.load %arg1[%c15_190, %c0_191, %c0_192] : memref<16x72x128xf32, #tpu.memory_space<vmem>>, vector<1x72x128xf32>
    %463 = vector.shape_cast %462 : vector<1x72x128xf32> to vector<72x128xf32>
    %464 = vector.broadcast %454 : f32 to vector<72x128xf32>
    %465 = arith.mulf %464, %457 : vector<72x128xf32>
    %466 = vector.broadcast %455 : f32 to vector<72x128xf32>
    %467 = arith.mulf %466, %459 : vector<72x128xf32>
    %468 = arith.addf %465, %467 : vector<72x128xf32>
    %469 = vector.broadcast %454 : f32 to vector<72x128xf32>
    %470 = arith.mulf %469, %459 : vector<72x128xf32>
    %471 = vector.broadcast %455 : f32 to vector<72x128xf32>
    %472 = arith.mulf %471, %461 : vector<72x128xf32>
    %473 = arith.addf %470, %472 : vector<72x128xf32>
    %474 = vector.broadcast %454 : f32 to vector<72x128xf32>
    %475 = arith.mulf %474, %461 : vector<72x128xf32>
    %476 = vector.broadcast %455 : f32 to vector<72x128xf32>
    %477 = arith.mulf %476, %463 : vector<72x128xf32>
    %478 = arith.addf %475, %477 : vector<72x128xf32>
    %479 = vector.extract_strided_slice %463 {offsets = [0, 0], sizes = [71, 128], strides = [1, 1]} : vector<72x128xf32> to vector<71x128xf32>
    %480 = vector.broadcast %454 : f32 to vector<71x128xf32>
    %481 = arith.mulf %480, %479 : vector<71x128xf32>
    %482 = vector.extract_strided_slice %457 {offsets = [1, 0], sizes = [71, 128], strides = [1, 1]} : vector<72x128xf32> to vector<71x128xf32>
    %483 = vector.broadcast %455 : f32 to vector<71x128xf32>
    %484 = arith.mulf %483, %482 : vector<71x128xf32>
    %485 = arith.addf %481, %484 : vector<71x128xf32>
    %486 = arith.addf %450, %468 : vector<72x128xf32>
    %487 = arith.addf %451, %473 : vector<72x128xf32>
    %488 = arith.addf %452, %478 : vector<72x128xf32>
    %489 = arith.addf %453, %485 : vector<71x128xf32>
    %c2_193 = arith.constant 2 : index
    %490 = memref.load %arg3[%c2_193] : memref<8xf32, #tpu.memory_space<smem>>
    %491 = vector.broadcast %490 : f32 to vector<72x128xf32>
    %492 = arith.addf %486, %491 : vector<72x128xf32>
    %cst_194 = arith.constant 0.000000e+00 : f32
    %493 = vector.broadcast %cst_194 : f32 to vector<72x128xf32>
    %494 = arith.maximumf %492, %493 : vector<72x128xf32>
    %495 = vector.broadcast %490 : f32 to vector<72x128xf32>
    %496 = arith.addf %487, %495 : vector<72x128xf32>
    %cst_195 = arith.constant 0.000000e+00 : f32
    %497 = vector.broadcast %cst_195 : f32 to vector<72x128xf32>
    %498 = arith.maximumf %496, %497 : vector<72x128xf32>
    %499 = vector.broadcast %490 : f32 to vector<72x128xf32>
    %500 = arith.addf %488, %499 : vector<72x128xf32>
    %cst_196 = arith.constant 0.000000e+00 : f32
    %501 = vector.broadcast %cst_196 : f32 to vector<72x128xf32>
    %502 = arith.maximumf %500, %501 : vector<72x128xf32>
    %503 = vector.broadcast %490 : f32 to vector<71x128xf32>
    %504 = arith.addf %489, %503 : vector<71x128xf32>
    %cst_197 = arith.constant 0.000000e+00 : f32
    %505 = vector.broadcast %cst_197 : f32 to vector<71x128xf32>
    %506 = arith.maximumf %504, %505 : vector<71x128xf32>
    %507 = arith.maximumf %494, %498 : vector<72x128xf32>
    %508 = vector.extract_strided_slice %502 {offsets = [0, 0], sizes = [71, 128], strides = [1, 1]} : vector<72x128xf32> to vector<71x128xf32>
    %509 = arith.maximumf %508, %506 : vector<71x128xf32>
    %c2_198 = arith.constant 2 : index
    %c0_199 = arith.constant 0 : index
    %510 = memref.load %arg4[%c2_198, %c0_199] : memref<8x2xf32, #tpu.memory_space<smem>>
    %c2_200 = arith.constant 2 : index
    %c1_201 = arith.constant 1 : index
    %511 = memref.load %arg4[%c2_200, %c1_201] : memref<8x2xf32, #tpu.memory_space<smem>>
    %512 = vector.extract_strided_slice %507 {offsets = [0, 0], sizes = [71, 128], strides = [1, 1]} : vector<72x128xf32> to vector<71x128xf32>
    %513 = vector.broadcast %510 : f32 to vector<71x128xf32>
    %514 = arith.mulf %513, %512 : vector<71x128xf32>
    %515 = vector.broadcast %511 : f32 to vector<71x128xf32>
    %516 = arith.mulf %515, %509 : vector<71x128xf32>
    %517 = arith.addf %514, %516 : vector<71x128xf32>
    %518 = vector.broadcast %510 : f32 to vector<71x128xf32>
    %519 = arith.mulf %518, %509 : vector<71x128xf32>
    %520 = vector.extract_strided_slice %507 {offsets = [1, 0], sizes = [71, 128], strides = [1, 1]} : vector<72x128xf32> to vector<71x128xf32>
    %521 = vector.broadcast %511 : f32 to vector<71x128xf32>
    %522 = arith.mulf %521, %520 : vector<71x128xf32>
    %523 = arith.addf %519, %522 : vector<71x128xf32>
    %524 = arith.addf %348, %517 : vector<71x128xf32>
    %525 = arith.addf %349, %523 : vector<71x128xf32>
    %c3_202 = arith.constant 3 : index
    %c0_203 = arith.constant 0 : index
    %526 = memref.load %arg2[%c3_202, %c0_203] : memref<8x8xf32, #tpu.memory_space<smem>>
    %c3_204 = arith.constant 3 : index
    %c1_205 = arith.constant 1 : index
    %527 = memref.load %arg2[%c3_204, %c1_205] : memref<8x8xf32, #tpu.memory_space<smem>>
    %c0_206 = arith.constant 0 : index
    %c0_207 = arith.constant 0 : index
    %c0_208 = arith.constant 0 : index
    %528 = vector.load %arg1[%c0_206, %c0_207, %c0_208] : memref<16x72x128xf32, #tpu.memory_space<vmem>>, vector<1x72x128xf32>
    %529 = vector.shape_cast %528 : vector<1x72x128xf32> to vector<72x128xf32>
    %c1_209 = arith.constant 1 : index
    %c0_210 = arith.constant 0 : index
    %c0_211 = arith.constant 0 : index
    %530 = vector.load %arg1[%c1_209, %c0_210, %c0_211] : memref<16x72x128xf32, #tpu.memory_space<vmem>>, vector<1x72x128xf32>
    %531 = vector.shape_cast %530 : vector<1x72x128xf32> to vector<72x128xf32>
    %c2_212 = arith.constant 2 : index
    %c0_213 = arith.constant 0 : index
    %c0_214 = arith.constant 0 : index
    %532 = vector.load %arg1[%c2_212, %c0_213, %c0_214] : memref<16x72x128xf32, #tpu.memory_space<vmem>>, vector<1x72x128xf32>
    %533 = vector.shape_cast %532 : vector<1x72x128xf32> to vector<72x128xf32>
    %c3_215 = arith.constant 3 : index
    %c0_216 = arith.constant 0 : index
    %c0_217 = arith.constant 0 : index
    %534 = vector.load %arg1[%c3_215, %c0_216, %c0_217] : memref<16x72x128xf32, #tpu.memory_space<vmem>>, vector<1x72x128xf32>
    %535 = vector.shape_cast %534 : vector<1x72x128xf32> to vector<72x128xf32>
    %536 = vector.broadcast %526 : f32 to vector<72x128xf32>
    %537 = arith.mulf %536, %529 : vector<72x128xf32>
    %538 = vector.broadcast %527 : f32 to vector<72x128xf32>
    %539 = arith.mulf %538, %531 : vector<72x128xf32>
    %540 = arith.addf %537, %539 : vector<72x128xf32>
    %541 = vector.broadcast %526 : f32 to vector<72x128xf32>
    %542 = arith.mulf %541, %531 : vector<72x128xf32>
    %543 = vector.broadcast %527 : f32 to vector<72x128xf32>
    %544 = arith.mulf %543, %533 : vector<72x128xf32>
    %545 = arith.addf %542, %544 : vector<72x128xf32>
    %546 = vector.broadcast %526 : f32 to vector<72x128xf32>
    %547 = arith.mulf %546, %533 : vector<72x128xf32>
    %548 = vector.broadcast %527 : f32 to vector<72x128xf32>
    %549 = arith.mulf %548, %535 : vector<72x128xf32>
    %550 = arith.addf %547, %549 : vector<72x128xf32>
    %551 = vector.extract_strided_slice %535 {offsets = [0, 0], sizes = [71, 128], strides = [1, 1]} : vector<72x128xf32> to vector<71x128xf32>
    %552 = vector.broadcast %526 : f32 to vector<71x128xf32>
    %553 = arith.mulf %552, %551 : vector<71x128xf32>
    %554 = vector.extract_strided_slice %529 {offsets = [1, 0], sizes = [71, 128], strides = [1, 1]} : vector<72x128xf32> to vector<71x128xf32>
    %555 = vector.broadcast %527 : f32 to vector<71x128xf32>
    %556 = arith.mulf %555, %554 : vector<71x128xf32>
    %557 = arith.addf %553, %556 : vector<71x128xf32>
    %c3_218 = arith.constant 3 : index
    %c2_219 = arith.constant 2 : index
    %558 = memref.load %arg2[%c3_218, %c2_219] : memref<8x8xf32, #tpu.memory_space<smem>>
    %c3_220 = arith.constant 3 : index
    %c3_221 = arith.constant 3 : index
    %559 = memref.load %arg2[%c3_220, %c3_221] : memref<8x8xf32, #tpu.memory_space<smem>>
    %c4_222 = arith.constant 4 : index
    %c0_223 = arith.constant 0 : index
    %c0_224 = arith.constant 0 : index
    %560 = vector.load %arg1[%c4_222, %c0_223, %c0_224] : memref<16x72x128xf32, #tpu.memory_space<vmem>>, vector<1x72x128xf32>
    %561 = vector.shape_cast %560 : vector<1x72x128xf32> to vector<72x128xf32>
    %c5_225 = arith.constant 5 : index
    %c0_226 = arith.constant 0 : index
    %c0_227 = arith.constant 0 : index
    %562 = vector.load %arg1[%c5_225, %c0_226, %c0_227] : memref<16x72x128xf32, #tpu.memory_space<vmem>>, vector<1x72x128xf32>
    %563 = vector.shape_cast %562 : vector<1x72x128xf32> to vector<72x128xf32>
    %c6_228 = arith.constant 6 : index
    %c0_229 = arith.constant 0 : index
    %c0_230 = arith.constant 0 : index
    %564 = vector.load %arg1[%c6_228, %c0_229, %c0_230] : memref<16x72x128xf32, #tpu.memory_space<vmem>>, vector<1x72x128xf32>
    %565 = vector.shape_cast %564 : vector<1x72x128xf32> to vector<72x128xf32>
    %c7_231 = arith.constant 7 : index
    %c0_232 = arith.constant 0 : index
    %c0_233 = arith.constant 0 : index
    %566 = vector.load %arg1[%c7_231, %c0_232, %c0_233] : memref<16x72x128xf32, #tpu.memory_space<vmem>>, vector<1x72x128xf32>
    %567 = vector.shape_cast %566 : vector<1x72x128xf32> to vector<72x128xf32>
    %568 = vector.broadcast %558 : f32 to vector<72x128xf32>
    %569 = arith.mulf %568, %561 : vector<72x128xf32>
    %570 = vector.broadcast %559 : f32 to vector<72x128xf32>
    %571 = arith.mulf %570, %563 : vector<72x128xf32>
    %572 = arith.addf %569, %571 : vector<72x128xf32>
    %573 = vector.broadcast %558 : f32 to vector<72x128xf32>
    %574 = arith.mulf %573, %563 : vector<72x128xf32>
    %575 = vector.broadcast %559 : f32 to vector<72x128xf32>
    %576 = arith.mulf %575, %565 : vector<72x128xf32>
    %577 = arith.addf %574, %576 : vector<72x128xf32>
    %578 = vector.broadcast %558 : f32 to vector<72x128xf32>
    %579 = arith.mulf %578, %565 : vector<72x128xf32>
    %580 = vector.broadcast %559 : f32 to vector<72x128xf32>
    %581 = arith.mulf %580, %567 : vector<72x128xf32>
    %582 = arith.addf %579, %581 : vector<72x128xf32>
    %583 = vector.extract_strided_slice %567 {offsets = [0, 0], sizes = [71, 128], strides = [1, 1]} : vector<72x128xf32> to vector<71x128xf32>
    %584 = vector.broadcast %558 : f32 to vector<71x128xf32>
    %585 = arith.mulf %584, %583 : vector<71x128xf32>
    %586 = vector.extract_strided_slice %561 {offsets = [1, 0], sizes = [71, 128], strides = [1, 1]} : vector<72x128xf32> to vector<71x128xf32>
    %587 = vector.broadcast %559 : f32 to vector<71x128xf32>
    %588 = arith.mulf %587, %586 : vector<71x128xf32>
    %589 = arith.addf %585, %588 : vector<71x128xf32>
    %590 = arith.addf %540, %572 : vector<72x128xf32>
    %591 = arith.addf %545, %577 : vector<72x128xf32>
    %592 = arith.addf %550, %582 : vector<72x128xf32>
    %593 = arith.addf %557, %589 : vector<71x128xf32>
    %c3_234 = arith.constant 3 : index
    %c4_235 = arith.constant 4 : index
    %594 = memref.load %arg2[%c3_234, %c4_235] : memref<8x8xf32, #tpu.memory_space<smem>>
    %c3_236 = arith.constant 3 : index
    %c5_237 = arith.constant 5 : index
    %595 = memref.load %arg2[%c3_236, %c5_237] : memref<8x8xf32, #tpu.memory_space<smem>>
    %c8_238 = arith.constant 8 : index
    %c0_239 = arith.constant 0 : index
    %c0_240 = arith.constant 0 : index
    %596 = vector.load %arg1[%c8_238, %c0_239, %c0_240] : memref<16x72x128xf32, #tpu.memory_space<vmem>>, vector<1x72x128xf32>
    %597 = vector.shape_cast %596 : vector<1x72x128xf32> to vector<72x128xf32>
    %c9_241 = arith.constant 9 : index
    %c0_242 = arith.constant 0 : index
    %c0_243 = arith.constant 0 : index
    %598 = vector.load %arg1[%c9_241, %c0_242, %c0_243] : memref<16x72x128xf32, #tpu.memory_space<vmem>>, vector<1x72x128xf32>
    %599 = vector.shape_cast %598 : vector<1x72x128xf32> to vector<72x128xf32>
    %c10_244 = arith.constant 10 : index
    %c0_245 = arith.constant 0 : index
    %c0_246 = arith.constant 0 : index
    %600 = vector.load %arg1[%c10_244, %c0_245, %c0_246] : memref<16x72x128xf32, #tpu.memory_space<vmem>>, vector<1x72x128xf32>
    %601 = vector.shape_cast %600 : vector<1x72x128xf32> to vector<72x128xf32>
    %c11_247 = arith.constant 11 : index
    %c0_248 = arith.constant 0 : index
    %c0_249 = arith.constant 0 : index
    %602 = vector.load %arg1[%c11_247, %c0_248, %c0_249] : memref<16x72x128xf32, #tpu.memory_space<vmem>>, vector<1x72x128xf32>
    %603 = vector.shape_cast %602 : vector<1x72x128xf32> to vector<72x128xf32>
    %604 = vector.broadcast %594 : f32 to vector<72x128xf32>
    %605 = arith.mulf %604, %597 : vector<72x128xf32>
    %606 = vector.broadcast %595 : f32 to vector<72x128xf32>
    %607 = arith.mulf %606, %599 : vector<72x128xf32>
    %608 = arith.addf %605, %607 : vector<72x128xf32>
    %609 = vector.broadcast %594 : f32 to vector<72x128xf32>
    %610 = arith.mulf %609, %599 : vector<72x128xf32>
    %611 = vector.broadcast %595 : f32 to vector<72x128xf32>
    %612 = arith.mulf %611, %601 : vector<72x128xf32>
    %613 = arith.addf %610, %612 : vector<72x128xf32>
    %614 = vector.broadcast %594 : f32 to vector<72x128xf32>
    %615 = arith.mulf %614, %601 : vector<72x128xf32>
    %616 = vector.broadcast %595 : f32 to vector<72x128xf32>
    %617 = arith.mulf %616, %603 : vector<72x128xf32>
    %618 = arith.addf %615, %617 : vector<72x128xf32>
    %619 = vector.extract_strided_slice %603 {offsets = [0, 0], sizes = [71, 128], strides = [1, 1]} : vector<72x128xf32> to vector<71x128xf32>
    %620 = vector.broadcast %594 : f32 to vector<71x128xf32>
    %621 = arith.mulf %620, %619 : vector<71x128xf32>
    %622 = vector.extract_strided_slice %597 {offsets = [1, 0], sizes = [71, 128], strides = [1, 1]} : vector<72x128xf32> to vector<71x128xf32>
    %623 = vector.broadcast %595 : f32 to vector<71x128xf32>
    %624 = arith.mulf %623, %622 : vector<71x128xf32>
    %625 = arith.addf %621, %624 : vector<71x128xf32>
    %626 = arith.addf %590, %608 : vector<72x128xf32>
    %627 = arith.addf %591, %613 : vector<72x128xf32>
    %628 = arith.addf %592, %618 : vector<72x128xf32>
    %629 = arith.addf %593, %625 : vector<71x128xf32>
    %c3_250 = arith.constant 3 : index
    %c6_251 = arith.constant 6 : index
    %630 = memref.load %arg2[%c3_250, %c6_251] : memref<8x8xf32, #tpu.memory_space<smem>>
    %c3_252 = arith.constant 3 : index
    %c7_253 = arith.constant 7 : index
    %631 = memref.load %arg2[%c3_252, %c7_253] : memref<8x8xf32, #tpu.memory_space<smem>>
    %c12_254 = arith.constant 12 : index
    %c0_255 = arith.constant 0 : index
    %c0_256 = arith.constant 0 : index
    %632 = vector.load %arg1[%c12_254, %c0_255, %c0_256] : memref<16x72x128xf32, #tpu.memory_space<vmem>>, vector<1x72x128xf32>
    %633 = vector.shape_cast %632 : vector<1x72x128xf32> to vector<72x128xf32>
    %c13_257 = arith.constant 13 : index
    %c0_258 = arith.constant 0 : index
    %c0_259 = arith.constant 0 : index
    %634 = vector.load %arg1[%c13_257, %c0_258, %c0_259] : memref<16x72x128xf32, #tpu.memory_space<vmem>>, vector<1x72x128xf32>
    %635 = vector.shape_cast %634 : vector<1x72x128xf32> to vector<72x128xf32>
    %c14_260 = arith.constant 14 : index
    %c0_261 = arith.constant 0 : index
    %c0_262 = arith.constant 0 : index
    %636 = vector.load %arg1[%c14_260, %c0_261, %c0_262] : memref<16x72x128xf32, #tpu.memory_space<vmem>>, vector<1x72x128xf32>
    %637 = vector.shape_cast %636 : vector<1x72x128xf32> to vector<72x128xf32>
    %c15_263 = arith.constant 15 : index
    %c0_264 = arith.constant 0 : index
    %c0_265 = arith.constant 0 : index
    %638 = vector.load %arg1[%c15_263, %c0_264, %c0_265] : memref<16x72x128xf32, #tpu.memory_space<vmem>>, vector<1x72x128xf32>
    %639 = vector.shape_cast %638 : vector<1x72x128xf32> to vector<72x128xf32>
    %640 = vector.broadcast %630 : f32 to vector<72x128xf32>
    %641 = arith.mulf %640, %633 : vector<72x128xf32>
    %642 = vector.broadcast %631 : f32 to vector<72x128xf32>
    %643 = arith.mulf %642, %635 : vector<72x128xf32>
    %644 = arith.addf %641, %643 : vector<72x128xf32>
    %645 = vector.broadcast %630 : f32 to vector<72x128xf32>
    %646 = arith.mulf %645, %635 : vector<72x128xf32>
    %647 = vector.broadcast %631 : f32 to vector<72x128xf32>
    %648 = arith.mulf %647, %637 : vector<72x128xf32>
    %649 = arith.addf %646, %648 : vector<72x128xf32>
    %650 = vector.broadcast %630 : f32 to vector<72x128xf32>
    %651 = arith.mulf %650, %637 : vector<72x128xf32>
    %652 = vector.broadcast %631 : f32 to vector<72x128xf32>
    %653 = arith.mulf %652, %639 : vector<72x128xf32>
    %654 = arith.addf %651, %653 : vector<72x128xf32>
    %655 = vector.extract_strided_slice %639 {offsets = [0, 0], sizes = [71, 128], strides = [1, 1]} : vector<72x128xf32> to vector<71x128xf32>
    %656 = vector.broadcast %630 : f32 to vector<71x128xf32>
    %657 = arith.mulf %656, %655 : vector<71x128xf32>
    %658 = vector.extract_strided_slice %633 {offsets = [1, 0], sizes = [71, 128], strides = [1, 1]} : vector<72x128xf32> to vector<71x128xf32>
    %659 = vector.broadcast %631 : f32 to vector<71x128xf32>
    %660 = arith.mulf %659, %658 : vector<71x128xf32>
    %661 = arith.addf %657, %660 : vector<71x128xf32>
    %662 = arith.addf %626, %644 : vector<72x128xf32>
    %663 = arith.addf %627, %649 : vector<72x128xf32>
    %664 = arith.addf %628, %654 : vector<72x128xf32>
    %665 = arith.addf %629, %661 : vector<71x128xf32>
    %c3_266 = arith.constant 3 : index
    %666 = memref.load %arg3[%c3_266] : memref<8xf32, #tpu.memory_space<smem>>
    %667 = vector.broadcast %666 : f32 to vector<72x128xf32>
    %668 = arith.addf %662, %667 : vector<72x128xf32>
    %cst_267 = arith.constant 0.000000e+00 : f32
    %669 = vector.broadcast %cst_267 : f32 to vector<72x128xf32>
    %670 = arith.maximumf %668, %669 : vector<72x128xf32>
    %671 = vector.broadcast %666 : f32 to vector<72x128xf32>
    %672 = arith.addf %663, %671 : vector<72x128xf32>
    %cst_268 = arith.constant 0.000000e+00 : f32
    %673 = vector.broadcast %cst_268 : f32 to vector<72x128xf32>
    %674 = arith.maximumf %672, %673 : vector<72x128xf32>
    %675 = vector.broadcast %666 : f32 to vector<72x128xf32>
    %676 = arith.addf %664, %675 : vector<72x128xf32>
    %cst_269 = arith.constant 0.000000e+00 : f32
    %677 = vector.broadcast %cst_269 : f32 to vector<72x128xf32>
    %678 = arith.maximumf %676, %677 : vector<72x128xf32>
    %679 = vector.broadcast %666 : f32 to vector<71x128xf32>
    %680 = arith.addf %665, %679 : vector<71x128xf32>
    %cst_270 = arith.constant 0.000000e+00 : f32
    %681 = vector.broadcast %cst_270 : f32 to vector<71x128xf32>
    %682 = arith.maximumf %680, %681 : vector<71x128xf32>
    %683 = arith.maximumf %670, %674 : vector<72x128xf32>
    %684 = vector.extract_strided_slice %678 {offsets = [0, 0], sizes = [71, 128], strides = [1, 1]} : vector<72x128xf32> to vector<71x128xf32>
    %685 = arith.maximumf %684, %682 : vector<71x128xf32>
    %c3_271 = arith.constant 3 : index
    %c0_272 = arith.constant 0 : index
    %686 = memref.load %arg4[%c3_271, %c0_272] : memref<8x2xf32, #tpu.memory_space<smem>>
    %c3_273 = arith.constant 3 : index
    %c1_274 = arith.constant 1 : index
    %687 = memref.load %arg4[%c3_273, %c1_274] : memref<8x2xf32, #tpu.memory_space<smem>>
    %688 = vector.extract_strided_slice %683 {offsets = [0, 0], sizes = [71, 128], strides = [1, 1]} : vector<72x128xf32> to vector<71x128xf32>
    %689 = vector.broadcast %686 : f32 to vector<71x128xf32>
    %690 = arith.mulf %689, %688 : vector<71x128xf32>
    %691 = vector.broadcast %687 : f32 to vector<71x128xf32>
    %692 = arith.mulf %691, %685 : vector<71x128xf32>
    %693 = arith.addf %690, %692 : vector<71x128xf32>
    %694 = vector.broadcast %686 : f32 to vector<71x128xf32>
    %695 = arith.mulf %694, %685 : vector<71x128xf32>
    %696 = vector.extract_strided_slice %683 {offsets = [1, 0], sizes = [71, 128], strides = [1, 1]} : vector<72x128xf32> to vector<71x128xf32>
    %697 = vector.broadcast %687 : f32 to vector<71x128xf32>
    %698 = arith.mulf %697, %696 : vector<71x128xf32>
    %699 = arith.addf %695, %698 : vector<71x128xf32>
    %700 = arith.addf %524, %693 : vector<71x128xf32>
    %701 = arith.addf %525, %699 : vector<71x128xf32>
    %c4_275 = arith.constant 4 : index
    %c0_276 = arith.constant 0 : index
    %702 = memref.load %arg2[%c4_275, %c0_276] : memref<8x8xf32, #tpu.memory_space<smem>>
    %c4_277 = arith.constant 4 : index
    %c1_278 = arith.constant 1 : index
    %703 = memref.load %arg2[%c4_277, %c1_278] : memref<8x8xf32, #tpu.memory_space<smem>>
    %c0_279 = arith.constant 0 : index
    %c0_280 = arith.constant 0 : index
    %c0_281 = arith.constant 0 : index
    %704 = vector.load %arg1[%c0_279, %c0_280, %c0_281] : memref<16x72x128xf32, #tpu.memory_space<vmem>>, vector<1x72x128xf32>
    %705 = vector.shape_cast %704 : vector<1x72x128xf32> to vector<72x128xf32>
    %c1_282 = arith.constant 1 : index
    %c0_283 = arith.constant 0 : index
    %c0_284 = arith.constant 0 : index
    %706 = vector.load %arg1[%c1_282, %c0_283, %c0_284] : memref<16x72x128xf32, #tpu.memory_space<vmem>>, vector<1x72x128xf32>
    %707 = vector.shape_cast %706 : vector<1x72x128xf32> to vector<72x128xf32>
    %c2_285 = arith.constant 2 : index
    %c0_286 = arith.constant 0 : index
    %c0_287 = arith.constant 0 : index
    %708 = vector.load %arg1[%c2_285, %c0_286, %c0_287] : memref<16x72x128xf32, #tpu.memory_space<vmem>>, vector<1x72x128xf32>
    %709 = vector.shape_cast %708 : vector<1x72x128xf32> to vector<72x128xf32>
    %c3_288 = arith.constant 3 : index
    %c0_289 = arith.constant 0 : index
    %c0_290 = arith.constant 0 : index
    %710 = vector.load %arg1[%c3_288, %c0_289, %c0_290] : memref<16x72x128xf32, #tpu.memory_space<vmem>>, vector<1x72x128xf32>
    %711 = vector.shape_cast %710 : vector<1x72x128xf32> to vector<72x128xf32>
    %712 = vector.broadcast %702 : f32 to vector<72x128xf32>
    %713 = arith.mulf %712, %705 : vector<72x128xf32>
    %714 = vector.broadcast %703 : f32 to vector<72x128xf32>
    %715 = arith.mulf %714, %707 : vector<72x128xf32>
    %716 = arith.addf %713, %715 : vector<72x128xf32>
    %717 = vector.broadcast %702 : f32 to vector<72x128xf32>
    %718 = arith.mulf %717, %707 : vector<72x128xf32>
    %719 = vector.broadcast %703 : f32 to vector<72x128xf32>
    %720 = arith.mulf %719, %709 : vector<72x128xf32>
    %721 = arith.addf %718, %720 : vector<72x128xf32>
    %722 = vector.broadcast %702 : f32 to vector<72x128xf32>
    %723 = arith.mulf %722, %709 : vector<72x128xf32>
    %724 = vector.broadcast %703 : f32 to vector<72x128xf32>
    %725 = arith.mulf %724, %711 : vector<72x128xf32>
    %726 = arith.addf %723, %725 : vector<72x128xf32>
    %727 = vector.extract_strided_slice %711 {offsets = [0, 0], sizes = [71, 128], strides = [1, 1]} : vector<72x128xf32> to vector<71x128xf32>
    %728 = vector.broadcast %702 : f32 to vector<71x128xf32>
    %729 = arith.mulf %728, %727 : vector<71x128xf32>
    %730 = vector.extract_strided_slice %705 {offsets = [1, 0], sizes = [71, 128], strides = [1, 1]} : vector<72x128xf32> to vector<71x128xf32>
    %731 = vector.broadcast %703 : f32 to vector<71x128xf32>
    %732 = arith.mulf %731, %730 : vector<71x128xf32>
    %733 = arith.addf %729, %732 : vector<71x128xf32>
    %c4_291 = arith.constant 4 : index
    %c2_292 = arith.constant 2 : index
    %734 = memref.load %arg2[%c4_291, %c2_292] : memref<8x8xf32, #tpu.memory_space<smem>>
    %c4_293 = arith.constant 4 : index
    %c3_294 = arith.constant 3 : index
    %735 = memref.load %arg2[%c4_293, %c3_294] : memref<8x8xf32, #tpu.memory_space<smem>>
    %c4_295 = arith.constant 4 : index
    %c0_296 = arith.constant 0 : index
    %c0_297 = arith.constant 0 : index
    %736 = vector.load %arg1[%c4_295, %c0_296, %c0_297] : memref<16x72x128xf32, #tpu.memory_space<vmem>>, vector<1x72x128xf32>
    %737 = vector.shape_cast %736 : vector<1x72x128xf32> to vector<72x128xf32>
    %c5_298 = arith.constant 5 : index
    %c0_299 = arith.constant 0 : index
    %c0_300 = arith.constant 0 : index
    %738 = vector.load %arg1[%c5_298, %c0_299, %c0_300] : memref<16x72x128xf32, #tpu.memory_space<vmem>>, vector<1x72x128xf32>
    %739 = vector.shape_cast %738 : vector<1x72x128xf32> to vector<72x128xf32>
    %c6_301 = arith.constant 6 : index
    %c0_302 = arith.constant 0 : index
    %c0_303 = arith.constant 0 : index
    %740 = vector.load %arg1[%c6_301, %c0_302, %c0_303] : memref<16x72x128xf32, #tpu.memory_space<vmem>>, vector<1x72x128xf32>
    %741 = vector.shape_cast %740 : vector<1x72x128xf32> to vector<72x128xf32>
    %c7_304 = arith.constant 7 : index
    %c0_305 = arith.constant 0 : index
    %c0_306 = arith.constant 0 : index
    %742 = vector.load %arg1[%c7_304, %c0_305, %c0_306] : memref<16x72x128xf32, #tpu.memory_space<vmem>>, vector<1x72x128xf32>
    %743 = vector.shape_cast %742 : vector<1x72x128xf32> to vector<72x128xf32>
    %744 = vector.broadcast %734 : f32 to vector<72x128xf32>
    %745 = arith.mulf %744, %737 : vector<72x128xf32>
    %746 = vector.broadcast %735 : f32 to vector<72x128xf32>
    %747 = arith.mulf %746, %739 : vector<72x128xf32>
    %748 = arith.addf %745, %747 : vector<72x128xf32>
    %749 = vector.broadcast %734 : f32 to vector<72x128xf32>
    %750 = arith.mulf %749, %739 : vector<72x128xf32>
    %751 = vector.broadcast %735 : f32 to vector<72x128xf32>
    %752 = arith.mulf %751, %741 : vector<72x128xf32>
    %753 = arith.addf %750, %752 : vector<72x128xf32>
    %754 = vector.broadcast %734 : f32 to vector<72x128xf32>
    %755 = arith.mulf %754, %741 : vector<72x128xf32>
    %756 = vector.broadcast %735 : f32 to vector<72x128xf32>
    %757 = arith.mulf %756, %743 : vector<72x128xf32>
    %758 = arith.addf %755, %757 : vector<72x128xf32>
    %759 = vector.extract_strided_slice %743 {offsets = [0, 0], sizes = [71, 128], strides = [1, 1]} : vector<72x128xf32> to vector<71x128xf32>
    %760 = vector.broadcast %734 : f32 to vector<71x128xf32>
    %761 = arith.mulf %760, %759 : vector<71x128xf32>
    %762 = vector.extract_strided_slice %737 {offsets = [1, 0], sizes = [71, 128], strides = [1, 1]} : vector<72x128xf32> to vector<71x128xf32>
    %763 = vector.broadcast %735 : f32 to vector<71x128xf32>
    %764 = arith.mulf %763, %762 : vector<71x128xf32>
    %765 = arith.addf %761, %764 : vector<71x128xf32>
    %766 = arith.addf %716, %748 : vector<72x128xf32>
    %767 = arith.addf %721, %753 : vector<72x128xf32>
    %768 = arith.addf %726, %758 : vector<72x128xf32>
    %769 = arith.addf %733, %765 : vector<71x128xf32>
    %c4_307 = arith.constant 4 : index
    %c4_308 = arith.constant 4 : index
    %770 = memref.load %arg2[%c4_307, %c4_308] : memref<8x8xf32, #tpu.memory_space<smem>>
    %c4_309 = arith.constant 4 : index
    %c5_310 = arith.constant 5 : index
    %771 = memref.load %arg2[%c4_309, %c5_310] : memref<8x8xf32, #tpu.memory_space<smem>>
    %c8_311 = arith.constant 8 : index
    %c0_312 = arith.constant 0 : index
    %c0_313 = arith.constant 0 : index
    %772 = vector.load %arg1[%c8_311, %c0_312, %c0_313] : memref<16x72x128xf32, #tpu.memory_space<vmem>>, vector<1x72x128xf32>
    %773 = vector.shape_cast %772 : vector<1x72x128xf32> to vector<72x128xf32>
    %c9_314 = arith.constant 9 : index
    %c0_315 = arith.constant 0 : index
    %c0_316 = arith.constant 0 : index
    %774 = vector.load %arg1[%c9_314, %c0_315, %c0_316] : memref<16x72x128xf32, #tpu.memory_space<vmem>>, vector<1x72x128xf32>
    %775 = vector.shape_cast %774 : vector<1x72x128xf32> to vector<72x128xf32>
    %c10_317 = arith.constant 10 : index
    %c0_318 = arith.constant 0 : index
    %c0_319 = arith.constant 0 : index
    %776 = vector.load %arg1[%c10_317, %c0_318, %c0_319] : memref<16x72x128xf32, #tpu.memory_space<vmem>>, vector<1x72x128xf32>
    %777 = vector.shape_cast %776 : vector<1x72x128xf32> to vector<72x128xf32>
    %c11_320 = arith.constant 11 : index
    %c0_321 = arith.constant 0 : index
    %c0_322 = arith.constant 0 : index
    %778 = vector.load %arg1[%c11_320, %c0_321, %c0_322] : memref<16x72x128xf32, #tpu.memory_space<vmem>>, vector<1x72x128xf32>
    %779 = vector.shape_cast %778 : vector<1x72x128xf32> to vector<72x128xf32>
    %780 = vector.broadcast %770 : f32 to vector<72x128xf32>
    %781 = arith.mulf %780, %773 : vector<72x128xf32>
    %782 = vector.broadcast %771 : f32 to vector<72x128xf32>
    %783 = arith.mulf %782, %775 : vector<72x128xf32>
    %784 = arith.addf %781, %783 : vector<72x128xf32>
    %785 = vector.broadcast %770 : f32 to vector<72x128xf32>
    %786 = arith.mulf %785, %775 : vector<72x128xf32>
    %787 = vector.broadcast %771 : f32 to vector<72x128xf32>
    %788 = arith.mulf %787, %777 : vector<72x128xf32>
    %789 = arith.addf %786, %788 : vector<72x128xf32>
    %790 = vector.broadcast %770 : f32 to vector<72x128xf32>
    %791 = arith.mulf %790, %777 : vector<72x128xf32>
    %792 = vector.broadcast %771 : f32 to vector<72x128xf32>
    %793 = arith.mulf %792, %779 : vector<72x128xf32>
    %794 = arith.addf %791, %793 : vector<72x128xf32>
    %795 = vector.extract_strided_slice %779 {offsets = [0, 0], sizes = [71, 128], strides = [1, 1]} : vector<72x128xf32> to vector<71x128xf32>
    %796 = vector.broadcast %770 : f32 to vector<71x128xf32>
    %797 = arith.mulf %796, %795 : vector<71x128xf32>
    %798 = vector.extract_strided_slice %773 {offsets = [1, 0], sizes = [71, 128], strides = [1, 1]} : vector<72x128xf32> to vector<71x128xf32>
    %799 = vector.broadcast %771 : f32 to vector<71x128xf32>
    %800 = arith.mulf %799, %798 : vector<71x128xf32>
    %801 = arith.addf %797, %800 : vector<71x128xf32>
    %802 = arith.addf %766, %784 : vector<72x128xf32>
    %803 = arith.addf %767, %789 : vector<72x128xf32>
    %804 = arith.addf %768, %794 : vector<72x128xf32>
    %805 = arith.addf %769, %801 : vector<71x128xf32>
    %c4_323 = arith.constant 4 : index
    %c6_324 = arith.constant 6 : index
    %806 = memref.load %arg2[%c4_323, %c6_324] : memref<8x8xf32, #tpu.memory_space<smem>>
    %c4_325 = arith.constant 4 : index
    %c7_326 = arith.constant 7 : index
    %807 = memref.load %arg2[%c4_325, %c7_326] : memref<8x8xf32, #tpu.memory_space<smem>>
    %c12_327 = arith.constant 12 : index
    %c0_328 = arith.constant 0 : index
    %c0_329 = arith.constant 0 : index
    %808 = vector.load %arg1[%c12_327, %c0_328, %c0_329] : memref<16x72x128xf32, #tpu.memory_space<vmem>>, vector<1x72x128xf32>
    %809 = vector.shape_cast %808 : vector<1x72x128xf32> to vector<72x128xf32>
    %c13_330 = arith.constant 13 : index
    %c0_331 = arith.constant 0 : index
    %c0_332 = arith.constant 0 : index
    %810 = vector.load %arg1[%c13_330, %c0_331, %c0_332] : memref<16x72x128xf32, #tpu.memory_space<vmem>>, vector<1x72x128xf32>
    %811 = vector.shape_cast %810 : vector<1x72x128xf32> to vector<72x128xf32>
    %c14_333 = arith.constant 14 : index
    %c0_334 = arith.constant 0 : index
    %c0_335 = arith.constant 0 : index
    %812 = vector.load %arg1[%c14_333, %c0_334, %c0_335] : memref<16x72x128xf32, #tpu.memory_space<vmem>>, vector<1x72x128xf32>
    %813 = vector.shape_cast %812 : vector<1x72x128xf32> to vector<72x128xf32>
    %c15_336 = arith.constant 15 : index
    %c0_337 = arith.constant 0 : index
    %c0_338 = arith.constant 0 : index
    %814 = vector.load %arg1[%c15_336, %c0_337, %c0_338] : memref<16x72x128xf32, #tpu.memory_space<vmem>>, vector<1x72x128xf32>
    %815 = vector.shape_cast %814 : vector<1x72x128xf32> to vector<72x128xf32>
    %816 = vector.broadcast %806 : f32 to vector<72x128xf32>
    %817 = arith.mulf %816, %809 : vector<72x128xf32>
    %818 = vector.broadcast %807 : f32 to vector<72x128xf32>
    %819 = arith.mulf %818, %811 : vector<72x128xf32>
    %820 = arith.addf %817, %819 : vector<72x128xf32>
    %821 = vector.broadcast %806 : f32 to vector<72x128xf32>
    %822 = arith.mulf %821, %811 : vector<72x128xf32>
    %823 = vector.broadcast %807 : f32 to vector<72x128xf32>
    %824 = arith.mulf %823, %813 : vector<72x128xf32>
    %825 = arith.addf %822, %824 : vector<72x128xf32>
    %826 = vector.broadcast %806 : f32 to vector<72x128xf32>
    %827 = arith.mulf %826, %813 : vector<72x128xf32>
    %828 = vector.broadcast %807 : f32 to vector<72x128xf32>
    %829 = arith.mulf %828, %815 : vector<72x128xf32>
    %830 = arith.addf %827, %829 : vector<72x128xf32>
    %831 = vector.extract_strided_slice %815 {offsets = [0, 0], sizes = [71, 128], strides = [1, 1]} : vector<72x128xf32> to vector<71x128xf32>
    %832 = vector.broadcast %806 : f32 to vector<71x128xf32>
    %833 = arith.mulf %832, %831 : vector<71x128xf32>
    %834 = vector.extract_strided_slice %809 {offsets = [1, 0], sizes = [71, 128], strides = [1, 1]} : vector<72x128xf32> to vector<71x128xf32>
    %835 = vector.broadcast %807 : f32 to vector<71x128xf32>
    %836 = arith.mulf %835, %834 : vector<71x128xf32>
    %837 = arith.addf %833, %836 : vector<71x128xf32>
    %838 = arith.addf %802, %820 : vector<72x128xf32>
    %839 = arith.addf %803, %825 : vector<72x128xf32>
    %840 = arith.addf %804, %830 : vector<72x128xf32>
    %841 = arith.addf %805, %837 : vector<71x128xf32>
    %c4_339 = arith.constant 4 : index
    %842 = memref.load %arg3[%c4_339] : memref<8xf32, #tpu.memory_space<smem>>
    %843 = vector.broadcast %842 : f32 to vector<72x128xf32>
    %844 = arith.addf %838, %843 : vector<72x128xf32>
    %cst_340 = arith.constant 0.000000e+00 : f32
    %845 = vector.broadcast %cst_340 : f32 to vector<72x128xf32>
    %846 = arith.maximumf %844, %845 : vector<72x128xf32>
    %847 = vector.broadcast %842 : f32 to vector<72x128xf32>
    %848 = arith.addf %839, %847 : vector<72x128xf32>
    %cst_341 = arith.constant 0.000000e+00 : f32
    %849 = vector.broadcast %cst_341 : f32 to vector<72x128xf32>
    %850 = arith.maximumf %848, %849 : vector<72x128xf32>
    %851 = vector.broadcast %842 : f32 to vector<72x128xf32>
    %852 = arith.addf %840, %851 : vector<72x128xf32>
    %cst_342 = arith.constant 0.000000e+00 : f32
    %853 = vector.broadcast %cst_342 : f32 to vector<72x128xf32>
    %854 = arith.maximumf %852, %853 : vector<72x128xf32>
    %855 = vector.broadcast %842 : f32 to vector<71x128xf32>
    %856 = arith.addf %841, %855 : vector<71x128xf32>
    %cst_343 = arith.constant 0.000000e+00 : f32
    %857 = vector.broadcast %cst_343 : f32 to vector<71x128xf32>
    %858 = arith.maximumf %856, %857 : vector<71x128xf32>
    %859 = arith.maximumf %846, %850 : vector<72x128xf32>
    %860 = vector.extract_strided_slice %854 {offsets = [0, 0], sizes = [71, 128], strides = [1, 1]} : vector<72x128xf32> to vector<71x128xf32>
    %861 = arith.maximumf %860, %858 : vector<71x128xf32>
    %c4_344 = arith.constant 4 : index
    %c0_345 = arith.constant 0 : index
    %862 = memref.load %arg4[%c4_344, %c0_345] : memref<8x2xf32, #tpu.memory_space<smem>>
    %c4_346 = arith.constant 4 : index
    %c1_347 = arith.constant 1 : index
    %863 = memref.load %arg4[%c4_346, %c1_347] : memref<8x2xf32, #tpu.memory_space<smem>>
    %864 = vector.extract_strided_slice %859 {offsets = [0, 0], sizes = [71, 128], strides = [1, 1]} : vector<72x128xf32> to vector<71x128xf32>
    %865 = vector.broadcast %862 : f32 to vector<71x128xf32>
    %866 = arith.mulf %865, %864 : vector<71x128xf32>
    %867 = vector.broadcast %863 : f32 to vector<71x128xf32>
    %868 = arith.mulf %867, %861 : vector<71x128xf32>
    %869 = arith.addf %866, %868 : vector<71x128xf32>
    %870 = vector.broadcast %862 : f32 to vector<71x128xf32>
    %871 = arith.mulf %870, %861 : vector<71x128xf32>
    %872 = vector.extract_strided_slice %859 {offsets = [1, 0], sizes = [71, 128], strides = [1, 1]} : vector<72x128xf32> to vector<71x128xf32>
    %873 = vector.broadcast %863 : f32 to vector<71x128xf32>
    %874 = arith.mulf %873, %872 : vector<71x128xf32>
    %875 = arith.addf %871, %874 : vector<71x128xf32>
    %876 = arith.addf %700, %869 : vector<71x128xf32>
    %877 = arith.addf %701, %875 : vector<71x128xf32>
    %c5_348 = arith.constant 5 : index
    %c0_349 = arith.constant 0 : index
    %878 = memref.load %arg2[%c5_348, %c0_349] : memref<8x8xf32, #tpu.memory_space<smem>>
    %c5_350 = arith.constant 5 : index
    %c1_351 = arith.constant 1 : index
    %879 = memref.load %arg2[%c5_350, %c1_351] : memref<8x8xf32, #tpu.memory_space<smem>>
    %c0_352 = arith.constant 0 : index
    %c0_353 = arith.constant 0 : index
    %c0_354 = arith.constant 0 : index
    %880 = vector.load %arg1[%c0_352, %c0_353, %c0_354] : memref<16x72x128xf32, #tpu.memory_space<vmem>>, vector<1x72x128xf32>
    %881 = vector.shape_cast %880 : vector<1x72x128xf32> to vector<72x128xf32>
    %c1_355 = arith.constant 1 : index
    %c0_356 = arith.constant 0 : index
    %c0_357 = arith.constant 0 : index
    %882 = vector.load %arg1[%c1_355, %c0_356, %c0_357] : memref<16x72x128xf32, #tpu.memory_space<vmem>>, vector<1x72x128xf32>
    %883 = vector.shape_cast %882 : vector<1x72x128xf32> to vector<72x128xf32>
    %c2_358 = arith.constant 2 : index
    %c0_359 = arith.constant 0 : index
    %c0_360 = arith.constant 0 : index
    %884 = vector.load %arg1[%c2_358, %c0_359, %c0_360] : memref<16x72x128xf32, #tpu.memory_space<vmem>>, vector<1x72x128xf32>
    %885 = vector.shape_cast %884 : vector<1x72x128xf32> to vector<72x128xf32>
    %c3_361 = arith.constant 3 : index
    %c0_362 = arith.constant 0 : index
    %c0_363 = arith.constant 0 : index
    %886 = vector.load %arg1[%c3_361, %c0_362, %c0_363] : memref<16x72x128xf32, #tpu.memory_space<vmem>>, vector<1x72x128xf32>
    %887 = vector.shape_cast %886 : vector<1x72x128xf32> to vector<72x128xf32>
    %888 = vector.broadcast %878 : f32 to vector<72x128xf32>
    %889 = arith.mulf %888, %881 : vector<72x128xf32>
    %890 = vector.broadcast %879 : f32 to vector<72x128xf32>
    %891 = arith.mulf %890, %883 : vector<72x128xf32>
    %892 = arith.addf %889, %891 : vector<72x128xf32>
    %893 = vector.broadcast %878 : f32 to vector<72x128xf32>
    %894 = arith.mulf %893, %883 : vector<72x128xf32>
    %895 = vector.broadcast %879 : f32 to vector<72x128xf32>
    %896 = arith.mulf %895, %885 : vector<72x128xf32>
    %897 = arith.addf %894, %896 : vector<72x128xf32>
    %898 = vector.broadcast %878 : f32 to vector<72x128xf32>
    %899 = arith.mulf %898, %885 : vector<72x128xf32>
    %900 = vector.broadcast %879 : f32 to vector<72x128xf32>
    %901 = arith.mulf %900, %887 : vector<72x128xf32>
    %902 = arith.addf %899, %901 : vector<72x128xf32>
    %903 = vector.extract_strided_slice %887 {offsets = [0, 0], sizes = [71, 128], strides = [1, 1]} : vector<72x128xf32> to vector<71x128xf32>
    %904 = vector.broadcast %878 : f32 to vector<71x128xf32>
    %905 = arith.mulf %904, %903 : vector<71x128xf32>
    %906 = vector.extract_strided_slice %881 {offsets = [1, 0], sizes = [71, 128], strides = [1, 1]} : vector<72x128xf32> to vector<71x128xf32>
    %907 = vector.broadcast %879 : f32 to vector<71x128xf32>
    %908 = arith.mulf %907, %906 : vector<71x128xf32>
    %909 = arith.addf %905, %908 : vector<71x128xf32>
    %c5_364 = arith.constant 5 : index
    %c2_365 = arith.constant 2 : index
    %910 = memref.load %arg2[%c5_364, %c2_365] : memref<8x8xf32, #tpu.memory_space<smem>>
    %c5_366 = arith.constant 5 : index
    %c3_367 = arith.constant 3 : index
    %911 = memref.load %arg2[%c5_366, %c3_367] : memref<8x8xf32, #tpu.memory_space<smem>>
    %c4_368 = arith.constant 4 : index
    %c0_369 = arith.constant 0 : index
    %c0_370 = arith.constant 0 : index
    %912 = vector.load %arg1[%c4_368, %c0_369, %c0_370] : memref<16x72x128xf32, #tpu.memory_space<vmem>>, vector<1x72x128xf32>
    %913 = vector.shape_cast %912 : vector<1x72x128xf32> to vector<72x128xf32>
    %c5_371 = arith.constant 5 : index
    %c0_372 = arith.constant 0 : index
    %c0_373 = arith.constant 0 : index
    %914 = vector.load %arg1[%c5_371, %c0_372, %c0_373] : memref<16x72x128xf32, #tpu.memory_space<vmem>>, vector<1x72x128xf32>
    %915 = vector.shape_cast %914 : vector<1x72x128xf32> to vector<72x128xf32>
    %c6_374 = arith.constant 6 : index
    %c0_375 = arith.constant 0 : index
    %c0_376 = arith.constant 0 : index
    %916 = vector.load %arg1[%c6_374, %c0_375, %c0_376] : memref<16x72x128xf32, #tpu.memory_space<vmem>>, vector<1x72x128xf32>
    %917 = vector.shape_cast %916 : vector<1x72x128xf32> to vector<72x128xf32>
    %c7_377 = arith.constant 7 : index
    %c0_378 = arith.constant 0 : index
    %c0_379 = arith.constant 0 : index
    %918 = vector.load %arg1[%c7_377, %c0_378, %c0_379] : memref<16x72x128xf32, #tpu.memory_space<vmem>>, vector<1x72x128xf32>
    %919 = vector.shape_cast %918 : vector<1x72x128xf32> to vector<72x128xf32>
    %920 = vector.broadcast %910 : f32 to vector<72x128xf32>
    %921 = arith.mulf %920, %913 : vector<72x128xf32>
    %922 = vector.broadcast %911 : f32 to vector<72x128xf32>
    %923 = arith.mulf %922, %915 : vector<72x128xf32>
    %924 = arith.addf %921, %923 : vector<72x128xf32>
    %925 = vector.broadcast %910 : f32 to vector<72x128xf32>
    %926 = arith.mulf %925, %915 : vector<72x128xf32>
    %927 = vector.broadcast %911 : f32 to vector<72x128xf32>
    %928 = arith.mulf %927, %917 : vector<72x128xf32>
    %929 = arith.addf %926, %928 : vector<72x128xf32>
    %930 = vector.broadcast %910 : f32 to vector<72x128xf32>
    %931 = arith.mulf %930, %917 : vector<72x128xf32>
    %932 = vector.broadcast %911 : f32 to vector<72x128xf32>
    %933 = arith.mulf %932, %919 : vector<72x128xf32>
    %934 = arith.addf %931, %933 : vector<72x128xf32>
    %935 = vector.extract_strided_slice %919 {offsets = [0, 0], sizes = [71, 128], strides = [1, 1]} : vector<72x128xf32> to vector<71x128xf32>
    %936 = vector.broadcast %910 : f32 to vector<71x128xf32>
    %937 = arith.mulf %936, %935 : vector<71x128xf32>
    %938 = vector.extract_strided_slice %913 {offsets = [1, 0], sizes = [71, 128], strides = [1, 1]} : vector<72x128xf32> to vector<71x128xf32>
    %939 = vector.broadcast %911 : f32 to vector<71x128xf32>
    %940 = arith.mulf %939, %938 : vector<71x128xf32>
    %941 = arith.addf %937, %940 : vector<71x128xf32>
    %942 = arith.addf %892, %924 : vector<72x128xf32>
    %943 = arith.addf %897, %929 : vector<72x128xf32>
    %944 = arith.addf %902, %934 : vector<72x128xf32>
    %945 = arith.addf %909, %941 : vector<71x128xf32>
    %c5_380 = arith.constant 5 : index
    %c4_381 = arith.constant 4 : index
    %946 = memref.load %arg2[%c5_380, %c4_381] : memref<8x8xf32, #tpu.memory_space<smem>>
    %c5_382 = arith.constant 5 : index
    %c5_383 = arith.constant 5 : index
    %947 = memref.load %arg2[%c5_382, %c5_383] : memref<8x8xf32, #tpu.memory_space<smem>>
    %c8_384 = arith.constant 8 : index
    %c0_385 = arith.constant 0 : index
    %c0_386 = arith.constant 0 : index
    %948 = vector.load %arg1[%c8_384, %c0_385, %c0_386] : memref<16x72x128xf32, #tpu.memory_space<vmem>>, vector<1x72x128xf32>
    %949 = vector.shape_cast %948 : vector<1x72x128xf32> to vector<72x128xf32>
    %c9_387 = arith.constant 9 : index
    %c0_388 = arith.constant 0 : index
    %c0_389 = arith.constant 0 : index
    %950 = vector.load %arg1[%c9_387, %c0_388, %c0_389] : memref<16x72x128xf32, #tpu.memory_space<vmem>>, vector<1x72x128xf32>
    %951 = vector.shape_cast %950 : vector<1x72x128xf32> to vector<72x128xf32>
    %c10_390 = arith.constant 10 : index
    %c0_391 = arith.constant 0 : index
    %c0_392 = arith.constant 0 : index
    %952 = vector.load %arg1[%c10_390, %c0_391, %c0_392] : memref<16x72x128xf32, #tpu.memory_space<vmem>>, vector<1x72x128xf32>
    %953 = vector.shape_cast %952 : vector<1x72x128xf32> to vector<72x128xf32>
    %c11_393 = arith.constant 11 : index
    %c0_394 = arith.constant 0 : index
    %c0_395 = arith.constant 0 : index
    %954 = vector.load %arg1[%c11_393, %c0_394, %c0_395] : memref<16x72x128xf32, #tpu.memory_space<vmem>>, vector<1x72x128xf32>
    %955 = vector.shape_cast %954 : vector<1x72x128xf32> to vector<72x128xf32>
    %956 = vector.broadcast %946 : f32 to vector<72x128xf32>
    %957 = arith.mulf %956, %949 : vector<72x128xf32>
    %958 = vector.broadcast %947 : f32 to vector<72x128xf32>
    %959 = arith.mulf %958, %951 : vector<72x128xf32>
    %960 = arith.addf %957, %959 : vector<72x128xf32>
    %961 = vector.broadcast %946 : f32 to vector<72x128xf32>
    %962 = arith.mulf %961, %951 : vector<72x128xf32>
    %963 = vector.broadcast %947 : f32 to vector<72x128xf32>
    %964 = arith.mulf %963, %953 : vector<72x128xf32>
    %965 = arith.addf %962, %964 : vector<72x128xf32>
    %966 = vector.broadcast %946 : f32 to vector<72x128xf32>
    %967 = arith.mulf %966, %953 : vector<72x128xf32>
    %968 = vector.broadcast %947 : f32 to vector<72x128xf32>
    %969 = arith.mulf %968, %955 : vector<72x128xf32>
    %970 = arith.addf %967, %969 : vector<72x128xf32>
    %971 = vector.extract_strided_slice %955 {offsets = [0, 0], sizes = [71, 128], strides = [1, 1]} : vector<72x128xf32> to vector<71x128xf32>
    %972 = vector.broadcast %946 : f32 to vector<71x128xf32>
    %973 = arith.mulf %972, %971 : vector<71x128xf32>
    %974 = vector.extract_strided_slice %949 {offsets = [1, 0], sizes = [71, 128], strides = [1, 1]} : vector<72x128xf32> to vector<71x128xf32>
    %975 = vector.broadcast %947 : f32 to vector<71x128xf32>
    %976 = arith.mulf %975, %974 : vector<71x128xf32>
    %977 = arith.addf %973, %976 : vector<71x128xf32>
    %978 = arith.addf %942, %960 : vector<72x128xf32>
    %979 = arith.addf %943, %965 : vector<72x128xf32>
    %980 = arith.addf %944, %970 : vector<72x128xf32>
    %981 = arith.addf %945, %977 : vector<71x128xf32>
    %c5_396 = arith.constant 5 : index
    %c6_397 = arith.constant 6 : index
    %982 = memref.load %arg2[%c5_396, %c6_397] : memref<8x8xf32, #tpu.memory_space<smem>>
    %c5_398 = arith.constant 5 : index
    %c7_399 = arith.constant 7 : index
    %983 = memref.load %arg2[%c5_398, %c7_399] : memref<8x8xf32, #tpu.memory_space<smem>>
    %c12_400 = arith.constant 12 : index
    %c0_401 = arith.constant 0 : index
    %c0_402 = arith.constant 0 : index
    %984 = vector.load %arg1[%c12_400, %c0_401, %c0_402] : memref<16x72x128xf32, #tpu.memory_space<vmem>>, vector<1x72x128xf32>
    %985 = vector.shape_cast %984 : vector<1x72x128xf32> to vector<72x128xf32>
    %c13_403 = arith.constant 13 : index
    %c0_404 = arith.constant 0 : index
    %c0_405 = arith.constant 0 : index
    %986 = vector.load %arg1[%c13_403, %c0_404, %c0_405] : memref<16x72x128xf32, #tpu.memory_space<vmem>>, vector<1x72x128xf32>
    %987 = vector.shape_cast %986 : vector<1x72x128xf32> to vector<72x128xf32>
    %c14_406 = arith.constant 14 : index
    %c0_407 = arith.constant 0 : index
    %c0_408 = arith.constant 0 : index
    %988 = vector.load %arg1[%c14_406, %c0_407, %c0_408] : memref<16x72x128xf32, #tpu.memory_space<vmem>>, vector<1x72x128xf32>
    %989 = vector.shape_cast %988 : vector<1x72x128xf32> to vector<72x128xf32>
    %c15_409 = arith.constant 15 : index
    %c0_410 = arith.constant 0 : index
    %c0_411 = arith.constant 0 : index
    %990 = vector.load %arg1[%c15_409, %c0_410, %c0_411] : memref<16x72x128xf32, #tpu.memory_space<vmem>>, vector<1x72x128xf32>
    %991 = vector.shape_cast %990 : vector<1x72x128xf32> to vector<72x128xf32>
    %992 = vector.broadcast %982 : f32 to vector<72x128xf32>
    %993 = arith.mulf %992, %985 : vector<72x128xf32>
    %994 = vector.broadcast %983 : f32 to vector<72x128xf32>
    %995 = arith.mulf %994, %987 : vector<72x128xf32>
    %996 = arith.addf %993, %995 : vector<72x128xf32>
    %997 = vector.broadcast %982 : f32 to vector<72x128xf32>
    %998 = arith.mulf %997, %987 : vector<72x128xf32>
    %999 = vector.broadcast %983 : f32 to vector<72x128xf32>
    %1000 = arith.mulf %999, %989 : vector<72x128xf32>
    %1001 = arith.addf %998, %1000 : vector<72x128xf32>
    %1002 = vector.broadcast %982 : f32 to vector<72x128xf32>
    %1003 = arith.mulf %1002, %989 : vector<72x128xf32>
    %1004 = vector.broadcast %983 : f32 to vector<72x128xf32>
    %1005 = arith.mulf %1004, %991 : vector<72x128xf32>
    %1006 = arith.addf %1003, %1005 : vector<72x128xf32>
    %1007 = vector.extract_strided_slice %991 {offsets = [0, 0], sizes = [71, 128], strides = [1, 1]} : vector<72x128xf32> to vector<71x128xf32>
    %1008 = vector.broadcast %982 : f32 to vector<71x128xf32>
    %1009 = arith.mulf %1008, %1007 : vector<71x128xf32>
    %1010 = vector.extract_strided_slice %985 {offsets = [1, 0], sizes = [71, 128], strides = [1, 1]} : vector<72x128xf32> to vector<71x128xf32>
    %1011 = vector.broadcast %983 : f32 to vector<71x128xf32>
    %1012 = arith.mulf %1011, %1010 : vector<71x128xf32>
    %1013 = arith.addf %1009, %1012 : vector<71x128xf32>
    %1014 = arith.addf %978, %996 : vector<72x128xf32>
    %1015 = arith.addf %979, %1001 : vector<72x128xf32>
    %1016 = arith.addf %980, %1006 : vector<72x128xf32>
    %1017 = arith.addf %981, %1013 : vector<71x128xf32>
    %c5_412 = arith.constant 5 : index
    %1018 = memref.load %arg3[%c5_412] : memref<8xf32, #tpu.memory_space<smem>>
    %1019 = vector.broadcast %1018 : f32 to vector<72x128xf32>
    %1020 = arith.addf %1014, %1019 : vector<72x128xf32>
    %cst_413 = arith.constant 0.000000e+00 : f32
    %1021 = vector.broadcast %cst_413 : f32 to vector<72x128xf32>
    %1022 = arith.maximumf %1020, %1021 : vector<72x128xf32>
    %1023 = vector.broadcast %1018 : f32 to vector<72x128xf32>
    %1024 = arith.addf %1015, %1023 : vector<72x128xf32>
    %cst_414 = arith.constant 0.000000e+00 : f32
    %1025 = vector.broadcast %cst_414 : f32 to vector<72x128xf32>
    %1026 = arith.maximumf %1024, %1025 : vector<72x128xf32>
    %1027 = vector.broadcast %1018 : f32 to vector<72x128xf32>
    %1028 = arith.addf %1016, %1027 : vector<72x128xf32>
    %cst_415 = arith.constant 0.000000e+00 : f32
    %1029 = vector.broadcast %cst_415 : f32 to vector<72x128xf32>
    %1030 = arith.maximumf %1028, %1029 : vector<72x128xf32>
    %1031 = vector.broadcast %1018 : f32 to vector<71x128xf32>
    %1032 = arith.addf %1017, %1031 : vector<71x128xf32>
    %cst_416 = arith.constant 0.000000e+00 : f32
    %1033 = vector.broadcast %cst_416 : f32 to vector<71x128xf32>
    %1034 = arith.maximumf %1032, %1033 : vector<71x128xf32>
    %1035 = arith.maximumf %1022, %1026 : vector<72x128xf32>
    %1036 = vector.extract_strided_slice %1030 {offsets = [0, 0], sizes = [71, 128], strides = [1, 1]} : vector<72x128xf32> to vector<71x128xf32>
    %1037 = arith.maximumf %1036, %1034 : vector<71x128xf32>
    %c5_417 = arith.constant 5 : index
    %c0_418 = arith.constant 0 : index
    %1038 = memref.load %arg4[%c5_417, %c0_418] : memref<8x2xf32, #tpu.memory_space<smem>>
    %c5_419 = arith.constant 5 : index
    %c1_420 = arith.constant 1 : index
    %1039 = memref.load %arg4[%c5_419, %c1_420] : memref<8x2xf32, #tpu.memory_space<smem>>
    %1040 = vector.extract_strided_slice %1035 {offsets = [0, 0], sizes = [71, 128], strides = [1, 1]} : vector<72x128xf32> to vector<71x128xf32>
    %1041 = vector.broadcast %1038 : f32 to vector<71x128xf32>
    %1042 = arith.mulf %1041, %1040 : vector<71x128xf32>
    %1043 = vector.broadcast %1039 : f32 to vector<71x128xf32>
    %1044 = arith.mulf %1043, %1037 : vector<71x128xf32>
    %1045 = arith.addf %1042, %1044 : vector<71x128xf32>
    %1046 = vector.broadcast %1038 : f32 to vector<71x128xf32>
    %1047 = arith.mulf %1046, %1037 : vector<71x128xf32>
    %1048 = vector.extract_strided_slice %1035 {offsets = [1, 0], sizes = [71, 128], strides = [1, 1]} : vector<72x128xf32> to vector<71x128xf32>
    %1049 = vector.broadcast %1039 : f32 to vector<71x128xf32>
    %1050 = arith.mulf %1049, %1048 : vector<71x128xf32>
    %1051 = arith.addf %1047, %1050 : vector<71x128xf32>
    %1052 = arith.addf %876, %1045 : vector<71x128xf32>
    %1053 = arith.addf %877, %1051 : vector<71x128xf32>
    %c6_421 = arith.constant 6 : index
    %c0_422 = arith.constant 0 : index
    %1054 = memref.load %arg2[%c6_421, %c0_422] : memref<8x8xf32, #tpu.memory_space<smem>>
    %c6_423 = arith.constant 6 : index
    %c1_424 = arith.constant 1 : index
    %1055 = memref.load %arg2[%c6_423, %c1_424] : memref<8x8xf32, #tpu.memory_space<smem>>
    %c0_425 = arith.constant 0 : index
    %c0_426 = arith.constant 0 : index
    %c0_427 = arith.constant 0 : index
    %1056 = vector.load %arg1[%c0_425, %c0_426, %c0_427] : memref<16x72x128xf32, #tpu.memory_space<vmem>>, vector<1x72x128xf32>
    %1057 = vector.shape_cast %1056 : vector<1x72x128xf32> to vector<72x128xf32>
    %c1_428 = arith.constant 1 : index
    %c0_429 = arith.constant 0 : index
    %c0_430 = arith.constant 0 : index
    %1058 = vector.load %arg1[%c1_428, %c0_429, %c0_430] : memref<16x72x128xf32, #tpu.memory_space<vmem>>, vector<1x72x128xf32>
    %1059 = vector.shape_cast %1058 : vector<1x72x128xf32> to vector<72x128xf32>
    %c2_431 = arith.constant 2 : index
    %c0_432 = arith.constant 0 : index
    %c0_433 = arith.constant 0 : index
    %1060 = vector.load %arg1[%c2_431, %c0_432, %c0_433] : memref<16x72x128xf32, #tpu.memory_space<vmem>>, vector<1x72x128xf32>
    %1061 = vector.shape_cast %1060 : vector<1x72x128xf32> to vector<72x128xf32>
    %c3_434 = arith.constant 3 : index
    %c0_435 = arith.constant 0 : index
    %c0_436 = arith.constant 0 : index
    %1062 = vector.load %arg1[%c3_434, %c0_435, %c0_436] : memref<16x72x128xf32, #tpu.memory_space<vmem>>, vector<1x72x128xf32>
    %1063 = vector.shape_cast %1062 : vector<1x72x128xf32> to vector<72x128xf32>
    %1064 = vector.broadcast %1054 : f32 to vector<72x128xf32>
    %1065 = arith.mulf %1064, %1057 : vector<72x128xf32>
    %1066 = vector.broadcast %1055 : f32 to vector<72x128xf32>
    %1067 = arith.mulf %1066, %1059 : vector<72x128xf32>
    %1068 = arith.addf %1065, %1067 : vector<72x128xf32>
    %1069 = vector.broadcast %1054 : f32 to vector<72x128xf32>
    %1070 = arith.mulf %1069, %1059 : vector<72x128xf32>
    %1071 = vector.broadcast %1055 : f32 to vector<72x128xf32>
    %1072 = arith.mulf %1071, %1061 : vector<72x128xf32>
    %1073 = arith.addf %1070, %1072 : vector<72x128xf32>
    %1074 = vector.broadcast %1054 : f32 to vector<72x128xf32>
    %1075 = arith.mulf %1074, %1061 : vector<72x128xf32>
    %1076 = vector.broadcast %1055 : f32 to vector<72x128xf32>
    %1077 = arith.mulf %1076, %1063 : vector<72x128xf32>
    %1078 = arith.addf %1075, %1077 : vector<72x128xf32>
    %1079 = vector.extract_strided_slice %1063 {offsets = [0, 0], sizes = [71, 128], strides = [1, 1]} : vector<72x128xf32> to vector<71x128xf32>
    %1080 = vector.broadcast %1054 : f32 to vector<71x128xf32>
    %1081 = arith.mulf %1080, %1079 : vector<71x128xf32>
    %1082 = vector.extract_strided_slice %1057 {offsets = [1, 0], sizes = [71, 128], strides = [1, 1]} : vector<72x128xf32> to vector<71x128xf32>
    %1083 = vector.broadcast %1055 : f32 to vector<71x128xf32>
    %1084 = arith.mulf %1083, %1082 : vector<71x128xf32>
    %1085 = arith.addf %1081, %1084 : vector<71x128xf32>
    %c6_437 = arith.constant 6 : index
    %c2_438 = arith.constant 2 : index
    %1086 = memref.load %arg2[%c6_437, %c2_438] : memref<8x8xf32, #tpu.memory_space<smem>>
    %c6_439 = arith.constant 6 : index
    %c3_440 = arith.constant 3 : index
    %1087 = memref.load %arg2[%c6_439, %c3_440] : memref<8x8xf32, #tpu.memory_space<smem>>
    %c4_441 = arith.constant 4 : index
    %c0_442 = arith.constant 0 : index
    %c0_443 = arith.constant 0 : index
    %1088 = vector.load %arg1[%c4_441, %c0_442, %c0_443] : memref<16x72x128xf32, #tpu.memory_space<vmem>>, vector<1x72x128xf32>
    %1089 = vector.shape_cast %1088 : vector<1x72x128xf32> to vector<72x128xf32>
    %c5_444 = arith.constant 5 : index
    %c0_445 = arith.constant 0 : index
    %c0_446 = arith.constant 0 : index
    %1090 = vector.load %arg1[%c5_444, %c0_445, %c0_446] : memref<16x72x128xf32, #tpu.memory_space<vmem>>, vector<1x72x128xf32>
    %1091 = vector.shape_cast %1090 : vector<1x72x128xf32> to vector<72x128xf32>
    %c6_447 = arith.constant 6 : index
    %c0_448 = arith.constant 0 : index
    %c0_449 = arith.constant 0 : index
    %1092 = vector.load %arg1[%c6_447, %c0_448, %c0_449] : memref<16x72x128xf32, #tpu.memory_space<vmem>>, vector<1x72x128xf32>
    %1093 = vector.shape_cast %1092 : vector<1x72x128xf32> to vector<72x128xf32>
    %c7_450 = arith.constant 7 : index
    %c0_451 = arith.constant 0 : index
    %c0_452 = arith.constant 0 : index
    %1094 = vector.load %arg1[%c7_450, %c0_451, %c0_452] : memref<16x72x128xf32, #tpu.memory_space<vmem>>, vector<1x72x128xf32>
    %1095 = vector.shape_cast %1094 : vector<1x72x128xf32> to vector<72x128xf32>
    %1096 = vector.broadcast %1086 : f32 to vector<72x128xf32>
    %1097 = arith.mulf %1096, %1089 : vector<72x128xf32>
    %1098 = vector.broadcast %1087 : f32 to vector<72x128xf32>
    %1099 = arith.mulf %1098, %1091 : vector<72x128xf32>
    %1100 = arith.addf %1097, %1099 : vector<72x128xf32>
    %1101 = vector.broadcast %1086 : f32 to vector<72x128xf32>
    %1102 = arith.mulf %1101, %1091 : vector<72x128xf32>
    %1103 = vector.broadcast %1087 : f32 to vector<72x128xf32>
    %1104 = arith.mulf %1103, %1093 : vector<72x128xf32>
    %1105 = arith.addf %1102, %1104 : vector<72x128xf32>
    %1106 = vector.broadcast %1086 : f32 to vector<72x128xf32>
    %1107 = arith.mulf %1106, %1093 : vector<72x128xf32>
    %1108 = vector.broadcast %1087 : f32 to vector<72x128xf32>
    %1109 = arith.mulf %1108, %1095 : vector<72x128xf32>
    %1110 = arith.addf %1107, %1109 : vector<72x128xf32>
    %1111 = vector.extract_strided_slice %1095 {offsets = [0, 0], sizes = [71, 128], strides = [1, 1]} : vector<72x128xf32> to vector<71x128xf32>
    %1112 = vector.broadcast %1086 : f32 to vector<71x128xf32>
    %1113 = arith.mulf %1112, %1111 : vector<71x128xf32>
    %1114 = vector.extract_strided_slice %1089 {offsets = [1, 0], sizes = [71, 128], strides = [1, 1]} : vector<72x128xf32> to vector<71x128xf32>
    %1115 = vector.broadcast %1087 : f32 to vector<71x128xf32>
    %1116 = arith.mulf %1115, %1114 : vector<71x128xf32>
    %1117 = arith.addf %1113, %1116 : vector<71x128xf32>
    %1118 = arith.addf %1068, %1100 : vector<72x128xf32>
    %1119 = arith.addf %1073, %1105 : vector<72x128xf32>
    %1120 = arith.addf %1078, %1110 : vector<72x128xf32>
    %1121 = arith.addf %1085, %1117 : vector<71x128xf32>
    %c6_453 = arith.constant 6 : index
    %c4_454 = arith.constant 4 : index
    %1122 = memref.load %arg2[%c6_453, %c4_454] : memref<8x8xf32, #tpu.memory_space<smem>>
    %c6_455 = arith.constant 6 : index
    %c5_456 = arith.constant 5 : index
    %1123 = memref.load %arg2[%c6_455, %c5_456] : memref<8x8xf32, #tpu.memory_space<smem>>
    %c8_457 = arith.constant 8 : index
    %c0_458 = arith.constant 0 : index
    %c0_459 = arith.constant 0 : index
    %1124 = vector.load %arg1[%c8_457, %c0_458, %c0_459] : memref<16x72x128xf32, #tpu.memory_space<vmem>>, vector<1x72x128xf32>
    %1125 = vector.shape_cast %1124 : vector<1x72x128xf32> to vector<72x128xf32>
    %c9_460 = arith.constant 9 : index
    %c0_461 = arith.constant 0 : index
    %c0_462 = arith.constant 0 : index
    %1126 = vector.load %arg1[%c9_460, %c0_461, %c0_462] : memref<16x72x128xf32, #tpu.memory_space<vmem>>, vector<1x72x128xf32>
    %1127 = vector.shape_cast %1126 : vector<1x72x128xf32> to vector<72x128xf32>
    %c10_463 = arith.constant 10 : index
    %c0_464 = arith.constant 0 : index
    %c0_465 = arith.constant 0 : index
    %1128 = vector.load %arg1[%c10_463, %c0_464, %c0_465] : memref<16x72x128xf32, #tpu.memory_space<vmem>>, vector<1x72x128xf32>
    %1129 = vector.shape_cast %1128 : vector<1x72x128xf32> to vector<72x128xf32>
    %c11_466 = arith.constant 11 : index
    %c0_467 = arith.constant 0 : index
    %c0_468 = arith.constant 0 : index
    %1130 = vector.load %arg1[%c11_466, %c0_467, %c0_468] : memref<16x72x128xf32, #tpu.memory_space<vmem>>, vector<1x72x128xf32>
    %1131 = vector.shape_cast %1130 : vector<1x72x128xf32> to vector<72x128xf32>
    %1132 = vector.broadcast %1122 : f32 to vector<72x128xf32>
    %1133 = arith.mulf %1132, %1125 : vector<72x128xf32>
    %1134 = vector.broadcast %1123 : f32 to vector<72x128xf32>
    %1135 = arith.mulf %1134, %1127 : vector<72x128xf32>
    %1136 = arith.addf %1133, %1135 : vector<72x128xf32>
    %1137 = vector.broadcast %1122 : f32 to vector<72x128xf32>
    %1138 = arith.mulf %1137, %1127 : vector<72x128xf32>
    %1139 = vector.broadcast %1123 : f32 to vector<72x128xf32>
    %1140 = arith.mulf %1139, %1129 : vector<72x128xf32>
    %1141 = arith.addf %1138, %1140 : vector<72x128xf32>
    %1142 = vector.broadcast %1122 : f32 to vector<72x128xf32>
    %1143 = arith.mulf %1142, %1129 : vector<72x128xf32>
    %1144 = vector.broadcast %1123 : f32 to vector<72x128xf32>
    %1145 = arith.mulf %1144, %1131 : vector<72x128xf32>
    %1146 = arith.addf %1143, %1145 : vector<72x128xf32>
    %1147 = vector.extract_strided_slice %1131 {offsets = [0, 0], sizes = [71, 128], strides = [1, 1]} : vector<72x128xf32> to vector<71x128xf32>
    %1148 = vector.broadcast %1122 : f32 to vector<71x128xf32>
    %1149 = arith.mulf %1148, %1147 : vector<71x128xf32>
    %1150 = vector.extract_strided_slice %1125 {offsets = [1, 0], sizes = [71, 128], strides = [1, 1]} : vector<72x128xf32> to vector<71x128xf32>
    %1151 = vector.broadcast %1123 : f32 to vector<71x128xf32>
    %1152 = arith.mulf %1151, %1150 : vector<71x128xf32>
    %1153 = arith.addf %1149, %1152 : vector<71x128xf32>
    %1154 = arith.addf %1118, %1136 : vector<72x128xf32>
    %1155 = arith.addf %1119, %1141 : vector<72x128xf32>
    %1156 = arith.addf %1120, %1146 : vector<72x128xf32>
    %1157 = arith.addf %1121, %1153 : vector<71x128xf32>
    %c6_469 = arith.constant 6 : index
    %c6_470 = arith.constant 6 : index
    %1158 = memref.load %arg2[%c6_469, %c6_470] : memref<8x8xf32, #tpu.memory_space<smem>>
    %c6_471 = arith.constant 6 : index
    %c7_472 = arith.constant 7 : index
    %1159 = memref.load %arg2[%c6_471, %c7_472] : memref<8x8xf32, #tpu.memory_space<smem>>
    %c12_473 = arith.constant 12 : index
    %c0_474 = arith.constant 0 : index
    %c0_475 = arith.constant 0 : index
    %1160 = vector.load %arg1[%c12_473, %c0_474, %c0_475] : memref<16x72x128xf32, #tpu.memory_space<vmem>>, vector<1x72x128xf32>
    %1161 = vector.shape_cast %1160 : vector<1x72x128xf32> to vector<72x128xf32>
    %c13_476 = arith.constant 13 : index
    %c0_477 = arith.constant 0 : index
    %c0_478 = arith.constant 0 : index
    %1162 = vector.load %arg1[%c13_476, %c0_477, %c0_478] : memref<16x72x128xf32, #tpu.memory_space<vmem>>, vector<1x72x128xf32>
    %1163 = vector.shape_cast %1162 : vector<1x72x128xf32> to vector<72x128xf32>
    %c14_479 = arith.constant 14 : index
    %c0_480 = arith.constant 0 : index
    %c0_481 = arith.constant 0 : index
    %1164 = vector.load %arg1[%c14_479, %c0_480, %c0_481] : memref<16x72x128xf32, #tpu.memory_space<vmem>>, vector<1x72x128xf32>
    %1165 = vector.shape_cast %1164 : vector<1x72x128xf32> to vector<72x128xf32>
    %c15_482 = arith.constant 15 : index
    %c0_483 = arith.constant 0 : index
    %c0_484 = arith.constant 0 : index
    %1166 = vector.load %arg1[%c15_482, %c0_483, %c0_484] : memref<16x72x128xf32, #tpu.memory_space<vmem>>, vector<1x72x128xf32>
    %1167 = vector.shape_cast %1166 : vector<1x72x128xf32> to vector<72x128xf32>
    %1168 = vector.broadcast %1158 : f32 to vector<72x128xf32>
    %1169 = arith.mulf %1168, %1161 : vector<72x128xf32>
    %1170 = vector.broadcast %1159 : f32 to vector<72x128xf32>
    %1171 = arith.mulf %1170, %1163 : vector<72x128xf32>
    %1172 = arith.addf %1169, %1171 : vector<72x128xf32>
    %1173 = vector.broadcast %1158 : f32 to vector<72x128xf32>
    %1174 = arith.mulf %1173, %1163 : vector<72x128xf32>
    %1175 = vector.broadcast %1159 : f32 to vector<72x128xf32>
    %1176 = arith.mulf %1175, %1165 : vector<72x128xf32>
    %1177 = arith.addf %1174, %1176 : vector<72x128xf32>
    %1178 = vector.broadcast %1158 : f32 to vector<72x128xf32>
    %1179 = arith.mulf %1178, %1165 : vector<72x128xf32>
    %1180 = vector.broadcast %1159 : f32 to vector<72x128xf32>
    %1181 = arith.mulf %1180, %1167 : vector<72x128xf32>
    %1182 = arith.addf %1179, %1181 : vector<72x128xf32>
    %1183 = vector.extract_strided_slice %1167 {offsets = [0, 0], sizes = [71, 128], strides = [1, 1]} : vector<72x128xf32> to vector<71x128xf32>
    %1184 = vector.broadcast %1158 : f32 to vector<71x128xf32>
    %1185 = arith.mulf %1184, %1183 : vector<71x128xf32>
    %1186 = vector.extract_strided_slice %1161 {offsets = [1, 0], sizes = [71, 128], strides = [1, 1]} : vector<72x128xf32> to vector<71x128xf32>
    %1187 = vector.broadcast %1159 : f32 to vector<71x128xf32>
    %1188 = arith.mulf %1187, %1186 : vector<71x128xf32>
    %1189 = arith.addf %1185, %1188 : vector<71x128xf32>
    %1190 = arith.addf %1154, %1172 : vector<72x128xf32>
    %1191 = arith.addf %1155, %1177 : vector<72x128xf32>
    %1192 = arith.addf %1156, %1182 : vector<72x128xf32>
    %1193 = arith.addf %1157, %1189 : vector<71x128xf32>
    %c6_485 = arith.constant 6 : index
    %1194 = memref.load %arg3[%c6_485] : memref<8xf32, #tpu.memory_space<smem>>
    %1195 = vector.broadcast %1194 : f32 to vector<72x128xf32>
    %1196 = arith.addf %1190, %1195 : vector<72x128xf32>
    %cst_486 = arith.constant 0.000000e+00 : f32
    %1197 = vector.broadcast %cst_486 : f32 to vector<72x128xf32>
    %1198 = arith.maximumf %1196, %1197 : vector<72x128xf32>
    %1199 = vector.broadcast %1194 : f32 to vector<72x128xf32>
    %1200 = arith.addf %1191, %1199 : vector<72x128xf32>
    %cst_487 = arith.constant 0.000000e+00 : f32
    %1201 = vector.broadcast %cst_487 : f32 to vector<72x128xf32>
    %1202 = arith.maximumf %1200, %1201 : vector<72x128xf32>
    %1203 = vector.broadcast %1194 : f32 to vector<72x128xf32>
    %1204 = arith.addf %1192, %1203 : vector<72x128xf32>
    %cst_488 = arith.constant 0.000000e+00 : f32
    %1205 = vector.broadcast %cst_488 : f32 to vector<72x128xf32>
    %1206 = arith.maximumf %1204, %1205 : vector<72x128xf32>
    %1207 = vector.broadcast %1194 : f32 to vector<71x128xf32>
    %1208 = arith.addf %1193, %1207 : vector<71x128xf32>
    %cst_489 = arith.constant 0.000000e+00 : f32
    %1209 = vector.broadcast %cst_489 : f32 to vector<71x128xf32>
    %1210 = arith.maximumf %1208, %1209 : vector<71x128xf32>
    %1211 = arith.maximumf %1198, %1202 : vector<72x128xf32>
    %1212 = vector.extract_strided_slice %1206 {offsets = [0, 0], sizes = [71, 128], strides = [1, 1]} : vector<72x128xf32> to vector<71x128xf32>
    %1213 = arith.maximumf %1212, %1210 : vector<71x128xf32>
    %c6_490 = arith.constant 6 : index
    %c0_491 = arith.constant 0 : index
    %1214 = memref.load %arg4[%c6_490, %c0_491] : memref<8x2xf32, #tpu.memory_space<smem>>
    %c6_492 = arith.constant 6 : index
    %c1_493 = arith.constant 1 : index
    %1215 = memref.load %arg4[%c6_492, %c1_493] : memref<8x2xf32, #tpu.memory_space<smem>>
    %1216 = vector.extract_strided_slice %1211 {offsets = [0, 0], sizes = [71, 128], strides = [1, 1]} : vector<72x128xf32> to vector<71x128xf32>
    %1217 = vector.broadcast %1214 : f32 to vector<71x128xf32>
    %1218 = arith.mulf %1217, %1216 : vector<71x128xf32>
    %1219 = vector.broadcast %1215 : f32 to vector<71x128xf32>
    %1220 = arith.mulf %1219, %1213 : vector<71x128xf32>
    %1221 = arith.addf %1218, %1220 : vector<71x128xf32>
    %1222 = vector.broadcast %1214 : f32 to vector<71x128xf32>
    %1223 = arith.mulf %1222, %1213 : vector<71x128xf32>
    %1224 = vector.extract_strided_slice %1211 {offsets = [1, 0], sizes = [71, 128], strides = [1, 1]} : vector<72x128xf32> to vector<71x128xf32>
    %1225 = vector.broadcast %1215 : f32 to vector<71x128xf32>
    %1226 = arith.mulf %1225, %1224 : vector<71x128xf32>
    %1227 = arith.addf %1223, %1226 : vector<71x128xf32>
    %1228 = arith.addf %1052, %1221 : vector<71x128xf32>
    %1229 = arith.addf %1053, %1227 : vector<71x128xf32>
    %c7_494 = arith.constant 7 : index
    %c0_495 = arith.constant 0 : index
    %1230 = memref.load %arg2[%c7_494, %c0_495] : memref<8x8xf32, #tpu.memory_space<smem>>
    %c7_496 = arith.constant 7 : index
    %c1_497 = arith.constant 1 : index
    %1231 = memref.load %arg2[%c7_496, %c1_497] : memref<8x8xf32, #tpu.memory_space<smem>>
    %c0_498 = arith.constant 0 : index
    %c0_499 = arith.constant 0 : index
    %c0_500 = arith.constant 0 : index
    %1232 = vector.load %arg1[%c0_498, %c0_499, %c0_500] : memref<16x72x128xf32, #tpu.memory_space<vmem>>, vector<1x72x128xf32>
    %1233 = vector.shape_cast %1232 : vector<1x72x128xf32> to vector<72x128xf32>
    %c1_501 = arith.constant 1 : index
    %c0_502 = arith.constant 0 : index
    %c0_503 = arith.constant 0 : index
    %1234 = vector.load %arg1[%c1_501, %c0_502, %c0_503] : memref<16x72x128xf32, #tpu.memory_space<vmem>>, vector<1x72x128xf32>
    %1235 = vector.shape_cast %1234 : vector<1x72x128xf32> to vector<72x128xf32>
    %c2_504 = arith.constant 2 : index
    %c0_505 = arith.constant 0 : index
    %c0_506 = arith.constant 0 : index
    %1236 = vector.load %arg1[%c2_504, %c0_505, %c0_506] : memref<16x72x128xf32, #tpu.memory_space<vmem>>, vector<1x72x128xf32>
    %1237 = vector.shape_cast %1236 : vector<1x72x128xf32> to vector<72x128xf32>
    %c3_507 = arith.constant 3 : index
    %c0_508 = arith.constant 0 : index
    %c0_509 = arith.constant 0 : index
    %1238 = vector.load %arg1[%c3_507, %c0_508, %c0_509] : memref<16x72x128xf32, #tpu.memory_space<vmem>>, vector<1x72x128xf32>
    %1239 = vector.shape_cast %1238 : vector<1x72x128xf32> to vector<72x128xf32>
    %1240 = vector.broadcast %1230 : f32 to vector<72x128xf32>
    %1241 = arith.mulf %1240, %1233 : vector<72x128xf32>
    %1242 = vector.broadcast %1231 : f32 to vector<72x128xf32>
    %1243 = arith.mulf %1242, %1235 : vector<72x128xf32>
    %1244 = arith.addf %1241, %1243 : vector<72x128xf32>
    %1245 = vector.broadcast %1230 : f32 to vector<72x128xf32>
    %1246 = arith.mulf %1245, %1235 : vector<72x128xf32>
    %1247 = vector.broadcast %1231 : f32 to vector<72x128xf32>
    %1248 = arith.mulf %1247, %1237 : vector<72x128xf32>
    %1249 = arith.addf %1246, %1248 : vector<72x128xf32>
    %1250 = vector.broadcast %1230 : f32 to vector<72x128xf32>
    %1251 = arith.mulf %1250, %1237 : vector<72x128xf32>
    %1252 = vector.broadcast %1231 : f32 to vector<72x128xf32>
    %1253 = arith.mulf %1252, %1239 : vector<72x128xf32>
    %1254 = arith.addf %1251, %1253 : vector<72x128xf32>
    %1255 = vector.extract_strided_slice %1239 {offsets = [0, 0], sizes = [71, 128], strides = [1, 1]} : vector<72x128xf32> to vector<71x128xf32>
    %1256 = vector.broadcast %1230 : f32 to vector<71x128xf32>
    %1257 = arith.mulf %1256, %1255 : vector<71x128xf32>
    %1258 = vector.extract_strided_slice %1233 {offsets = [1, 0], sizes = [71, 128], strides = [1, 1]} : vector<72x128xf32> to vector<71x128xf32>
    %1259 = vector.broadcast %1231 : f32 to vector<71x128xf32>
    %1260 = arith.mulf %1259, %1258 : vector<71x128xf32>
    %1261 = arith.addf %1257, %1260 : vector<71x128xf32>
    %c7_510 = arith.constant 7 : index
    %c2_511 = arith.constant 2 : index
    %1262 = memref.load %arg2[%c7_510, %c2_511] : memref<8x8xf32, #tpu.memory_space<smem>>
    %c7_512 = arith.constant 7 : index
    %c3_513 = arith.constant 3 : index
    %1263 = memref.load %arg2[%c7_512, %c3_513] : memref<8x8xf32, #tpu.memory_space<smem>>
    %c4_514 = arith.constant 4 : index
    %c0_515 = arith.constant 0 : index
    %c0_516 = arith.constant 0 : index
    %1264 = vector.load %arg1[%c4_514, %c0_515, %c0_516] : memref<16x72x128xf32, #tpu.memory_space<vmem>>, vector<1x72x128xf32>
    %1265 = vector.shape_cast %1264 : vector<1x72x128xf32> to vector<72x128xf32>
    %c5_517 = arith.constant 5 : index
    %c0_518 = arith.constant 0 : index
    %c0_519 = arith.constant 0 : index
    %1266 = vector.load %arg1[%c5_517, %c0_518, %c0_519] : memref<16x72x128xf32, #tpu.memory_space<vmem>>, vector<1x72x128xf32>
    %1267 = vector.shape_cast %1266 : vector<1x72x128xf32> to vector<72x128xf32>
    %c6_520 = arith.constant 6 : index
    %c0_521 = arith.constant 0 : index
    %c0_522 = arith.constant 0 : index
    %1268 = vector.load %arg1[%c6_520, %c0_521, %c0_522] : memref<16x72x128xf32, #tpu.memory_space<vmem>>, vector<1x72x128xf32>
    %1269 = vector.shape_cast %1268 : vector<1x72x128xf32> to vector<72x128xf32>
    %c7_523 = arith.constant 7 : index
    %c0_524 = arith.constant 0 : index
    %c0_525 = arith.constant 0 : index
    %1270 = vector.load %arg1[%c7_523, %c0_524, %c0_525] : memref<16x72x128xf32, #tpu.memory_space<vmem>>, vector<1x72x128xf32>
    %1271 = vector.shape_cast %1270 : vector<1x72x128xf32> to vector<72x128xf32>
    %1272 = vector.broadcast %1262 : f32 to vector<72x128xf32>
    %1273 = arith.mulf %1272, %1265 : vector<72x128xf32>
    %1274 = vector.broadcast %1263 : f32 to vector<72x128xf32>
    %1275 = arith.mulf %1274, %1267 : vector<72x128xf32>
    %1276 = arith.addf %1273, %1275 : vector<72x128xf32>
    %1277 = vector.broadcast %1262 : f32 to vector<72x128xf32>
    %1278 = arith.mulf %1277, %1267 : vector<72x128xf32>
    %1279 = vector.broadcast %1263 : f32 to vector<72x128xf32>
    %1280 = arith.mulf %1279, %1269 : vector<72x128xf32>
    %1281 = arith.addf %1278, %1280 : vector<72x128xf32>
    %1282 = vector.broadcast %1262 : f32 to vector<72x128xf32>
    %1283 = arith.mulf %1282, %1269 : vector<72x128xf32>
    %1284 = vector.broadcast %1263 : f32 to vector<72x128xf32>
    %1285 = arith.mulf %1284, %1271 : vector<72x128xf32>
    %1286 = arith.addf %1283, %1285 : vector<72x128xf32>
    %1287 = vector.extract_strided_slice %1271 {offsets = [0, 0], sizes = [71, 128], strides = [1, 1]} : vector<72x128xf32> to vector<71x128xf32>
    %1288 = vector.broadcast %1262 : f32 to vector<71x128xf32>
    %1289 = arith.mulf %1288, %1287 : vector<71x128xf32>
    %1290 = vector.extract_strided_slice %1265 {offsets = [1, 0], sizes = [71, 128], strides = [1, 1]} : vector<72x128xf32> to vector<71x128xf32>
    %1291 = vector.broadcast %1263 : f32 to vector<71x128xf32>
    %1292 = arith.mulf %1291, %1290 : vector<71x128xf32>
    %1293 = arith.addf %1289, %1292 : vector<71x128xf32>
    %1294 = arith.addf %1244, %1276 : vector<72x128xf32>
    %1295 = arith.addf %1249, %1281 : vector<72x128xf32>
    %1296 = arith.addf %1254, %1286 : vector<72x128xf32>
    %1297 = arith.addf %1261, %1293 : vector<71x128xf32>
    %c7_526 = arith.constant 7 : index
    %c4_527 = arith.constant 4 : index
    %1298 = memref.load %arg2[%c7_526, %c4_527] : memref<8x8xf32, #tpu.memory_space<smem>>
    %c7_528 = arith.constant 7 : index
    %c5_529 = arith.constant 5 : index
    %1299 = memref.load %arg2[%c7_528, %c5_529] : memref<8x8xf32, #tpu.memory_space<smem>>
    %c8_530 = arith.constant 8 : index
    %c0_531 = arith.constant 0 : index
    %c0_532 = arith.constant 0 : index
    %1300 = vector.load %arg1[%c8_530, %c0_531, %c0_532] : memref<16x72x128xf32, #tpu.memory_space<vmem>>, vector<1x72x128xf32>
    %1301 = vector.shape_cast %1300 : vector<1x72x128xf32> to vector<72x128xf32>
    %c9_533 = arith.constant 9 : index
    %c0_534 = arith.constant 0 : index
    %c0_535 = arith.constant 0 : index
    %1302 = vector.load %arg1[%c9_533, %c0_534, %c0_535] : memref<16x72x128xf32, #tpu.memory_space<vmem>>, vector<1x72x128xf32>
    %1303 = vector.shape_cast %1302 : vector<1x72x128xf32> to vector<72x128xf32>
    %c10_536 = arith.constant 10 : index
    %c0_537 = arith.constant 0 : index
    %c0_538 = arith.constant 0 : index
    %1304 = vector.load %arg1[%c10_536, %c0_537, %c0_538] : memref<16x72x128xf32, #tpu.memory_space<vmem>>, vector<1x72x128xf32>
    %1305 = vector.shape_cast %1304 : vector<1x72x128xf32> to vector<72x128xf32>
    %c11_539 = arith.constant 11 : index
    %c0_540 = arith.constant 0 : index
    %c0_541 = arith.constant 0 : index
    %1306 = vector.load %arg1[%c11_539, %c0_540, %c0_541] : memref<16x72x128xf32, #tpu.memory_space<vmem>>, vector<1x72x128xf32>
    %1307 = vector.shape_cast %1306 : vector<1x72x128xf32> to vector<72x128xf32>
    %1308 = vector.broadcast %1298 : f32 to vector<72x128xf32>
    %1309 = arith.mulf %1308, %1301 : vector<72x128xf32>
    %1310 = vector.broadcast %1299 : f32 to vector<72x128xf32>
    %1311 = arith.mulf %1310, %1303 : vector<72x128xf32>
    %1312 = arith.addf %1309, %1311 : vector<72x128xf32>
    %1313 = vector.broadcast %1298 : f32 to vector<72x128xf32>
    %1314 = arith.mulf %1313, %1303 : vector<72x128xf32>
    %1315 = vector.broadcast %1299 : f32 to vector<72x128xf32>
    %1316 = arith.mulf %1315, %1305 : vector<72x128xf32>
    %1317 = arith.addf %1314, %1316 : vector<72x128xf32>
    %1318 = vector.broadcast %1298 : f32 to vector<72x128xf32>
    %1319 = arith.mulf %1318, %1305 : vector<72x128xf32>
    %1320 = vector.broadcast %1299 : f32 to vector<72x128xf32>
    %1321 = arith.mulf %1320, %1307 : vector<72x128xf32>
    %1322 = arith.addf %1319, %1321 : vector<72x128xf32>
    %1323 = vector.extract_strided_slice %1307 {offsets = [0, 0], sizes = [71, 128], strides = [1, 1]} : vector<72x128xf32> to vector<71x128xf32>
    %1324 = vector.broadcast %1298 : f32 to vector<71x128xf32>
    %1325 = arith.mulf %1324, %1323 : vector<71x128xf32>
    %1326 = vector.extract_strided_slice %1301 {offsets = [1, 0], sizes = [71, 128], strides = [1, 1]} : vector<72x128xf32> to vector<71x128xf32>
    %1327 = vector.broadcast %1299 : f32 to vector<71x128xf32>
    %1328 = arith.mulf %1327, %1326 : vector<71x128xf32>
    %1329 = arith.addf %1325, %1328 : vector<71x128xf32>
    %1330 = arith.addf %1294, %1312 : vector<72x128xf32>
    %1331 = arith.addf %1295, %1317 : vector<72x128xf32>
    %1332 = arith.addf %1296, %1322 : vector<72x128xf32>
    %1333 = arith.addf %1297, %1329 : vector<71x128xf32>
    %c7_542 = arith.constant 7 : index
    %c6_543 = arith.constant 6 : index
    %1334 = memref.load %arg2[%c7_542, %c6_543] : memref<8x8xf32, #tpu.memory_space<smem>>
    %c7_544 = arith.constant 7 : index
    %c7_545 = arith.constant 7 : index
    %1335 = memref.load %arg2[%c7_544, %c7_545] : memref<8x8xf32, #tpu.memory_space<smem>>
    %c12_546 = arith.constant 12 : index
    %c0_547 = arith.constant 0 : index
    %c0_548 = arith.constant 0 : index
    %1336 = vector.load %arg1[%c12_546, %c0_547, %c0_548] : memref<16x72x128xf32, #tpu.memory_space<vmem>>, vector<1x72x128xf32>
    %1337 = vector.shape_cast %1336 : vector<1x72x128xf32> to vector<72x128xf32>
    %c13_549 = arith.constant 13 : index
    %c0_550 = arith.constant 0 : index
    %c0_551 = arith.constant 0 : index
    %1338 = vector.load %arg1[%c13_549, %c0_550, %c0_551] : memref<16x72x128xf32, #tpu.memory_space<vmem>>, vector<1x72x128xf32>
    %1339 = vector.shape_cast %1338 : vector<1x72x128xf32> to vector<72x128xf32>
    %c14_552 = arith.constant 14 : index
    %c0_553 = arith.constant 0 : index
    %c0_554 = arith.constant 0 : index
    %1340 = vector.load %arg1[%c14_552, %c0_553, %c0_554] : memref<16x72x128xf32, #tpu.memory_space<vmem>>, vector<1x72x128xf32>
    %1341 = vector.shape_cast %1340 : vector<1x72x128xf32> to vector<72x128xf32>
    %c15_555 = arith.constant 15 : index
    %c0_556 = arith.constant 0 : index
    %c0_557 = arith.constant 0 : index
    %1342 = vector.load %arg1[%c15_555, %c0_556, %c0_557] : memref<16x72x128xf32, #tpu.memory_space<vmem>>, vector<1x72x128xf32>
    %1343 = vector.shape_cast %1342 : vector<1x72x128xf32> to vector<72x128xf32>
    %1344 = vector.broadcast %1334 : f32 to vector<72x128xf32>
    %1345 = arith.mulf %1344, %1337 : vector<72x128xf32>
    %1346 = vector.broadcast %1335 : f32 to vector<72x128xf32>
    %1347 = arith.mulf %1346, %1339 : vector<72x128xf32>
    %1348 = arith.addf %1345, %1347 : vector<72x128xf32>
    %1349 = vector.broadcast %1334 : f32 to vector<72x128xf32>
    %1350 = arith.mulf %1349, %1339 : vector<72x128xf32>
    %1351 = vector.broadcast %1335 : f32 to vector<72x128xf32>
    %1352 = arith.mulf %1351, %1341 : vector<72x128xf32>
    %1353 = arith.addf %1350, %1352 : vector<72x128xf32>
    %1354 = vector.broadcast %1334 : f32 to vector<72x128xf32>
    %1355 = arith.mulf %1354, %1341 : vector<72x128xf32>
    %1356 = vector.broadcast %1335 : f32 to vector<72x128xf32>
    %1357 = arith.mulf %1356, %1343 : vector<72x128xf32>
    %1358 = arith.addf %1355, %1357 : vector<72x128xf32>
    %1359 = vector.extract_strided_slice %1343 {offsets = [0, 0], sizes = [71, 128], strides = [1, 1]} : vector<72x128xf32> to vector<71x128xf32>
    %1360 = vector.broadcast %1334 : f32 to vector<71x128xf32>
    %1361 = arith.mulf %1360, %1359 : vector<71x128xf32>
    %1362 = vector.extract_strided_slice %1337 {offsets = [1, 0], sizes = [71, 128], strides = [1, 1]} : vector<72x128xf32> to vector<71x128xf32>
    %1363 = vector.broadcast %1335 : f32 to vector<71x128xf32>
    %1364 = arith.mulf %1363, %1362 : vector<71x128xf32>
    %1365 = arith.addf %1361, %1364 : vector<71x128xf32>
    %1366 = arith.addf %1330, %1348 : vector<72x128xf32>
    %1367 = arith.addf %1331, %1353 : vector<72x128xf32>
    %1368 = arith.addf %1332, %1358 : vector<72x128xf32>
    %1369 = arith.addf %1333, %1365 : vector<71x128xf32>
    %c7_558 = arith.constant 7 : index
    %1370 = memref.load %arg3[%c7_558] : memref<8xf32, #tpu.memory_space<smem>>
    %1371 = vector.broadcast %1370 : f32 to vector<72x128xf32>
    %1372 = arith.addf %1366, %1371 : vector<72x128xf32>
    %cst_559 = arith.constant 0.000000e+00 : f32
    %1373 = vector.broadcast %cst_559 : f32 to vector<72x128xf32>
    %1374 = arith.maximumf %1372, %1373 : vector<72x128xf32>
    %1375 = vector.broadcast %1370 : f32 to vector<72x128xf32>
    %1376 = arith.addf %1367, %1375 : vector<72x128xf32>
    %cst_560 = arith.constant 0.000000e+00 : f32
    %1377 = vector.broadcast %cst_560 : f32 to vector<72x128xf32>
    %1378 = arith.maximumf %1376, %1377 : vector<72x128xf32>
    %1379 = vector.broadcast %1370 : f32 to vector<72x128xf32>
    %1380 = arith.addf %1368, %1379 : vector<72x128xf32>
    %cst_561 = arith.constant 0.000000e+00 : f32
    %1381 = vector.broadcast %cst_561 : f32 to vector<72x128xf32>
    %1382 = arith.maximumf %1380, %1381 : vector<72x128xf32>
    %1383 = vector.broadcast %1370 : f32 to vector<71x128xf32>
    %1384 = arith.addf %1369, %1383 : vector<71x128xf32>
    %cst_562 = arith.constant 0.000000e+00 : f32
    %1385 = vector.broadcast %cst_562 : f32 to vector<71x128xf32>
    %1386 = arith.maximumf %1384, %1385 : vector<71x128xf32>
    %1387 = arith.maximumf %1374, %1378 : vector<72x128xf32>
    %1388 = vector.extract_strided_slice %1382 {offsets = [0, 0], sizes = [71, 128], strides = [1, 1]} : vector<72x128xf32> to vector<71x128xf32>
    %1389 = arith.maximumf %1388, %1386 : vector<71x128xf32>
    %c7_563 = arith.constant 7 : index
    %c0_564 = arith.constant 0 : index
    %1390 = memref.load %arg4[%c7_563, %c0_564] : memref<8x2xf32, #tpu.memory_space<smem>>
    %c7_565 = arith.constant 7 : index
    %c1_566 = arith.constant 1 : index
    %1391 = memref.load %arg4[%c7_565, %c1_566] : memref<8x2xf32, #tpu.memory_space<smem>>
    %1392 = vector.extract_strided_slice %1387 {offsets = [0, 0], sizes = [71, 128], strides = [1, 1]} : vector<72x128xf32> to vector<71x128xf32>
    %1393 = vector.broadcast %1390 : f32 to vector<71x128xf32>
    %1394 = arith.mulf %1393, %1392 : vector<71x128xf32>
    %1395 = vector.broadcast %1391 : f32 to vector<71x128xf32>
    %1396 = arith.mulf %1395, %1389 : vector<71x128xf32>
    %1397 = arith.addf %1394, %1396 : vector<71x128xf32>
    %1398 = vector.broadcast %1390 : f32 to vector<71x128xf32>
    %1399 = arith.mulf %1398, %1389 : vector<71x128xf32>
    %1400 = vector.extract_strided_slice %1387 {offsets = [1, 0], sizes = [71, 128], strides = [1, 1]} : vector<72x128xf32> to vector<71x128xf32>
    %1401 = vector.broadcast %1391 : f32 to vector<71x128xf32>
    %1402 = arith.mulf %1401, %1400 : vector<71x128xf32>
    %1403 = arith.addf %1399, %1402 : vector<71x128xf32>
    %1404 = arith.addf %1228, %1397 : vector<71x128xf32>
    %1405 = arith.addf %1229, %1403 : vector<71x128xf32>
    %c0_567 = arith.constant 0 : index
    %1406 = memref.load %arg5[%c0_567] : memref<1xf32, #tpu.memory_space<smem>>
    %1407 = vector.broadcast %1406 : f32 to vector<71x128xf32>
    %1408 = arith.addf %1404, %1407 : vector<71x128xf32>
    %cst_568 = arith.constant 0.000000e+00 : f32
    %1409 = vector.broadcast %cst_568 : f32 to vector<71x128xf32>
    %1410 = arith.maximumf %1408, %1409 : vector<71x128xf32>
    %1411 = vector.broadcast %1406 : f32 to vector<71x128xf32>
    %1412 = arith.addf %1405, %1411 : vector<71x128xf32>
    %cst_569 = arith.constant 0.000000e+00 : f32
    %1413 = vector.broadcast %cst_569 : f32 to vector<71x128xf32>
    %1414 = arith.maximumf %1412, %1413 : vector<71x128xf32>
    %1415 = arith.maximumf %1410, %1414 : vector<71x128xf32>
    %c0_570 = arith.constant 0 : index
    %c0_571 = arith.constant 0 : index
    %1416 = vector.load %arg6[%c0_570, %c0_571] : memref<60x71xf32, #tpu.memory_space<vmem>>, vector<60x71xf32>
    %cst_572 = arith.constant dense<0.000000e+00> : vector<60x128xf32>
    %1417 = tpu.matmul %1416, %1415, %cst_572 {dimension_numbers = #tpu.dot_dimension_numbers<[1], [0], [0], [1], [0, 0, 1, 1], [], []>} : vector<60x71xf32>, vector<71x128xf32>, vector<60x128xf32> -> vector<60x128xf32>
    %c0_573 = arith.constant 0 : index
    %c0_574 = arith.constant 0 : index
    %1418 = vector.load %arg7[%c0_573, %c0_574] : memref<60x1xf32, #tpu.memory_space<vmem>>, vector<60x1xf32>
    %1419 = vector.broadcast %1418 : vector<60x1xf32> to vector<60x128xf32>
    %1420 = arith.addf %1417, %1419 : vector<60x128xf32>
    %cst_575 = arith.constant 0.000000e+00 : f32
    %1421 = vector.broadcast %cst_575 : f32 to vector<60x128xf32>
    %1422 = arith.maximumf %1420, %1421 : vector<60x128xf32>
    %c0_576 = arith.constant 0 : index
    %c0_577 = arith.constant 0 : index
    %1423 = vector.load %arg8[%c0_576, %c0_577] : memref<40x60xf32, #tpu.memory_space<vmem>>, vector<40x60xf32>
    %cst_578 = arith.constant dense<0.000000e+00> : vector<40x128xf32>
    %1424 = tpu.matmul %1423, %1422, %cst_578 {dimension_numbers = #tpu.dot_dimension_numbers<[1], [0], [0], [1], [0, 0, 1, 1], [], []>} : vector<40x60xf32>, vector<60x128xf32>, vector<40x128xf32> -> vector<40x128xf32>
    %c0_579 = arith.constant 0 : index
    %c0_580 = arith.constant 0 : index
    %1425 = vector.load %arg9[%c0_579, %c0_580] : memref<40x1xf32, #tpu.memory_space<vmem>>, vector<40x1xf32>
    %1426 = vector.broadcast %1425 : vector<40x1xf32> to vector<40x128xf32>
    %1427 = arith.addf %1424, %1426 : vector<40x128xf32>
    %cst_581 = arith.constant 0.000000e+00 : f32
    %1428 = vector.broadcast %cst_581 : f32 to vector<40x128xf32>
    %1429 = arith.maximumf %1427, %1428 : vector<40x128xf32>
    %c0_582 = arith.constant 0 : index
    %c0_583 = arith.constant 0 : index
    %1430 = vector.load %arg10[%c0_582, %c0_583] : memref<20x40xf32, #tpu.memory_space<vmem>>, vector<20x40xf32>
    %cst_584 = arith.constant dense<0.000000e+00> : vector<20x128xf32>
    %1431 = tpu.matmul %1430, %1429, %cst_584 {dimension_numbers = #tpu.dot_dimension_numbers<[1], [0], [0], [1], [0, 0, 1, 1], [], []>} : vector<20x40xf32>, vector<40x128xf32>, vector<20x128xf32> -> vector<20x128xf32>
    %c0_585 = arith.constant 0 : index
    %c0_586 = arith.constant 0 : index
    %1432 = vector.load %arg11[%c0_585, %c0_586] : memref<20x1xf32, #tpu.memory_space<vmem>>, vector<20x1xf32>
    %1433 = vector.broadcast %1432 : vector<20x1xf32> to vector<20x128xf32>
    %1434 = arith.addf %1431, %1433 : vector<20x128xf32>
    %cst_587 = arith.constant 0.000000e+00 : f32
    %1435 = vector.broadcast %cst_587 : f32 to vector<20x128xf32>
    %1436 = arith.maximumf %1434, %1435 : vector<20x128xf32>
    %c0_588 = arith.constant 0 : index
    %c0_589 = arith.constant 0 : index
    %1437 = vector.load %arg12[%c0_588, %c0_589] : memref<1x20xf32, #tpu.memory_space<vmem>>, vector<1x20xf32>
    %cst_590 = arith.constant dense<0.000000e+00> : vector<1x128xf32>
    %1438 = tpu.matmul %1437, %1436, %cst_590 {dimension_numbers = #tpu.dot_dimension_numbers<[1], [0], [0], [1], [0, 0, 1, 1], [], []>} : vector<1x20xf32>, vector<20x128xf32>, vector<1x128xf32> -> vector<1x128xf32>
    %c0_591 = arith.constant 0 : index
    %c0_592 = arith.constant 0 : index
    %1439 = vector.load %arg13[%c0_591, %c0_592] : memref<1x1xf32, #tpu.memory_space<vmem>>, vector<1x1xf32>
    %1440 = vector.broadcast %1439 : vector<1x1xf32> to vector<1x128xf32>
    %1441 = arith.addf %1438, %1440 : vector<1x128xf32>
    %c0_593 = arith.constant 0 : index
    %c0_594 = arith.constant 0 : index
    %c0_595 = arith.constant 0 : index
    %1442 = vector.load %arg14[%c0_593, %c0_594, %c0_595] : memref<1x1x128xf32, #tpu.memory_space<vmem>>, vector<1x1x128xf32>
    %1443 = vector.shape_cast %1442 : vector<1x1x128xf32> to vector<1x128xf32>
    %1444 = vector.shape_cast %1441 : vector<1x128xf32> to vector<1x1x128xf32>
    tpu.vector_store %arg14[%c0_593, %c0_594, %c0_595], %1444 {strides = array<i32>} : memref<1x1x128xf32, #tpu.memory_space<vmem>>, vector<1x1x128xf32>,
    return
  }
  func.func @transform_0(%arg0: i32) -> (i32, i32, i32) {
    %c0_i32 = arith.constant 0 : i32
    %c0_i32_0 = arith.constant 0 : i32
    %c0_i32_1 = arith.constant 0 : i32
    return %c0_i32, %c0_i32_0, %arg0 : i32, i32, i32
  }
  func.func @transform_1(%arg0: i32) -> (i32, i32) {
    %c0_i32 = arith.constant 0 : i32
    %c0_i32_0 = arith.constant 0 : i32
    %c0_i32_1 = arith.constant 0 : i32
    return %c0_i32, %c0_i32_0 : i32, i32
  }
  func.func @transform_2(%arg0: i32) -> i32 {
    %c0_i32 = arith.constant 0 : i32
    %c0_i32_0 = arith.constant 0 : i32
    return %c0_i32 : i32
  }
  func.func @transform_3(%arg0: i32) -> (i32, i32) {
    %c0_i32 = arith.constant 0 : i32
    %c0_i32_0 = arith.constant 0 : i32
    %c0_i32_1 = arith.constant 0 : i32
    return %c0_i32, %c0_i32_0 : i32, i32
  }
  func.func @transform_4(%arg0: i32) -> i32 {
    %c0_i32 = arith.constant 0 : i32
    %c0_i32_0 = arith.constant 0 : i32
    return %c0_i32 : i32
  }
  func.func @transform_5(%arg0: i32) -> (i32, i32) {
    %c0_i32 = arith.constant 0 : i32
    %c0_i32_0 = arith.constant 0 : i32
    %c0_i32_1 = arith.constant 0 : i32
    return %c0_i32, %c0_i32_0 : i32, i32
  }
  func.func @transform_6(%arg0: i32) -> (i32, i32) {
    %c0_i32 = arith.constant 0 : i32
    %c0_i32_0 = arith.constant 0 : i32
    %c0_i32_1 = arith.constant 0 : i32
    return %c0_i32, %c0_i32_0 : i32, i32
  }
  func.func @transform_7(%arg0: i32) -> (i32, i32) {
    %c0_i32 = arith.constant 0 : i32
    %c0_i32_0 = arith.constant 0 : i32
    %c0_i32_1 = arith.constant 0 : i32
    return %c0_i32, %c0_i32_0 : i32, i32
  }
  func.func @transform_8(%arg0: i32) -> (i32, i32) {
    %c0_i32 = arith.constant 0 : i32
    %c0_i32_0 = arith.constant 0 : i32
    %c0_i32_1 = arith.constant 0 : i32
    return %c0_i32, %c0_i32_0 : i32, i32
  }
  func.func @transform_9(%arg0: i32) -> (i32, i32) {
    %c0_i32 = arith.constant 0 : i32
    %c0_i32_0 = arith.constant 0 : i32
    %c0_i32_1 = arith.constant 0 : i32
    return %c0_i32, %c0_i32_0 : i32, i32
  }
  func.func @transform_10(%arg0: i32) -> (i32, i32) {
    %c0_i32 = arith.constant 0 : i32
    %c0_i32_0 = arith.constant 0 : i32
    %c0_i32_1 = arith.constant 0 : i32
    return %c0_i32, %c0_i32_0 : i32, i32
  }
  func.func @transform_11(%arg0: i32) -> (i32, i32) {
    %c0_i32 = arith.constant 0 : i32
    %c0_i32_0 = arith.constant 0 : i32
    %c0_i32_1 = arith.constant 0 : i32
    return %c0_i32, %c0_i32_0 : i32, i32
  }
  func.func @transform_12(%arg0: i32) -> (i32, i32) {
    %c0_i32 = arith.constant 0 : i32
    %c0_i32_0 = arith.constant 0 : i32
    %c0_i32_1 = arith.constant 0 : i32
    return %c0_i32, %c0_i32_0 : i32, i32
  }
  func.func @transform_13(%arg0: i32) -> (i32, i32, i32) {
    %c0_i32 = arith.constant 0 : i32
    %c0_i32_0 = arith.constant 0 : i32
    %c0_i32_1 = arith.constant 0 : i32
    return %arg0, %c0_i32, %c0_i32_0 : i32, i32, i32
  }
}

</mosaic_0001>

<llo_original>
// kernel: cnn_forward.1
$region0: #{cnn_forward.1}
  #allocation0 [shape = 'u32[]', space=smem, size = 0x4, offset = 0x4, fixed_abs, tag = 'smem constant byte address 0x4 - core index']
  #allocation1 [shape = 'u32[144,128]{1,0:T(1,128)}', space=vmem, size = 0x12000, scoped, tag = 'internal scratch']
  #allocation2 [shape = 'f32[1]{0:T(128)S(6)}', space=smem, size = 0x200, scoped, tag = 'scoped memory for cnn_forward.1']
  #allocation3 [shape = 'f32[1,1]{1,0:T(1,128)S(1)}', space=vmem, size = 0x200, scoped, tag = 'scoped memory for cnn_forward.1']
  %s0 = inlined_call_operand.vmem [shape: f32[16,72,128], index: 0, kind: input, shape index: {}]
  %s1 = inlined_call_operand.vmem [shape: f32[8,8], index: 1, kind: input, shape index: {}]
  %s2 = inlined_call_operand.vmem [shape: f32[8], index: 2, kind: input, shape index: {}]
  %s3 = inlined_call_operand.vmem [shape: f32[8,2], index: 3, kind: input, shape index: {}]
  %s4 = inlined_call_operand.<no memory space> [shape: f32[1], index: 4, kind: input, shape index: {}]
  %s5 = inlined_call_operand.vmem [shape: f32[60,71], index: 5, kind: input, shape index: {}]
  %s6 = inlined_call_operand.vmem [shape: f32[60,1], index: 6, kind: input, shape index: {}]
  %s7 = inlined_call_operand.vmem [shape: f32[40,60], index: 7, kind: input, shape index: {}]
  %s8 = inlined_call_operand.vmem [shape: f32[40,1], index: 8, kind: input, shape index: {}]
  %s9 = inlined_call_operand.vmem [shape: f32[20,40], index: 9, kind: input, shape index: {}]
  %s10 = inlined_call_operand.vmem [shape: f32[20,1], index: 10, kind: input, shape index: {}]
  %s11 = inlined_call_operand.vmem [shape: f32[1,20], index: 11, kind: input, shape index: {}]
  %s12 = inlined_call_operand.<no memory space> [shape: f32[1,1], index: 12, kind: input, shape index: {}]
  %s13 = inlined_call_operand.vmem [shape: f32[1,1,128], index: 13, kind: output, shape index: {}]
  %s14 = sld [smem:[#allocation0]]
  $region74: #{cnn_forward.1} parent=0
    _
  %s16 = ssub.s32 1, %s14
  %s17 = scalar_select 0, %s16, %s14
  %18 = sst [smem:[#allocation2]] %s4
  %v19 = vstv %s12
  %20 = vst [vmem:[#allocation3] sm:$0x1] %v19
  $region1: #{cnn_forward.1} parent=0
    #allocation4 [shape = 'u8[4096]{0}', space=smem, size = 0x1000, scoped, tag = 'input window, operand 1, single buffered']
    #allocation5 [shape = 's32[1]{0}', space=sflag, size = 0x4, scoped, tag = 'scoped memory for cnn_forward.1']
    #allocation6 [shape = 'u8[512]{0}', space=smem, size = 0x200, scoped, tag = 'input window, operand 2, single buffered']
    #allocation7 [shape = 's32[1]{0}', space=sflag, size = 0x4, scoped, tag = 'scoped memory for cnn_forward.1']
    #allocation8 [shape = 'u8[4096]{0}', space=smem, size = 0x1000, scoped, tag = 'input window, operand 3, single buffered']
    %21 = vsyncpa [#allocation5], 0
    %22 = vsyncpa [#allocation7], 0
    // Predicated region
    $region2: #{cnn_forward.1} parent=1 // pred_check
      _
    $region3: #{cnn_forward.1} parent=1 // pred_check_branch
      %24 = sbr.rel (0) target = $region5
    $region4: #{cnn_forward.1} parent=1 // pred_region
      _
    $region5: #{cnn_forward.1} parent=1 // pred_fallthru
      _
    // Predicated region
    $region6: #{cnn_forward.1} parent=1 // pred_check
      _
    $region7: #{cnn_forward.1} parent=1 // pred_check_branch
      %26 = sbr.rel (0) target = $region9
    $region8: #{cnn_forward.1} parent=1 // pred_region
      %s28 = ssub.s32 128, 128
      %29 = vsyncadd [#allocation5], %s28
      %s31 = sshll.u32 %s1, 4
      %s32 = int_to_ptr.vmem [resolvable:$true] %s31
      %34 = dma.vmem_to_smem %s32, 128, [#allocation4], [#allocation5]
    $region9: #{cnn_forward.1} parent=1 // pred_fallthru
      _
    // Predicated region
    $region10: #{cnn_forward.1} parent=1 // pred_check
      _
    $region11: #{cnn_forward.1} parent=1 // pred_check_branch
      %36 = sbr.rel (0) target = $region13
    $region12: #{cnn_forward.1} parent=1 // pred_region
      %s38 = ssub.s32 16, 16
      %39 = vsyncadd [#allocation7], %s38
      %s41 = sshll.u32 %s2, 4
      %s42 = int_to_ptr.vmem [resolvable:$true] %s41
      %44 = dma.vmem_to_smem %s42, 16, [#allocation6], [#allocation7]
    $region13: #{cnn_forward.1} parent=1 // pred_fallthru
      _
    // Predicated region
    $region14: #{cnn_forward.1} parent=1 // pred_check
      _
    $region15: #{cnn_forward.1} parent=1 // pred_check_branch
      %46 = sbr.rel (0) target = $region17
    $region16: #{cnn_forward.1} parent=1 // pred_region
      %s48 = ssub.s32 128, 128
      %49 = vsyncadd [#allocation7], %s48
      %s51 = sshll.u32 %s3, 4
      %s52 = int_to_ptr.vmem [resolvable:$true] %s51
      %54 = dma.vmem_to_smem %s52, 128, [#allocation8], [#allocation7]
    $region17: #{cnn_forward.1} parent=1 // pred_fallthru
      _
    // Predicated region
    $region18: #{cnn_forward.1} parent=1 // pred_check
      _
    $region19: #{cnn_forward.1} parent=1 // pred_check_branch
      %56 = sbr.rel (0) target = $region21
    $region20: #{cnn_forward.1} parent=1 // pred_region
      _
    $region21: #{cnn_forward.1} parent=1 // pred_fallthru
      _
    // Predicated region
    $region22: #{cnn_forward.1} parent=1 // pred_check
      _
    $region23: #{cnn_forward.1} parent=1 // pred_check_branch
      %58 = sbr.rel (0) target = $region25
    $region24: #{cnn_forward.1} parent=1 // pred_region
      _
    $region25: #{cnn_forward.1} parent=1 // pred_fallthru
      _
    // Predicated region
    $region26: #{cnn_forward.1} parent=1 // pred_check
      _
    $region27: #{cnn_forward.1} parent=1 // pred_check_branch
      %60 = sbr.rel (0) target = $region29
    $region28: #{cnn_forward.1} parent=1 // pred_region
      _
    $region29: #{cnn_forward.1} parent=1 // pred_fallthru
      _
    // Predicated region
    $region30: #{cnn_forward.1} parent=1 // pred_check
      _
    $region31: #{cnn_forward.1} parent=1 // pred_check_branch
      %62 = sbr.rel (0) target = $region33
    $region32: #{cnn_forward.1} parent=1 // pred_region
      _
    $region33: #{cnn_forward.1} parent=1 // pred_fallthru
      _
    // Predicated region
    $region34: #{cnn_forward.1} parent=1 // pred_check
      _
    $region35: #{cnn_forward.1} parent=1 // pred_check_branch
      %64 = sbr.rel (0) target = $region37
    $region36: #{cnn_forward.1} parent=1 // pred_region
      _
    $region37: #{cnn_forward.1} parent=1 // pred_fallthru
      _
    // Predicated region
    $region38: #{cnn_forward.1} parent=1 // pred_check
      _
    $region39: #{cnn_forward.1} parent=1 // pred_check_branch
      %66 = sbr.rel (0) target = $region41
    $region40: #{cnn_forward.1} parent=1 // pred_region
      _
    $region41: #{cnn_forward.1} parent=1 // pred_fallthru
      _
    // Predicated region
    $region42: #{cnn_forward.1} parent=1 // pred_check
      _
    $region43: #{cnn_forward.1} parent=1 // pred_check_branch
      %68 = sbr.rel (0) target = $region45
    $region44: #{cnn_forward.1} parent=1 // pred_region
      _
    $region45: #{cnn_forward.1} parent=1 // pred_fallthru
      _
    // Predicated region
    $region46: #{cnn_forward.1} parent=1 // pred_check
      _
    $region47: #{cnn_forward.1} parent=1 // pred_check_branch
      %70 = sbr.rel (0) target = $region49
    $region48: #{cnn_forward.1} parent=1 // pred_region
      _
    $region49: #{cnn_forward.1} parent=1 // pred_fallthru
      _
    // Predicated region
    $region50: #{cnn_forward.1} parent=1 // pred_check
      _
    $region51: #{cnn_forward.1} parent=1 // pred_check_branch
      %72 = sbr.rel (0) target = $region53
    $region52: #{cnn_forward.1} parent=1 // pred_region
      _
    $region53: #{cnn_forward.1} parent=1 // pred_fallthru
      _
    // Predicated region
    $region54: #{cnn_forward.1} parent=1 // pred_check
      _
    $region55: #{cnn_forward.1} parent=1 // pred_check_branch
      %74 = sbr.rel (0) target = $region57
    $region56: #{cnn_forward.1} parent=1 // pred_region
      %75 = dma.done [#allocation5], 128
    $region57: #{cnn_forward.1} parent=1 // pred_fallthru
      _
    // Predicated region
    $region58: #{cnn_forward.1} parent=1 // pred_check
      _
    $region59: #{cnn_forward.1} parent=1 // pred_check_branch
      %77 = sbr.rel (0) target = $region61
    $region60: #{cnn_forward.1} parent=1 // pred_region
      %78 = dma.done [#allocation7], 16
    $region61: #{cnn_forward.1} parent=1 // pred_fallthru
      _
    // Predicated region
    $region62: #{cnn_forward.1} parent=1 // pred_check
      _
    $region63: #{cnn_forward.1} parent=1 // pred_check_branch
      %80 = sbr.rel (0) target = $region65
    $region64: #{cnn_forward.1} parent=1 // pred_region
      %81 = dma.done [#allocation7], 128
    $region65: #{cnn_forward.1} parent=1 // pred_fallthru
      _
    %82 = sfence
    %s83 = sld [smem:[#allocation4]]
    %s84 = sld [smem:[#allocation4 + $0x1]]
    %v85 = vld [vmem:[%s0] sm:$0xff]
    %v86 = vld [vmem:[%s0 + $0x8] sm:$0xff]
    %v87 = vld [vmem:[%s0 + $0x10] sm:$0xff]
    %v88 = vld [vmem:[%s0 + $0x18] sm:$0xff]
    %v89 = vld [vmem:[%s0 + $0x20] sm:$0xff]
    %v90 = vld [vmem:[%s0 + $0x28] sm:$0xff]
    %v91 = vld [vmem:[%s0 + $0x30] sm:$0xff]
    %v92 = vld [vmem:[%s0 + $0x38] sm:$0xff]
    %v93 = vld [vmem:[%s0 + $0x40] sm:$0xff]
    %s94 = scalar_lea.vmem %s0, 72
    %v95 = vld [vmem:[%s94] sm:$0xff]
    %v96 = vld [vmem:[%s94 + $0x8] sm:$0xff]
    %v97 = vld [vmem:[%s94 + $0x10] sm:$0xff]
    %v98 = vld [vmem:[%s94 + $0x18] sm:$0xff]
    %v99 = vld [vmem:[%s94 + $0x20] sm:$0xff]
    %v100 = vld [vmem:[%s94 + $0x28] sm:$0xff]
    %v101 = vld [vmem:[%s94 + $0x30] sm:$0xff]
    %v102 = vld [vmem:[%s94 + $0x38] sm:$0xff]
    %v103 = vld [vmem:[%s94 + $0x40] sm:$0xff]
    %s104 = scalar_lea.vmem %s0, 144
    %v105 = vld [vmem:[%s104] sm:$0xff]
    %v106 = vld [vmem:[%s104 + $0x8] sm:$0xff]
    %v107 = vld [vmem:[%s104 + $0x10] sm:$0xff]
    %v108 = vld [vmem:[%s104 + $0x18] sm:$0xff]
    %v109 = vld [vmem:[%s104 + $0x20] sm:$0xff]
    %v110 = vld [vmem:[%s104 + $0x28] sm:$0xff]
    %v111 = vld [vmem:[%s104 + $0x30] sm:$0xff]
    %v112 = vld [vmem:[%s104 + $0x38] sm:$0xff]
    %v113 = vld [vmem:[%s104 + $0x40] sm:$0xff]
    %s114 = scalar_lea.vmem %s0, 216
    %v115 = vld [vmem:[%s114] sm:$0xff]
    %v116 = vld [vmem:[%s114 + $0x8] sm:$0xff]
    %v117 = vld [vmem:[%s114 + $0x10] sm:$0xff]
    %v118 = vld [vmem:[%s114 + $0x18] sm:$0xff]
    %v119 = vld [vmem:[%s114 + $0x20] sm:$0xff]
    %v120 = vld [vmem:[%s114 + $0x28] sm:$0xff]
    %v121 = vld [vmem:[%s114 + $0x30] sm:$0xff]
    %v122 = vld [vmem:[%s114 + $0x38] sm:$0xff]
    %v123 = vld [vmem:[%s114 + $0x40] sm:$0xff]
    %v124 = vstv %s83
    %v125 = vmul.f32 %v124, %v85
    %v126 = vmul.f32 %v124, %v86
    %v127 = vmul.f32 %v124, %v87
    %v128 = vmul.f32 %v124, %v88
    %v129 = vmul.f32 %v124, %v89
    %v130 = vmul.f32 %v124, %v90
    %v131 = vmul.f32 %v124, %v91
    %v132 = vmul.f32 %v124, %v92
    %v133 = vmul.f32 %v124, %v93
    %v134 = vstv %s84
    %v135 = vmul.f32 %v134, %v95
    %v136 = vmul.f32 %v134, %v96
    %v137 = vmul.f32 %v134, %v97
    %v138 = vmul.f32 %v134, %v98
    %v139 = vmul.f32 %v134, %v99
    %v140 = vmul.f32 %v134, %v100
    %v141 = vmul.f32 %v134, %v101
    %v142 = vmul.f32 %v134, %v102
    %v143 = vmul.f32 %v134, %v103
    %v144 = vadd.f32 %v125, %v135
    %v145 = vadd.f32 %v126, %v136
    %v146 = vadd.f32 %v127, %v137
    %v147 = vadd.f32 %v128, %v138
    %v148 = vadd.f32 %v129, %v139
    %v149 = vadd.f32 %v130, %v140
    %v150 = vadd.f32 %v131, %v141
    %v151 = vadd.f32 %v132, %v142
    %v152 = vadd.f32 %v133, %v143
    %v153 = vmul.f32 %v124, %v95
    %v154 = vmul.f32 %v124, %v96
    %v155 = vmul.f32 %v124, %v97
    %v156 = vmul.f32 %v124, %v98
    %v157 = vmul.f32 %v124, %v99
    %v158 = vmul.f32 %v124, %v100
    %v159 = vmul.f32 %v124, %v101
    %v160 = vmul.f32 %v124, %v102
    %v161 = vmul.f32 %v124, %v103
    %v162 = vmul.f32 %v134, %v105
    %v163 = vmul.f32 %v134, %v106
    %v164 = vmul.f32 %v134, %v107
    %v165 = vmul.f32 %v134, %v108
    %v166 = vmul.f32 %v134, %v109
    %v167 = vmul.f32 %v134, %v110
    %v168 = vmul.f32 %v134, %v111
    %v169 = vmul.f32 %v134, %v112
    %v170 = vmul.f32 %v134, %v113
    %v171 = vadd.f32 %v153, %v162
    %v172 = vadd.f32 %v154, %v163
    %v173 = vadd.f32 %v155, %v164
    %v174 = vadd.f32 %v156, %v165
    %v175 = vadd.f32 %v157, %v166
    %v176 = vadd.f32 %v158, %v167
    %v177 = vadd.f32 %v159, %v168
    %v178 = vadd.f32 %v160, %v169
    %v179 = vadd.f32 %v161, %v170
    %v180 = vmul.f32 %v124, %v105
    %v181 = vmul.f32 %v124, %v106
    %v182 = vmul.f32 %v124, %v107
    %v183 = vmul.f32 %v124, %v108
    %v184 = vmul.f32 %v124, %v109
    %v185 = vmul.f32 %v124, %v110
    %v186 = vmul.f32 %v124, %v111
    %v187 = vmul.f32 %v124, %v112
    %v188 = vmul.f32 %v124, %v113
    %v189 = vmul.f32 %v134, %v115
    %v190 = vmul.f32 %v134, %v116
    %v191 = vmul.f32 %v134, %v117
    %v192 = vmul.f32 %v134, %v118
    %v193 = vmul.f32 %v134, %v119
    %v194 = vmul.f32 %v134, %v120
    %v195 = vmul.f32 %v134, %v121
    %v196 = vmul.f32 %v134, %v122
    %v197 = vmul.f32 %v134, %v123
    %v198 = vadd.f32 %v180, %v189
    %v199 = vadd.f32 %v181, %v190
    %v200 = vadd.f32 %v182, %v191
    %v201 = vadd.f32 %v183, %v192
    %v202 = vadd.f32 %v184, %v193
    %v203 = vadd.f32 %v185, %v194
    %v204 = vadd.f32 %v186, %v195
    %v205 = vadd.f32 %v187, %v196
    %v206 = vadd.f32 %v188, %v197
    %v207 = vmul.f32 %v124, %v115
    %v208 = vmul.f32 %v124, %v116
    %v209 = vmul.f32 %v124, %v117
    %v210 = vmul.f32 %v124, %v118
    %v211 = vmul.f32 %v124, %v119
    %v212 = vmul.f32 %v124, %v120
    %v213 = vmul.f32 %v124, %v121
    %v214 = vmul.f32 %v124, %v122
    %v215 = vmul.f32 %v124, %v123
    %v216 = vmul.f32 %v134, %v85
    %v217 = vmul.f32 %v134, %v86
    %v218 = vmul.f32 %v134, %v87
    %v219 = vmul.f32 %v134, %v88
    %v220 = vmul.f32 %v134, %v89
    %v221 = vmul.f32 %v134, %v90
    %v222 = vmul.f32 %v134, %v91
    %v223 = vmul.f32 %v134, %v92
    %v224 = vmul.f32 %v134, %v93
    %vm234 = vcmask 1046528
    %v235 = vrot.slane %v216, 1
    %v236 = vrot.slane %v217, 1
    %v237 = vsel %vm234, %v235, %v236
    %v238 = vrot.slane %v218, 1
    %v239 = vsel %vm234, %v236, %v238
    %v240 = vrot.slane %v219, 1
    %v241 = vsel %vm234, %v238, %v240
    %v242 = vrot.slane %v220, 1
    %v243 = vsel %vm234, %v240, %v242
    %v244 = vrot.slane %v221, 1
    %v245 = vsel %vm234, %v242, %v244
    %v246 = vrot.slane %v222, 1
    %v247 = vsel %vm234, %v244, %v246
    %v248 = vrot.slane %v223, 1
    %v249 = vsel %vm234, %v246, %v248
    %v250 = vrot.slane %v224, 1
    %v251 = vsel %vm234, %v248, %v250
    %v261 = vadd.f32 %v207, %v237
    %v262 = vadd.f32 %v208, %v239
    %v263 = vadd.f32 %v209, %v241
    %v264 = vadd.f32 %v210, %v243
    %v265 = vadd.f32 %v211, %v245
    %v266 = vadd.f32 %v212, %v247
    %v267 = vadd.f32 %v213, %v249
    %v268 = vadd.f32 %v214, %v251
    %v269 = vadd.f32 %v215, %v250
    %s270 = sld [smem:[#allocation4 + $0x2]]
    %s271 = sld [smem:[#allocation4 + $0x3]]
    %s272 = scalar_lea.vmem %s0, 288
    %v273 = vld [vmem:[%s272] sm:$0xff]
    %v274 = vld [vmem:[%s272 + $0x8] sm:$0xff]
    %v275 = vld [vmem:[%s272 + $0x10] sm:$0xff]
    %v276 = vld [vmem:[%s272 + $0x18] sm:$0xff]
    %v277 = vld [vmem:[%s272 + $0x20] sm:$0xff]
    %v278 = vld [vmem:[%s272 + $0x28] sm:$0xff]
    %v279 = vld [vmem:[%s272 + $0x30] sm:$0xff]
    %v280 = vld [vmem:[%s272 + $0x38] sm:$0xff]
    %v281 = vld [vmem:[%s272 + $0x40] sm:$0xff]
    %s282 = scalar_lea.vmem %s0, 360
    %v283 = vld [vmem:[%s282] sm:$0xff]
    %v284 = vld [vmem:[%s282 + $0x8] sm:$0xff]
    %v285 = vld [vmem:[%s282 + $0x10] sm:$0xff]
    %v286 = vld [vmem:[%s282 + $0x18] sm:$0xff]
    %v287 = vld [vmem:[%s282 + $0x20] sm:$0xff]
    %v288 = vld [vmem:[%s282 + $0x28] sm:$0xff]
    %v289 = vld [vmem:[%s282 + $0x30] sm:$0xff]
    %v290 = vld [vmem:[%s282 + $0x38] sm:$0xff]
    %v291 = vld [vmem:[%s282 + $0x40] sm:$0xff]
    %s292 = scalar_lea.vmem %s0, 432
    %v293 = vld [vmem:[%s292] sm:$0xff]
    %v294 = vld [vmem:[%s292 + $0x8] sm:$0xff]
    %v295 = vld [vmem:[%s292 + $0x10] sm:$0xff]
    %v296 = vld [vmem:[%s292 + $0x18] sm:$0xff]
    %v297 = vld [vmem:[%s292 + $0x20] sm:$0xff]
    %v298 = vld [vmem:[%s292 + $0x28] sm:$0xff]
    %v299 = vld [vmem:[%s292 + $0x30] sm:$0xff]
    %v300 = vld [vmem:[%s292 + $0x38] sm:$0xff]
    %v301 = vld [vmem:[%s292 + $0x40] sm:$0xff]
    %s302 = scalar_lea.vmem %s0, 504
    %v303 = vld [vmem:[%s302] sm:$0xff]
    %v304 = vld [vmem:[%s302 + $0x8] sm:$0xff]
    %v305 = vld [vmem:[%s302 + $0x10] sm:$0xff]
    %v306 = vld [vmem:[%s302 + $0x18] sm:$0xff]
    %v307 = vld [vmem:[%s302 + $0x20] sm:$0xff]
    %v308 = vld [vmem:[%s302 + $0x28] sm:$0xff]
    %v309 = vld [vmem:[%s302 + $0x30] sm:$0xff]
    %v310 = vld [vmem:[%s302 + $0x38] sm:$0xff]
    %v311 = vld [vmem:[%s302 + $0x40] sm:$0xff]
    %v312 = vstv %s270
    %v313 = vmul.f32 %v312, %v273
    %v314 = vmul.f32 %v312, %v274
    %v315 = vmul.f32 %v312, %v275
    %v316 = vmul.f32 %v312, %v276
    %v317 = vmul.f32 %v312, %v277
    %v318 = vmul.f32 %v312, %v278
    %v319 = vmul.f32 %v312, %v279
    %v320 = vmul.f32 %v312, %v280
    %v321 = vmul.f32 %v312, %v281
    %v322 = vstv %s271
    %v323 = vmul.f32 %v322, %v283
    %v324 = vmul.f32 %v322, %v284
    %v325 = vmul.f32 %v322, %v285
    %v326 = vmul.f32 %v322, %v286
    %v327 = vmul.f32 %v322, %v287
    %v328 = vmul.f32 %v322, %v288
    %v329 = vmul.f32 %v322, %v289
    %v330 = vmul.f32 %v322, %v290
    %v331 = vmul.f32 %v322, %v291
    %v332 = vadd.f32 %v313, %v323
    %v333 = vadd.f32 %v314, %v324
    %v334 = vadd.f32 %v315, %v325
    %v335 = vadd.f32 %v316, %v326
    %v336 = vadd.f32 %v317, %v327
    %v337 = vadd.f32 %v318, %v328
    %v338 = vadd.f32 %v319, %v329
    %v339 = vadd.f32 %v320, %v330
    %v340 = vadd.f32 %v321, %v331
    %v341 = vmul.f32 %v312, %v283
    %v342 = vmul.f32 %v312, %v284
    %v343 = vmul.f32 %v312, %v285
    %v344 = vmul.f32 %v312, %v286
    %v345 = vmul.f32 %v312, %v287
    %v346 = vmul.f32 %v312, %v288
    %v347 = vmul.f32 %v312, %v289
    %v348 = vmul.f32 %v312, %v290
    %v349 = vmul.f32 %v312, %v291
    %v350 = vmul.f32 %v322, %v293
    %v351 = vmul.f32 %v322, %v294
    %v352 = vmul.f32 %v322, %v295
    %v353 = vmul.f32 %v322, %v296
    %v354 = vmul.f32 %v322, %v297
    %v355 = vmul.f32 %v322, %v298
    %v356 = vmul.f32 %v322, %v299
    %v357 = vmul.f32 %v322, %v300
    %v358 = vmul.f32 %v322, %v301
    %v359 = vadd.f32 %v341, %v350
    %v360 = vadd.f32 %v342, %v351
    %v361 = vadd.f32 %v343, %v352
    %v362 = vadd.f32 %v344, %v353
    %v363 = vadd.f32 %v345, %v354
    %v364 = vadd.f32 %v346, %v355
    %v365 = vadd.f32 %v347, %v356
    %v366 = vadd.f32 %v348, %v357
    %v367 = vadd.f32 %v349, %v358
    %v368 = vmul.f32 %v312, %v293
    %v369 = vmul.f32 %v312, %v294
    %v370 = vmul.f32 %v312, %v295
    %v371 = vmul.f32 %v312, %v296
    %v372 = vmul.f32 %v312, %v297
    %v373 = vmul.f32 %v312, %v298
    %v374 = vmul.f32 %v312, %v299
    %v375 = vmul.f32 %v312, %v300
    %v376 = vmul.f32 %v312, %v301
    %v377 = vmul.f32 %v322, %v303
    %v378 = vmul.f32 %v322, %v304
    %v379 = vmul.f32 %v322, %v305
    %v380 = vmul.f32 %v322, %v306
    %v381 = vmul.f32 %v322, %v307
    %v382 = vmul.f32 %v322, %v308
    %v383 = vmul.f32 %v322, %v309
    %v384 = vmul.f32 %v322, %v310
    %v385 = vmul.f32 %v322, %v311
    %v386 = vadd.f32 %v368, %v377
    %v387 = vadd.f32 %v369, %v378
    %v388 = vadd.f32 %v370, %v379
    %v389 = vadd.f32 %v371, %v380
    %v390 = vadd.f32 %v372, %v381
    %v391 = vadd.f32 %v373, %v382
    %v392 = vadd.f32 %v374, %v383
    %v393 = vadd.f32 %v375, %v384
    %v394 = vadd.f32 %v376, %v385
    %v395 = vmul.f32 %v312, %v303
    %v396 = vmul.f32 %v312, %v304
    %v397 = vmul.f32 %v312, %v305
    %v398 = vmul.f32 %v312, %v306
    %v399 = vmul.f32 %v312, %v307
    %v400 = vmul.f32 %v312, %v308
    %v401 = vmul.f32 %v312, %v309
    %v402 = vmul.f32 %v312, %v310
    %v403 = vmul.f32 %v312, %v311
    %v404 = vmul.f32 %v322, %v273
    %v405 = vmul.f32 %v322, %v274
    %v406 = vmul.f32 %v322, %v275
    %v407 = vmul.f32 %v322, %v276
    %v408 = vmul.f32 %v322, %v277
    %v409 = vmul.f32 %v322, %v278
    %v410 = vmul.f32 %v322, %v279
    %v411 = vmul.f32 %v322, %v280
    %v412 = vmul.f32 %v322, %v281
    %v422 = vrot.slane %v404, 1
    %v423 = vrot.slane %v405, 1
    %v424 = vsel %vm234, %v422, %v423
    %v425 = vrot.slane %v406, 1
    %v426 = vsel %vm234, %v423, %v425
    %v427 = vrot.slane %v407, 1
    %v428 = vsel %vm234, %v425, %v427
    %v429 = vrot.slane %v408, 1
    %v430 = vsel %vm234, %v427, %v429
    %v431 = vrot.slane %v409, 1
    %v432 = vsel %vm234, %v429, %v431
    %v433 = vrot.slane %v410, 1
    %v434 = vsel %vm234, %v431, %v433
    %v435 = vrot.slane %v411, 1
    %v436 = vsel %vm234, %v433, %v435
    %v437 = vrot.slane %v412, 1
    %v438 = vsel %vm234, %v435, %v437
    %v448 = vadd.f32 %v395, %v424
    %v449 = vadd.f32 %v396, %v426
    %v450 = vadd.f32 %v397, %v428
    %v451 = vadd.f32 %v398, %v430
    %v452 = vadd.f32 %v399, %v432
    %v453 = vadd.f32 %v400, %v434
    %v454 = vadd.f32 %v401, %v436
    %v455 = vadd.f32 %v402, %v438
    %v456 = vadd.f32 %v403, %v437
    %v457 = vadd.f32 %v144, %v332
    %v458 = vadd.f32 %v145, %v333
    %v459 = vadd.f32 %v146, %v334
    %v460 = vadd.f32 %v147, %v335
    %v461 = vadd.f32 %v148, %v336
    %v462 = vadd.f32 %v149, %v337
    %v463 = vadd.f32 %v150, %v338
    %v464 = vadd.f32 %v151, %v339
    %v465 = vadd.f32 %v152, %v340
    %v466 = vadd.f32 %v171, %v359
    %v467 = vadd.f32 %v172, %v360
    %v468 = vadd.f32 %v173, %v361
    %v469 = vadd.f32 %v174, %v362
    %v470 = vadd.f32 %v175, %v363
    %v471 = vadd.f32 %v176, %v364
    %v472 = vadd.f32 %v177, %v365
    %v473 = vadd.f32 %v178, %v366
    %v474 = vadd.f32 %v179, %v367
    %v475 = vadd.f32 %v198, %v386
    %v476 = vadd.f32 %v199, %v387
    %v477 = vadd.f32 %v200, %v388
    %v478 = vadd.f32 %v201, %v389
    %v479 = vadd.f32 %v202, %v390
    %v480 = vadd.f32 %v203, %v391
    %v481 = vadd.f32 %v204, %v392
    %v482 = vadd.f32 %v205, %v393
    %v483 = vadd.f32 %v206, %v394
    %v484 = vadd.f32 %v261, %v448
    %v485 = vadd.f32 %v262, %v449
    %v486 = vadd.f32 %v263, %v450
    %v487 = vadd.f32 %v264, %v451
    %v488 = vadd.f32 %v265, %v452
    %v489 = vadd.f32 %v266, %v453
    %v490 = vadd.f32 %v267, %v454
    %v491 = vadd.f32 %v268, %v455
    %v492 = vadd.f32 %v269, %v456
    %s493 = sld [smem:[#allocation4 + $0x4]]
    %s494 = sld [smem:[#allocation4 + $0x5]]
    %s495 = scalar_lea.vmem %s0, 576
    %v496 = vld [vmem:[%s495] sm:$0xff]
    %v497 = vld [vmem:[%s495 + $0x8] sm:$0xff]
    %v498 = vld [vmem:[%s495 + $0x10] sm:$0xff]
    %v499 = vld [vmem:[%s495 + $0x18] sm:$0xff]
    %v500 = vld [vmem:[%s495 + $0x20] sm:$0xff]
    %v501 = vld [vmem:[%s495 + $0x28] sm:$0xff]
    %v502 = vld [vmem:[%s495 + $0x30] sm:$0xff]
    %v503 = vld [vmem:[%s495 + $0x38] sm:$0xff]
    %v504 = vld [vmem:[%s495 + $0x40] sm:$0xff]
    %s505 = scalar_lea.vmem %s0, 648
    %v506 = vld [vmem:[%s505] sm:$0xff]
    %v507 = vld [vmem:[%s505 + $0x8] sm:$0xff]
    %v508 = vld [vmem:[%s505 + $0x10] sm:$0xff]
    %v509 = vld [vmem:[%s505 + $0x18] sm:$0xff]
    %v510 = vld [vmem:[%s505 + $0x20] sm:$0xff]
    %v511 = vld [vmem:[%s505 + $0x28] sm:$0xff]
    %v512 = vld [vmem:[%s505 + $0x30] sm:$0xff]
    %v513 = vld [vmem:[%s505 + $0x38] sm:$0xff]
    %v514 = vld [vmem:[%s505 + $0x40] sm:$0xff]
    %s515 = scalar_lea.vmem %s0, 720
    %v516 = vld [vmem:[%s515] sm:$0xff]
    %v517 = vld [vmem:[%s515 + $0x8] sm:$0xff]
    %v518 = vld [vmem:[%s515 + $0x10] sm:$0xff]
    %v519 = vld [vmem:[%s515 + $0x18] sm:$0xff]
    %v520 = vld [vmem:[%s515 + $0x20] sm:$0xff]
    %v521 = vld [vmem:[%s515 + $0x28] sm:$0xff]
    %v522 = vld [vmem:[%s515 + $0x30] sm:$0xff]
    %v523 = vld [vmem:[%s515 + $0x38] sm:$0xff]
    %v524 = vld [vmem:[%s515 + $0x40] sm:$0xff]
    %s525 = scalar_lea.vmem %s0, 792
    %v526 = vld [vmem:[%s525] sm:$0xff]
    %v527 = vld [vmem:[%s525 + $0x8] sm:$0xff]
    %v528 = vld [vmem:[%s525 + $0x10] sm:$0xff]
    %v529 = vld [vmem:[%s525 + $0x18] sm:$0xff]
    %v530 = vld [vmem:[%s525 + $0x20] sm:$0xff]
    %v531 = vld [vmem:[%s525 + $0x28] sm:$0xff]
    %v532 = vld [vmem:[%s525 + $0x30] sm:$0xff]
    %v533 = vld [vmem:[%s525 + $0x38] sm:$0xff]
    %v534 = vld [vmem:[%s525 + $0x40] sm:$0xff]
    %v535 = vstv %s493
    %v536 = vmul.f32 %v535, %v496
    %v537 = vmul.f32 %v535, %v497
    %v538 = vmul.f32 %v535, %v498
    %v539 = vmul.f32 %v535, %v499
    %v540 = vmul.f32 %v535, %v500
    %v541 = vmul.f32 %v535, %v501
    %v542 = vmul.f32 %v535, %v502
    %v543 = vmul.f32 %v535, %v503
    %v544 = vmul.f32 %v535, %v504
    %v545 = vstv %s494
    %v546 = vmul.f32 %v545, %v506
    %v547 = vmul.f32 %v545, %v507
    %v548 = vmul.f32 %v545, %v508
    %v549 = vmul.f32 %v545, %v509
    %v550 = vmul.f32 %v545, %v510
    %v551 = vmul.f32 %v545, %v511
    %v552 = vmul.f32 %v545, %v512
    %v553 = vmul.f32 %v545, %v513
    %v554 = vmul.f32 %v545, %v514
    %v555 = vadd.f32 %v536, %v546
    %v556 = vadd.f32 %v537, %v547
    %v557 = vadd.f32 %v538, %v548
    %v558 = vadd.f32 %v539, %v549
    %v559 = vadd.f32 %v540, %v550
    %v560 = vadd.f32 %v541, %v551
    %v561 = vadd.f32 %v542, %v552
    %v562 = vadd.f32 %v543, %v553
    %v563 = vadd.f32 %v544, %v554
    %v564 = vmul.f32 %v535, %v506
    %v565 = vmul.f32 %v535, %v507
    %v566 = vmul.f32 %v535, %v508
    %v567 = vmul.f32 %v535, %v509
    %v568 = vmul.f32 %v535, %v510
    %v569 = vmul.f32 %v535, %v511
    %v570 = vmul.f32 %v535, %v512
    %v571 = vmul.f32 %v535, %v513
    %v572 = vmul.f32 %v535, %v514
    %v573 = vmul.f32 %v545, %v516
    %v574 = vmul.f32 %v545, %v517
    %v575 = vmul.f32 %v545, %v518
    %v576 = vmul.f32 %v545, %v519
    %v577 = vmul.f32 %v545, %v520
    %v578 = vmul.f32 %v545, %v521
    %v579 = vmul.f32 %v545, %v522
    %v580 = vmul.f32 %v545, %v523
    %v581 = vmul.f32 %v545, %v524
    %v582 = vadd.f32 %v564, %v573
    %v583 = vadd.f32 %v565, %v574
    %v584 = vadd.f32 %v566, %v575
    %v585 = vadd.f32 %v567, %v576
    %v586 = vadd.f32 %v568, %v577
    %v587 = vadd.f32 %v569, %v578
    %v588 = vadd.f32 %v570, %v579
    %v589 = vadd.f32 %v571, %v580
    %v590 = vadd.f32 %v572, %v581
    %v591 = vmul.f32 %v535, %v516
    %v592 = vmul.f32 %v535, %v517
    %v593 = vmul.f32 %v535, %v518
    %v594 = vmul.f32 %v535, %v519
    %v595 = vmul.f32 %v535, %v520
    %v596 = vmul.f32 %v535, %v521
    %v597 = vmul.f32 %v535, %v522
    %v598 = vmul.f32 %v535, %v523
    %v599 = vmul.f32 %v535, %v524
    %v600 = vmul.f32 %v545, %v526
    %v601 = vmul.f32 %v545, %v527
    %v602 = vmul.f32 %v545, %v528
    %v603 = vmul.f32 %v545, %v529
    %v604 = vmul.f32 %v545, %v530
    %v605 = vmul.f32 %v545, %v531
    %v606 = vmul.f32 %v545, %v532
    %v607 = vmul.f32 %v545, %v533
    %v608 = vmul.f32 %v545, %v534
    %v609 = vadd.f32 %v591, %v600
    %v610 = vadd.f32 %v592, %v601
    %v611 = vadd.f32 %v593, %v602
    %v612 = vadd.f32 %v594, %v603
    %v613 = vadd.f32 %v595, %v604
    %v614 = vadd.f32 %v596, %v605
    %v615 = vadd.f32 %v597, %v606
    %v616 = vadd.f32 %v598, %v607
    %v617 = vadd.f32 %v599, %v608
    %v618 = vmul.f32 %v535, %v526
    %v619 = vmul.f32 %v535, %v527
    %v620 = vmul.f32 %v535, %v528
    %v621 = vmul.f32 %v535, %v529
    %v622 = vmul.f32 %v535, %v530
    %v623 = vmul.f32 %v535, %v531
    %v624 = vmul.f32 %v535, %v532
    %v625 = vmul.f32 %v535, %v533
    %v626 = vmul.f32 %v535, %v534
    %v627 = vmul.f32 %v545, %v496
    %v628 = vmul.f32 %v545, %v497
    %v629 = vmul.f32 %v545, %v498
    %v630 = vmul.f32 %v545, %v499
    %v631 = vmul.f32 %v545, %v500
    %v632 = vmul.f32 %v545, %v501
    %v633 = vmul.f32 %v545, %v502
    %v634 = vmul.f32 %v545, %v503
    %v635 = vmul.f32 %v545, %v504
    %v645 = vrot.slane %v627, 1
    %v646 = vrot.slane %v628, 1
    %v647 = vsel %vm234, %v645, %v646
    %v648 = vrot.slane %v629, 1
    %v649 = vsel %vm234, %v646, %v648
    %v650 = vrot.slane %v630, 1
    %v651 = vsel %vm234, %v648, %v650
    %v652 = vrot.slane %v631, 1
    %v653 = vsel %vm234, %v650, %v652
    %v654 = vrot.slane %v632, 1
    %v655 = vsel %vm234, %v652, %v654
    %v656 = vrot.slane %v633, 1
    %v657 = vsel %vm234, %v654, %v656
    %v658 = vrot.slane %v634, 1
    %v659 = vsel %vm234, %v656, %v658
    %v660 = vrot.slane %v635, 1
    %v661 = vsel %vm234, %v658, %v660
    %v671 = vadd.f32 %v618, %v647
    %v672 = vadd.f32 %v619, %v649
    %v673 = vadd.f32 %v620, %v651
    %v674 = vadd.f32 %v621, %v653
    %v675 = vadd.f32 %v622, %v655
    %v676 = vadd.f32 %v623, %v657
    %v677 = vadd.f32 %v624, %v659
    %v678 = vadd.f32 %v625, %v661
    %v679 = vadd.f32 %v626, %v660
    %v680 = vadd.f32 %v457, %v555
    %v681 = vadd.f32 %v458, %v556
    %v682 = vadd.f32 %v459, %v557
    %v683 = vadd.f32 %v460, %v558
    %v684 = vadd.f32 %v461, %v559
    %v685 = vadd.f32 %v462, %v560
    %v686 = vadd.f32 %v463, %v561
    %v687 = vadd.f32 %v464, %v562
    %v688 = vadd.f32 %v465, %v563
    %v689 = vadd.f32 %v466, %v582
    %v690 = vadd.f32 %v467, %v583
    %v691 = vadd.f32 %v468, %v584
    %v692 = vadd.f32 %v469, %v585
    %v693 = vadd.f32 %v470, %v586
    %v694 = vadd.f32 %v471, %v587
    %v695 = vadd.f32 %v472, %v588
    %v696 = vadd.f32 %v473, %v589
    %v697 = vadd.f32 %v474, %v590
    %v698 = vadd.f32 %v475, %v609
    %v699 = vadd.f32 %v476, %v610
    %v700 = vadd.f32 %v477, %v611
    %v701 = vadd.f32 %v478, %v612
    %v702 = vadd.f32 %v479, %v613
    %v703 = vadd.f32 %v480, %v614
    %v704 = vadd.f32 %v481, %v615
    %v705 = vadd.f32 %v482, %v616
    %v706 = vadd.f32 %v483, %v617
    %v707 = vadd.f32 %v484, %v671
    %v708 = vadd.f32 %v485, %v672
    %v709 = vadd.f32 %v486, %v673
    %v710 = vadd.f32 %v487, %v674
    %v711 = vadd.f32 %v488, %v675
    %v712 = vadd.f32 %v489, %v676
    %v713 = vadd.f32 %v490, %v677
    %v714 = vadd.f32 %v491, %v678
    %v715 = vadd.f32 %v492, %v679
    %s716 = sld [smem:[#allocation4 + $0x6]]
    %s717 = sld [smem:[#allocation4 + $0x7]]
    %s718 = scalar_lea.vmem %s0, 864
    %v719 = vld [vmem:[%s718] sm:$0xff]
    %v720 = vld [vmem:[%s718 + $0x8] sm:$0xff]
    %v721 = vld [vmem:[%s718 + $0x10] sm:$0xff]
    %v722 = vld [vmem:[%s718 + $0x18] sm:$0xff]
    %v723 = vld [vmem:[%s718 + $0x20] sm:$0xff]
    %v724 = vld [vmem:[%s718 + $0x28] sm:$0xff]
    %v725 = vld [vmem:[%s718 + $0x30] sm:$0xff]
    %v726 = vld [vmem:[%s718 + $0x38] sm:$0xff]
    %v727 = vld [vmem:[%s718 + $0x40] sm:$0xff]
    %s728 = scalar_lea.vmem %s0, 936
    %v729 = vld [vmem:[%s728] sm:$0xff]
    %v730 = vld [vmem:[%s728 + $0x8] sm:$0xff]
    %v731 = vld [vmem:[%s728 + $0x10] sm:$0xff]
    %v732 = vld [vmem:[%s728 + $0x18] sm:$0xff]
    %v733 = vld [vmem:[%s728 + $0x20] sm:$0xff]
    %v734 = vld [vmem:[%s728 + $0x28] sm:$0xff]
    %v735 = vld [vmem:[%s728 + $0x30] sm:$0xff]
    %v736 = vld [vmem:[%s728 + $0x38] sm:$0xff]
    %v737 = vld [vmem:[%s728 + $0x40] sm:$0xff]
    %s738 = scalar_lea.vmem %s0, 1008
    %v739 = vld [vmem:[%s738] sm:$0xff]
    %v740 = vld [vmem:[%s738 + $0x8] sm:$0xff]
    %v741 = vld [vmem:[%s738 + $0x10] sm:$0xff]
    %v742 = vld [vmem:[%s738 + $0x18] sm:$0xff]
    %v743 = vld [vmem:[%s738 + $0x20] sm:$0xff]
    %v744 = vld [vmem:[%s738 + $0x28] sm:$0xff]
    %v745 = vld [vmem:[%s738 + $0x30] sm:$0xff]
    %v746 = vld [vmem:[%s738 + $0x38] sm:$0xff]
    %v747 = vld [vmem:[%s738 + $0x40] sm:$0xff]
    %s748 = scalar_lea.vmem %s0, 1080
    %v749 = vld [vmem:[%s748] sm:$0xff]
    %v750 = vld [vmem:[%s748 + $0x8] sm:$0xff]
    %v751 = vld [vmem:[%s748 + $0x10] sm:$0xff]
    %v752 = vld [vmem:[%s748 + $0x18] sm:$0xff]
    %v753 = vld [vmem:[%s748 + $0x20] sm:$0xff]
    %v754 = vld [vmem:[%s748 + $0x28] sm:$0xff]
    %v755 = vld [vmem:[%s748 + $0x30] sm:$0xff]
    %v756 = vld [vmem:[%s748 + $0x38] sm:$0xff]
    %v757 = vld [vmem:[%s748 + $0x40] sm:$0xff]
    %v758 = vstv %s716
    %v759 = vmul.f32 %v758, %v719
    %v760 = vmul.f32 %v758, %v720
    %v761 = vmul.f32 %v758, %v721
    %v762 = vmul.f32 %v758, %v722
    %v763 = vmul.f32 %v758, %v723
    %v764 = vmul.f32 %v758, %v724
    %v765 = vmul.f32 %v758, %v725
    %v766 = vmul.f32 %v758, %v726
    %v767 = vmul.f32 %v758, %v727
    %v768 = vstv %s717
    %v769 = vmul.f32 %v768, %v729
    %v770 = vmul.f32 %v768, %v730
    %v771 = vmul.f32 %v768, %v731
    %v772 = vmul.f32 %v768, %v732
    %v773 = vmul.f32 %v768, %v733
    %v774 = vmul.f32 %v768, %v734
    %v775 = vmul.f32 %v768, %v735
    %v776 = vmul.f32 %v768, %v736
    %v777 = vmul.f32 %v768, %v737
    %v778 = vadd.f32 %v759, %v769
    %v779 = vadd.f32 %v760, %v770
    %v780 = vadd.f32 %v761, %v771
    %v781 = vadd.f32 %v762, %v772
    %v782 = vadd.f32 %v763, %v773
    %v783 = vadd.f32 %v764, %v774
    %v784 = vadd.f32 %v765, %v775
    %v785 = vadd.f32 %v766, %v776
    %v786 = vadd.f32 %v767, %v777
    %v787 = vmul.f32 %v758, %v729
    %v788 = vmul.f32 %v758, %v730
    %v789 = vmul.f32 %v758, %v731
    %v790 = vmul.f32 %v758, %v732
    %v791 = vmul.f32 %v758, %v733
    %v792 = vmul.f32 %v758, %v734
    %v793 = vmul.f32 %v758, %v735
    %v794 = vmul.f32 %v758, %v736
    %v795 = vmul.f32 %v758, %v737
    %v796 = vmul.f32 %v768, %v739
    %v797 = vmul.f32 %v768, %v740
    %v798 = vmul.f32 %v768, %v741
    %v799 = vmul.f32 %v768, %v742
    %v800 = vmul.f32 %v768, %v743
    %v801 = vmul.f32 %v768, %v744
    %v802 = vmul.f32 %v768, %v745
    %v803 = vmul.f32 %v768, %v746
    %v804 = vmul.f32 %v768, %v747
    %v805 = vadd.f32 %v787, %v796
    %v806 = vadd.f32 %v788, %v797
    %v807 = vadd.f32 %v789, %v798
    %v808 = vadd.f32 %v790, %v799
    %v809 = vadd.f32 %v791, %v800
    %v810 = vadd.f32 %v792, %v801
    %v811 = vadd.f32 %v793, %v802
    %v812 = vadd.f32 %v794, %v803
    %v813 = vadd.f32 %v795, %v804
    %v814 = vmul.f32 %v758, %v739
    %v815 = vmul.f32 %v758, %v740
    %v816 = vmul.f32 %v758, %v741
    %v817 = vmul.f32 %v758, %v742
    %v818 = vmul.f32 %v758, %v743
    %v819 = vmul.f32 %v758, %v744
    %v820 = vmul.f32 %v758, %v745
    %v821 = vmul.f32 %v758, %v746
    %v822 = vmul.f32 %v758, %v747
    %v823 = vmul.f32 %v768, %v749
    %v824 = vmul.f32 %v768, %v750
    %v825 = vmul.f32 %v768, %v751
    %v826 = vmul.f32 %v768, %v752
    %v827 = vmul.f32 %v768, %v753
    %v828 = vmul.f32 %v768, %v754
    %v829 = vmul.f32 %v768, %v755
    %v830 = vmul.f32 %v768, %v756
    %v831 = vmul.f32 %v768, %v757
    %v832 = vadd.f32 %v814, %v823
    %v833 = vadd.f32 %v815, %v824
    %v834 = vadd.f32 %v816, %v825
    %v835 = vadd.f32 %v817, %v826
    %v836 = vadd.f32 %v818, %v827
    %v837 = vadd.f32 %v819, %v828
    %v838 = vadd.f32 %v820, %v829
    %v839 = vadd.f32 %v821, %v830
    %v840 = vadd.f32 %v822, %v831
    %v841 = vmul.f32 %v758, %v749
    %v842 = vmul.f32 %v758, %v750
    %v843 = vmul.f32 %v758, %v751
    %v844 = vmul.f32 %v758, %v752
    %v845 = vmul.f32 %v758, %v753
    %v846 = vmul.f32 %v758, %v754
    %v847 = vmul.f32 %v758, %v755
    %v848 = vmul.f32 %v758, %v756
    %v849 = vmul.f32 %v758, %v757
    %v850 = vmul.f32 %v768, %v719
    %v851 = vmul.f32 %v768, %v720
    %v852 = vmul.f32 %v768, %v721
    %v853 = vmul.f32 %v768, %v722
    %v854 = vmul.f32 %v768, %v723
    %v855 = vmul.f32 %v768, %v724
    %v856 = vmul.f32 %v768, %v725
    %v857 = vmul.f32 %v768, %v726
    %v858 = vmul.f32 %v768, %v727
    %v868 = vrot.slane %v850, 1
    %v869 = vrot.slane %v851, 1
    %v870 = vsel %vm234, %v868, %v869
    %v871 = vrot.slane %v852, 1
    %v872 = vsel %vm234, %v869, %v871
    %v873 = vrot.slane %v853, 1
    %v874 = vsel %vm234, %v871, %v873
    %v875 = vrot.slane %v854, 1
    %v876 = vsel %vm234, %v873, %v875
    %v877 = vrot.slane %v855, 1
    %v878 = vsel %vm234, %v875, %v877
    %v879 = vrot.slane %v856, 1
    %v880 = vsel %vm234, %v877, %v879
    %v881 = vrot.slane %v857, 1
    %v882 = vsel %vm234, %v879, %v881
    %v883 = vrot.slane %v858, 1
    %v884 = vsel %vm234, %v881, %v883
    %v894 = vadd.f32 %v841, %v870
    %v895 = vadd.f32 %v842, %v872
    %v896 = vadd.f32 %v843, %v874
    %v897 = vadd.f32 %v844, %v876
    %v898 = vadd.f32 %v845, %v878
    %v899 = vadd.f32 %v846, %v880
    %v900 = vadd.f32 %v847, %v882
    %v901 = vadd.f32 %v848, %v884
    %v902 = vadd.f32 %v849, %v883
    %v903 = vadd.f32 %v680, %v778
    %v904 = vadd.f32 %v681, %v779
    %v905 = vadd.f32 %v682, %v780
    %v906 = vadd.f32 %v683, %v781
    %v907 = vadd.f32 %v684, %v782
    %v908 = vadd.f32 %v685, %v783
    %v909 = vadd.f32 %v686, %v784
    %v910 = vadd.f32 %v687, %v785
    %v911 = vadd.f32 %v688, %v786
    %v912 = vadd.f32 %v689, %v805
    %v913 = vadd.f32 %v690, %v806
    %v914 = vadd.f32 %v691, %v807
    %v915 = vadd.f32 %v692, %v808
    %v916 = vadd.f32 %v693, %v809
    %v917 = vadd.f32 %v694, %v810
    %v918 = vadd.f32 %v695, %v811
    %v919 = vadd.f32 %v696, %v812
    %v920 = vadd.f32 %v697, %v813
    %v921 = vadd.f32 %v698, %v832
    %v922 = vadd.f32 %v699, %v833
    %v923 = vadd.f32 %v700, %v834
    %v924 = vadd.f32 %v701, %v835
    %v925 = vadd.f32 %v702, %v836
    %v926 = vadd.f32 %v703, %v837
    %v927 = vadd.f32 %v704, %v838
    %v928 = vadd.f32 %v705, %v839
    %v929 = vadd.f32 %v706, %v840
    %v930 = vadd.f32 %v707, %v894
    %v931 = vadd.f32 %v708, %v895
    %v932 = vadd.f32 %v709, %v896
    %v933 = vadd.f32 %v710, %v897
    %v934 = vadd.f32 %v711, %v898
    %v935 = vadd.f32 %v712, %v899
    %v936 = vadd.f32 %v713, %v900
    %v937 = vadd.f32 %v714, %v901
    %v938 = vadd.f32 %v715, %v902
    %s939 = sld [smem:[#allocation6]]
    %v940 = vstv %s939
    %v941 = vadd.f32 %v903, %v940
    %v942 = vadd.f32 %v904, %v940
    %v943 = vadd.f32 %v905, %v940
    %v944 = vadd.f32 %v906, %v940
    %v945 = vadd.f32 %v907, %v940
    %v946 = vadd.f32 %v908, %v940
    %v947 = vadd.f32 %v909, %v940
    %v948 = vadd.f32 %v910, %v940
    %v949 = vadd.f32 %v911, %v940
    %v950 = vmax.f32 %v941, 0.0
    %v951 = vmax.f32 %v942, 0.0
    %v952 = vmax.f32 %v943, 0.0
    %v953 = vmax.f32 %v944, 0.0
    %v954 = vmax.f32 %v945, 0.0
    %v955 = vmax.f32 %v946, 0.0
    %v956 = vmax.f32 %v947, 0.0
    %v957 = vmax.f32 %v948, 0.0
    %v958 = vmax.f32 %v949, 0.0
    %v959 = vadd.f32 %v912, %v940
    %v960 = vadd.f32 %v913, %v940
    %v961 = vadd.f32 %v914, %v940
    %v962 = vadd.f32 %v915, %v940
    %v963 = vadd.f32 %v916, %v940
    %v964 = vadd.f32 %v917, %v940
    %v965 = vadd.f32 %v918, %v940
    %v966 = vadd.f32 %v919, %v940
    %v967 = vadd.f32 %v920, %v940
    %v968 = vmax.f32 %v959, 0.0
    %v969 = vmax.f32 %v960, 0.0
    %v970 = vmax.f32 %v961, 0.0
    %v971 = vmax.f32 %v962, 0.0
    %v972 = vmax.f32 %v963, 0.0
    %v973 = vmax.f32 %v964, 0.0
    %v974 = vmax.f32 %v965, 0.0
    %v975 = vmax.f32 %v966, 0.0
    %v976 = vmax.f32 %v967, 0.0
    %v977 = vadd.f32 %v921, %v940
    %v978 = vadd.f32 %v922, %v940
    %v979 = vadd.f32 %v923, %v940
    %v980 = vadd.f32 %v924, %v940
    %v981 = vadd.f32 %v925, %v940
    %v982 = vadd.f32 %v926, %v940
    %v983 = vadd.f32 %v927, %v940
    %v984 = vadd.f32 %v928, %v940
    %v985 = vadd.f32 %v929, %v940
    %v986 = vmax.f32 %v977, 0.0
    %v987 = vmax.f32 %v978, 0.0
    %v988 = vmax.f32 %v979, 0.0
    %v989 = vmax.f32 %v980, 0.0
    %v990 = vmax.f32 %v981, 0.0
    %v991 = vmax.f32 %v982, 0.0
    %v992 = vmax.f32 %v983, 0.0
    %v993 = vmax.f32 %v984, 0.0
    %v994 = vmax.f32 %v985, 0.0
    %v995 = vadd.f32 %v930, %v940
    %v996 = vadd.f32 %v931, %v940
    %v997 = vadd.f32 %v932, %v940
    %v998 = vadd.f32 %v933, %v940
    %v999 = vadd.f32 %v934, %v940
    %v1000 = vadd.f32 %v935, %v940
    %v1001 = vadd.f32 %v936, %v940
    %v1002 = vadd.f32 %v937, %v940
    %v1003 = vadd.f32 %v938, %v940
    %v1004 = vmax.f32 %v995, 0.0
    %v1005 = vmax.f32 %v996, 0.0
    %v1006 = vmax.f32 %v997, 0.0
    %v1007 = vmax.f32 %v998, 0.0
    %v1008 = vmax.f32 %v999, 0.0
    %v1009 = vmax.f32 %v1000, 0.0
    %v1010 = vmax.f32 %v1001, 0.0
    %v1011 = vmax.f32 %v1002, 0.0
    %v1012 = vmax.f32 %v1003, 0.0
    %v1013 = vmax.f32 %v950, %v968
    %v1014 = vmax.f32 %v951, %v969
    %v1015 = vmax.f32 %v952, %v970
    %v1016 = vmax.f32 %v953, %v971
    %v1017 = vmax.f32 %v954, %v972
    %v1018 = vmax.f32 %v955, %v973
    %v1019 = vmax.f32 %v956, %v974
    %v1020 = vmax.f32 %v957, %v975
    %v1021 = vmax.f32 %v958, %v976
    %v1022 = vmax.f32 %v986, %v1004
    %v1023 = vmax.f32 %v987, %v1005
    %v1024 = vmax.f32 %v988, %v1006
    %v1025 = vmax.f32 %v989, %v1007
    %v1026 = vmax.f32 %v990, %v1008
    %v1027 = vmax.f32 %v991, %v1009
    %v1028 = vmax.f32 %v992, %v1010
    %v1029 = vmax.f32 %v993, %v1011
    %v1030 = vmax.f32 %v994, %v1012
    %s1031 = sld [smem:[#allocation8]]
    %s1032 = sld [smem:[#allocation8 + $0x1]]
    %v1033 = vstv %s1031
    %v1034 = vmul.f32 %v1033, %v1013
    %v1035 = vmul.f32 %v1033, %v1014
    %v1036 = vmul.f32 %v1033, %v1015
    %v1037 = vmul.f32 %v1033, %v1016
    %v1038 = vmul.f32 %v1033, %v1017
    %v1039 = vmul.f32 %v1033, %v1018
    %v1040 = vmul.f32 %v1033, %v1019
    %v1041 = vmul.f32 %v1033, %v1020
    %v1042 = vmul.f32 %v1033, %v1021
    %v1043 = vstv %s1032
    %v1044 = vmul.f32 %v1043, %v1022
    %v1045 = vmul.f32 %v1043, %v1023
    %v1046 = vmul.f32 %v1043, %v1024
    %v1047 = vmul.f32 %v1043, %v1025
    %v1048 = vmul.f32 %v1043, %v1026
    %v1049 = vmul.f32 %v1043, %v1027
    %v1050 = vmul.f32 %v1043, %v1028
    %v1051 = vmul.f32 %v1043, %v1029
    %v1052 = vmul.f32 %v1043, %v1030
    %v1053 = vadd.f32 %v1034, %v1044
    %v1054 = vadd.f32 %v1035, %v1045
    %v1055 = vadd.f32 %v1036, %v1046
    %v1056 = vadd.f32 %v1037, %v1047
    %v1057 = vadd.f32 %v1038, %v1048
    %v1058 = vadd.f32 %v1039, %v1049
    %v1059 = vadd.f32 %v1040, %v1050
    %v1060 = vadd.f32 %v1041, %v1051
    %v1061 = vadd.f32 %v1042, %v1052
    %v1062 = vmul.f32 %v1033, %v1022
    %v1063 = vmul.f32 %v1033, %v1023
    %v1064 = vmul.f32 %v1033, %v1024
    %v1065 = vmul.f32 %v1033, %v1025
    %v1066 = vmul.f32 %v1033, %v1026
    %v1067 = vmul.f32 %v1033, %v1027
    %v1068 = vmul.f32 %v1033, %v1028
    %v1069 = vmul.f32 %v1033, %v1029
    %v1070 = vmul.f32 %v1033, %v1030
    %v1071 = vmul.f32 %v1043, %v1013
    %v1072 = vmul.f32 %v1043, %v1014
    %v1073 = vmul.f32 %v1043, %v1015
    %v1074 = vmul.f32 %v1043, %v1016
    %v1075 = vmul.f32 %v1043, %v1017
    %v1076 = vmul.f32 %v1043, %v1018
    %v1077 = vmul.f32 %v1043, %v1019
    %v1078 = vmul.f32 %v1043, %v1020
    %v1079 = vmul.f32 %v1043, %v1021
    %v1089 = vrot.slane %v1071, 1
    %v1090 = vrot.slane %v1072, 1
    %v1091 = vsel %vm234, %v1089, %v1090
    %v1092 = vrot.slane %v1073, 1
    %v1093 = vsel %vm234, %v1090, %v1092
    %v1094 = vrot.slane %v1074, 1
    %v1095 = vsel %vm234, %v1092, %v1094
    %v1096 = vrot.slane %v1075, 1
    %v1097 = vsel %vm234, %v1094, %v1096
    %v1098 = vrot.slane %v1076, 1
    %v1099 = vsel %vm234, %v1096, %v1098
    %v1100 = vrot.slane %v1077, 1
    %v1101 = vsel %vm234, %v1098, %v1100
    %v1102 = vrot.slane %v1078, 1
    %v1103 = vsel %vm234, %v1100, %v1102
    %v1104 = vrot.slane %v1079, 1
    %v1105 = vsel %vm234, %v1102, %v1104
    %v1115 = vadd.f32 %v1062, %v1091
    %v1116 = vadd.f32 %v1063, %v1093
    %v1117 = vadd.f32 %v1064, %v1095
    %v1118 = vadd.f32 %v1065, %v1097
    %v1119 = vadd.f32 %v1066, %v1099
    %v1120 = vadd.f32 %v1067, %v1101
    %v1121 = vadd.f32 %v1068, %v1103
    %v1122 = vadd.f32 %v1069, %v1105
    %v1123 = vadd.f32 %v1070, %v1104
    %s1124 = sld [smem:[#allocation4 + $0x80]]
    %s1125 = sld [smem:[#allocation4 + $0x81]]
    %v1126 = vstv %s1124
    %v1127 = vmul.f32 %v1126, %v85
    %v1128 = vmul.f32 %v1126, %v86
    %v1129 = vmul.f32 %v1126, %v87
    %v1130 = vmul.f32 %v1126, %v88
    %v1131 = vmul.f32 %v1126, %v89
    %v1132 = vmul.f32 %v1126, %v90
    %v1133 = vmul.f32 %v1126, %v91
    %v1134 = vmul.f32 %v1126, %v92
    %v1135 = vmul.f32 %v1126, %v93
    %v1136 = vstv %s1125
    %v1137 = vmul.f32 %v1136, %v95
    %v1138 = vmul.f32 %v1136, %v96
    %v1139 = vmul.f32 %v1136, %v97
    %v1140 = vmul.f32 %v1136, %v98
    %v1141 = vmul.f32 %v1136, %v99
    %v1142 = vmul.f32 %v1136, %v100
    %v1143 = vmul.f32 %v1136, %v101
    %v1144 = vmul.f32 %v1136, %v102
    %v1145 = vmul.f32 %v1136, %v103
    %v1146 = vadd.f32 %v1127, %v1137
    %v1147 = vadd.f32 %v1128, %v1138
    %v1148 = vadd.f32 %v1129, %v1139
    %v1149 = vadd.f32 %v1130, %v1140
    %v1150 = vadd.f32 %v1131, %v1141
    %v1151 = vadd.f32 %v1132, %v1142
    %v1152 = vadd.f32 %v1133, %v1143
    %v1153 = vadd.f32 %v1134, %v1144
    %v1154 = vadd.f32 %v1135, %v1145
    %v1155 = vmul.f32 %v1126, %v95
    %v1156 = vmul.f32 %v1126, %v96
    %v1157 = vmul.f32 %v1126, %v97
    %v1158 = vmul.f32 %v1126, %v98
    %v1159 = vmul.f32 %v1126, %v99
    %v1160 = vmul.f32 %v1126, %v100
    %v1161 = vmul.f32 %v1126, %v101
    %v1162 = vmul.f32 %v1126, %v102
    %v1163 = vmul.f32 %v1126, %v103
    %v1164 = vmul.f32 %v1136, %v105
    %v1165 = vmul.f32 %v1136, %v106
    %v1166 = vmul.f32 %v1136, %v107
    %v1167 = vmul.f32 %v1136, %v108
    %v1168 = vmul.f32 %v1136, %v109
    %v1169 = vmul.f32 %v1136, %v110
    %v1170 = vmul.f32 %v1136, %v111
    %v1171 = vmul.f32 %v1136, %v112
    %v1172 = vmul.f32 %v1136, %v113
    %v1173 = vadd.f32 %v1155, %v1164
    %v1174 = vadd.f32 %v1156, %v1165
    %v1175 = vadd.f32 %v1157, %v1166
    %v1176 = vadd.f32 %v1158, %v1167
    %v1177 = vadd.f32 %v1159, %v1168
    %v1178 = vadd.f32 %v1160, %v1169
    %v1179 = vadd.f32 %v1161, %v1170
    %v1180 = vadd.f32 %v1162, %v1171
    %v1181 = vadd.f32 %v1163, %v1172
    %v1182 = vmul.f32 %v1126, %v105
    %v1183 = vmul.f32 %v1126, %v106
    %v1184 = vmul.f32 %v1126, %v107
    %v1185 = vmul.f32 %v1126, %v108
    %v1186 = vmul.f32 %v1126, %v109
    %v1187 = vmul.f32 %v1126, %v110
    %v1188 = vmul.f32 %v1126, %v111
    %v1189 = vmul.f32 %v1126, %v112
    %v1190 = vmul.f32 %v1126, %v113
    %v1191 = vmul.f32 %v1136, %v115
    %v1192 = vmul.f32 %v1136, %v116
    %v1193 = vmul.f32 %v1136, %v117
    %v1194 = vmul.f32 %v1136, %v118
    %v1195 = vmul.f32 %v1136, %v119
    %v1196 = vmul.f32 %v1136, %v120
    %v1197 = vmul.f32 %v1136, %v121
    %v1198 = vmul.f32 %v1136, %v122
    %v1199 = vmul.f32 %v1136, %v123
    %v1200 = vadd.f32 %v1182, %v1191
    %v1201 = vadd.f32 %v1183, %v1192
    %v1202 = vadd.f32 %v1184, %v1193
    %v1203 = vadd.f32 %v1185, %v1194
    %v1204 = vadd.f32 %v1186, %v1195
    %v1205 = vadd.f32 %v1187, %v1196
    %v1206 = vadd.f32 %v1188, %v1197
    %v1207 = vadd.f32 %v1189, %v1198
    %v1208 = vadd.f32 %v1190, %v1199
    %v1209 = vmul.f32 %v1126, %v115
    %v1210 = vmul.f32 %v1126, %v116
    %v1211 = vmul.f32 %v1126, %v117
    %v1212 = vmul.f32 %v1126, %v118
    %v1213 = vmul.f32 %v1126, %v119
    %v1214 = vmul.f32 %v1126, %v120
    %v1215 = vmul.f32 %v1126, %v121
    %v1216 = vmul.f32 %v1126, %v122
    %v1217 = vmul.f32 %v1126, %v123
    %v1218 = vmul.f32 %v1136, %v85
    %v1219 = vmul.f32 %v1136, %v86
    %v1220 = vmul.f32 %v1136, %v87
    %v1221 = vmul.f32 %v1136, %v88
    %v1222 = vmul.f32 %v1136, %v89
    %v1223 = vmul.f32 %v1136, %v90
    %v1224 = vmul.f32 %v1136, %v91
    %v1225 = vmul.f32 %v1136, %v92
    %v1226 = vmul.f32 %v1136, %v93
    %v1236 = vrot.slane %v1218, 1
    %v1237 = vrot.slane %v1219, 1
    %v1238 = vsel %vm234, %v1236, %v1237
    %v1239 = vrot.slane %v1220, 1
    %v1240 = vsel %vm234, %v1237, %v1239
    %v1241 = vrot.slane %v1221, 1
    %v1242 = vsel %vm234, %v1239, %v1241
    %v1243 = vrot.slane %v1222, 1
    %v1244 = vsel %vm234, %v1241, %v1243
    %v1245 = vrot.slane %v1223, 1
    %v1246 = vsel %vm234, %v1243, %v1245
    %v1247 = vrot.slane %v1224, 1
    %v1248 = vsel %vm234, %v1245, %v1247
    %v1249 = vrot.slane %v1225, 1
    %v1250 = vsel %vm234, %v1247, %v1249
    %v1251 = vrot.slane %v1226, 1
    %v1252 = vsel %vm234, %v1249, %v1251
    %v1262 = vadd.f32 %v1209, %v1238
    %v1263 = vadd.f32 %v1210, %v1240
    %v1264 = vadd.f32 %v1211, %v1242
    %v1265 = vadd.f32 %v1212, %v1244
    %v1266 = vadd.f32 %v1213, %v1246
    %v1267 = vadd.f32 %v1214, %v1248
    %v1268 = vadd.f32 %v1215, %v1250
    %v1269 = vadd.f32 %v1216, %v1252
    %v1270 = vadd.f32 %v1217, %v1251
    %s1271 = sld [smem:[#allocation4 + $0x82]]
    %s1272 = sld [smem:[#allocation4 + $0x83]]
    %v1273 = vstv %s1271
    %v1274 = vmul.f32 %v1273, %v273
    %v1275 = vmul.f32 %v1273, %v274
    %v1276 = vmul.f32 %v1273, %v275
    %v1277 = vmul.f32 %v1273, %v276
    %v1278 = vmul.f32 %v1273, %v277
    %v1279 = vmul.f32 %v1273, %v278
    %v1280 = vmul.f32 %v1273, %v279
    %v1281 = vmul.f32 %v1273, %v280
    %v1282 = vmul.f32 %v1273, %v281
    %v1283 = vstv %s1272
    %v1284 = vmul.f32 %v1283, %v283
    %v1285 = vmul.f32 %v1283, %v284
    %v1286 = vmul.f32 %v1283, %v285
    %v1287 = vmul.f32 %v1283, %v286
    %v1288 = vmul.f32 %v1283, %v287
    %v1289 = vmul.f32 %v1283, %v288
    %v1290 = vmul.f32 %v1283, %v289
    %v1291 = vmul.f32 %v1283, %v290
    %v1292 = vmul.f32 %v1283, %v291
    %v1293 = vadd.f32 %v1274, %v1284
    %v1294 = vadd.f32 %v1275, %v1285
    %v1295 = vadd.f32 %v1276, %v1286
    %v1296 = vadd.f32 %v1277, %v1287
    %v1297 = vadd.f32 %v1278, %v1288
    %v1298 = vadd.f32 %v1279, %v1289
    %v1299 = vadd.f32 %v1280, %v1290
    %v1300 = vadd.f32 %v1281, %v1291
    %v1301 = vadd.f32 %v1282, %v1292
    %v1302 = vmul.f32 %v1273, %v283
    %v1303 = vmul.f32 %v1273, %v284
    %v1304 = vmul.f32 %v1273, %v285
    %v1305 = vmul.f32 %v1273, %v286
    %v1306 = vmul.f32 %v1273, %v287
    %v1307 = vmul.f32 %v1273, %v288
    %v1308 = vmul.f32 %v1273, %v289
    %v1309 = vmul.f32 %v1273, %v290
    %v1310 = vmul.f32 %v1273, %v291
    %v1311 = vmul.f32 %v1283, %v293
    %v1312 = vmul.f32 %v1283, %v294
    %v1313 = vmul.f32 %v1283, %v295
    %v1314 = vmul.f32 %v1283, %v296
    %v1315 = vmul.f32 %v1283, %v297
    %v1316 = vmul.f32 %v1283, %v298
    %v1317 = vmul.f32 %v1283, %v299
    %v1318 = vmul.f32 %v1283, %v300
    %v1319 = vmul.f32 %v1283, %v301
    %v1320 = vadd.f32 %v1302, %v1311
    %v1321 = vadd.f32 %v1303, %v1312
    %v1322 = vadd.f32 %v1304, %v1313
    %v1323 = vadd.f32 %v1305, %v1314
    %v1324 = vadd.f32 %v1306, %v1315
    %v1325 = vadd.f32 %v1307, %v1316
    %v1326 = vadd.f32 %v1308, %v1317
    %v1327 = vadd.f32 %v1309, %v1318
    %v1328 = vadd.f32 %v1310, %v1319
    %v1329 = vmul.f32 %v1273, %v293
    %v1330 = vmul.f32 %v1273, %v294
    %v1331 = vmul.f32 %v1273, %v295
    %v1332 = vmul.f32 %v1273, %v296
    %v1333 = vmul.f32 %v1273, %v297
    %v1334 = vmul.f32 %v1273, %v298
    %v1335 = vmul.f32 %v1273, %v299
    %v1336 = vmul.f32 %v1273, %v300
    %v1337 = vmul.f32 %v1273, %v301
    %v1338 = vmul.f32 %v1283, %v303
    %v1339 = vmul.f32 %v1283, %v304
    %v1340 = vmul.f32 %v1283, %v305
    %v1341 = vmul.f32 %v1283, %v306
    %v1342 = vmul.f32 %v1283, %v307
    %v1343 = vmul.f32 %v1283, %v308
    %v1344 = vmul.f32 %v1283, %v309
    %v1345 = vmul.f32 %v1283, %v310
    %v1346 = vmul.f32 %v1283, %v311
    %v1347 = vadd.f32 %v1329, %v1338
    %v1348 = vadd.f32 %v1330, %v1339
    %v1349 = vadd.f32 %v1331, %v1340
    %v1350 = vadd.f32 %v1332, %v1341
    %v1351 = vadd.f32 %v1333, %v1342
    %v1352 = vadd.f32 %v1334, %v1343
    %v1353 = vadd.f32 %v1335, %v1344
    %v1354 = vadd.f32 %v1336, %v1345
    %v1355 = vadd.f32 %v1337, %v1346
    %v1356 = vmul.f32 %v1273, %v303
    %v1357 = vmul.f32 %v1273, %v304
    %v1358 = vmul.f32 %v1273, %v305
    %v1359 = vmul.f32 %v1273, %v306
    %v1360 = vmul.f32 %v1273, %v307
    %v1361 = vmul.f32 %v1273, %v308
    %v1362 = vmul.f32 %v1273, %v309
    %v1363 = vmul.f32 %v1273, %v310
    %v1364 = vmul.f32 %v1273, %v311
    %v1365 = vmul.f32 %v1283, %v273
    %v1366 = vmul.f32 %v1283, %v274
    %v1367 = vmul.f32 %v1283, %v275
    %v1368 = vmul.f32 %v1283, %v276
    %v1369 = vmul.f32 %v1283, %v277
    %v1370 = vmul.f32 %v1283, %v278
    %v1371 = vmul.f32 %v1283, %v279
    %v1372 = vmul.f32 %v1283, %v280
    %v1373 = vmul.f32 %v1283, %v281
    %v1383 = vrot.slane %v1365, 1
    %v1384 = vrot.slane %v1366, 1
    %v1385 = vsel %vm234, %v1383, %v1384
    %v1386 = vrot.slane %v1367, 1
    %v1387 = vsel %vm234, %v1384, %v1386
    %v1388 = vrot.slane %v1368, 1
    %v1389 = vsel %vm234, %v1386, %v1388
    %v1390 = vrot.slane %v1369, 1
    %v1391 = vsel %vm234, %v1388, %v1390
    %v1392 = vrot.slane %v1370, 1
    %v1393 = vsel %vm234, %v1390, %v1392
    %v1394 = vrot.slane %v1371, 1
    %v1395 = vsel %vm234, %v1392, %v1394
    %v1396 = vrot.slane %v1372, 1
    %v1397 = vsel %vm234, %v1394, %v1396
    %v1398 = vrot.slane %v1373, 1
    %v1399 = vsel %vm234, %v1396, %v1398
    %v1409 = vadd.f32 %v1356, %v1385
    %v1410 = vadd.f32 %v1357, %v1387
    %v1411 = vadd.f32 %v1358, %v1389
    %v1412 = vadd.f32 %v1359, %v1391
    %v1413 = vadd.f32 %v1360, %v1393
    %v1414 = vadd.f32 %v1361, %v1395
    %v1415 = vadd.f32 %v1362, %v1397
    %v1416 = vadd.f32 %v1363, %v1399
    %v1417 = vadd.f32 %v1364, %v1398
    %v1418 = vadd.f32 %v1146, %v1293
    %v1419 = vadd.f32 %v1147, %v1294
    %v1420 = vadd.f32 %v1148, %v1295
    %v1421 = vadd.f32 %v1149, %v1296
    %v1422 = vadd.f32 %v1150, %v1297
    %v1423 = vadd.f32 %v1151, %v1298
    %v1424 = vadd.f32 %v1152, %v1299
    %v1425 = vadd.f32 %v1153, %v1300
    %v1426 = vadd.f32 %v1154, %v1301
    %v1427 = vadd.f32 %v1173, %v1320
    %v1428 = vadd.f32 %v1174, %v1321
    %v1429 = vadd.f32 %v1175, %v1322
    %v1430 = vadd.f32 %v1176, %v1323
    %v1431 = vadd.f32 %v1177, %v1324
    %v1432 = vadd.f32 %v1178, %v1325
    %v1433 = vadd.f32 %v1179, %v1326
    %v1434 = vadd.f32 %v1180, %v1327
    %v1435 = vadd.f32 %v1181, %v1328
    %v1436 = vadd.f32 %v1200, %v1347
    %v1437 = vadd.f32 %v1201, %v1348
    %v1438 = vadd.f32 %v1202, %v1349
    %v1439 = vadd.f32 %v1203, %v1350
    %v1440 = vadd.f32 %v1204, %v1351
    %v1441 = vadd.f32 %v1205, %v1352
    %v1442 = vadd.f32 %v1206, %v1353
    %v1443 = vadd.f32 %v1207, %v1354
    %v1444 = vadd.f32 %v1208, %v1355
    %v1445 = vadd.f32 %v1262, %v1409
    %v1446 = vadd.f32 %v1263, %v1410
    %v1447 = vadd.f32 %v1264, %v1411
    %v1448 = vadd.f32 %v1265, %v1412
    %v1449 = vadd.f32 %v1266, %v1413
    %v1450 = vadd.f32 %v1267, %v1414
    %v1451 = vadd.f32 %v1268, %v1415
    %v1452 = vadd.f32 %v1269, %v1416
    %v1453 = vadd.f32 %v1270, %v1417
    %s1454 = sld [smem:[#allocation4 + $0x84]]
    %s1455 = sld [smem:[#allocation4 + $0x85]]
    %v1456 = vstv %s1454
    %v1457 = vmul.f32 %v1456, %v496
    %v1458 = vmul.f32 %v1456, %v497
    %v1459 = vmul.f32 %v1456, %v498
    %v1460 = vmul.f32 %v1456, %v499
    %v1461 = vmul.f32 %v1456, %v500
    %v1462 = vmul.f32 %v1456, %v501
    %v1463 = vmul.f32 %v1456, %v502
    %v1464 = vmul.f32 %v1456, %v503
    %v1465 = vmul.f32 %v1456, %v504
    %v1466 = vstv %s1455
    %v1467 = vmul.f32 %v1466, %v506
    %v1468 = vmul.f32 %v1466, %v507
    %v1469 = vmul.f32 %v1466, %v508
    %v1470 = vmul.f32 %v1466, %v509
    %v1471 = vmul.f32 %v1466, %v510
    %v1472 = vmul.f32 %v1466, %v511
    %v1473 = vmul.f32 %v1466, %v512
    %v1474 = vmul.f32 %v1466, %v513
    %v1475 = vmul.f32 %v1466, %v514
    %v1476 = vadd.f32 %v1457, %v1467
    %v1477 = vadd.f32 %v1458, %v1468
    %v1478 = vadd.f32 %v1459, %v1469
    %v1479 = vadd.f32 %v1460, %v1470
    %v1480 = vadd.f32 %v1461, %v1471
    %v1481 = vadd.f32 %v1462, %v1472
    %v1482 = vadd.f32 %v1463, %v1473
    %v1483 = vadd.f32 %v1464, %v1474
    %v1484 = vadd.f32 %v1465, %v1475
    %v1485 = vmul.f32 %v1456, %v506
    %v1486 = vmul.f32 %v1456, %v507
    %v1487 = vmul.f32 %v1456, %v508
    %v1488 = vmul.f32 %v1456, %v509
    %v1489 = vmul.f32 %v1456, %v510
    %v1490 = vmul.f32 %v1456, %v511
    %v1491 = vmul.f32 %v1456, %v512
    %v1492 = vmul.f32 %v1456, %v513
    %v1493 = vmul.f32 %v1456, %v514
    %v1494 = vmul.f32 %v1466, %v516
    %v1495 = vmul.f32 %v1466, %v517
    %v1496 = vmul.f32 %v1466, %v518
    %v1497 = vmul.f32 %v1466, %v519
    %v1498 = vmul.f32 %v1466, %v520
    %v1499 = vmul.f32 %v1466, %v521
    %v1500 = vmul.f32 %v1466, %v522
    %v1501 = vmul.f32 %v1466, %v523
    %v1502 = vmul.f32 %v1466, %v524
    %v1503 = vadd.f32 %v1485, %v1494
    %v1504 = vadd.f32 %v1486, %v1495
    %v1505 = vadd.f32 %v1487, %v1496
    %v1506 = vadd.f32 %v1488, %v1497
    %v1507 = vadd.f32 %v1489, %v1498
    %v1508 = vadd.f32 %v1490, %v1499
    %v1509 = vadd.f32 %v1491, %v1500
    %v1510 = vadd.f32 %v1492, %v1501
    %v1511 = vadd.f32 %v1493, %v1502
    %v1512 = vmul.f32 %v1456, %v516
    %v1513 = vmul.f32 %v1456, %v517
    %v1514 = vmul.f32 %v1456, %v518
    %v1515 = vmul.f32 %v1456, %v519
    %v1516 = vmul.f32 %v1456, %v520
    %v1517 = vmul.f32 %v1456, %v521
    %v1518 = vmul.f32 %v1456, %v522
    %v1519 = vmul.f32 %v1456, %v523
    %v1520 = vmul.f32 %v1456, %v524
    %v1521 = vmul.f32 %v1466, %v526
    %v1522 = vmul.f32 %v1466, %v527
    %v1523 = vmul.f32 %v1466, %v528
    %v1524 = vmul.f32 %v1466, %v529
    %v1525 = vmul.f32 %v1466, %v530
    %v1526 = vmul.f32 %v1466, %v531
    %v1527 = vmul.f32 %v1466, %v532
    %v1528 = vmul.f32 %v1466, %v533
    %v1529 = vmul.f32 %v1466, %v534
    %v1530 = vadd.f32 %v1512, %v1521
    %v1531 = vadd.f32 %v1513, %v1522
    %v1532 = vadd.f32 %v1514, %v1523
    %v1533 = vadd.f32 %v1515, %v1524
    %v1534 = vadd.f32 %v1516, %v1525
    %v1535 = vadd.f32 %v1517, %v1526
    %v1536 = vadd.f32 %v1518, %v1527
    %v1537 = vadd.f32 %v1519, %v1528
    %v1538 = vadd.f32 %v1520, %v1529
    %v1539 = vmul.f32 %v1456, %v526
    %v1540 = vmul.f32 %v1456, %v527
    %v1541 = vmul.f32 %v1456, %v528
    %v1542 = vmul.f32 %v1456, %v529
    %v1543 = vmul.f32 %v1456, %v530
    %v1544 = vmul.f32 %v1456, %v531
    %v1545 = vmul.f32 %v1456, %v532
    %v1546 = vmul.f32 %v1456, %v533
    %v1547 = vmul.f32 %v1456, %v534
    %v1548 = vmul.f32 %v1466, %v496
    %v1549 = vmul.f32 %v1466, %v497
    %v1550 = vmul.f32 %v1466, %v498
    %v1551 = vmul.f32 %v1466, %v499
    %v1552 = vmul.f32 %v1466, %v500
    %v1553 = vmul.f32 %v1466, %v501
    %v1554 = vmul.f32 %v1466, %v502
    %v1555 = vmul.f32 %v1466, %v503
    %v1556 = vmul.f32 %v1466, %v504
    %v1566 = vrot.slane %v1548, 1
    %v1567 = vrot.slane %v1549, 1
    %v1568 = vsel %vm234, %v1566, %v1567
    %v1569 = vrot.slane %v1550, 1
    %v1570 = vsel %vm234, %v1567, %v1569
    %v1571 = vrot.slane %v1551, 1
    %v1572 = vsel %vm234, %v1569, %v1571
    %v1573 = vrot.slane %v1552, 1
    %v1574 = vsel %vm234, %v1571, %v1573
    %v1575 = vrot.slane %v1553, 1
    %v1576 = vsel %vm234, %v1573, %v1575
    %v1577 = vrot.slane %v1554, 1
    %v1578 = vsel %vm234, %v1575, %v1577
    %v1579 = vrot.slane %v1555, 1
    %v1580 = vsel %vm234, %v1577, %v1579
    %v1581 = vrot.slane %v1556, 1
    %v1582 = vsel %vm234, %v1579, %v1581
    %v1592 = vadd.f32 %v1539, %v1568
    %v1593 = vadd.f32 %v1540, %v1570
    %v1594 = vadd.f32 %v1541, %v1572
    %v1595 = vadd.f32 %v1542, %v1574
    %v1596 = vadd.f32 %v1543, %v1576
    %v1597 = vadd.f32 %v1544, %v1578
    %v1598 = vadd.f32 %v1545, %v1580
    %v1599 = vadd.f32 %v1546, %v1582
    %v1600 = vadd.f32 %v1547, %v1581
    %v1601 = vadd.f32 %v1418, %v1476
    %v1602 = vadd.f32 %v1419, %v1477
    %v1603 = vadd.f32 %v1420, %v1478
    %v1604 = vadd.f32 %v1421, %v1479
    %v1605 = vadd.f32 %v1422, %v1480
    %v1606 = vadd.f32 %v1423, %v1481
    %v1607 = vadd.f32 %v1424, %v1482
    %v1608 = vadd.f32 %v1425, %v1483
    %v1609 = vadd.f32 %v1426, %v1484
    %v1610 = vadd.f32 %v1427, %v1503
    %v1611 = vadd.f32 %v1428, %v1504
    %v1612 = vadd.f32 %v1429, %v1505
    %v1613 = vadd.f32 %v1430, %v1506
    %v1614 = vadd.f32 %v1431, %v1507
    %v1615 = vadd.f32 %v1432, %v1508
    %v1616 = vadd.f32 %v1433, %v1509
    %v1617 = vadd.f32 %v1434, %v1510
    %v1618 = vadd.f32 %v1435, %v1511
    %v1619 = vadd.f32 %v1436, %v1530
    %v1620 = vadd.f32 %v1437, %v1531
    %v1621 = vadd.f32 %v1438, %v1532
    %v1622 = vadd.f32 %v1439, %v1533
    %v1623 = vadd.f32 %v1440, %v1534
    %v1624 = vadd.f32 %v1441, %v1535
    %v1625 = vadd.f32 %v1442, %v1536
    %v1626 = vadd.f32 %v1443, %v1537
    %v1627 = vadd.f32 %v1444, %v1538
    %v1628 = vadd.f32 %v1445, %v1592
    %v1629 = vadd.f32 %v1446, %v1593
    %v1630 = vadd.f32 %v1447, %v1594
    %v1631 = vadd.f32 %v1448, %v1595
    %v1632 = vadd.f32 %v1449, %v1596
    %v1633 = vadd.f32 %v1450, %v1597
    %v1634 = vadd.f32 %v1451, %v1598
    %v1635 = vadd.f32 %v1452, %v1599
    %v1636 = vadd.f32 %v1453, %v1600
    %s1637 = sld [smem:[#allocation4 + $0x86]]
    %s1638 = sld [smem:[#allocation4 + $0x87]]
    %v1639 = vstv %s1637
    %v1640 = vmul.f32 %v1639, %v719
    %v1641 = vmul.f32 %v1639, %v720
    %v1642 = vmul.f32 %v1639, %v721
    %v1643 = vmul.f32 %v1639, %v722
    %v1644 = vmul.f32 %v1639, %v723
    %v1645 = vmul.f32 %v1639, %v724
    %v1646 = vmul.f32 %v1639, %v725
    %v1647 = vmul.f32 %v1639, %v726
    %v1648 = vmul.f32 %v1639, %v727
    %v1649 = vstv %s1638
    %v1650 = vmul.f32 %v1649, %v729
    %v1651 = vmul.f32 %v1649, %v730
    %v1652 = vmul.f32 %v1649, %v731
    %v1653 = vmul.f32 %v1649, %v732
    %v1654 = vmul.f32 %v1649, %v733
    %v1655 = vmul.f32 %v1649, %v734
    %v1656 = vmul.f32 %v1649, %v735
    %v1657 = vmul.f32 %v1649, %v736
    %v1658 = vmul.f32 %v1649, %v737
    %v1659 = vadd.f32 %v1640, %v1650
    %v1660 = vadd.f32 %v1641, %v1651
    %v1661 = vadd.f32 %v1642, %v1652
    %v1662 = vadd.f32 %v1643, %v1653
    %v1663 = vadd.f32 %v1644, %v1654
    %v1664 = vadd.f32 %v1645, %v1655
    %v1665 = vadd.f32 %v1646, %v1656
    %v1666 = vadd.f32 %v1647, %v1657
    %v1667 = vadd.f32 %v1648, %v1658
    %v1668 = vmul.f32 %v1639, %v729
    %v1669 = vmul.f32 %v1639, %v730
    %v1670 = vmul.f32 %v1639, %v731
    %v1671 = vmul.f32 %v1639, %v732
    %v1672 = vmul.f32 %v1639, %v733
    %v1673 = vmul.f32 %v1639, %v734
    %v1674 = vmul.f32 %v1639, %v735
    %v1675 = vmul.f32 %v1639, %v736
    %v1676 = vmul.f32 %v1639, %v737
    %v1677 = vmul.f32 %v1649, %v739
    %v1678 = vmul.f32 %v1649, %v740
    %v1679 = vmul.f32 %v1649, %v741
    %v1680 = vmul.f32 %v1649, %v742
    %v1681 = vmul.f32 %v1649, %v743
    %v1682 = vmul.f32 %v1649, %v744
    %v1683 = vmul.f32 %v1649, %v745
    %v1684 = vmul.f32 %v1649, %v746
    %v1685 = vmul.f32 %v1649, %v747
    %v1686 = vadd.f32 %v1668, %v1677
    %v1687 = vadd.f32 %v1669, %v1678
    %v1688 = vadd.f32 %v1670, %v1679
    %v1689 = vadd.f32 %v1671, %v1680
    %v1690 = vadd.f32 %v1672, %v1681
    %v1691 = vadd.f32 %v1673, %v1682
    %v1692 = vadd.f32 %v1674, %v1683
    %v1693 = vadd.f32 %v1675, %v1684
    %v1694 = vadd.f32 %v1676, %v1685
    %v1695 = vmul.f32 %v1639, %v739
    %v1696 = vmul.f32 %v1639, %v740
    %v1697 = vmul.f32 %v1639, %v741
    %v1698 = vmul.f32 %v1639, %v742
    %v1699 = vmul.f32 %v1639, %v743
    %v1700 = vmul.f32 %v1639, %v744
    %v1701 = vmul.f32 %v1639, %v745
    %v1702 = vmul.f32 %v1639, %v746
    %v1703 = vmul.f32 %v1639, %v747
    %v1704 = vmul.f32 %v1649, %v749
    %v1705 = vmul.f32 %v1649, %v750
    %v1706 = vmul.f32 %v1649, %v751
    %v1707 = vmul.f32 %v1649, %v752
    %v1708 = vmul.f32 %v1649, %v753
    %v1709 = vmul.f32 %v1649, %v754
    %v1710 = vmul.f32 %v1649, %v755
    %v1711 = vmul.f32 %v1649, %v756
    %v1712 = vmul.f32 %v1649, %v757
    %v1713 = vadd.f32 %v1695, %v1704
    %v1714 = vadd.f32 %v1696, %v1705
    %v1715 = vadd.f32 %v1697, %v1706
    %v1716 = vadd.f32 %v1698, %v1707
    %v1717 = vadd.f32 %v1699, %v1708
    %v1718 = vadd.f32 %v1700, %v1709
    %v1719 = vadd.f32 %v1701, %v1710
    %v1720 = vadd.f32 %v1702, %v1711
    %v1721 = vadd.f32 %v1703, %v1712
    %v1722 = vmul.f32 %v1639, %v749
    %v1723 = vmul.f32 %v1639, %v750
    %v1724 = vmul.f32 %v1639, %v751
    %v1725 = vmul.f32 %v1639, %v752
    %v1726 = vmul.f32 %v1639, %v753
    %v1727 = vmul.f32 %v1639, %v754
    %v1728 = vmul.f32 %v1639, %v755
    %v1729 = vmul.f32 %v1639, %v756
    %v1730 = vmul.f32 %v1639, %v757
    %v1731 = vmul.f32 %v1649, %v719
    %v1732 = vmul.f32 %v1649, %v720
    %v1733 = vmul.f32 %v1649, %v721
    %v1734 = vmul.f32 %v1649, %v722
    %v1735 = vmul.f32 %v1649, %v723
    %v1736 = vmul.f32 %v1649, %v724
    %v1737 = vmul.f32 %v1649, %v725
    %v1738 = vmul.f32 %v1649, %v726
    %v1739 = vmul.f32 %v1649, %v727
    %v1749 = vrot.slane %v1731, 1
    %v1750 = vrot.slane %v1732, 1
    %v1751 = vsel %vm234, %v1749, %v1750
    %v1752 = vrot.slane %v1733, 1
    %v1753 = vsel %vm234, %v1750, %v1752
    %v1754 = vrot.slane %v1734, 1
    %v1755 = vsel %vm234, %v1752, %v1754
    %v1756 = vrot.slane %v1735, 1
    %v1757 = vsel %vm234, %v1754, %v1756
    %v1758 = vrot.slane %v1736, 1
    %v1759 = vsel %vm234, %v1756, %v1758
    %v1760 = vrot.slane %v1737, 1
    %v1761 = vsel %vm234, %v1758, %v1760
    %v1762 = vrot.slane %v1738, 1
    %v1763 = vsel %vm234, %v1760, %v1762
    %v1764 = vrot.slane %v1739, 1
    %v1765 = vsel %vm234, %v1762, %v1764
    %v1775 = vadd.f32 %v1722, %v1751
    %v1776 = vadd.f32 %v1723, %v1753
    %v1777 = vadd.f32 %v1724, %v1755
    %v1778 = vadd.f32 %v1725, %v1757
    %v1779 = vadd.f32 %v1726, %v1759
    %v1780 = vadd.f32 %v1727, %v1761
    %v1781 = vadd.f32 %v1728, %v1763
    %v1782 = vadd.f32 %v1729, %v1765
    %v1783 = vadd.f32 %v1730, %v1764
    %v1784 = vadd.f32 %v1601, %v1659
    %v1785 = vadd.f32 %v1602, %v1660
    %v1786 = vadd.f32 %v1603, %v1661
    %v1787 = vadd.f32 %v1604, %v1662
    %v1788 = vadd.f32 %v1605, %v1663
    %v1789 = vadd.f32 %v1606, %v1664
    %v1790 = vadd.f32 %v1607, %v1665
    %v1791 = vadd.f32 %v1608, %v1666
    %v1792 = vadd.f32 %v1609, %v1667
    %v1793 = vadd.f32 %v1610, %v1686
    %v1794 = vadd.f32 %v1611, %v1687
    %v1795 = vadd.f32 %v1612, %v1688
    %v1796 = vadd.f32 %v1613, %v1689
    %v1797 = vadd.f32 %v1614, %v1690
    %v1798 = vadd.f32 %v1615, %v1691
    %v1799 = vadd.f32 %v1616, %v1692
    %v1800 = vadd.f32 %v1617, %v1693
    %v1801 = vadd.f32 %v1618, %v1694
    %v1802 = vadd.f32 %v1619, %v1713
    %v1803 = vadd.f32 %v1620, %v1714
    %v1804 = vadd.f32 %v1621, %v1715
    %v1805 = vadd.f32 %v1622, %v1716
    %v1806 = vadd.f32 %v1623, %v1717
    %v1807 = vadd.f32 %v1624, %v1718
    %v1808 = vadd.f32 %v1625, %v1719
    %v1809 = vadd.f32 %v1626, %v1720
    %v1810 = vadd.f32 %v1627, %v1721
    %v1811 = vadd.f32 %v1628, %v1775
    %v1812 = vadd.f32 %v1629, %v1776
    %v1813 = vadd.f32 %v1630, %v1777
    %v1814 = vadd.f32 %v1631, %v1778
    %v1815 = vadd.f32 %v1632, %v1779
    %v1816 = vadd.f32 %v1633, %v1780
    %v1817 = vadd.f32 %v1634, %v1781
    %v1818 = vadd.f32 %v1635, %v1782
    %v1819 = vadd.f32 %v1636, %v1783
    %s1820 = sld [smem:[#allocation6 + $0x1]]
    %v1821 = vstv %s1820
    %v1822 = vadd.f32 %v1784, %v1821
    %v1823 = vadd.f32 %v1785, %v1821
    %v1824 = vadd.f32 %v1786, %v1821
    %v1825 = vadd.f32 %v1787, %v1821
    %v1826 = vadd.f32 %v1788, %v1821
    %v1827 = vadd.f32 %v1789, %v1821
    %v1828 = vadd.f32 %v1790, %v1821
    %v1829 = vadd.f32 %v1791, %v1821
    %v1830 = vadd.f32 %v1792, %v1821
    %v1831 = vmax.f32 %v1822, 0.0
    %v1832 = vmax.f32 %v1823, 0.0
    %v1833 = vmax.f32 %v1824, 0.0
    %v1834 = vmax.f32 %v1825, 0.0
    %v1835 = vmax.f32 %v1826, 0.0
    %v1836 = vmax.f32 %v1827, 0.0
    %v1837 = vmax.f32 %v1828, 0.0
    %v1838 = vmax.f32 %v1829, 0.0
    %v1839 = vmax.f32 %v1830, 0.0
    %v1840 = vadd.f32 %v1793, %v1821
    %v1841 = vadd.f32 %v1794, %v1821
    %v1842 = vadd.f32 %v1795, %v1821
    %v1843 = vadd.f32 %v1796, %v1821
    %v1844 = vadd.f32 %v1797, %v1821
    %v1845 = vadd.f32 %v1798, %v1821
    %v1846 = vadd.f32 %v1799, %v1821
    %v1847 = vadd.f32 %v1800, %v1821
    %v1848 = vadd.f32 %v1801, %v1821
    %v1849 = vmax.f32 %v1840, 0.0
    %v1850 = vmax.f32 %v1841, 0.0
    %v1851 = vmax.f32 %v1842, 0.0
    %v1852 = vmax.f32 %v1843, 0.0
    %v1853 = vmax.f32 %v1844, 0.0
    %v1854 = vmax.f32 %v1845, 0.0
    %v1855 = vmax.f32 %v1846, 0.0
    %v1856 = vmax.f32 %v1847, 0.0
    %v1857 = vmax.f32 %v1848, 0.0
    %v1858 = vadd.f32 %v1802, %v1821
    %v1859 = vadd.f32 %v1803, %v1821
    %v1860 = vadd.f32 %v1804, %v1821
    %v1861 = vadd.f32 %v1805, %v1821
    %v1862 = vadd.f32 %v1806, %v1821
    %v1863 = vadd.f32 %v1807, %v1821
    %v1864 = vadd.f32 %v1808, %v1821
    %v1865 = vadd.f32 %v1809, %v1821
    %v1866 = vadd.f32 %v1810, %v1821
    %v1867 = vmax.f32 %v1858, 0.0
    %v1868 = vmax.f32 %v1859, 0.0
    %v1869 = vmax.f32 %v1860, 0.0
    %v1870 = vmax.f32 %v1861, 0.0
    %v1871 = vmax.f32 %v1862, 0.0
    %v1872 = vmax.f32 %v1863, 0.0
    %v1873 = vmax.f32 %v1864, 0.0
    %v1874 = vmax.f32 %v1865, 0.0
    %v1875 = vmax.f32 %v1866, 0.0
    %v1876 = vadd.f32 %v1811, %v1821
    %v1877 = vadd.f32 %v1812, %v1821
    %v1878 = vadd.f32 %v1813, %v1821
    %v1879 = vadd.f32 %v1814, %v1821
    %v1880 = vadd.f32 %v1815, %v1821
    %v1881 = vadd.f32 %v1816, %v1821
    %v1882 = vadd.f32 %v1817, %v1821
    %v1883 = vadd.f32 %v1818, %v1821
    %v1884 = vadd.f32 %v1819, %v1821
    %v1885 = vmax.f32 %v1876, 0.0
    %v1886 = vmax.f32 %v1877, 0.0
    %v1887 = vmax.f32 %v1878, 0.0
    %v1888 = vmax.f32 %v1879, 0.0
    %v1889 = vmax.f32 %v1880, 0.0
    %v1890 = vmax.f32 %v1881, 0.0
    %v1891 = vmax.f32 %v1882, 0.0
    %v1892 = vmax.f32 %v1883, 0.0
    %v1893 = vmax.f32 %v1884, 0.0
    %v1894 = vmax.f32 %v1831, %v1849
    %v1895 = vmax.f32 %v1832, %v1850
    %v1896 = vmax.f32 %v1833, %v1851
    %v1897 = vmax.f32 %v1834, %v1852
    %v1898 = vmax.f32 %v1835, %v1853
    %v1899 = vmax.f32 %v1836, %v1854
    %v1900 = vmax.f32 %v1837, %v1855
    %v1901 = vmax.f32 %v1838, %v1856
    %v1902 = vmax.f32 %v1839, %v1857
    %v1903 = vmax.f32 %v1867, %v1885
    %v1904 = vmax.f32 %v1868, %v1886
    %v1905 = vmax.f32 %v1869, %v1887
    %v1906 = vmax.f32 %v1870, %v1888
    %v1907 = vmax.f32 %v1871, %v1889
    %v1908 = vmax.f32 %v1872, %v1890
    %v1909 = vmax.f32 %v1873, %v1891
    %v1910 = vmax.f32 %v1874, %v1892
    %v1911 = vmax.f32 %v1875, %v1893
    %s1912 = sld [smem:[#allocation8 + $0x80]]
    %s1913 = sld [smem:[#allocation8 + $0x81]]
    %v1914 = vstv %s1912
    %v1915 = vmul.f32 %v1914, %v1894
    %v1916 = vmul.f32 %v1914, %v1895
    %v1917 = vmul.f32 %v1914, %v1896
    %v1918 = vmul.f32 %v1914, %v1897
    %v1919 = vmul.f32 %v1914, %v1898
    %v1920 = vmul.f32 %v1914, %v1899
    %v1921 = vmul.f32 %v1914, %v1900
    %v1922 = vmul.f32 %v1914, %v1901
    %v1923 = vmul.f32 %v1914, %v1902
    %v1924 = vstv %s1913
    %v1925 = vmul.f32 %v1924, %v1903
    %v1926 = vmul.f32 %v1924, %v1904
    %v1927 = vmul.f32 %v1924, %v1905
    %v1928 = vmul.f32 %v1924, %v1906
    %v1929 = vmul.f32 %v1924, %v1907
    %v1930 = vmul.f32 %v1924, %v1908
    %v1931 = vmul.f32 %v1924, %v1909
    %v1932 = vmul.f32 %v1924, %v1910
    %v1933 = vmul.f32 %v1924, %v1911
    %v1934 = vadd.f32 %v1915, %v1925
    %v1935 = vadd.f32 %v1916, %v1926
    %v1936 = vadd.f32 %v1917, %v1927
    %v1937 = vadd.f32 %v1918, %v1928
    %v1938 = vadd.f32 %v1919, %v1929
    %v1939 = vadd.f32 %v1920, %v1930
    %v1940 = vadd.f32 %v1921, %v1931
    %v1941 = vadd.f32 %v1922, %v1932
    %v1942 = vadd.f32 %v1923, %v1933
    %v1943 = vmul.f32 %v1914, %v1903
    %v1944 = vmul.f32 %v1914, %v1904
    %v1945 = vmul.f32 %v1914, %v1905
    %v1946 = vmul.f32 %v1914, %v1906
    %v1947 = vmul.f32 %v1914, %v1907
    %v1948 = vmul.f32 %v1914, %v1908
    %v1949 = vmul.f32 %v1914, %v1909
    %v1950 = vmul.f32 %v1914, %v1910
    %v1951 = vmul.f32 %v1914, %v1911
    %v1952 = vmul.f32 %v1924, %v1894
    %v1953 = vmul.f32 %v1924, %v1895
    %v1954 = vmul.f32 %v1924, %v1896
    %v1955 = vmul.f32 %v1924, %v1897
    %v1956 = vmul.f32 %v1924, %v1898
    %v1957 = vmul.f32 %v1924, %v1899
    %v1958 = vmul.f32 %v1924, %v1900
    %v1959 = vmul.f32 %v1924, %v1901
    %v1960 = vmul.f32 %v1924, %v1902
    %v1970 = vrot.slane %v1952, 1
    %v1971 = vrot.slane %v1953, 1
    %v1972 = vsel %vm234, %v1970, %v1971
    %v1973 = vrot.slane %v1954, 1
    %v1974 = vsel %vm234, %v1971, %v1973
    %v1975 = vrot.slane %v1955, 1
    %v1976 = vsel %vm234, %v1973, %v1975
    %v1977 = vrot.slane %v1956, 1
    %v1978 = vsel %vm234, %v1975, %v1977
    %v1979 = vrot.slane %v1957, 1
    %v1980 = vsel %vm234, %v1977, %v1979
    %v1981 = vrot.slane %v1958, 1
    %v1982 = vsel %vm234, %v1979, %v1981
    %v1983 = vrot.slane %v1959, 1
    %v1984 = vsel %vm234, %v1981, %v1983
    %v1985 = vrot.slane %v1960, 1
    %v1986 = vsel %vm234, %v1983, %v1985
    %v1996 = vadd.f32 %v1943, %v1972
    %v1997 = vadd.f32 %v1944, %v1974
    %v1998 = vadd.f32 %v1945, %v1976
    %v1999 = vadd.f32 %v1946, %v1978
    %v2000 = vadd.f32 %v1947, %v1980
    %v2001 = vadd.f32 %v1948, %v1982
    %v2002 = vadd.f32 %v1949, %v1984
    %v2003 = vadd.f32 %v1950, %v1986
    %v2004 = vadd.f32 %v1951, %v1985
    %v2005 = vadd.f32 %v1053, %v1934
    %v2006 = vadd.f32 %v1054, %v1935
    %v2007 = vadd.f32 %v1055, %v1936
    %v2008 = vadd.f32 %v1056, %v1937
    %v2009 = vadd.f32 %v1057, %v1938
    %v2010 = vadd.f32 %v1058, %v1939
    %v2011 = vadd.f32 %v1059, %v1940
    %v2012 = vadd.f32 %v1060, %v1941
    %v2013 = vadd.f32 %v1061, %v1942
    %v2014 = vadd.f32 %v1115, %v1996
    %v2015 = vadd.f32 %v1116, %v1997
    %v2016 = vadd.f32 %v1117, %v1998
    %v2017 = vadd.f32 %v1118, %v1999
    %v2018 = vadd.f32 %v1119, %v2000
    %v2019 = vadd.f32 %v1120, %v2001
    %v2020 = vadd.f32 %v1121, %v2002
    %v2021 = vadd.f32 %v1122, %v2003
    %v2022 = vadd.f32 %v1123, %v2004
    %s2023 = sld [smem:[#allocation4 + $0x100]]
    %s2024 = sld [smem:[#allocation4 + $0x101]]
    %v2025 = vstv %s2023
    %v2026 = vmul.f32 %v2025, %v85
    %v2027 = vmul.f32 %v2025, %v86
    %v2028 = vmul.f32 %v2025, %v87
    %v2029 = vmul.f32 %v2025, %v88
    %v2030 = vmul.f32 %v2025, %v89
    %v2031 = vmul.f32 %v2025, %v90
    %v2032 = vmul.f32 %v2025, %v91
    %v2033 = vmul.f32 %v2025, %v92
    %v2034 = vmul.f32 %v2025, %v93
    %v2035 = vstv %s2024
    %v2036 = vmul.f32 %v2035, %v95
    %v2037 = vmul.f32 %v2035, %v96
    %v2038 = vmul.f32 %v2035, %v97
    %v2039 = vmul.f32 %v2035, %v98
    %v2040 = vmul.f32 %v2035, %v99
    %v2041 = vmul.f32 %v2035, %v100
    %v2042 = vmul.f32 %v2035, %v101
    %v2043 = vmul.f32 %v2035, %v102
    %v2044 = vmul.f32 %v2035, %v103
    %v2045 = vadd.f32 %v2026, %v2036
    %v2046 = vadd.f32 %v2027, %v2037
    %v2047 = vadd.f32 %v2028, %v2038
    %v2048 = vadd.f32 %v2029, %v2039
    %v2049 = vadd.f32 %v2030, %v2040
    %v2050 = vadd.f32 %v2031, %v2041
    %v2051 = vadd.f32 %v2032, %v2042
    %v2052 = vadd.f32 %v2033, %v2043
    %v2053 = vadd.f32 %v2034, %v2044
    %v2054 = vmul.f32 %v2025, %v95
    %v2055 = vmul.f32 %v2025, %v96
    %v2056 = vmul.f32 %v2025, %v97
    %v2057 = vmul.f32 %v2025, %v98
    %v2058 = vmul.f32 %v2025, %v99
    %v2059 = vmul.f32 %v2025, %v100
    %v2060 = vmul.f32 %v2025, %v101
    %v2061 = vmul.f32 %v2025, %v102
    %v2062 = vmul.f32 %v2025, %v103
    %v2063 = vmul.f32 %v2035, %v105
    %v2064 = vmul.f32 %v2035, %v106
    %v2065 = vmul.f32 %v2035, %v107
    %v2066 = vmul.f32 %v2035, %v108
    %v2067 = vmul.f32 %v2035, %v109
    %v2068 = vmul.f32 %v2035, %v110
    %v2069 = vmul.f32 %v2035, %v111
    %v2070 = vmul.f32 %v2035, %v112
    %v2071 = vmul.f32 %v2035, %v113
    %v2072 = vadd.f32 %v2054, %v2063
    %v2073 = vadd.f32 %v2055, %v2064
    %v2074 = vadd.f32 %v2056, %v2065
    %v2075 = vadd.f32 %v2057, %v2066
    %v2076 = vadd.f32 %v2058, %v2067
    %v2077 = vadd.f32 %v2059, %v2068
    %v2078 = vadd.f32 %v2060, %v2069
    %v2079 = vadd.f32 %v2061, %v2070
    %v2080 = vadd.f32 %v2062, %v2071
    %v2081 = vmul.f32 %v2025, %v105
    %v2082 = vmul.f32 %v2025, %v106
    %v2083 = vmul.f32 %v2025, %v107
    %v2084 = vmul.f32 %v2025, %v108
    %v2085 = vmul.f32 %v2025, %v109
    %v2086 = vmul.f32 %v2025, %v110
    %v2087 = vmul.f32 %v2025, %v111
    %v2088 = vmul.f32 %v2025, %v112
    %v2089 = vmul.f32 %v2025, %v113
    %v2090 = vmul.f32 %v2035, %v115
    %v2091 = vmul.f32 %v2035, %v116
    %v2092 = vmul.f32 %v2035, %v117
    %v2093 = vmul.f32 %v2035, %v118
    %v2094 = vmul.f32 %v2035, %v119
    %v2095 = vmul.f32 %v2035, %v120
    %v2096 = vmul.f32 %v2035, %v121
    %v2097 = vmul.f32 %v2035, %v122
    %v2098 = vmul.f32 %v2035, %v123
    %v2099 = vadd.f32 %v2081, %v2090
    %v2100 = vadd.f32 %v2082, %v2091
    %v2101 = vadd.f32 %v2083, %v2092
    %v2102 = vadd.f32 %v2084, %v2093
    %v2103 = vadd.f32 %v2085, %v2094
    %v2104 = vadd.f32 %v2086, %v2095
    %v2105 = vadd.f32 %v2087, %v2096
    %v2106 = vadd.f32 %v2088, %v2097
    %v2107 = vadd.f32 %v2089, %v2098
    %v2108 = vmul.f32 %v2025, %v115
    %v2109 = vmul.f32 %v2025, %v116
    %v2110 = vmul.f32 %v2025, %v117
    %v2111 = vmul.f32 %v2025, %v118
    %v2112 = vmul.f32 %v2025, %v119
    %v2113 = vmul.f32 %v2025, %v120
    %v2114 = vmul.f32 %v2025, %v121
    %v2115 = vmul.f32 %v2025, %v122
    %v2116 = vmul.f32 %v2025, %v123
    %v2117 = vmul.f32 %v2035, %v85
    %v2118 = vmul.f32 %v2035, %v86
    %v2119 = vmul.f32 %v2035, %v87
    %v2120 = vmul.f32 %v2035, %v88
    %v2121 = vmul.f32 %v2035, %v89
    %v2122 = vmul.f32 %v2035, %v90
    %v2123 = vmul.f32 %v2035, %v91
    %v2124 = vmul.f32 %v2035, %v92
    %v2125 = vmul.f32 %v2035, %v93
    %v2135 = vrot.slane %v2117, 1
    %v2136 = vrot.slane %v2118, 1
    %v2137 = vsel %vm234, %v2135, %v2136
    %v2138 = vrot.slane %v2119, 1
    %v2139 = vsel %vm234, %v2136, %v2138
    %v2140 = vrot.slane %v2120, 1
    %v2141 = vsel %vm234, %v2138, %v2140
    %v2142 = vrot.slane %v2121, 1
    %v2143 = vsel %vm234, %v2140, %v2142
    %v2144 = vrot.slane %v2122, 1
    %v2145 = vsel %vm234, %v2142, %v2144
    %v2146 = vrot.slane %v2123, 1
    %v2147 = vsel %vm234, %v2144, %v2146
    %v2148 = vrot.slane %v2124, 1
    %v2149 = vsel %vm234, %v2146, %v2148
    %v2150 = vrot.slane %v2125, 1
    %v2151 = vsel %vm234, %v2148, %v2150
    %v2161 = vadd.f32 %v2108, %v2137
    %v2162 = vadd.f32 %v2109, %v2139
    %v2163 = vadd.f32 %v2110, %v2141
    %v2164 = vadd.f32 %v2111, %v2143
    %v2165 = vadd.f32 %v2112, %v2145
    %v2166 = vadd.f32 %v2113, %v2147
    %v2167 = vadd.f32 %v2114, %v2149
    %v2168 = vadd.f32 %v2115, %v2151
    %v2169 = vadd.f32 %v2116, %v2150
    %s2170 = sld [smem:[#allocation4 + $0x102]]
    %s2171 = sld [smem:[#allocation4 + $0x103]]
    %v2172 = vstv %s2170
    %v2173 = vmul.f32 %v2172, %v273
    %v2174 = vmul.f32 %v2172, %v274
    %v2175 = vmul.f32 %v2172, %v275
    %v2176 = vmul.f32 %v2172, %v276
    %v2177 = vmul.f32 %v2172, %v277
    %v2178 = vmul.f32 %v2172, %v278
    %v2179 = vmul.f32 %v2172, %v279
    %v2180 = vmul.f32 %v2172, %v280
    %v2181 = vmul.f32 %v2172, %v281
    %v2182 = vstv %s2171
    %v2183 = vmul.f32 %v2182, %v283
    %v2184 = vmul.f32 %v2182, %v284
    %v2185 = vmul.f32 %v2182, %v285
    %v2186 = vmul.f32 %v2182, %v286
    %v2187 = vmul.f32 %v2182, %v287
    %v2188 = vmul.f32 %v2182, %v288
    %v2189 = vmul.f32 %v2182, %v289
    %v2190 = vmul.f32 %v2182, %v290
    %v2191 = vmul.f32 %v2182, %v291
    %v2192 = vadd.f32 %v2173, %v2183
    %v2193 = vadd.f32 %v2174, %v2184
    %v2194 = vadd.f32 %v2175, %v2185
    %v2195 = vadd.f32 %v2176, %v2186
    %v2196 = vadd.f32 %v2177, %v2187
    %v2197 = vadd.f32 %v2178, %v2188
    %v2198 = vadd.f32 %v2179, %v2189
    %v2199 = vadd.f32 %v2180, %v2190
    %v2200 = vadd.f32 %v2181, %v2191
    %v2201 = vmul.f32 %v2172, %v283
    %v2202 = vmul.f32 %v2172, %v284
    %v2203 = vmul.f32 %v2172, %v285
    %v2204 = vmul.f32 %v2172, %v286
    %v2205 = vmul.f32 %v2172, %v287
    %v2206 = vmul.f32 %v2172, %v288
    %v2207 = vmul.f32 %v2172, %v289
    %v2208 = vmul.f32 %v2172, %v290
    %v2209 = vmul.f32 %v2172, %v291
    %v2210 = vmul.f32 %v2182, %v293
    %v2211 = vmul.f32 %v2182, %v294
    %v2212 = vmul.f32 %v2182, %v295
    %v2213 = vmul.f32 %v2182, %v296
    %v2214 = vmul.f32 %v2182, %v297
    %v2215 = vmul.f32 %v2182, %v298
    %v2216 = vmul.f32 %v2182, %v299
    %v2217 = vmul.f32 %v2182, %v300
    %v2218 = vmul.f32 %v2182, %v301
    %v2219 = vadd.f32 %v2201, %v2210
    %v2220 = vadd.f32 %v2202, %v2211
    %v2221 = vadd.f32 %v2203, %v2212
    %v2222 = vadd.f32 %v2204, %v2213
    %v2223 = vadd.f32 %v2205, %v2214
    %v2224 = vadd.f32 %v2206, %v2215
    %v2225 = vadd.f32 %v2207, %v2216
    %v2226 = vadd.f32 %v2208, %v2217
    %v2227 = vadd.f32 %v2209, %v2218
    %v2228 = vmul.f32 %v2172, %v293
    %v2229 = vmul.f32 %v2172, %v294
    %v2230 = vmul.f32 %v2172, %v295
    %v2231 = vmul.f32 %v2172, %v296
    %v2232 = vmul.f32 %v2172, %v297
    %v2233 = vmul.f32 %v2172, %v298
    %v2234 = vmul.f32 %v2172, %v299
    %v2235 = vmul.f32 %v2172, %v300
    %v2236 = vmul.f32 %v2172, %v301
    %v2237 = vmul.f32 %v2182, %v303
    %v2238 = vmul.f32 %v2182, %v304
    %v2239 = vmul.f32 %v2182, %v305
    %v2240 = vmul.f32 %v2182, %v306
    %v2241 = vmul.f32 %v2182, %v307
    %v2242 = vmul.f32 %v2182, %v308
    %v2243 = vmul.f32 %v2182, %v309
    %v2244 = vmul.f32 %v2182, %v310
    %v2245 = vmul.f32 %v2182, %v311
    %v2246 = vadd.f32 %v2228, %v2237
    %v2247 = vadd.f32 %v2229, %v2238
    %v2248 = vadd.f32 %v2230, %v2239
    %v2249 = vadd.f32 %v2231, %v2240
    %v2250 = vadd.f32 %v2232, %v2241
    %v2251 = vadd.f32 %v2233, %v2242
    %v2252 = vadd.f32 %v2234, %v2243
    %v2253 = vadd.f32 %v2235, %v2244
    %v2254 = vadd.f32 %v2236, %v2245
    %v2255 = vmul.f32 %v2172, %v303
    %v2256 = vmul.f32 %v2172, %v304
    %v2257 = vmul.f32 %v2172, %v305
    %v2258 = vmul.f32 %v2172, %v306
    %v2259 = vmul.f32 %v2172, %v307
    %v2260 = vmul.f32 %v2172, %v308
    %v2261 = vmul.f32 %v2172, %v309
    %v2262 = vmul.f32 %v2172, %v310
    %v2263 = vmul.f32 %v2172, %v311
    %v2264 = vmul.f32 %v2182, %v273
    %v2265 = vmul.f32 %v2182, %v274
    %v2266 = vmul.f32 %v2182, %v275
    %v2267 = vmul.f32 %v2182, %v276
    %v2268 = vmul.f32 %v2182, %v277
    %v2269 = vmul.f32 %v2182, %v278
    %v2270 = vmul.f32 %v2182, %v279
    %v2271 = vmul.f32 %v2182, %v280
    %v2272 = vmul.f32 %v2182, %v281
    %v2282 = vrot.slane %v2264, 1
    %v2283 = vrot.slane %v2265, 1
    %v2284 = vsel %vm234, %v2282, %v2283
    %v2285 = vrot.slane %v2266, 1
    %v2286 = vsel %vm234, %v2283, %v2285
    %v2287 = vrot.slane %v2267, 1
    %v2288 = vsel %vm234, %v2285, %v2287
    %v2289 = vrot.slane %v2268, 1
    %v2290 = vsel %vm234, %v2287, %v2289
    %v2291 = vrot.slane %v2269, 1
    %v2292 = vsel %vm234, %v2289, %v2291
    %v2293 = vrot.slane %v2270, 1
    %v2294 = vsel %vm234, %v2291, %v2293
    %v2295 = vrot.slane %v2271, 1
    %v2296 = vsel %vm234, %v2293, %v2295
    %v2297 = vrot.slane %v2272, 1
    %v2298 = vsel %vm234, %v2295, %v2297
    %v2308 = vadd.f32 %v2255, %v2284
    %v2309 = vadd.f32 %v2256, %v2286
    %v2310 = vadd.f32 %v2257, %v2288
    %v2311 = vadd.f32 %v2258, %v2290
    %v2312 = vadd.f32 %v2259, %v2292
    %v2313 = vadd.f32 %v2260, %v2294
    %v2314 = vadd.f32 %v2261, %v2296
    %v2315 = vadd.f32 %v2262, %v2298
    %v2316 = vadd.f32 %v2263, %v2297
    %v2317 = vadd.f32 %v2045, %v2192
    %v2318 = vadd.f32 %v2046, %v2193
    %v2319 = vadd.f32 %v2047, %v2194
    %v2320 = vadd.f32 %v2048, %v2195
    %v2321 = vadd.f32 %v2049, %v2196
    %v2322 = vadd.f32 %v2050, %v2197
    %v2323 = vadd.f32 %v2051, %v2198
    %v2324 = vadd.f32 %v2052, %v2199
    %v2325 = vadd.f32 %v2053, %v2200
    %v2326 = vadd.f32 %v2072, %v2219
    %v2327 = vadd.f32 %v2073, %v2220
    %v2328 = vadd.f32 %v2074, %v2221
    %v2329 = vadd.f32 %v2075, %v2222
    %v2330 = vadd.f32 %v2076, %v2223
    %v2331 = vadd.f32 %v2077, %v2224
    %v2332 = vadd.f32 %v2078, %v2225
    %v2333 = vadd.f32 %v2079, %v2226
    %v2334 = vadd.f32 %v2080, %v2227
    %v2335 = vadd.f32 %v2099, %v2246
    %v2336 = vadd.f32 %v2100, %v2247
    %v2337 = vadd.f32 %v2101, %v2248
    %v2338 = vadd.f32 %v2102, %v2249
    %v2339 = vadd.f32 %v2103, %v2250
    %v2340 = vadd.f32 %v2104, %v2251
    %v2341 = vadd.f32 %v2105, %v2252
    %v2342 = vadd.f32 %v2106, %v2253
    %v2343 = vadd.f32 %v2107, %v2254
    %v2344 = vadd.f32 %v2161, %v2308
    %v2345 = vadd.f32 %v2162, %v2309
    %v2346 = vadd.f32 %v2163, %v2310
    %v2347 = vadd.f32 %v2164, %v2311
    %v2348 = vadd.f32 %v2165, %v2312
    %v2349 = vadd.f32 %v2166, %v2313
    %v2350 = vadd.f32 %v2167, %v2314
    %v2351 = vadd.f32 %v2168, %v2315
    %v2352 = vadd.f32 %v2169, %v2316
    %s2353 = sld [smem:[#allocation4 + $0x104]]
    %s2354 = sld [smem:[#allocation4 + $0x105]]
    %v2355 = vstv %s2353
    %v2356 = vmul.f32 %v2355, %v496
    %v2357 = vmul.f32 %v2355, %v497
    %v2358 = vmul.f32 %v2355, %v498
    %v2359 = vmul.f32 %v2355, %v499
    %v2360 = vmul.f32 %v2355, %v500
    %v2361 = vmul.f32 %v2355, %v501
    %v2362 = vmul.f32 %v2355, %v502
    %v2363 = vmul.f32 %v2355, %v503
    %v2364 = vmul.f32 %v2355, %v504
    %v2365 = vstv %s2354
    %v2366 = vmul.f32 %v2365, %v506
    %v2367 = vmul.f32 %v2365, %v507
    %v2368 = vmul.f32 %v2365, %v508
    %v2369 = vmul.f32 %v2365, %v509
    %v2370 = vmul.f32 %v2365, %v510
    %v2371 = vmul.f32 %v2365, %v511
    %v2372 = vmul.f32 %v2365, %v512
    %v2373 = vmul.f32 %v2365, %v513
    %v2374 = vmul.f32 %v2365, %v514
    %v2375 = vadd.f32 %v2356, %v2366
    %v2376 = vadd.f32 %v2357, %v2367
    %v2377 = vadd.f32 %v2358, %v2368
    %v2378 = vadd.f32 %v2359, %v2369
    %v2379 = vadd.f32 %v2360, %v2370
    %v2380 = vadd.f32 %v2361, %v2371
    %v2381 = vadd.f32 %v2362, %v2372
    %v2382 = vadd.f32 %v2363, %v2373
    %v2383 = vadd.f32 %v2364, %v2374
    %v2384 = vmul.f32 %v2355, %v506
    %v2385 = vmul.f32 %v2355, %v507
    %v2386 = vmul.f32 %v2355, %v508
    %v2387 = vmul.f32 %v2355, %v509
    %v2388 = vmul.f32 %v2355, %v510
    %v2389 = vmul.f32 %v2355, %v511
    %v2390 = vmul.f32 %v2355, %v512
    %v2391 = vmul.f32 %v2355, %v513
    %v2392 = vmul.f32 %v2355, %v514
    %v2393 = vmul.f32 %v2365, %v516
    %v2394 = vmul.f32 %v2365, %v517
    %v2395 = vmul.f32 %v2365, %v518
    %v2396 = vmul.f32 %v2365, %v519
    %v2397 = vmul.f32 %v2365, %v520
    %v2398 = vmul.f32 %v2365, %v521
    %v2399 = vmul.f32 %v2365, %v522
    %v2400 = vmul.f32 %v2365, %v523
    %v2401 = vmul.f32 %v2365, %v524
    %v2402 = vadd.f32 %v2384, %v2393
    %v2403 = vadd.f32 %v2385, %v2394
    %v2404 = vadd.f32 %v2386, %v2395
    %v2405 = vadd.f32 %v2387, %v2396
    %v2406 = vadd.f32 %v2388, %v2397
    %v2407 = vadd.f32 %v2389, %v2398
    %v2408 = vadd.f32 %v2390, %v2399
    %v2409 = vadd.f32 %v2391, %v2400
    %v2410 = vadd.f32 %v2392, %v2401
    %v2411 = vmul.f32 %v2355, %v516
    %v2412 = vmul.f32 %v2355, %v517
    %v2413 = vmul.f32 %v2355, %v518
    %v2414 = vmul.f32 %v2355, %v519
    %v2415 = vmul.f32 %v2355, %v520
    %v2416 = vmul.f32 %v2355, %v521
    %v2417 = vmul.f32 %v2355, %v522
    %v2418 = vmul.f32 %v2355, %v523
    %v2419 = vmul.f32 %v2355, %v524
    %v2420 = vmul.f32 %v2365, %v526
    %v2421 = vmul.f32 %v2365, %v527
    %v2422 = vmul.f32 %v2365, %v528
    %v2423 = vmul.f32 %v2365, %v529
    %v2424 = vmul.f32 %v2365, %v530
    %v2425 = vmul.f32 %v2365, %v531
    %v2426 = vmul.f32 %v2365, %v532
    %v2427 = vmul.f32 %v2365, %v533
    %v2428 = vmul.f32 %v2365, %v534
    %v2429 = vadd.f32 %v2411, %v2420
    %v2430 = vadd.f32 %v2412, %v2421
    %v2431 = vadd.f32 %v2413, %v2422
    %v2432 = vadd.f32 %v2414, %v2423
    %v2433 = vadd.f32 %v2415, %v2424
    %v2434 = vadd.f32 %v2416, %v2425
    %v2435 = vadd.f32 %v2417, %v2426
    %v2436 = vadd.f32 %v2418, %v2427
    %v2437 = vadd.f32 %v2419, %v2428
    %v2438 = vmul.f32 %v2355, %v526
    %v2439 = vmul.f32 %v2355, %v527
    %v2440 = vmul.f32 %v2355, %v528
    %v2441 = vmul.f32 %v2355, %v529
    %v2442 = vmul.f32 %v2355, %v530
    %v2443 = vmul.f32 %v2355, %v531
    %v2444 = vmul.f32 %v2355, %v532
    %v2445 = vmul.f32 %v2355, %v533
    %v2446 = vmul.f32 %v2355, %v534
    %v2447 = vmul.f32 %v2365, %v496
    %v2448 = vmul.f32 %v2365, %v497
    %v2449 = vmul.f32 %v2365, %v498
    %v2450 = vmul.f32 %v2365, %v499
    %v2451 = vmul.f32 %v2365, %v500
    %v2452 = vmul.f32 %v2365, %v501
    %v2453 = vmul.f32 %v2365, %v502
    %v2454 = vmul.f32 %v2365, %v503
    %v2455 = vmul.f32 %v2365, %v504
    %v2465 = vrot.slane %v2447, 1
    %v2466 = vrot.slane %v2448, 1
    %v2467 = vsel %vm234, %v2465, %v2466
    %v2468 = vrot.slane %v2449, 1
    %v2469 = vsel %vm234, %v2466, %v2468
    %v2470 = vrot.slane %v2450, 1
    %v2471 = vsel %vm234, %v2468, %v2470
    %v2472 = vrot.slane %v2451, 1
    %v2473 = vsel %vm234, %v2470, %v2472
    %v2474 = vrot.slane %v2452, 1
    %v2475 = vsel %vm234, %v2472, %v2474
    %v2476 = vrot.slane %v2453, 1
    %v2477 = vsel %vm234, %v2474, %v2476
    %v2478 = vrot.slane %v2454, 1
    %v2479 = vsel %vm234, %v2476, %v2478
    %v2480 = vrot.slane %v2455, 1
    %v2481 = vsel %vm234, %v2478, %v2480
    %v2491 = vadd.f32 %v2438, %v2467
    %v2492 = vadd.f32 %v2439, %v2469
    %v2493 = vadd.f32 %v2440, %v2471
    %v2494 = vadd.f32 %v2441, %v2473
    %v2495 = vadd.f32 %v2442, %v2475
    %v2496 = vadd.f32 %v2443, %v2477
    %v2497 = vadd.f32 %v2444, %v2479
    %v2498 = vadd.f32 %v2445, %v2481
    %v2499 = vadd.f32 %v2446, %v2480
    %v2500 = vadd.f32 %v2317, %v2375
    %v2501 = vadd.f32 %v2318, %v2376
    %v2502 = vadd.f32 %v2319, %v2377
    %v2503 = vadd.f32 %v2320, %v2378
    %v2504 = vadd.f32 %v2321, %v2379
    %v2505 = vadd.f32 %v2322, %v2380
    %v2506 = vadd.f32 %v2323, %v2381
    %v2507 = vadd.f32 %v2324, %v2382
    %v2508 = vadd.f32 %v2325, %v2383
    %v2509 = vadd.f32 %v2326, %v2402
    %v2510 = vadd.f32 %v2327, %v2403
    %v2511 = vadd.f32 %v2328, %v2404
    %v2512 = vadd.f32 %v2329, %v2405
    %v2513 = vadd.f32 %v2330, %v2406
    %v2514 = vadd.f32 %v2331, %v2407
    %v2515 = vadd.f32 %v2332, %v2408
    %v2516 = vadd.f32 %v2333, %v2409
    %v2517 = vadd.f32 %v2334, %v2410
    %v2518 = vadd.f32 %v2335, %v2429
    %v2519 = vadd.f32 %v2336, %v2430
    %v2520 = vadd.f32 %v2337, %v2431
    %v2521 = vadd.f32 %v2338, %v2432
    %v2522 = vadd.f32 %v2339, %v2433
    %v2523 = vadd.f32 %v2340, %v2434
    %v2524 = vadd.f32 %v2341, %v2435
    %v2525 = vadd.f32 %v2342, %v2436
    %v2526 = vadd.f32 %v2343, %v2437
    %v2527 = vadd.f32 %v2344, %v2491
    %v2528 = vadd.f32 %v2345, %v2492
    %v2529 = vadd.f32 %v2346, %v2493
    %v2530 = vadd.f32 %v2347, %v2494
    %v2531 = vadd.f32 %v2348, %v2495
    %v2532 = vadd.f32 %v2349, %v2496
    %v2533 = vadd.f32 %v2350, %v2497
    %v2534 = vadd.f32 %v2351, %v2498
    %v2535 = vadd.f32 %v2352, %v2499
    %s2536 = sld [smem:[#allocation4 + $0x106]]
    %s2537 = sld [smem:[#allocation4 + $0x107]]
    %v2538 = vstv %s2536
    %v2539 = vmul.f32 %v2538, %v719
    %v2540 = vmul.f32 %v2538, %v720
    %v2541 = vmul.f32 %v2538, %v721
    %v2542 = vmul.f32 %v2538, %v722
    %v2543 = vmul.f32 %v2538, %v723
    %v2544 = vmul.f32 %v2538, %v724
    %v2545 = vmul.f32 %v2538, %v725
    %v2546 = vmul.f32 %v2538, %v726
    %v2547 = vmul.f32 %v2538, %v727
    %v2548 = vstv %s2537
    %v2549 = vmul.f32 %v2548, %v729
    %v2550 = vmul.f32 %v2548, %v730
    %v2551 = vmul.f32 %v2548, %v731
    %v2552 = vmul.f32 %v2548, %v732
    %v2553 = vmul.f32 %v2548, %v733
    %v2554 = vmul.f32 %v2548, %v734
    %v2555 = vmul.f32 %v2548, %v735
    %v2556 = vmul.f32 %v2548, %v736
    %v2557 = vmul.f32 %v2548, %v737
    %v2558 = vadd.f32 %v2539, %v2549
    %v2559 = vadd.f32 %v2540, %v2550
    %v2560 = vadd.f32 %v2541, %v2551
    %v2561 = vadd.f32 %v2542, %v2552
    %v2562 = vadd.f32 %v2543, %v2553
    %v2563 = vadd.f32 %v2544, %v2554
    %v2564 = vadd.f32 %v2545, %v2555
    %v2565 = vadd.f32 %v2546, %v2556
    %v2566 = vadd.f32 %v2547, %v2557
    %v2567 = vmul.f32 %v2538, %v729
    %v2568 = vmul.f32 %v2538, %v730
    %v2569 = vmul.f32 %v2538, %v731
    %v2570 = vmul.f32 %v2538, %v732
    %v2571 = vmul.f32 %v2538, %v733
    %v2572 = vmul.f32 %v2538, %v734
    %v2573 = vmul.f32 %v2538, %v735
    %v2574 = vmul.f32 %v2538, %v736
    %v2575 = vmul.f32 %v2538, %v737
    %v2576 = vmul.f32 %v2548, %v739
    %v2577 = vmul.f32 %v2548, %v740
    %v2578 = vmul.f32 %v2548, %v741
    %v2579 = vmul.f32 %v2548, %v742
    %v2580 = vmul.f32 %v2548, %v743
    %v2581 = vmul.f32 %v2548, %v744
    %v2582 = vmul.f32 %v2548, %v745
    %v2583 = vmul.f32 %v2548, %v746
    %v2584 = vmul.f32 %v2548, %v747
    %v2585 = vadd.f32 %v2567, %v2576
    %v2586 = vadd.f32 %v2568, %v2577
    %v2587 = vadd.f32 %v2569, %v2578
    %v2588 = vadd.f32 %v2570, %v2579
    %v2589 = vadd.f32 %v2571, %v2580
    %v2590 = vadd.f32 %v2572, %v2581
    %v2591 = vadd.f32 %v2573, %v2582
    %v2592 = vadd.f32 %v2574, %v2583
    %v2593 = vadd.f32 %v2575, %v2584
    %v2594 = vmul.f32 %v2538, %v739
    %v2595 = vmul.f32 %v2538, %v740
    %v2596 = vmul.f32 %v2538, %v741
    %v2597 = vmul.f32 %v2538, %v742
    %v2598 = vmul.f32 %v2538, %v743
    %v2599 = vmul.f32 %v2538, %v744
    %v2600 = vmul.f32 %v2538, %v745
    %v2601 = vmul.f32 %v2538, %v746
    %v2602 = vmul.f32 %v2538, %v747
    %v2603 = vmul.f32 %v2548, %v749
    %v2604 = vmul.f32 %v2548, %v750
    %v2605 = vmul.f32 %v2548, %v751
    %v2606 = vmul.f32 %v2548, %v752
    %v2607 = vmul.f32 %v2548, %v753
    %v2608 = vmul.f32 %v2548, %v754
    %v2609 = vmul.f32 %v2548, %v755
    %v2610 = vmul.f32 %v2548, %v756
    %v2611 = vmul.f32 %v2548, %v757
    %v2612 = vadd.f32 %v2594, %v2603
    %v2613 = vadd.f32 %v2595, %v2604
    %v2614 = vadd.f32 %v2596, %v2605
    %v2615 = vadd.f32 %v2597, %v2606
    %v2616 = vadd.f32 %v2598, %v2607
    %v2617 = vadd.f32 %v2599, %v2608
    %v2618 = vadd.f32 %v2600, %v2609
    %v2619 = vadd.f32 %v2601, %v2610
    %v2620 = vadd.f32 %v2602, %v2611
    %v2621 = vmul.f32 %v2538, %v749
    %v2622 = vmul.f32 %v2538, %v750
    %v2623 = vmul.f32 %v2538, %v751
    %v2624 = vmul.f32 %v2538, %v752
    %v2625 = vmul.f32 %v2538, %v753
    %v2626 = vmul.f32 %v2538, %v754
    %v2627 = vmul.f32 %v2538, %v755
    %v2628 = vmul.f32 %v2538, %v756
    %v2629 = vmul.f32 %v2538, %v757
    %v2630 = vmul.f32 %v2548, %v719
    %v2631 = vmul.f32 %v2548, %v720
    %v2632 = vmul.f32 %v2548, %v721
    %v2633 = vmul.f32 %v2548, %v722
    %v2634 = vmul.f32 %v2548, %v723
    %v2635 = vmul.f32 %v2548, %v724
    %v2636 = vmul.f32 %v2548, %v725
    %v2637 = vmul.f32 %v2548, %v726
    %v2638 = vmul.f32 %v2548, %v727
    %v2648 = vrot.slane %v2630, 1
    %v2649 = vrot.slane %v2631, 1
    %v2650 = vsel %vm234, %v2648, %v2649
    %v2651 = vrot.slane %v2632, 1
    %v2652 = vsel %vm234, %v2649, %v2651
    %v2653 = vrot.slane %v2633, 1
    %v2654 = vsel %vm234, %v2651, %v2653
    %v2655 = vrot.slane %v2634, 1
    %v2656 = vsel %vm234, %v2653, %v2655
    %v2657 = vrot.slane %v2635, 1
    %v2658 = vsel %vm234, %v2655, %v2657
    %v2659 = vrot.slane %v2636, 1
    %v2660 = vsel %vm234, %v2657, %v2659
    %v2661 = vrot.slane %v2637, 1
    %v2662 = vsel %vm234, %v2659, %v2661
    %v2663 = vrot.slane %v2638, 1
    %v2664 = vsel %vm234, %v2661, %v2663
    %v2674 = vadd.f32 %v2621, %v2650
    %v2675 = vadd.f32 %v2622, %v2652
    %v2676 = vadd.f32 %v2623, %v2654
    %v2677 = vadd.f32 %v2624, %v2656
    %v2678 = vadd.f32 %v2625, %v2658
    %v2679 = vadd.f32 %v2626, %v2660
    %v2680 = vadd.f32 %v2627, %v2662
    %v2681 = vadd.f32 %v2628, %v2664
    %v2682 = vadd.f32 %v2629, %v2663
    %v2683 = vadd.f32 %v2500, %v2558
    %v2684 = vadd.f32 %v2501, %v2559
    %v2685 = vadd.f32 %v2502, %v2560
    %v2686 = vadd.f32 %v2503, %v2561
    %v2687 = vadd.f32 %v2504, %v2562
    %v2688 = vadd.f32 %v2505, %v2563
    %v2689 = vadd.f32 %v2506, %v2564
    %v2690 = vadd.f32 %v2507, %v2565
    %v2691 = vadd.f32 %v2508, %v2566
    %v2692 = vadd.f32 %v2509, %v2585
    %v2693 = vadd.f32 %v2510, %v2586
    %v2694 = vadd.f32 %v2511, %v2587
    %v2695 = vadd.f32 %v2512, %v2588
    %v2696 = vadd.f32 %v2513, %v2589
    %v2697 = vadd.f32 %v2514, %v2590
    %v2698 = vadd.f32 %v2515, %v2591
    %v2699 = vadd.f32 %v2516, %v2592
    %v2700 = vadd.f32 %v2517, %v2593
    %v2701 = vadd.f32 %v2518, %v2612
    %v2702 = vadd.f32 %v2519, %v2613
    %v2703 = vadd.f32 %v2520, %v2614
    %v2704 = vadd.f32 %v2521, %v2615
    %v2705 = vadd.f32 %v2522, %v2616
    %v2706 = vadd.f32 %v2523, %v2617
    %v2707 = vadd.f32 %v2524, %v2618
    %v2708 = vadd.f32 %v2525, %v2619
    %v2709 = vadd.f32 %v2526, %v2620
    %v2710 = vadd.f32 %v2527, %v2674
    %v2711 = vadd.f32 %v2528, %v2675
    %v2712 = vadd.f32 %v2529, %v2676
    %v2713 = vadd.f32 %v2530, %v2677
    %v2714 = vadd.f32 %v2531, %v2678
    %v2715 = vadd.f32 %v2532, %v2679
    %v2716 = vadd.f32 %v2533, %v2680
    %v2717 = vadd.f32 %v2534, %v2681
    %v2718 = vadd.f32 %v2535, %v2682
    %s2719 = sld [smem:[#allocation6 + $0x2]]
    %v2720 = vstv %s2719
    %v2721 = vadd.f32 %v2683, %v2720
    %v2722 = vadd.f32 %v2684, %v2720
    %v2723 = vadd.f32 %v2685, %v2720
    %v2724 = vadd.f32 %v2686, %v2720
    %v2725 = vadd.f32 %v2687, %v2720
    %v2726 = vadd.f32 %v2688, %v2720
    %v2727 = vadd.f32 %v2689, %v2720
    %v2728 = vadd.f32 %v2690, %v2720
    %v2729 = vadd.f32 %v2691, %v2720
    %v2730 = vmax.f32 %v2721, 0.0
    %v2731 = vmax.f32 %v2722, 0.0
    %v2732 = vmax.f32 %v2723, 0.0
    %v2733 = vmax.f32 %v2724, 0.0
    %v2734 = vmax.f32 %v2725, 0.0
    %v2735 = vmax.f32 %v2726, 0.0
    %v2736 = vmax.f32 %v2727, 0.0
    %v2737 = vmax.f32 %v2728, 0.0
    %v2738 = vmax.f32 %v2729, 0.0
    %v2739 = vadd.f32 %v2692, %v2720
    %v2740 = vadd.f32 %v2693, %v2720
    %v2741 = vadd.f32 %v2694, %v2720
    %v2742 = vadd.f32 %v2695, %v2720
    %v2743 = vadd.f32 %v2696, %v2720
    %v2744 = vadd.f32 %v2697, %v2720
    %v2745 = vadd.f32 %v2698, %v2720
    %v2746 = vadd.f32 %v2699, %v2720
    %v2747 = vadd.f32 %v2700, %v2720
    %v2748 = vmax.f32 %v2739, 0.0
    %v2749 = vmax.f32 %v2740, 0.0
    %v2750 = vmax.f32 %v2741, 0.0
    %v2751 = vmax.f32 %v2742, 0.0
    %v2752 = vmax.f32 %v2743, 0.0
    %v2753 = vmax.f32 %v2744, 0.0
    %v2754 = vmax.f32 %v2745, 0.0
    %v2755 = vmax.f32 %v2746, 0.0
    %v2756 = vmax.f32 %v2747, 0.0
    %v2757 = vadd.f32 %v2701, %v2720
    %v2758 = vadd.f32 %v2702, %v2720
    %v2759 = vadd.f32 %v2703, %v2720
    %v2760 = vadd.f32 %v2704, %v2720
    %v2761 = vadd.f32 %v2705, %v2720
    %v2762 = vadd.f32 %v2706, %v2720
    %v2763 = vadd.f32 %v2707, %v2720
    %v2764 = vadd.f32 %v2708, %v2720
    %v2765 = vadd.f32 %v2709, %v2720
    %v2766 = vmax.f32 %v2757, 0.0
    %v2767 = vmax.f32 %v2758, 0.0
    %v2768 = vmax.f32 %v2759, 0.0
    %v2769 = vmax.f32 %v2760, 0.0
    %v2770 = vmax.f32 %v2761, 0.0
    %v2771 = vmax.f32 %v2762, 0.0
    %v2772 = vmax.f32 %v2763, 0.0
    %v2773 = vmax.f32 %v2764, 0.0
    %v2774 = vmax.f32 %v2765, 0.0
    %v2775 = vadd.f32 %v2710, %v2720
    %v2776 = vadd.f32 %v2711, %v2720
    %v2777 = vadd.f32 %v2712, %v2720
    %v2778 = vadd.f32 %v2713, %v2720
    %v2779 = vadd.f32 %v2714, %v2720
    %v2780 = vadd.f32 %v2715, %v2720
    %v2781 = vadd.f32 %v2716, %v2720
    %v2782 = vadd.f32 %v2717, %v2720
    %v2783 = vadd.f32 %v2718, %v2720
    %v2784 = vmax.f32 %v2775, 0.0
    %v2785 = vmax.f32 %v2776, 0.0
    %v2786 = vmax.f32 %v2777, 0.0
    %v2787 = vmax.f32 %v2778, 0.0
    %v2788 = vmax.f32 %v2779, 0.0
    %v2789 = vmax.f32 %v2780, 0.0
    %v2790 = vmax.f32 %v2781, 0.0
    %v2791 = vmax.f32 %v2782, 0.0
    %v2792 = vmax.f32 %v2783, 0.0
    %v2793 = vmax.f32 %v2730, %v2748
    %v2794 = vmax.f32 %v2731, %v2749
    %v2795 = vmax.f32 %v2732, %v2750
    %v2796 = vmax.f32 %v2733, %v2751
    %v2797 = vmax.f32 %v2734, %v2752
    %v2798 = vmax.f32 %v2735, %v2753
    %v2799 = vmax.f32 %v2736, %v2754
    %v2800 = vmax.f32 %v2737, %v2755
    %v2801 = vmax.f32 %v2738, %v2756
    %v2802 = vmax.f32 %v2766, %v2784
    %v2803 = vmax.f32 %v2767, %v2785
    %v2804 = vmax.f32 %v2768, %v2786
    %v2805 = vmax.f32 %v2769, %v2787
    %v2806 = vmax.f32 %v2770, %v2788
    %v2807 = vmax.f32 %v2771, %v2789
    %v2808 = vmax.f32 %v2772, %v2790
    %v2809 = vmax.f32 %v2773, %v2791
    %v2810 = vmax.f32 %v2774, %v2792
    %s2811 = sld [smem:[#allocation8 + $0x100]]
    %s2812 = sld [smem:[#allocation8 + $0x101]]
    %v2813 = vstv %s2811
    %v2814 = vmul.f32 %v2813, %v2793
    %v2815 = vmul.f32 %v2813, %v2794
    %v2816 = vmul.f32 %v2813, %v2795
    %v2817 = vmul.f32 %v2813, %v2796
    %v2818 = vmul.f32 %v2813, %v2797
    %v2819 = vmul.f32 %v2813, %v2798
    %v2820 = vmul.f32 %v2813, %v2799
    %v2821 = vmul.f32 %v2813, %v2800
    %v2822 = vmul.f32 %v2813, %v2801
    %v2823 = vstv %s2812
    %v2824 = vmul.f32 %v2823, %v2802
    %v2825 = vmul.f32 %v2823, %v2803
    %v2826 = vmul.f32 %v2823, %v2804
    %v2827 = vmul.f32 %v2823, %v2805
    %v2828 = vmul.f32 %v2823, %v2806
    %v2829 = vmul.f32 %v2823, %v2807
    %v2830 = vmul.f32 %v2823, %v2808
    %v2831 = vmul.f32 %v2823, %v2809
    %v2832 = vmul.f32 %v2823, %v2810
    %v2833 = vadd.f32 %v2814, %v2824
    %v2834 = vadd.f32 %v2815, %v2825
    %v2835 = vadd.f32 %v2816, %v2826
    %v2836 = vadd.f32 %v2817, %v2827
    %v2837 = vadd.f32 %v2818, %v2828
    %v2838 = vadd.f32 %v2819, %v2829
    %v2839 = vadd.f32 %v2820, %v2830
    %v2840 = vadd.f32 %v2821, %v2831
    %v2841 = vadd.f32 %v2822, %v2832
    %v2842 = vmul.f32 %v2813, %v2802
    %v2843 = vmul.f32 %v2813, %v2803
    %v2844 = vmul.f32 %v2813, %v2804
    %v2845 = vmul.f32 %v2813, %v2805
    %v2846 = vmul.f32 %v2813, %v2806
    %v2847 = vmul.f32 %v2813, %v2807
    %v2848 = vmul.f32 %v2813, %v2808
    %v2849 = vmul.f32 %v2813, %v2809
    %v2850 = vmul.f32 %v2813, %v2810
    %v2851 = vmul.f32 %v2823, %v2793
    %v2852 = vmul.f32 %v2823, %v2794
    %v2853 = vmul.f32 %v2823, %v2795
    %v2854 = vmul.f32 %v2823, %v2796
    %v2855 = vmul.f32 %v2823, %v2797
    %v2856 = vmul.f32 %v2823, %v2798
    %v2857 = vmul.f32 %v2823, %v2799
    %v2858 = vmul.f32 %v2823, %v2800
    %v2859 = vmul.f32 %v2823, %v2801
    %v2869 = vrot.slane %v2851, 1
    %v2870 = vrot.slane %v2852, 1
    %v2871 = vsel %vm234, %v2869, %v2870
    %v2872 = vrot.slane %v2853, 1
    %v2873 = vsel %vm234, %v2870, %v2872
    %v2874 = vrot.slane %v2854, 1
    %v2875 = vsel %vm234, %v2872, %v2874
    %v2876 = vrot.slane %v2855, 1
    %v2877 = vsel %vm234, %v2874, %v2876
    %v2878 = vrot.slane %v2856, 1
    %v2879 = vsel %vm234, %v2876, %v2878
    %v2880 = vrot.slane %v2857, 1
    %v2881 = vsel %vm234, %v2878, %v2880
    %v2882 = vrot.slane %v2858, 1
    %v2883 = vsel %vm234, %v2880, %v2882
    %v2884 = vrot.slane %v2859, 1
    %v2885 = vsel %vm234, %v2882, %v2884
    %v2895 = vadd.f32 %v2842, %v2871
    %v2896 = vadd.f32 %v2843, %v2873
    %v2897 = vadd.f32 %v2844, %v2875
    %v2898 = vadd.f32 %v2845, %v2877
    %v2899 = vadd.f32 %v2846, %v2879
    %v2900 = vadd.f32 %v2847, %v2881
    %v2901 = vadd.f32 %v2848, %v2883
    %v2902 = vadd.f32 %v2849, %v2885
    %v2903 = vadd.f32 %v2850, %v2884
    %v2904 = vadd.f32 %v2005, %v2833
    %v2905 = vadd.f32 %v2006, %v2834
    %v2906 = vadd.f32 %v2007, %v2835
    %v2907 = vadd.f32 %v2008, %v2836
    %v2908 = vadd.f32 %v2009, %v2837
    %v2909 = vadd.f32 %v2010, %v2838
    %v2910 = vadd.f32 %v2011, %v2839
    %v2911 = vadd.f32 %v2012, %v2840
    %v2912 = vadd.f32 %v2013, %v2841
    %v2913 = vadd.f32 %v2014, %v2895
    %v2914 = vadd.f32 %v2015, %v2896
    %v2915 = vadd.f32 %v2016, %v2897
    %v2916 = vadd.f32 %v2017, %v2898
    %v2917 = vadd.f32 %v2018, %v2899
    %v2918 = vadd.f32 %v2019, %v2900
    %v2919 = vadd.f32 %v2020, %v2901
    %v2920 = vadd.f32 %v2021, %v2902
    %v2921 = vadd.f32 %v2022, %v2903
    %s2922 = sld [smem:[#allocation4 + $0x180]]
    %s2923 = sld [smem:[#allocation4 + $0x181]]
    %v2924 = vstv %s2922
    %v2925 = vmul.f32 %v2924, %v85
    %v2926 = vmul.f32 %v2924, %v86
    %v2927 = vmul.f32 %v2924, %v87
    %v2928 = vmul.f32 %v2924, %v88
    %v2929 = vmul.f32 %v2924, %v89
    %v2930 = vmul.f32 %v2924, %v90
    %v2931 = vmul.f32 %v2924, %v91
    %v2932 = vmul.f32 %v2924, %v92
    %v2933 = vmul.f32 %v2924, %v93
    %v2934 = vstv %s2923
    %v2935 = vmul.f32 %v2934, %v95
    %v2936 = vmul.f32 %v2934, %v96
    %v2937 = vmul.f32 %v2934, %v97
    %v2938 = vmul.f32 %v2934, %v98
    %v2939 = vmul.f32 %v2934, %v99
    %v2940 = vmul.f32 %v2934, %v100
    %v2941 = vmul.f32 %v2934, %v101
    %v2942 = vmul.f32 %v2934, %v102
    %v2943 = vmul.f32 %v2934, %v103
    %v2944 = vadd.f32 %v2925, %v2935
    %v2945 = vadd.f32 %v2926, %v2936
    %v2946 = vadd.f32 %v2927, %v2937
    %v2947 = vadd.f32 %v2928, %v2938
    %v2948 = vadd.f32 %v2929, %v2939
    %v2949 = vadd.f32 %v2930, %v2940
    %v2950 = vadd.f32 %v2931, %v2941
    %v2951 = vadd.f32 %v2932, %v2942
    %v2952 = vadd.f32 %v2933, %v2943
    %v2953 = vmul.f32 %v2924, %v95
    %v2954 = vmul.f32 %v2924, %v96
    %v2955 = vmul.f32 %v2924, %v97
    %v2956 = vmul.f32 %v2924, %v98
    %v2957 = vmul.f32 %v2924, %v99
    %v2958 = vmul.f32 %v2924, %v100
    %v2959 = vmul.f32 %v2924, %v101
    %v2960 = vmul.f32 %v2924, %v102
    %v2961 = vmul.f32 %v2924, %v103
    %v2962 = vmul.f32 %v2934, %v105
    %v2963 = vmul.f32 %v2934, %v106
    %v2964 = vmul.f32 %v2934, %v107
    %v2965 = vmul.f32 %v2934, %v108
    %v2966 = vmul.f32 %v2934, %v109
    %v2967 = vmul.f32 %v2934, %v110
    %v2968 = vmul.f32 %v2934, %v111
    %v2969 = vmul.f32 %v2934, %v112
    %v2970 = vmul.f32 %v2934, %v113
    %v2971 = vadd.f32 %v2953, %v2962
    %v2972 = vadd.f32 %v2954, %v2963
    %v2973 = vadd.f32 %v2955, %v2964
    %v2974 = vadd.f32 %v2956, %v2965
    %v2975 = vadd.f32 %v2957, %v2966
    %v2976 = vadd.f32 %v2958, %v2967
    %v2977 = vadd.f32 %v2959, %v2968
    %v2978 = vadd.f32 %v2960, %v2969
    %v2979 = vadd.f32 %v2961, %v2970
    %v2980 = vmul.f32 %v2924, %v105
    %v2981 = vmul.f32 %v2924, %v106
    %v2982 = vmul.f32 %v2924, %v107
    %v2983 = vmul.f32 %v2924, %v108
    %v2984 = vmul.f32 %v2924, %v109
    %v2985 = vmul.f32 %v2924, %v110
    %v2986 = vmul.f32 %v2924, %v111
    %v2987 = vmul.f32 %v2924, %v112
    %v2988 = vmul.f32 %v2924, %v113
    %v2989 = vmul.f32 %v2934, %v115
    %v2990 = vmul.f32 %v2934, %v116
    %v2991 = vmul.f32 %v2934, %v117
    %v2992 = vmul.f32 %v2934, %v118
    %v2993 = vmul.f32 %v2934, %v119
    %v2994 = vmul.f32 %v2934, %v120
    %v2995 = vmul.f32 %v2934, %v121
    %v2996 = vmul.f32 %v2934, %v122
    %v2997 = vmul.f32 %v2934, %v123
    %v2998 = vadd.f32 %v2980, %v2989
    %v2999 = vadd.f32 %v2981, %v2990
    %v3000 = vadd.f32 %v2982, %v2991
    %v3001 = vadd.f32 %v2983, %v2992
    %v3002 = vadd.f32 %v2984, %v2993
    %v3003 = vadd.f32 %v2985, %v2994
    %v3004 = vadd.f32 %v2986, %v2995
    %v3005 = vadd.f32 %v2987, %v2996
    %v3006 = vadd.f32 %v2988, %v2997
    %v3007 = vmul.f32 %v2924, %v115
    %v3008 = vmul.f32 %v2924, %v116
    %v3009 = vmul.f32 %v2924, %v117
    %v3010 = vmul.f32 %v2924, %v118
    %v3011 = vmul.f32 %v2924, %v119
    %v3012 = vmul.f32 %v2924, %v120
    %v3013 = vmul.f32 %v2924, %v121
    %v3014 = vmul.f32 %v2924, %v122
    %v3015 = vmul.f32 %v2924, %v123
    %v3016 = vmul.f32 %v2934, %v85
    %v3017 = vmul.f32 %v2934, %v86
    %v3018 = vmul.f32 %v2934, %v87
    %v3019 = vmul.f32 %v2934, %v88
    %v3020 = vmul.f32 %v2934, %v89
    %v3021 = vmul.f32 %v2934, %v90
    %v3022 = vmul.f32 %v2934, %v91
    %v3023 = vmul.f32 %v2934, %v92
    %v3024 = vmul.f32 %v2934, %v93
    %v3034 = vrot.slane %v3016, 1
    %v3035 = vrot.slane %v3017, 1
    %v3036 = vsel %vm234, %v3034, %v3035
    %v3037 = vrot.slane %v3018, 1
    %v3038 = vsel %vm234, %v3035, %v3037
    %v3039 = vrot.slane %v3019, 1
    %v3040 = vsel %vm234, %v3037, %v3039
    %v3041 = vrot.slane %v3020, 1
    %v3042 = vsel %vm234, %v3039, %v3041
    %v3043 = vrot.slane %v3021, 1
    %v3044 = vsel %vm234, %v3041, %v3043
    %v3045 = vrot.slane %v3022, 1
    %v3046 = vsel %vm234, %v3043, %v3045
    %v3047 = vrot.slane %v3023, 1
    %v3048 = vsel %vm234, %v3045, %v3047
    %v3049 = vrot.slane %v3024, 1
    %v3050 = vsel %vm234, %v3047, %v3049
    %v3060 = vadd.f32 %v3007, %v3036
    %v3061 = vadd.f32 %v3008, %v3038
    %v3062 = vadd.f32 %v3009, %v3040
    %v3063 = vadd.f32 %v3010, %v3042
    %v3064 = vadd.f32 %v3011, %v3044
    %v3065 = vadd.f32 %v3012, %v3046
    %v3066 = vadd.f32 %v3013, %v3048
    %v3067 = vadd.f32 %v3014, %v3050
    %v3068 = vadd.f32 %v3015, %v3049
    %s3069 = sld [smem:[#allocation4 + $0x182]]
    %s3070 = sld [smem:[#allocation4 + $0x183]]
    %v3071 = vstv %s3069
    %v3072 = vmul.f32 %v3071, %v273
    %v3073 = vmul.f32 %v3071, %v274
    %v3074 = vmul.f32 %v3071, %v275
    %v3075 = vmul.f32 %v3071, %v276
    %v3076 = vmul.f32 %v3071, %v277
    %v3077 = vmul.f32 %v3071, %v278
    %v3078 = vmul.f32 %v3071, %v279
    %v3079 = vmul.f32 %v3071, %v280
    %v3080 = vmul.f32 %v3071, %v281
    %v3081 = vstv %s3070
    %v3082 = vmul.f32 %v3081, %v283
    %v3083 = vmul.f32 %v3081, %v284
    %v3084 = vmul.f32 %v3081, %v285
    %v3085 = vmul.f32 %v3081, %v286
    %v3086 = vmul.f32 %v3081, %v287
    %v3087 = vmul.f32 %v3081, %v288
    %v3088 = vmul.f32 %v3081, %v289
    %v3089 = vmul.f32 %v3081, %v290
    %v3090 = vmul.f32 %v3081, %v291
    %v3091 = vadd.f32 %v3072, %v3082
    %v3092 = vadd.f32 %v3073, %v3083
    %v3093 = vadd.f32 %v3074, %v3084
    %v3094 = vadd.f32 %v3075, %v3085
    %v3095 = vadd.f32 %v3076, %v3086
    %v3096 = vadd.f32 %v3077, %v3087
    %v3097 = vadd.f32 %v3078, %v3088
    %v3098 = vadd.f32 %v3079, %v3089
    %v3099 = vadd.f32 %v3080, %v3090
    %v3100 = vmul.f32 %v3071, %v283
    %v3101 = vmul.f32 %v3071, %v284
    %v3102 = vmul.f32 %v3071, %v285
    %v3103 = vmul.f32 %v3071, %v286
    %v3104 = vmul.f32 %v3071, %v287
    %v3105 = vmul.f32 %v3071, %v288
    %v3106 = vmul.f32 %v3071, %v289
    %v3107 = vmul.f32 %v3071, %v290
    %v3108 = vmul.f32 %v3071, %v291
    %v3109 = vmul.f32 %v3081, %v293
    %v3110 = vmul.f32 %v3081, %v294
    %v3111 = vmul.f32 %v3081, %v295
    %v3112 = vmul.f32 %v3081, %v296
    %v3113 = vmul.f32 %v3081, %v297
    %v3114 = vmul.f32 %v3081, %v298
    %v3115 = vmul.f32 %v3081, %v299
    %v3116 = vmul.f32 %v3081, %v300
    %v3117 = vmul.f32 %v3081, %v301
    %v3118 = vadd.f32 %v3100, %v3109
    %v3119 = vadd.f32 %v3101, %v3110
    %v3120 = vadd.f32 %v3102, %v3111
    %v3121 = vadd.f32 %v3103, %v3112
    %v3122 = vadd.f32 %v3104, %v3113
    %v3123 = vadd.f32 %v3105, %v3114
    %v3124 = vadd.f32 %v3106, %v3115
    %v3125 = vadd.f32 %v3107, %v3116
    %v3126 = vadd.f32 %v3108, %v3117
    %v3127 = vmul.f32 %v3071, %v293
    %v3128 = vmul.f32 %v3071, %v294
    %v3129 = vmul.f32 %v3071, %v295
    %v3130 = vmul.f32 %v3071, %v296
    %v3131 = vmul.f32 %v3071, %v297
    %v3132 = vmul.f32 %v3071, %v298
    %v3133 = vmul.f32 %v3071, %v299
    %v3134 = vmul.f32 %v3071, %v300
    %v3135 = vmul.f32 %v3071, %v301
    %v3136 = vmul.f32 %v3081, %v303
    %v3137 = vmul.f32 %v3081, %v304
    %v3138 = vmul.f32 %v3081, %v305
    %v3139 = vmul.f32 %v3081, %v306
    %v3140 = vmul.f32 %v3081, %v307
    %v3141 = vmul.f32 %v3081, %v308
    %v3142 = vmul.f32 %v3081, %v309
    %v3143 = vmul.f32 %v3081, %v310
    %v3144 = vmul.f32 %v3081, %v311
    %v3145 = vadd.f32 %v3127, %v3136
    %v3146 = vadd.f32 %v3128, %v3137
    %v3147 = vadd.f32 %v3129, %v3138
    %v3148 = vadd.f32 %v3130, %v3139
    %v3149 = vadd.f32 %v3131, %v3140
    %v3150 = vadd.f32 %v3132, %v3141
    %v3151 = vadd.f32 %v3133, %v3142
    %v3152 = vadd.f32 %v3134, %v3143
    %v3153 = vadd.f32 %v3135, %v3144
    %v3154 = vmul.f32 %v3071, %v303
    %v3155 = vmul.f32 %v3071, %v304
    %v3156 = vmul.f32 %v3071, %v305
    %v3157 = vmul.f32 %v3071, %v306
    %v3158 = vmul.f32 %v3071, %v307
    %v3159 = vmul.f32 %v3071, %v308
    %v3160 = vmul.f32 %v3071, %v309
    %v3161 = vmul.f32 %v3071, %v310
    %v3162 = vmul.f32 %v3071, %v311
    %v3163 = vmul.f32 %v3081, %v273
    %v3164 = vmul.f32 %v3081, %v274
    %v3165 = vmul.f32 %v3081, %v275
    %v3166 = vmul.f32 %v3081, %v276
    %v3167 = vmul.f32 %v3081, %v277
    %v3168 = vmul.f32 %v3081, %v278
    %v3169 = vmul.f32 %v3081, %v279
    %v3170 = vmul.f32 %v3081, %v280
    %v3171 = vmul.f32 %v3081, %v281
    %v3181 = vrot.slane %v3163, 1
    %v3182 = vrot.slane %v3164, 1
    %v3183 = vsel %vm234, %v3181, %v3182
    %v3184 = vrot.slane %v3165, 1
    %v3185 = vsel %vm234, %v3182, %v3184
    %v3186 = vrot.slane %v3166, 1
    %v3187 = vsel %vm234, %v3184, %v3186
    %v3188 = vrot.slane %v3167, 1
    %v3189 = vsel %vm234, %v3186, %v3188
    %v3190 = vrot.slane %v3168, 1
    %v3191 = vsel %vm234, %v3188, %v3190
    %v3192 = vrot.slane %v3169, 1
    %v3193 = vsel %vm234, %v3190, %v3192
    %v3194 = vrot.slane %v3170, 1
    %v3195 = vsel %vm234, %v3192, %v3194
    %v3196 = vrot.slane %v3171, 1
    %v3197 = vsel %vm234, %v3194, %v3196
    %v3207 = vadd.f32 %v3154, %v3183
    %v3208 = vadd.f32 %v3155, %v3185
    %v3209 = vadd.f32 %v3156, %v3187
    %v3210 = vadd.f32 %v3157, %v3189
    %v3211 = vadd.f32 %v3158, %v3191
    %v3212 = vadd.f32 %v3159, %v3193
    %v3213 = vadd.f32 %v3160, %v3195
    %v3214 = vadd.f32 %v3161, %v3197
    %v3215 = vadd.f32 %v3162, %v3196
    %v3216 = vadd.f32 %v2944, %v3091
    %v3217 = vadd.f32 %v2945, %v3092
    %v3218 = vadd.f32 %v2946, %v3093
    %v3219 = vadd.f32 %v2947, %v3094
    %v3220 = vadd.f32 %v2948, %v3095
    %v3221 = vadd.f32 %v2949, %v3096
    %v3222 = vadd.f32 %v2950, %v3097
    %v3223 = vadd.f32 %v2951, %v3098
    %v3224 = vadd.f32 %v2952, %v3099
    %v3225 = vadd.f32 %v2971, %v3118
    %v3226 = vadd.f32 %v2972, %v3119
    %v3227 = vadd.f32 %v2973, %v3120
    %v3228 = vadd.f32 %v2974, %v3121
    %v3229 = vadd.f32 %v2975, %v3122
    %v3230 = vadd.f32 %v2976, %v3123
    %v3231 = vadd.f32 %v2977, %v3124
    %v3232 = vadd.f32 %v2978, %v3125
    %v3233 = vadd.f32 %v2979, %v3126
    %v3234 = vadd.f32 %v2998, %v3145
    %v3235 = vadd.f32 %v2999, %v3146
    %v3236 = vadd.f32 %v3000, %v3147
    %v3237 = vadd.f32 %v3001, %v3148
    %v3238 = vadd.f32 %v3002, %v3149
    %v3239 = vadd.f32 %v3003, %v3150
    %v3240 = vadd.f32 %v3004, %v3151
    %v3241 = vadd.f32 %v3005, %v3152
    %v3242 = vadd.f32 %v3006, %v3153
    %v3243 = vadd.f32 %v3060, %v3207
    %v3244 = vadd.f32 %v3061, %v3208
    %v3245 = vadd.f32 %v3062, %v3209
    %v3246 = vadd.f32 %v3063, %v3210
    %v3247 = vadd.f32 %v3064, %v3211
    %v3248 = vadd.f32 %v3065, %v3212
    %v3249 = vadd.f32 %v3066, %v3213
    %v3250 = vadd.f32 %v3067, %v3214
    %v3251 = vadd.f32 %v3068, %v3215
    %s3252 = sld [smem:[#allocation4 + $0x184]]
    %s3253 = sld [smem:[#allocation4 + $0x185]]
    %v3254 = vstv %s3252
    %v3255 = vmul.f32 %v3254, %v496
    %v3256 = vmul.f32 %v3254, %v497
    %v3257 = vmul.f32 %v3254, %v498
    %v3258 = vmul.f32 %v3254, %v499
    %v3259 = vmul.f32 %v3254, %v500
    %v3260 = vmul.f32 %v3254, %v501
    %v3261 = vmul.f32 %v3254, %v502
    %v3262 = vmul.f32 %v3254, %v503
    %v3263 = vmul.f32 %v3254, %v504
    %v3264 = vstv %s3253
    %v3265 = vmul.f32 %v3264, %v506
    %v3266 = vmul.f32 %v3264, %v507
    %v3267 = vmul.f32 %v3264, %v508
    %v3268 = vmul.f32 %v3264, %v509
    %v3269 = vmul.f32 %v3264, %v510
    %v3270 = vmul.f32 %v3264, %v511
    %v3271 = vmul.f32 %v3264, %v512
    %v3272 = vmul.f32 %v3264, %v513
    %v3273 = vmul.f32 %v3264, %v514
    %v3274 = vadd.f32 %v3255, %v3265
    %v3275 = vadd.f32 %v3256, %v3266
    %v3276 = vadd.f32 %v3257, %v3267
    %v3277 = vadd.f32 %v3258, %v3268
    %v3278 = vadd.f32 %v3259, %v3269
    %v3279 = vadd.f32 %v3260, %v3270
    %v3280 = vadd.f32 %v3261, %v3271
    %v3281 = vadd.f32 %v3262, %v3272
    %v3282 = vadd.f32 %v3263, %v3273
    %v3283 = vmul.f32 %v3254, %v506
    %v3284 = vmul.f32 %v3254, %v507
    %v3285 = vmul.f32 %v3254, %v508
    %v3286 = vmul.f32 %v3254, %v509
    %v3287 = vmul.f32 %v3254, %v510
    %v3288 = vmul.f32 %v3254, %v511
    %v3289 = vmul.f32 %v3254, %v512
    %v3290 = vmul.f32 %v3254, %v513
    %v3291 = vmul.f32 %v3254, %v514
    %v3292 = vmul.f32 %v3264, %v516
    %v3293 = vmul.f32 %v3264, %v517
    %v3294 = vmul.f32 %v3264, %v518
    %v3295 = vmul.f32 %v3264, %v519
    %v3296 = vmul.f32 %v3264, %v520
    %v3297 = vmul.f32 %v3264, %v521
    %v3298 = vmul.f32 %v3264, %v522
    %v3299 = vmul.f32 %v3264, %v523
    %v3300 = vmul.f32 %v3264, %v524
    %v3301 = vadd.f32 %v3283, %v3292
    %v3302 = vadd.f32 %v3284, %v3293
    %v3303 = vadd.f32 %v3285, %v3294
    %v3304 = vadd.f32 %v3286, %v3295
    %v3305 = vadd.f32 %v3287, %v3296
    %v3306 = vadd.f32 %v3288, %v3297
    %v3307 = vadd.f32 %v3289, %v3298
    %v3308 = vadd.f32 %v3290, %v3299
    %v3309 = vadd.f32 %v3291, %v3300
    %v3310 = vmul.f32 %v3254, %v516
    %v3311 = vmul.f32 %v3254, %v517
    %v3312 = vmul.f32 %v3254, %v518
    %v3313 = vmul.f32 %v3254, %v519
    %v3314 = vmul.f32 %v3254, %v520
    %v3315 = vmul.f32 %v3254, %v521
    %v3316 = vmul.f32 %v3254, %v522
    %v3317 = vmul.f32 %v3254, %v523
    %v3318 = vmul.f32 %v3254, %v524
    %v3319 = vmul.f32 %v3264, %v526
    %v3320 = vmul.f32 %v3264, %v527
    %v3321 = vmul.f32 %v3264, %v528
    %v3322 = vmul.f32 %v3264, %v529
    %v3323 = vmul.f32 %v3264, %v530
    %v3324 = vmul.f32 %v3264, %v531
    %v3325 = vmul.f32 %v3264, %v532
    %v3326 = vmul.f32 %v3264, %v533
    %v3327 = vmul.f32 %v3264, %v534
    %v3328 = vadd.f32 %v3310, %v3319
    %v3329 = vadd.f32 %v3311, %v3320
    %v3330 = vadd.f32 %v3312, %v3321
    %v3331 = vadd.f32 %v3313, %v3322
    %v3332 = vadd.f32 %v3314, %v3323
    %v3333 = vadd.f32 %v3315, %v3324
    %v3334 = vadd.f32 %v3316, %v3325
    %v3335 = vadd.f32 %v3317, %v3326
    %v3336 = vadd.f32 %v3318, %v3327
    %v3337 = vmul.f32 %v3254, %v526
    %v3338 = vmul.f32 %v3254, %v527
    %v3339 = vmul.f32 %v3254, %v528
    %v3340 = vmul.f32 %v3254, %v529
    %v3341 = vmul.f32 %v3254, %v530
    %v3342 = vmul.f32 %v3254, %v531
    %v3343 = vmul.f32 %v3254, %v532
    %v3344 = vmul.f32 %v3254, %v533
    %v3345 = vmul.f32 %v3254, %v534
    %v3346 = vmul.f32 %v3264, %v496
    %v3347 = vmul.f32 %v3264, %v497
    %v3348 = vmul.f32 %v3264, %v498
    %v3349 = vmul.f32 %v3264, %v499
    %v3350 = vmul.f32 %v3264, %v500
    %v3351 = vmul.f32 %v3264, %v501
    %v3352 = vmul.f32 %v3264, %v502
    %v3353 = vmul.f32 %v3264, %v503
    %v3354 = vmul.f32 %v3264, %v504
    %v3364 = vrot.slane %v3346, 1
    %v3365 = vrot.slane %v3347, 1
    %v3366 = vsel %vm234, %v3364, %v3365
    %v3367 = vrot.slane %v3348, 1
    %v3368 = vsel %vm234, %v3365, %v3367
    %v3369 = vrot.slane %v3349, 1
    %v3370 = vsel %vm234, %v3367, %v3369
    %v3371 = vrot.slane %v3350, 1
    %v3372 = vsel %vm234, %v3369, %v3371
    %v3373 = vrot.slane %v3351, 1
    %v3374 = vsel %vm234, %v3371, %v3373
    %v3375 = vrot.slane %v3352, 1
    %v3376 = vsel %vm234, %v3373, %v3375
    %v3377 = vrot.slane %v3353, 1
    %v3378 = vsel %vm234, %v3375, %v3377
    %v3379 = vrot.slane %v3354, 1
    %v3380 = vsel %vm234, %v3377, %v3379
    %v3390 = vadd.f32 %v3337, %v3366
    %v3391 = vadd.f32 %v3338, %v3368
    %v3392 = vadd.f32 %v3339, %v3370
    %v3393 = vadd.f32 %v3340, %v3372
    %v3394 = vadd.f32 %v3341, %v3374
    %v3395 = vadd.f32 %v3342, %v3376
    %v3396 = vadd.f32 %v3343, %v3378
    %v3397 = vadd.f32 %v3344, %v3380
    %v3398 = vadd.f32 %v3345, %v3379
    %v3399 = vadd.f32 %v3216, %v3274
    %v3400 = vadd.f32 %v3217, %v3275
    %v3401 = vadd.f32 %v3218, %v3276
    %v3402 = vadd.f32 %v3219, %v3277
    %v3403 = vadd.f32 %v3220, %v3278
    %v3404 = vadd.f32 %v3221, %v3279
    %v3405 = vadd.f32 %v3222, %v3280
    %v3406 = vadd.f32 %v3223, %v3281
    %v3407 = vadd.f32 %v3224, %v3282
    %v3408 = vadd.f32 %v3225, %v3301
    %v3409 = vadd.f32 %v3226, %v3302
    %v3410 = vadd.f32 %v3227, %v3303
    %v3411 = vadd.f32 %v3228, %v3304
    %v3412 = vadd.f32 %v3229, %v3305
    %v3413 = vadd.f32 %v3230, %v3306
    %v3414 = vadd.f32 %v3231, %v3307
    %v3415 = vadd.f32 %v3232, %v3308
    %v3416 = vadd.f32 %v3233, %v3309
    %v3417 = vadd.f32 %v3234, %v3328
    %v3418 = vadd.f32 %v3235, %v3329
    %v3419 = vadd.f32 %v3236, %v3330
    %v3420 = vadd.f32 %v3237, %v3331
    %v3421 = vadd.f32 %v3238, %v3332
    %v3422 = vadd.f32 %v3239, %v3333
    %v3423 = vadd.f32 %v3240, %v3334
    %v3424 = vadd.f32 %v3241, %v3335
    %v3425 = vadd.f32 %v3242, %v3336
    %v3426 = vadd.f32 %v3243, %v3390
    %v3427 = vadd.f32 %v3244, %v3391
    %v3428 = vadd.f32 %v3245, %v3392
    %v3429 = vadd.f32 %v3246, %v3393
    %v3430 = vadd.f32 %v3247, %v3394
    %v3431 = vadd.f32 %v3248, %v3395
    %v3432 = vadd.f32 %v3249, %v3396
    %v3433 = vadd.f32 %v3250, %v3397
    %v3434 = vadd.f32 %v3251, %v3398
    %s3435 = sld [smem:[#allocation4 + $0x186]]
    %s3436 = sld [smem:[#allocation4 + $0x187]]
    %v3437 = vstv %s3435
    %v3438 = vmul.f32 %v3437, %v719
    %v3439 = vmul.f32 %v3437, %v720
    %v3440 = vmul.f32 %v3437, %v721
    %v3441 = vmul.f32 %v3437, %v722
    %v3442 = vmul.f32 %v3437, %v723
    %v3443 = vmul.f32 %v3437, %v724
    %v3444 = vmul.f32 %v3437, %v725
    %v3445 = vmul.f32 %v3437, %v726
    %v3446 = vmul.f32 %v3437, %v727
    %v3447 = vstv %s3436
    %v3448 = vmul.f32 %v3447, %v729
    %v3449 = vmul.f32 %v3447, %v730
    %v3450 = vmul.f32 %v3447, %v731
    %v3451 = vmul.f32 %v3447, %v732
    %v3452 = vmul.f32 %v3447, %v733
    %v3453 = vmul.f32 %v3447, %v734
    %v3454 = vmul.f32 %v3447, %v735
    %v3455 = vmul.f32 %v3447, %v736
    %v3456 = vmul.f32 %v3447, %v737
    %v3457 = vadd.f32 %v3438, %v3448
    %v3458 = vadd.f32 %v3439, %v3449
    %v3459 = vadd.f32 %v3440, %v3450
    %v3460 = vadd.f32 %v3441, %v3451
    %v3461 = vadd.f32 %v3442, %v3452
    %v3462 = vadd.f32 %v3443, %v3453
    %v3463 = vadd.f32 %v3444, %v3454
    %v3464 = vadd.f32 %v3445, %v3455
    %v3465 = vadd.f32 %v3446, %v3456
    %v3466 = vmul.f32 %v3437, %v729
    %v3467 = vmul.f32 %v3437, %v730
    %v3468 = vmul.f32 %v3437, %v731
    %v3469 = vmul.f32 %v3437, %v732
    %v3470 = vmul.f32 %v3437, %v733
    %v3471 = vmul.f32 %v3437, %v734
    %v3472 = vmul.f32 %v3437, %v735
    %v3473 = vmul.f32 %v3437, %v736
    %v3474 = vmul.f32 %v3437, %v737
    %v3475 = vmul.f32 %v3447, %v739
    %v3476 = vmul.f32 %v3447, %v740
    %v3477 = vmul.f32 %v3447, %v741
    %v3478 = vmul.f32 %v3447, %v742
    %v3479 = vmul.f32 %v3447, %v743
    %v3480 = vmul.f32 %v3447, %v744
    %v3481 = vmul.f32 %v3447, %v745
    %v3482 = vmul.f32 %v3447, %v746
    %v3483 = vmul.f32 %v3447, %v747
    %v3484 = vadd.f32 %v3466, %v3475
    %v3485 = vadd.f32 %v3467, %v3476
    %v3486 = vadd.f32 %v3468, %v3477
    %v3487 = vadd.f32 %v3469, %v3478
    %v3488 = vadd.f32 %v3470, %v3479
    %v3489 = vadd.f32 %v3471, %v3480
    %v3490 = vadd.f32 %v3472, %v3481
    %v3491 = vadd.f32 %v3473, %v3482
    %v3492 = vadd.f32 %v3474, %v3483
    %v3493 = vmul.f32 %v3437, %v739
    %v3494 = vmul.f32 %v3437, %v740
    %v3495 = vmul.f32 %v3437, %v741
    %v3496 = vmul.f32 %v3437, %v742
    %v3497 = vmul.f32 %v3437, %v743
    %v3498 = vmul.f32 %v3437, %v744
    %v3499 = vmul.f32 %v3437, %v745
    %v3500 = vmul.f32 %v3437, %v746
    %v3501 = vmul.f32 %v3437, %v747
    %v3502 = vmul.f32 %v3447, %v749
    %v3503 = vmul.f32 %v3447, %v750
    %v3504 = vmul.f32 %v3447, %v751
    %v3505 = vmul.f32 %v3447, %v752
    %v3506 = vmul.f32 %v3447, %v753
    %v3507 = vmul.f32 %v3447, %v754
    %v3508 = vmul.f32 %v3447, %v755
    %v3509 = vmul.f32 %v3447, %v756
    %v3510 = vmul.f32 %v3447, %v757
    %v3511 = vadd.f32 %v3493, %v3502
    %v3512 = vadd.f32 %v3494, %v3503
    %v3513 = vadd.f32 %v3495, %v3504
    %v3514 = vadd.f32 %v3496, %v3505
    %v3515 = vadd.f32 %v3497, %v3506
    %v3516 = vadd.f32 %v3498, %v3507
    %v3517 = vadd.f32 %v3499, %v3508
    %v3518 = vadd.f32 %v3500, %v3509
    %v3519 = vadd.f32 %v3501, %v3510
    %v3520 = vmul.f32 %v3437, %v749
    %v3521 = vmul.f32 %v3437, %v750
    %v3522 = vmul.f32 %v3437, %v751
    %v3523 = vmul.f32 %v3437, %v752
    %v3524 = vmul.f32 %v3437, %v753
    %v3525 = vmul.f32 %v3437, %v754
    %v3526 = vmul.f32 %v3437, %v755
    %v3527 = vmul.f32 %v3437, %v756
    %v3528 = vmul.f32 %v3437, %v757
    %v3529 = vmul.f32 %v3447, %v719
    %v3530 = vmul.f32 %v3447, %v720
    %v3531 = vmul.f32 %v3447, %v721
    %v3532 = vmul.f32 %v3447, %v722
    %v3533 = vmul.f32 %v3447, %v723
    %v3534 = vmul.f32 %v3447, %v724
    %v3535 = vmul.f32 %v3447, %v725
    %v3536 = vmul.f32 %v3447, %v726
    %v3537 = vmul.f32 %v3447, %v727
    %v3547 = vrot.slane %v3529, 1
    %v3548 = vrot.slane %v3530, 1
    %v3549 = vsel %vm234, %v3547, %v3548
    %v3550 = vrot.slane %v3531, 1
    %v3551 = vsel %vm234, %v3548, %v3550
    %v3552 = vrot.slane %v3532, 1
    %v3553 = vsel %vm234, %v3550, %v3552
    %v3554 = vrot.slane %v3533, 1
    %v3555 = vsel %vm234, %v3552, %v3554
    %v3556 = vrot.slane %v3534, 1
    %v3557 = vsel %vm234, %v3554, %v3556
    %v3558 = vrot.slane %v3535, 1
    %v3559 = vsel %vm234, %v3556, %v3558
    %v3560 = vrot.slane %v3536, 1
    %v3561 = vsel %vm234, %v3558, %v3560
    %v3562 = vrot.slane %v3537, 1
    %v3563 = vsel %vm234, %v3560, %v3562
    %v3573 = vadd.f32 %v3520, %v3549
    %v3574 = vadd.f32 %v3521, %v3551
    %v3575 = vadd.f32 %v3522, %v3553
    %v3576 = vadd.f32 %v3523, %v3555
    %v3577 = vadd.f32 %v3524, %v3557
    %v3578 = vadd.f32 %v3525, %v3559
    %v3579 = vadd.f32 %v3526, %v3561
    %v3580 = vadd.f32 %v3527, %v3563
    %v3581 = vadd.f32 %v3528, %v3562
    %v3582 = vadd.f32 %v3399, %v3457
    %v3583 = vadd.f32 %v3400, %v3458
    %v3584 = vadd.f32 %v3401, %v3459
    %v3585 = vadd.f32 %v3402, %v3460
    %v3586 = vadd.f32 %v3403, %v3461
    %v3587 = vadd.f32 %v3404, %v3462
    %v3588 = vadd.f32 %v3405, %v3463
    %v3589 = vadd.f32 %v3406, %v3464
    %v3590 = vadd.f32 %v3407, %v3465
    %v3591 = vadd.f32 %v3408, %v3484
    %v3592 = vadd.f32 %v3409, %v3485
    %v3593 = vadd.f32 %v3410, %v3486
    %v3594 = vadd.f32 %v3411, %v3487
    %v3595 = vadd.f32 %v3412, %v3488
    %v3596 = vadd.f32 %v3413, %v3489
    %v3597 = vadd.f32 %v3414, %v3490
    %v3598 = vadd.f32 %v3415, %v3491
    %v3599 = vadd.f32 %v3416, %v3492
    %v3600 = vadd.f32 %v3417, %v3511
    %v3601 = vadd.f32 %v3418, %v3512
    %v3602 = vadd.f32 %v3419, %v3513
    %v3603 = vadd.f32 %v3420, %v3514
    %v3604 = vadd.f32 %v3421, %v3515
    %v3605 = vadd.f32 %v3422, %v3516
    %v3606 = vadd.f32 %v3423, %v3517
    %v3607 = vadd.f32 %v3424, %v3518
    %v3608 = vadd.f32 %v3425, %v3519
    %v3609 = vadd.f32 %v3426, %v3573
    %v3610 = vadd.f32 %v3427, %v3574
    %v3611 = vadd.f32 %v3428, %v3575
    %v3612 = vadd.f32 %v3429, %v3576
    %v3613 = vadd.f32 %v3430, %v3577
    %v3614 = vadd.f32 %v3431, %v3578
    %v3615 = vadd.f32 %v3432, %v3579
    %v3616 = vadd.f32 %v3433, %v3580
    %v3617 = vadd.f32 %v3434, %v3581
    %s3618 = sld [smem:[#allocation6 + $0x3]]
    %v3619 = vstv %s3618
    %v3620 = vadd.f32 %v3582, %v3619
    %v3621 = vadd.f32 %v3583, %v3619
    %v3622 = vadd.f32 %v3584, %v3619
    %v3623 = vadd.f32 %v3585, %v3619
    %v3624 = vadd.f32 %v3586, %v3619
    %v3625 = vadd.f32 %v3587, %v3619
    %v3626 = vadd.f32 %v3588, %v3619
    %v3627 = vadd.f32 %v3589, %v3619
    %v3628 = vadd.f32 %v3590, %v3619
    %v3629 = vmax.f32 %v3620, 0.0
    %v3630 = vmax.f32 %v3621, 0.0
    %v3631 = vmax.f32 %v3622, 0.0
    %v3632 = vmax.f32 %v3623, 0.0
    %v3633 = vmax.f32 %v3624, 0.0
    %v3634 = vmax.f32 %v3625, 0.0
    %v3635 = vmax.f32 %v3626, 0.0
    %v3636 = vmax.f32 %v3627, 0.0
    %v3637 = vmax.f32 %v3628, 0.0
    %v3638 = vadd.f32 %v3591, %v3619
    %v3639 = vadd.f32 %v3592, %v3619
    %v3640 = vadd.f32 %v3593, %v3619
    %v3641 = vadd.f32 %v3594, %v3619
    %v3642 = vadd.f32 %v3595, %v3619
    %v3643 = vadd.f32 %v3596, %v3619
    %v3644 = vadd.f32 %v3597, %v3619
    %v3645 = vadd.f32 %v3598, %v3619
    %v3646 = vadd.f32 %v3599, %v3619
    %v3647 = vmax.f32 %v3638, 0.0
    %v3648 = vmax.f32 %v3639, 0.0
    %v3649 = vmax.f32 %v3640, 0.0
    %v3650 = vmax.f32 %v3641, 0.0
    %v3651 = vmax.f32 %v3642, 0.0
    %v3652 = vmax.f32 %v3643, 0.0
    %v3653 = vmax.f32 %v3644, 0.0
    %v3654 = vmax.f32 %v3645, 0.0
    %v3655 = vmax.f32 %v3646, 0.0
    %v3656 = vadd.f32 %v3600, %v3619
    %v3657 = vadd.f32 %v3601, %v3619
    %v3658 = vadd.f32 %v3602, %v3619
    %v3659 = vadd.f32 %v3603, %v3619
    %v3660 = vadd.f32 %v3604, %v3619
    %v3661 = vadd.f32 %v3605, %v3619
    %v3662 = vadd.f32 %v3606, %v3619
    %v3663 = vadd.f32 %v3607, %v3619
    %v3664 = vadd.f32 %v3608, %v3619
    %v3665 = vmax.f32 %v3656, 0.0
    %v3666 = vmax.f32 %v3657, 0.0
    %v3667 = vmax.f32 %v3658, 0.0
    %v3668 = vmax.f32 %v3659, 0.0
    %v3669 = vmax.f32 %v3660, 0.0
    %v3670 = vmax.f32 %v3661, 0.0
    %v3671 = vmax.f32 %v3662, 0.0
    %v3672 = vmax.f32 %v3663, 0.0
    %v3673 = vmax.f32 %v3664, 0.0
    %v3674 = vadd.f32 %v3609, %v3619
    %v3675 = vadd.f32 %v3610, %v3619
    %v3676 = vadd.f32 %v3611, %v3619
    %v3677 = vadd.f32 %v3612, %v3619
    %v3678 = vadd.f32 %v3613, %v3619
    %v3679 = vadd.f32 %v3614, %v3619
    %v3680 = vadd.f32 %v3615, %v3619
    %v3681 = vadd.f32 %v3616, %v3619
    %v3682 = vadd.f32 %v3617, %v3619
    %v3683 = vmax.f32 %v3674, 0.0
    %v3684 = vmax.f32 %v3675, 0.0
    %v3685 = vmax.f32 %v3676, 0.0
    %v3686 = vmax.f32 %v3677, 0.0
    %v3687 = vmax.f32 %v3678, 0.0
    %v3688 = vmax.f32 %v3679, 0.0
    %v3689 = vmax.f32 %v3680, 0.0
    %v3690 = vmax.f32 %v3681, 0.0
    %v3691 = vmax.f32 %v3682, 0.0
    %v3692 = vmax.f32 %v3629, %v3647
    %v3693 = vmax.f32 %v3630, %v3648
    %v3694 = vmax.f32 %v3631, %v3649
    %v3695 = vmax.f32 %v3632, %v3650
    %v3696 = vmax.f32 %v3633, %v3651
    %v3697 = vmax.f32 %v3634, %v3652
    %v3698 = vmax.f32 %v3635, %v3653
    %v3699 = vmax.f32 %v3636, %v3654
    %v3700 = vmax.f32 %v3637, %v3655
    %v3701 = vmax.f32 %v3665, %v3683
    %v3702 = vmax.f32 %v3666, %v3684
    %v3703 = vmax.f32 %v3667, %v3685
    %v3704 = vmax.f32 %v3668, %v3686
    %v3705 = vmax.f32 %v3669, %v3687
    %v3706 = vmax.f32 %v3670, %v3688
    %v3707 = vmax.f32 %v3671, %v3689
    %v3708 = vmax.f32 %v3672, %v3690
    %v3709 = vmax.f32 %v3673, %v3691
    %s3710 = sld [smem:[#allocation8 + $0x180]]
    %s3711 = sld [smem:[#allocation8 + $0x181]]
    %v3712 = vstv %s3710
    %v3713 = vmul.f32 %v3712, %v3692
    %v3714 = vmul.f32 %v3712, %v3693
    %v3715 = vmul.f32 %v3712, %v3694
    %v3716 = vmul.f32 %v3712, %v3695
    %v3717 = vmul.f32 %v3712, %v3696
    %v3718 = vmul.f32 %v3712, %v3697
    %v3719 = vmul.f32 %v3712, %v3698
    %v3720 = vmul.f32 %v3712, %v3699
    %v3721 = vmul.f32 %v3712, %v3700
    %v3722 = vstv %s3711
    %v3723 = vmul.f32 %v3722, %v3701
    %v3724 = vmul.f32 %v3722, %v3702
    %v3725 = vmul.f32 %v3722, %v3703
    %v3726 = vmul.f32 %v3722, %v3704
    %v3727 = vmul.f32 %v3722, %v3705
    %v3728 = vmul.f32 %v3722, %v3706
    %v3729 = vmul.f32 %v3722, %v3707
    %v3730 = vmul.f32 %v3722, %v3708
    %v3731 = vmul.f32 %v3722, %v3709
    %v3732 = vadd.f32 %v3713, %v3723
    %v3733 = vadd.f32 %v3714, %v3724
    %v3734 = vadd.f32 %v3715, %v3725
    %v3735 = vadd.f32 %v3716, %v3726
    %v3736 = vadd.f32 %v3717, %v3727
    %v3737 = vadd.f32 %v3718, %v3728
    %v3738 = vadd.f32 %v3719, %v3729
    %v3739 = vadd.f32 %v3720, %v3730
    %v3740 = vadd.f32 %v3721, %v3731
    %v3741 = vmul.f32 %v3712, %v3701
    %v3742 = vmul.f32 %v3712, %v3702
    %v3743 = vmul.f32 %v3712, %v3703
    %v3744 = vmul.f32 %v3712, %v3704
    %v3745 = vmul.f32 %v3712, %v3705
    %v3746 = vmul.f32 %v3712, %v3706
    %v3747 = vmul.f32 %v3712, %v3707
    %v3748 = vmul.f32 %v3712, %v3708
    %v3749 = vmul.f32 %v3712, %v3709
    %v3750 = vmul.f32 %v3722, %v3692
    %v3751 = vmul.f32 %v3722, %v3693
    %v3752 = vmul.f32 %v3722, %v3694
    %v3753 = vmul.f32 %v3722, %v3695
    %v3754 = vmul.f32 %v3722, %v3696
    %v3755 = vmul.f32 %v3722, %v3697
    %v3756 = vmul.f32 %v3722, %v3698
    %v3757 = vmul.f32 %v3722, %v3699
    %v3758 = vmul.f32 %v3722, %v3700
    %v3768 = vrot.slane %v3750, 1
    %v3769 = vrot.slane %v3751, 1
    %v3770 = vsel %vm234, %v3768, %v3769
    %v3771 = vrot.slane %v3752, 1
    %v3772 = vsel %vm234, %v3769, %v3771
    %v3773 = vrot.slane %v3753, 1
    %v3774 = vsel %vm234, %v3771, %v3773
    %v3775 = vrot.slane %v3754, 1
    %v3776 = vsel %vm234, %v3773, %v3775
    %v3777 = vrot.slane %v3755, 1
    %v3778 = vsel %vm234, %v3775, %v3777
    %v3779 = vrot.slane %v3756, 1
    %v3780 = vsel %vm234, %v3777, %v3779
    %v3781 = vrot.slane %v3757, 1
    %v3782 = vsel %vm234, %v3779, %v3781
    %v3783 = vrot.slane %v3758, 1
    %v3784 = vsel %vm234, %v3781, %v3783
    %v3794 = vadd.f32 %v3741, %v3770
    %v3795 = vadd.f32 %v3742, %v3772
    %v3796 = vadd.f32 %v3743, %v3774
    %v3797 = vadd.f32 %v3744, %v3776
    %v3798 = vadd.f32 %v3745, %v3778
    %v3799 = vadd.f32 %v3746, %v3780
    %v3800 = vadd.f32 %v3747, %v3782
    %v3801 = vadd.f32 %v3748, %v3784
    %v3802 = vadd.f32 %v3749, %v3783
    %v3803 = vadd.f32 %v2904, %v3732
    %v3804 = vadd.f32 %v2905, %v3733
    %v3805 = vadd.f32 %v2906, %v3734
    %v3806 = vadd.f32 %v2907, %v3735
    %v3807 = vadd.f32 %v2908, %v3736
    %v3808 = vadd.f32 %v2909, %v3737
    %v3809 = vadd.f32 %v2910, %v3738
    %v3810 = vadd.f32 %v2911, %v3739
    %v3811 = vadd.f32 %v2912, %v3740
    %v3812 = vadd.f32 %v2913, %v3794
    %v3813 = vadd.f32 %v2914, %v3795
    %v3814 = vadd.f32 %v2915, %v3796
    %v3815 = vadd.f32 %v2916, %v3797
    %v3816 = vadd.f32 %v2917, %v3798
    %v3817 = vadd.f32 %v2918, %v3799
    %v3818 = vadd.f32 %v2919, %v3800
    %v3819 = vadd.f32 %v2920, %v3801
    %v3820 = vadd.f32 %v2921, %v3802
    %s3821 = sld [smem:[#allocation4 + $0x200]]
    %s3822 = sld [smem:[#allocation4 + $0x201]]
    %v3823 = vstv %s3821
    %v3824 = vmul.f32 %v3823, %v85
    %v3825 = vmul.f32 %v3823, %v86
    %v3826 = vmul.f32 %v3823, %v87
    %v3827 = vmul.f32 %v3823, %v88
    %v3828 = vmul.f32 %v3823, %v89
    %v3829 = vmul.f32 %v3823, %v90
    %v3830 = vmul.f32 %v3823, %v91
    %v3831 = vmul.f32 %v3823, %v92
    %v3832 = vmul.f32 %v3823, %v93
    %v3833 = vstv %s3822
    %v3834 = vmul.f32 %v3833, %v95
    %v3835 = vmul.f32 %v3833, %v96
    %v3836 = vmul.f32 %v3833, %v97
    %v3837 = vmul.f32 %v3833, %v98
    %v3838 = vmul.f32 %v3833, %v99
    %v3839 = vmul.f32 %v3833, %v100
    %v3840 = vmul.f32 %v3833, %v101
    %v3841 = vmul.f32 %v3833, %v102
    %v3842 = vmul.f32 %v3833, %v103
    %v3843 = vadd.f32 %v3824, %v3834
    %v3844 = vadd.f32 %v3825, %v3835
    %v3845 = vadd.f32 %v3826, %v3836
    %v3846 = vadd.f32 %v3827, %v3837
    %v3847 = vadd.f32 %v3828, %v3838
    %v3848 = vadd.f32 %v3829, %v3839
    %v3849 = vadd.f32 %v3830, %v3840
    %v3850 = vadd.f32 %v3831, %v3841
    %v3851 = vadd.f32 %v3832, %v3842
    %v3852 = vmul.f32 %v3823, %v95
    %v3853 = vmul.f32 %v3823, %v96
    %v3854 = vmul.f32 %v3823, %v97
    %v3855 = vmul.f32 %v3823, %v98
    %v3856 = vmul.f32 %v3823, %v99
    %v3857 = vmul.f32 %v3823, %v100
    %v3858 = vmul.f32 %v3823, %v101
    %v3859 = vmul.f32 %v3823, %v102
    %v3860 = vmul.f32 %v3823, %v103
    %v3861 = vmul.f32 %v3833, %v105
    %v3862 = vmul.f32 %v3833, %v106
    %v3863 = vmul.f32 %v3833, %v107
    %v3864 = vmul.f32 %v3833, %v108
    %v3865 = vmul.f32 %v3833, %v109
    %v3866 = vmul.f32 %v3833, %v110
    %v3867 = vmul.f32 %v3833, %v111
    %v3868 = vmul.f32 %v3833, %v112
    %v3869 = vmul.f32 %v3833, %v113
    %v3870 = vadd.f32 %v3852, %v3861
    %v3871 = vadd.f32 %v3853, %v3862
    %v3872 = vadd.f32 %v3854, %v3863
    %v3873 = vadd.f32 %v3855, %v3864
    %v3874 = vadd.f32 %v3856, %v3865
    %v3875 = vadd.f32 %v3857, %v3866
    %v3876 = vadd.f32 %v3858, %v3867
    %v3877 = vadd.f32 %v3859, %v3868
    %v3878 = vadd.f32 %v3860, %v3869
    %v3879 = vmul.f32 %v3823, %v105
    %v3880 = vmul.f32 %v3823, %v106
    %v3881 = vmul.f32 %v3823, %v107
    %v3882 = vmul.f32 %v3823, %v108
    %v3883 = vmul.f32 %v3823, %v109
    %v3884 = vmul.f32 %v3823, %v110
    %v3885 = vmul.f32 %v3823, %v111
    %v3886 = vmul.f32 %v3823, %v112
    %v3887 = vmul.f32 %v3823, %v113
    %v3888 = vmul.f32 %v3833, %v115
    %v3889 = vmul.f32 %v3833, %v116
    %v3890 = vmul.f32 %v3833, %v117
    %v3891 = vmul.f32 %v3833, %v118
    %v3892 = vmul.f32 %v3833, %v119
    %v3893 = vmul.f32 %v3833, %v120
    %v3894 = vmul.f32 %v3833, %v121
    %v3895 = vmul.f32 %v3833, %v122
    %v3896 = vmul.f32 %v3833, %v123
    %v3897 = vadd.f32 %v3879, %v3888
    %v3898 = vadd.f32 %v3880, %v3889
    %v3899 = vadd.f32 %v3881, %v3890
    %v3900 = vadd.f32 %v3882, %v3891
    %v3901 = vadd.f32 %v3883, %v3892
    %v3902 = vadd.f32 %v3884, %v3893
    %v3903 = vadd.f32 %v3885, %v3894
    %v3904 = vadd.f32 %v3886, %v3895
    %v3905 = vadd.f32 %v3887, %v3896
    %v3906 = vmul.f32 %v3823, %v115
    %v3907 = vmul.f32 %v3823, %v116
    %v3908 = vmul.f32 %v3823, %v117
    %v3909 = vmul.f32 %v3823, %v118
    %v3910 = vmul.f32 %v3823, %v119
    %v3911 = vmul.f32 %v3823, %v120
    %v3912 = vmul.f32 %v3823, %v121
    %v3913 = vmul.f32 %v3823, %v122
    %v3914 = vmul.f32 %v3823, %v123
    %v3915 = vmul.f32 %v3833, %v85
    %v3916 = vmul.f32 %v3833, %v86
    %v3917 = vmul.f32 %v3833, %v87
    %v3918 = vmul.f32 %v3833, %v88
    %v3919 = vmul.f32 %v3833, %v89
    %v3920 = vmul.f32 %v3833, %v90
    %v3921 = vmul.f32 %v3833, %v91
    %v3922 = vmul.f32 %v3833, %v92
    %v3923 = vmul.f32 %v3833, %v93
    %v3933 = vrot.slane %v3915, 1
    %v3934 = vrot.slane %v3916, 1
    %v3935 = vsel %vm234, %v3933, %v3934
    %v3936 = vrot.slane %v3917, 1
    %v3937 = vsel %vm234, %v3934, %v3936
    %v3938 = vrot.slane %v3918, 1
    %v3939 = vsel %vm234, %v3936, %v3938
    %v3940 = vrot.slane %v3919, 1
    %v3941 = vsel %vm234, %v3938, %v3940
    %v3942 = vrot.slane %v3920, 1
    %v3943 = vsel %vm234, %v3940, %v3942
    %v3944 = vrot.slane %v3921, 1
    %v3945 = vsel %vm234, %v3942, %v3944
    %v3946 = vrot.slane %v3922, 1
    %v3947 = vsel %vm234, %v3944, %v3946
    %v3948 = vrot.slane %v3923, 1
    %v3949 = vsel %vm234, %v3946, %v3948
    %v3959 = vadd.f32 %v3906, %v3935
    %v3960 = vadd.f32 %v3907, %v3937
    %v3961 = vadd.f32 %v3908, %v3939
    %v3962 = vadd.f32 %v3909, %v3941
    %v3963 = vadd.f32 %v3910, %v3943
    %v3964 = vadd.f32 %v3911, %v3945
    %v3965 = vadd.f32 %v3912, %v3947
    %v3966 = vadd.f32 %v3913, %v3949
    %v3967 = vadd.f32 %v3914, %v3948
    %s3968 = sld [smem:[#allocation4 + $0x202]]
    %s3969 = sld [smem:[#allocation4 + $0x203]]
    %v3970 = vstv %s3968
    %v3971 = vmul.f32 %v3970, %v273
    %v3972 = vmul.f32 %v3970, %v274
    %v3973 = vmul.f32 %v3970, %v275
    %v3974 = vmul.f32 %v3970, %v276
    %v3975 = vmul.f32 %v3970, %v277
    %v3976 = vmul.f32 %v3970, %v278
    %v3977 = vmul.f32 %v3970, %v279
    %v3978 = vmul.f32 %v3970, %v280
    %v3979 = vmul.f32 %v3970, %v281
    %v3980 = vstv %s3969
    %v3981 = vmul.f32 %v3980, %v283
    %v3982 = vmul.f32 %v3980, %v284
    %v3983 = vmul.f32 %v3980, %v285
    %v3984 = vmul.f32 %v3980, %v286
    %v3985 = vmul.f32 %v3980, %v287
    %v3986 = vmul.f32 %v3980, %v288
    %v3987 = vmul.f32 %v3980, %v289
    %v3988 = vmul.f32 %v3980, %v290
    %v3989 = vmul.f32 %v3980, %v291
    %v3990 = vadd.f32 %v3971, %v3981
    %v3991 = vadd.f32 %v3972, %v3982
    %v3992 = vadd.f32 %v3973, %v3983
    %v3993 = vadd.f32 %v3974, %v3984
    %v3994 = vadd.f32 %v3975, %v3985
    %v3995 = vadd.f32 %v3976, %v3986
    %v3996 = vadd.f32 %v3977, %v3987
    %v3997 = vadd.f32 %v3978, %v3988
    %v3998 = vadd.f32 %v3979, %v3989
    %v3999 = vmul.f32 %v3970, %v283
    %v4000 = vmul.f32 %v3970, %v284
    %v4001 = vmul.f32 %v3970, %v285
    %v4002 = vmul.f32 %v3970, %v286
    %v4003 = vmul.f32 %v3970, %v287
    %v4004 = vmul.f32 %v3970, %v288
    %v4005 = vmul.f32 %v3970, %v289
    %v4006 = vmul.f32 %v3970, %v290
    %v4007 = vmul.f32 %v3970, %v291
    %v4008 = vmul.f32 %v3980, %v293
    %v4009 = vmul.f32 %v3980, %v294
    %v4010 = vmul.f32 %v3980, %v295
    %v4011 = vmul.f32 %v3980, %v296
    %v4012 = vmul.f32 %v3980, %v297
    %v4013 = vmul.f32 %v3980, %v298
    %v4014 = vmul.f32 %v3980, %v299
    %v4015 = vmul.f32 %v3980, %v300
    %v4016 = vmul.f32 %v3980, %v301
    %v4017 = vadd.f32 %v3999, %v4008
    %v4018 = vadd.f32 %v4000, %v4009
    %v4019 = vadd.f32 %v4001, %v4010
    %v4020 = vadd.f32 %v4002, %v4011
    %v4021 = vadd.f32 %v4003, %v4012
    %v4022 = vadd.f32 %v4004, %v4013
    %v4023 = vadd.f32 %v4005, %v4014
    %v4024 = vadd.f32 %v4006, %v4015
    %v4025 = vadd.f32 %v4007, %v4016
    %v4026 = vmul.f32 %v3970, %v293
    %v4027 = vmul.f32 %v3970, %v294
    %v4028 = vmul.f32 %v3970, %v295
    %v4029 = vmul.f32 %v3970, %v296
    %v4030 = vmul.f32 %v3970, %v297
    %v4031 = vmul.f32 %v3970, %v298
    %v4032 = vmul.f32 %v3970, %v299
    %v4033 = vmul.f32 %v3970, %v300
    %v4034 = vmul.f32 %v3970, %v301
    %v4035 = vmul.f32 %v3980, %v303
    %v4036 = vmul.f32 %v3980, %v304
    %v4037 = vmul.f32 %v3980, %v305
    %v4038 = vmul.f32 %v3980, %v306
    %v4039 = vmul.f32 %v3980, %v307
    %v4040 = vmul.f32 %v3980, %v308
    %v4041 = vmul.f32 %v3980, %v309
    %v4042 = vmul.f32 %v3980, %v310
    %v4043 = vmul.f32 %v3980, %v311
    %v4044 = vadd.f32 %v4026, %v4035
    %v4045 = vadd.f32 %v4027, %v4036
    %v4046 = vadd.f32 %v4028, %v4037
    %v4047 = vadd.f32 %v4029, %v4038
    %v4048 = vadd.f32 %v4030, %v4039
    %v4049 = vadd.f32 %v4031, %v4040
    %v4050 = vadd.f32 %v4032, %v4041
    %v4051 = vadd.f32 %v4033, %v4042
    %v4052 = vadd.f32 %v4034, %v4043
    %v4053 = vmul.f32 %v3970, %v303
    %v4054 = vmul.f32 %v3970, %v304
    %v4055 = vmul.f32 %v3970, %v305
    %v4056 = vmul.f32 %v3970, %v306
    %v4057 = vmul.f32 %v3970, %v307
    %v4058 = vmul.f32 %v3970, %v308
    %v4059 = vmul.f32 %v3970, %v309
    %v4060 = vmul.f32 %v3970, %v310
    %v4061 = vmul.f32 %v3970, %v311
    %v4062 = vmul.f32 %v3980, %v273
    %v4063 = vmul.f32 %v3980, %v274
    %v4064 = vmul.f32 %v3980, %v275
    %v4065 = vmul.f32 %v3980, %v276
    %v4066 = vmul.f32 %v3980, %v277
    %v4067 = vmul.f32 %v3980, %v278
    %v4068 = vmul.f32 %v3980, %v279
    %v4069 = vmul.f32 %v3980, %v280
    %v4070 = vmul.f32 %v3980, %v281
    %v4080 = vrot.slane %v4062, 1
    %v4081 = vrot.slane %v4063, 1
    %v4082 = vsel %vm234, %v4080, %v4081
    %v4083 = vrot.slane %v4064, 1
    %v4084 = vsel %vm234, %v4081, %v4083
    %v4085 = vrot.slane %v4065, 1
    %v4086 = vsel %vm234, %v4083, %v4085
    %v4087 = vrot.slane %v4066, 1
    %v4088 = vsel %vm234, %v4085, %v4087
    %v4089 = vrot.slane %v4067, 1
    %v4090 = vsel %vm234, %v4087, %v4089
    %v4091 = vrot.slane %v4068, 1
    %v4092 = vsel %vm234, %v4089, %v4091
    %v4093 = vrot.slane %v4069, 1
    %v4094 = vsel %vm234, %v4091, %v4093
    %v4095 = vrot.slane %v4070, 1
    %v4096 = vsel %vm234, %v4093, %v4095
    %v4106 = vadd.f32 %v4053, %v4082
    %v4107 = vadd.f32 %v4054, %v4084
    %v4108 = vadd.f32 %v4055, %v4086
    %v4109 = vadd.f32 %v4056, %v4088
    %v4110 = vadd.f32 %v4057, %v4090
    %v4111 = vadd.f32 %v4058, %v4092
    %v4112 = vadd.f32 %v4059, %v4094
    %v4113 = vadd.f32 %v4060, %v4096
    %v4114 = vadd.f32 %v4061, %v4095
    %v4115 = vadd.f32 %v3843, %v3990
    %v4116 = vadd.f32 %v3844, %v3991
    %v4117 = vadd.f32 %v3845, %v3992
    %v4118 = vadd.f32 %v3846, %v3993
    %v4119 = vadd.f32 %v3847, %v3994
    %v4120 = vadd.f32 %v3848, %v3995
    %v4121 = vadd.f32 %v3849, %v3996
    %v4122 = vadd.f32 %v3850, %v3997
    %v4123 = vadd.f32 %v3851, %v3998
    %v4124 = vadd.f32 %v3870, %v4017
    %v4125 = vadd.f32 %v3871, %v4018
    %v4126 = vadd.f32 %v3872, %v4019
    %v4127 = vadd.f32 %v3873, %v4020
    %v4128 = vadd.f32 %v3874, %v4021
    %v4129 = vadd.f32 %v3875, %v4022
    %v4130 = vadd.f32 %v3876, %v4023
    %v4131 = vadd.f32 %v3877, %v4024
    %v4132 = vadd.f32 %v3878, %v4025
    %v4133 = vadd.f32 %v3897, %v4044
    %v4134 = vadd.f32 %v3898, %v4045
    %v4135 = vadd.f32 %v3899, %v4046
    %v4136 = vadd.f32 %v3900, %v4047
    %v4137 = vadd.f32 %v3901, %v4048
    %v4138 = vadd.f32 %v3902, %v4049
    %v4139 = vadd.f32 %v3903, %v4050
    %v4140 = vadd.f32 %v3904, %v4051
    %v4141 = vadd.f32 %v3905, %v4052
    %v4142 = vadd.f32 %v3959, %v4106
    %v4143 = vadd.f32 %v3960, %v4107
    %v4144 = vadd.f32 %v3961, %v4108
    %v4145 = vadd.f32 %v3962, %v4109
    %v4146 = vadd.f32 %v3963, %v4110
    %v4147 = vadd.f32 %v3964, %v4111
    %v4148 = vadd.f32 %v3965, %v4112
    %v4149 = vadd.f32 %v3966, %v4113
    %v4150 = vadd.f32 %v3967, %v4114
    %s4151 = sld [smem:[#allocation4 + $0x204]]
    %s4152 = sld [smem:[#allocation4 + $0x205]]
    %v4153 = vstv %s4151
    %v4154 = vmul.f32 %v4153, %v496
    %v4155 = vmul.f32 %v4153, %v497
    %v4156 = vmul.f32 %v4153, %v498
    %v4157 = vmul.f32 %v4153, %v499
    %v4158 = vmul.f32 %v4153, %v500
    %v4159 = vmul.f32 %v4153, %v501
    %v4160 = vmul.f32 %v4153, %v502
    %v4161 = vmul.f32 %v4153, %v503
    %v4162 = vmul.f32 %v4153, %v504
    %v4163 = vstv %s4152
    %v4164 = vmul.f32 %v4163, %v506
    %v4165 = vmul.f32 %v4163, %v507
    %v4166 = vmul.f32 %v4163, %v508
    %v4167 = vmul.f32 %v4163, %v509
    %v4168 = vmul.f32 %v4163, %v510
    %v4169 = vmul.f32 %v4163, %v511
    %v4170 = vmul.f32 %v4163, %v512
    %v4171 = vmul.f32 %v4163, %v513
    %v4172 = vmul.f32 %v4163, %v514
    %v4173 = vadd.f32 %v4154, %v4164
    %v4174 = vadd.f32 %v4155, %v4165
    %v4175 = vadd.f32 %v4156, %v4166
    %v4176 = vadd.f32 %v4157, %v4167
    %v4177 = vadd.f32 %v4158, %v4168
    %v4178 = vadd.f32 %v4159, %v4169
    %v4179 = vadd.f32 %v4160, %v4170
    %v4180 = vadd.f32 %v4161, %v4171
    %v4181 = vadd.f32 %v4162, %v4172
    %v4182 = vmul.f32 %v4153, %v506
    %v4183 = vmul.f32 %v4153, %v507
    %v4184 = vmul.f32 %v4153, %v508
    %v4185 = vmul.f32 %v4153, %v509
    %v4186 = vmul.f32 %v4153, %v510
    %v4187 = vmul.f32 %v4153, %v511
    %v4188 = vmul.f32 %v4153, %v512
    %v4189 = vmul.f32 %v4153, %v513
    %v4190 = vmul.f32 %v4153, %v514
    %v4191 = vmul.f32 %v4163, %v516
    %v4192 = vmul.f32 %v4163, %v517
    %v4193 = vmul.f32 %v4163, %v518
    %v4194 = vmul.f32 %v4163, %v519
    %v4195 = vmul.f32 %v4163, %v520
    %v4196 = vmul.f32 %v4163, %v521
    %v4197 = vmul.f32 %v4163, %v522
    %v4198 = vmul.f32 %v4163, %v523
    %v4199 = vmul.f32 %v4163, %v524
    %v4200 = vadd.f32 %v4182, %v4191
    %v4201 = vadd.f32 %v4183, %v4192
    %v4202 = vadd.f32 %v4184, %v4193
    %v4203 = vadd.f32 %v4185, %v4194
    %v4204 = vadd.f32 %v4186, %v4195
    %v4205 = vadd.f32 %v4187, %v4196
    %v4206 = vadd.f32 %v4188, %v4197
    %v4207 = vadd.f32 %v4189, %v4198
    %v4208 = vadd.f32 %v4190, %v4199
    %v4209 = vmul.f32 %v4153, %v516
    %v4210 = vmul.f32 %v4153, %v517
    %v4211 = vmul.f32 %v4153, %v518
    %v4212 = vmul.f32 %v4153, %v519
    %v4213 = vmul.f32 %v4153, %v520
    %v4214 = vmul.f32 %v4153, %v521
    %v4215 = vmul.f32 %v4153, %v522
    %v4216 = vmul.f32 %v4153, %v523
    %v4217 = vmul.f32 %v4153, %v524
    %v4218 = vmul.f32 %v4163, %v526
    %v4219 = vmul.f32 %v4163, %v527
    %v4220 = vmul.f32 %v4163, %v528
    %v4221 = vmul.f32 %v4163, %v529
    %v4222 = vmul.f32 %v4163, %v530
    %v4223 = vmul.f32 %v4163, %v531
    %v4224 = vmul.f32 %v4163, %v532
    %v4225 = vmul.f32 %v4163, %v533
    %v4226 = vmul.f32 %v4163, %v534
    %v4227 = vadd.f32 %v4209, %v4218
    %v4228 = vadd.f32 %v4210, %v4219
    %v4229 = vadd.f32 %v4211, %v4220
    %v4230 = vadd.f32 %v4212, %v4221
    %v4231 = vadd.f32 %v4213, %v4222
    %v4232 = vadd.f32 %v4214, %v4223
    %v4233 = vadd.f32 %v4215, %v4224
    %v4234 = vadd.f32 %v4216, %v4225
    %v4235 = vadd.f32 %v4217, %v4226
    %v4236 = vmul.f32 %v4153, %v526
    %v4237 = vmul.f32 %v4153, %v527
    %v4238 = vmul.f32 %v4153, %v528
    %v4239 = vmul.f32 %v4153, %v529
    %v4240 = vmul.f32 %v4153, %v530
    %v4241 = vmul.f32 %v4153, %v531
    %v4242 = vmul.f32 %v4153, %v532
    %v4243 = vmul.f32 %v4153, %v533
    %v4244 = vmul.f32 %v4153, %v534
    %v4245 = vmul.f32 %v4163, %v496
    %v4246 = vmul.f32 %v4163, %v497
    %v4247 = vmul.f32 %v4163, %v498
    %v4248 = vmul.f32 %v4163, %v499
    %v4249 = vmul.f32 %v4163, %v500
    %v4250 = vmul.f32 %v4163, %v501
    %v4251 = vmul.f32 %v4163, %v502
    %v4252 = vmul.f32 %v4163, %v503
    %v4253 = vmul.f32 %v4163, %v504
    %v4263 = vrot.slane %v4245, 1
    %v4264 = vrot.slane %v4246, 1
    %v4265 = vsel %vm234, %v4263, %v4264
    %v4266 = vrot.slane %v4247, 1
    %v4267 = vsel %vm234, %v4264, %v4266
    %v4268 = vrot.slane %v4248, 1
    %v4269 = vsel %vm234, %v4266, %v4268
    %v4270 = vrot.slane %v4249, 1
    %v4271 = vsel %vm234, %v4268, %v4270
    %v4272 = vrot.slane %v4250, 1
    %v4273 = vsel %vm234, %v4270, %v4272
    %v4274 = vrot.slane %v4251, 1
    %v4275 = vsel %vm234, %v4272, %v4274
    %v4276 = vrot.slane %v4252, 1
    %v4277 = vsel %vm234, %v4274, %v4276
    %v4278 = vrot.slane %v4253, 1
    %v4279 = vsel %vm234, %v4276, %v4278
    %v4289 = vadd.f32 %v4236, %v4265
    %v4290 = vadd.f32 %v4237, %v4267
    %v4291 = vadd.f32 %v4238, %v4269
    %v4292 = vadd.f32 %v4239, %v4271
    %v4293 = vadd.f32 %v4240, %v4273
    %v4294 = vadd.f32 %v4241, %v4275
    %v4295 = vadd.f32 %v4242, %v4277
    %v4296 = vadd.f32 %v4243, %v4279
    %v4297 = vadd.f32 %v4244, %v4278
    %v4298 = vadd.f32 %v4115, %v4173
    %v4299 = vadd.f32 %v4116, %v4174
    %v4300 = vadd.f32 %v4117, %v4175
    %v4301 = vadd.f32 %v4118, %v4176
    %v4302 = vadd.f32 %v4119, %v4177
    %v4303 = vadd.f32 %v4120, %v4178
    %v4304 = vadd.f32 %v4121, %v4179
    %v4305 = vadd.f32 %v4122, %v4180
    %v4306 = vadd.f32 %v4123, %v4181
    %v4307 = vadd.f32 %v4124, %v4200
    %v4308 = vadd.f32 %v4125, %v4201
    %v4309 = vadd.f32 %v4126, %v4202
    %v4310 = vadd.f32 %v4127, %v4203
    %v4311 = vadd.f32 %v4128, %v4204
    %v4312 = vadd.f32 %v4129, %v4205
    %v4313 = vadd.f32 %v4130, %v4206
    %v4314 = vadd.f32 %v4131, %v4207
    %v4315 = vadd.f32 %v4132, %v4208
    %v4316 = vadd.f32 %v4133, %v4227
    %v4317 = vadd.f32 %v4134, %v4228
    %v4318 = vadd.f32 %v4135, %v4229
    %v4319 = vadd.f32 %v4136, %v4230
    %v4320 = vadd.f32 %v4137, %v4231
    %v4321 = vadd.f32 %v4138, %v4232
    %v4322 = vadd.f32 %v4139, %v4233
    %v4323 = vadd.f32 %v4140, %v4234
    %v4324 = vadd.f32 %v4141, %v4235
    %v4325 = vadd.f32 %v4142, %v4289
    %v4326 = vadd.f32 %v4143, %v4290
    %v4327 = vadd.f32 %v4144, %v4291
    %v4328 = vadd.f32 %v4145, %v4292
    %v4329 = vadd.f32 %v4146, %v4293
    %v4330 = vadd.f32 %v4147, %v4294
    %v4331 = vadd.f32 %v4148, %v4295
    %v4332 = vadd.f32 %v4149, %v4296
    %v4333 = vadd.f32 %v4150, %v4297
    %s4334 = sld [smem:[#allocation4 + $0x206]]
    %s4335 = sld [smem:[#allocation4 + $0x207]]
    %v4336 = vstv %s4334
    %v4337 = vmul.f32 %v4336, %v719
    %v4338 = vmul.f32 %v4336, %v720
    %v4339 = vmul.f32 %v4336, %v721
    %v4340 = vmul.f32 %v4336, %v722
    %v4341 = vmul.f32 %v4336, %v723
    %v4342 = vmul.f32 %v4336, %v724
    %v4343 = vmul.f32 %v4336, %v725
    %v4344 = vmul.f32 %v4336, %v726
    %v4345 = vmul.f32 %v4336, %v727
    %v4346 = vstv %s4335
    %v4347 = vmul.f32 %v4346, %v729
    %v4348 = vmul.f32 %v4346, %v730
    %v4349 = vmul.f32 %v4346, %v731
    %v4350 = vmul.f32 %v4346, %v732
    %v4351 = vmul.f32 %v4346, %v733
    %v4352 = vmul.f32 %v4346, %v734
    %v4353 = vmul.f32 %v4346, %v735
    %v4354 = vmul.f32 %v4346, %v736
    %v4355 = vmul.f32 %v4346, %v737
    %v4356 = vadd.f32 %v4337, %v4347
    %v4357 = vadd.f32 %v4338, %v4348
    %v4358 = vadd.f32 %v4339, %v4349
    %v4359 = vadd.f32 %v4340, %v4350
    %v4360 = vadd.f32 %v4341, %v4351
    %v4361 = vadd.f32 %v4342, %v4352
    %v4362 = vadd.f32 %v4343, %v4353
    %v4363 = vadd.f32 %v4344, %v4354
    %v4364 = vadd.f32 %v4345, %v4355
    %v4365 = vmul.f32 %v4336, %v729
    %v4366 = vmul.f32 %v4336, %v730
    %v4367 = vmul.f32 %v4336, %v731
    %v4368 = vmul.f32 %v4336, %v732
    %v4369 = vmul.f32 %v4336, %v733
    %v4370 = vmul.f32 %v4336, %v734
    %v4371 = vmul.f32 %v4336, %v735
    %v4372 = vmul.f32 %v4336, %v736
    %v4373 = vmul.f32 %v4336, %v737
    %v4374 = vmul.f32 %v4346, %v739
    %v4375 = vmul.f32 %v4346, %v740
    %v4376 = vmul.f32 %v4346, %v741
    %v4377 = vmul.f32 %v4346, %v742
    %v4378 = vmul.f32 %v4346, %v743
    %v4379 = vmul.f32 %v4346, %v744
    %v4380 = vmul.f32 %v4346, %v745
    %v4381 = vmul.f32 %v4346, %v746
    %v4382 = vmul.f32 %v4346, %v747
    %v4383 = vadd.f32 %v4365, %v4374
    %v4384 = vadd.f32 %v4366, %v4375
    %v4385 = vadd.f32 %v4367, %v4376
    %v4386 = vadd.f32 %v4368, %v4377
    %v4387 = vadd.f32 %v4369, %v4378
    %v4388 = vadd.f32 %v4370, %v4379
    %v4389 = vadd.f32 %v4371, %v4380
    %v4390 = vadd.f32 %v4372, %v4381
    %v4391 = vadd.f32 %v4373, %v4382
    %v4392 = vmul.f32 %v4336, %v739
    %v4393 = vmul.f32 %v4336, %v740
    %v4394 = vmul.f32 %v4336, %v741
    %v4395 = vmul.f32 %v4336, %v742
    %v4396 = vmul.f32 %v4336, %v743
    %v4397 = vmul.f32 %v4336, %v744
    %v4398 = vmul.f32 %v4336, %v745
    %v4399 = vmul.f32 %v4336, %v746
    %v4400 = vmul.f32 %v4336, %v747
    %v4401 = vmul.f32 %v4346, %v749
    %v4402 = vmul.f32 %v4346, %v750
    %v4403 = vmul.f32 %v4346, %v751
    %v4404 = vmul.f32 %v4346, %v752
    %v4405 = vmul.f32 %v4346, %v753
    %v4406 = vmul.f32 %v4346, %v754
    %v4407 = vmul.f32 %v4346, %v755
    %v4408 = vmul.f32 %v4346, %v756
    %v4409 = vmul.f32 %v4346, %v757
    %v4410 = vadd.f32 %v4392, %v4401
    %v4411 = vadd.f32 %v4393, %v4402
    %v4412 = vadd.f32 %v4394, %v4403
    %v4413 = vadd.f32 %v4395, %v4404
    %v4414 = vadd.f32 %v4396, %v4405
    %v4415 = vadd.f32 %v4397, %v4406
    %v4416 = vadd.f32 %v4398, %v4407
    %v4417 = vadd.f32 %v4399, %v4408
    %v4418 = vadd.f32 %v4400, %v4409
    %v4419 = vmul.f32 %v4336, %v749
    %v4420 = vmul.f32 %v4336, %v750
    %v4421 = vmul.f32 %v4336, %v751
    %v4422 = vmul.f32 %v4336, %v752
    %v4423 = vmul.f32 %v4336, %v753
    %v4424 = vmul.f32 %v4336, %v754
    %v4425 = vmul.f32 %v4336, %v755
    %v4426 = vmul.f32 %v4336, %v756
    %v4427 = vmul.f32 %v4336, %v757
    %v4428 = vmul.f32 %v4346, %v719
    %v4429 = vmul.f32 %v4346, %v720
    %v4430 = vmul.f32 %v4346, %v721
    %v4431 = vmul.f32 %v4346, %v722
    %v4432 = vmul.f32 %v4346, %v723
    %v4433 = vmul.f32 %v4346, %v724
    %v4434 = vmul.f32 %v4346, %v725
    %v4435 = vmul.f32 %v4346, %v726
    %v4436 = vmul.f32 %v4346, %v727
    %v4446 = vrot.slane %v4428, 1
    %v4447 = vrot.slane %v4429, 1
    %v4448 = vsel %vm234, %v4446, %v4447
    %v4449 = vrot.slane %v4430, 1
    %v4450 = vsel %vm234, %v4447, %v4449
    %v4451 = vrot.slane %v4431, 1
    %v4452 = vsel %vm234, %v4449, %v4451
    %v4453 = vrot.slane %v4432, 1
    %v4454 = vsel %vm234, %v4451, %v4453
    %v4455 = vrot.slane %v4433, 1
    %v4456 = vsel %vm234, %v4453, %v4455
    %v4457 = vrot.slane %v4434, 1
    %v4458 = vsel %vm234, %v4455, %v4457
    %v4459 = vrot.slane %v4435, 1
    %v4460 = vsel %vm234, %v4457, %v4459
    %v4461 = vrot.slane %v4436, 1
    %v4462 = vsel %vm234, %v4459, %v4461
    %v4472 = vadd.f32 %v4419, %v4448
    %v4473 = vadd.f32 %v4420, %v4450
    %v4474 = vadd.f32 %v4421, %v4452
    %v4475 = vadd.f32 %v4422, %v4454
    %v4476 = vadd.f32 %v4423, %v4456
    %v4477 = vadd.f32 %v4424, %v4458
    %v4478 = vadd.f32 %v4425, %v4460
    %v4479 = vadd.f32 %v4426, %v4462
    %v4480 = vadd.f32 %v4427, %v4461
    %v4481 = vadd.f32 %v4298, %v4356
    %v4482 = vadd.f32 %v4299, %v4357
    %v4483 = vadd.f32 %v4300, %v4358
    %v4484 = vadd.f32 %v4301, %v4359
    %v4485 = vadd.f32 %v4302, %v4360
    %v4486 = vadd.f32 %v4303, %v4361
    %v4487 = vadd.f32 %v4304, %v4362
    %v4488 = vadd.f32 %v4305, %v4363
    %v4489 = vadd.f32 %v4306, %v4364
    %v4490 = vadd.f32 %v4307, %v4383
    %v4491 = vadd.f32 %v4308, %v4384
    %v4492 = vadd.f32 %v4309, %v4385
    %v4493 = vadd.f32 %v4310, %v4386
    %v4494 = vadd.f32 %v4311, %v4387
    %v4495 = vadd.f32 %v4312, %v4388
    %v4496 = vadd.f32 %v4313, %v4389
    %v4497 = vadd.f32 %v4314, %v4390
    %v4498 = vadd.f32 %v4315, %v4391
    %v4499 = vadd.f32 %v4316, %v4410
    %v4500 = vadd.f32 %v4317, %v4411
    %v4501 = vadd.f32 %v4318, %v4412
    %v4502 = vadd.f32 %v4319, %v4413
    %v4503 = vadd.f32 %v4320, %v4414
    %v4504 = vadd.f32 %v4321, %v4415
    %v4505 = vadd.f32 %v4322, %v4416
    %v4506 = vadd.f32 %v4323, %v4417
    %v4507 = vadd.f32 %v4324, %v4418
    %v4508 = vadd.f32 %v4325, %v4472
    %v4509 = vadd.f32 %v4326, %v4473
    %v4510 = vadd.f32 %v4327, %v4474
    %v4511 = vadd.f32 %v4328, %v4475
    %v4512 = vadd.f32 %v4329, %v4476
    %v4513 = vadd.f32 %v4330, %v4477
    %v4514 = vadd.f32 %v4331, %v4478
    %v4515 = vadd.f32 %v4332, %v4479
    %v4516 = vadd.f32 %v4333, %v4480
    %s4517 = sld [smem:[#allocation6 + $0x4]]
    %v4518 = vstv %s4517
    %v4519 = vadd.f32 %v4481, %v4518
    %v4520 = vadd.f32 %v4482, %v4518
    %v4521 = vadd.f32 %v4483, %v4518
    %v4522 = vadd.f32 %v4484, %v4518
    %v4523 = vadd.f32 %v4485, %v4518
    %v4524 = vadd.f32 %v4486, %v4518
    %v4525 = vadd.f32 %v4487, %v4518
    %v4526 = vadd.f32 %v4488, %v4518
    %v4527 = vadd.f32 %v4489, %v4518
    %v4528 = vmax.f32 %v4519, 0.0
    %v4529 = vmax.f32 %v4520, 0.0
    %v4530 = vmax.f32 %v4521, 0.0
    %v4531 = vmax.f32 %v4522, 0.0
    %v4532 = vmax.f32 %v4523, 0.0
    %v4533 = vmax.f32 %v4524, 0.0
    %v4534 = vmax.f32 %v4525, 0.0
    %v4535 = vmax.f32 %v4526, 0.0
    %v4536 = vmax.f32 %v4527, 0.0
    %v4537 = vadd.f32 %v4490, %v4518
    %v4538 = vadd.f32 %v4491, %v4518
    %v4539 = vadd.f32 %v4492, %v4518
    %v4540 = vadd.f32 %v4493, %v4518
    %v4541 = vadd.f32 %v4494, %v4518
    %v4542 = vadd.f32 %v4495, %v4518
    %v4543 = vadd.f32 %v4496, %v4518
    %v4544 = vadd.f32 %v4497, %v4518
    %v4545 = vadd.f32 %v4498, %v4518
    %v4546 = vmax.f32 %v4537, 0.0
    %v4547 = vmax.f32 %v4538, 0.0
    %v4548 = vmax.f32 %v4539, 0.0
    %v4549 = vmax.f32 %v4540, 0.0
    %v4550 = vmax.f32 %v4541, 0.0
    %v4551 = vmax.f32 %v4542, 0.0
    %v4552 = vmax.f32 %v4543, 0.0
    %v4553 = vmax.f32 %v4544, 0.0
    %v4554 = vmax.f32 %v4545, 0.0
    %v4555 = vadd.f32 %v4499, %v4518
    %v4556 = vadd.f32 %v4500, %v4518
    %v4557 = vadd.f32 %v4501, %v4518
    %v4558 = vadd.f32 %v4502, %v4518
    %v4559 = vadd.f32 %v4503, %v4518
    %v4560 = vadd.f32 %v4504, %v4518
    %v4561 = vadd.f32 %v4505, %v4518
    %v4562 = vadd.f32 %v4506, %v4518
    %v4563 = vadd.f32 %v4507, %v4518
    %v4564 = vmax.f32 %v4555, 0.0
    %v4565 = vmax.f32 %v4556, 0.0
    %v4566 = vmax.f32 %v4557, 0.0
    %v4567 = vmax.f32 %v4558, 0.0
    %v4568 = vmax.f32 %v4559, 0.0
    %v4569 = vmax.f32 %v4560, 0.0
    %v4570 = vmax.f32 %v4561, 0.0
    %v4571 = vmax.f32 %v4562, 0.0
    %v4572 = vmax.f32 %v4563, 0.0
    %v4573 = vadd.f32 %v4508, %v4518
    %v4574 = vadd.f32 %v4509, %v4518
    %v4575 = vadd.f32 %v4510, %v4518
    %v4576 = vadd.f32 %v4511, %v4518
    %v4577 = vadd.f32 %v4512, %v4518
    %v4578 = vadd.f32 %v4513, %v4518
    %v4579 = vadd.f32 %v4514, %v4518
    %v4580 = vadd.f32 %v4515, %v4518
    %v4581 = vadd.f32 %v4516, %v4518
    %v4582 = vmax.f32 %v4573, 0.0
    %v4583 = vmax.f32 %v4574, 0.0
    %v4584 = vmax.f32 %v4575, 0.0
    %v4585 = vmax.f32 %v4576, 0.0
    %v4586 = vmax.f32 %v4577, 0.0
    %v4587 = vmax.f32 %v4578, 0.0
    %v4588 = vmax.f32 %v4579, 0.0
    %v4589 = vmax.f32 %v4580, 0.0
    %v4590 = vmax.f32 %v4581, 0.0
    %v4591 = vmax.f32 %v4528, %v4546
    %v4592 = vmax.f32 %v4529, %v4547
    %v4593 = vmax.f32 %v4530, %v4548
    %v4594 = vmax.f32 %v4531, %v4549
    %v4595 = vmax.f32 %v4532, %v4550
    %v4596 = vmax.f32 %v4533, %v4551
    %v4597 = vmax.f32 %v4534, %v4552
    %v4598 = vmax.f32 %v4535, %v4553
    %v4599 = vmax.f32 %v4536, %v4554
    %v4600 = vmax.f32 %v4564, %v4582
    %v4601 = vmax.f32 %v4565, %v4583
    %v4602 = vmax.f32 %v4566, %v4584
    %v4603 = vmax.f32 %v4567, %v4585
    %v4604 = vmax.f32 %v4568, %v4586
    %v4605 = vmax.f32 %v4569, %v4587
    %v4606 = vmax.f32 %v4570, %v4588
    %v4607 = vmax.f32 %v4571, %v4589
    %v4608 = vmax.f32 %v4572, %v4590
    %s4609 = sld [smem:[#allocation8 + $0x200]]
    %s4610 = sld [smem:[#allocation8 + $0x201]]
    %v4611 = vstv %s4609
    %v4612 = vmul.f32 %v4611, %v4591
    %v4613 = vmul.f32 %v4611, %v4592
    %v4614 = vmul.f32 %v4611, %v4593
    %v4615 = vmul.f32 %v4611, %v4594
    %v4616 = vmul.f32 %v4611, %v4595
    %v4617 = vmul.f32 %v4611, %v4596
    %v4618 = vmul.f32 %v4611, %v4597
    %v4619 = vmul.f32 %v4611, %v4598
    %v4620 = vmul.f32 %v4611, %v4599
    %v4621 = vstv %s4610
    %v4622 = vmul.f32 %v4621, %v4600
    %v4623 = vmul.f32 %v4621, %v4601
    %v4624 = vmul.f32 %v4621, %v4602
    %v4625 = vmul.f32 %v4621, %v4603
    %v4626 = vmul.f32 %v4621, %v4604
    %v4627 = vmul.f32 %v4621, %v4605
    %v4628 = vmul.f32 %v4621, %v4606
    %v4629 = vmul.f32 %v4621, %v4607
    %v4630 = vmul.f32 %v4621, %v4608
    %v4631 = vadd.f32 %v4612, %v4622
    %v4632 = vadd.f32 %v4613, %v4623
    %v4633 = vadd.f32 %v4614, %v4624
    %v4634 = vadd.f32 %v4615, %v4625
    %v4635 = vadd.f32 %v4616, %v4626
    %v4636 = vadd.f32 %v4617, %v4627
    %v4637 = vadd.f32 %v4618, %v4628
    %v4638 = vadd.f32 %v4619, %v4629
    %v4639 = vadd.f32 %v4620, %v4630
    %v4640 = vmul.f32 %v4611, %v4600
    %v4641 = vmul.f32 %v4611, %v4601
    %v4642 = vmul.f32 %v4611, %v4602
    %v4643 = vmul.f32 %v4611, %v4603
    %v4644 = vmul.f32 %v4611, %v4604
    %v4645 = vmul.f32 %v4611, %v4605
    %v4646 = vmul.f32 %v4611, %v4606
    %v4647 = vmul.f32 %v4611, %v4607
    %v4648 = vmul.f32 %v4611, %v4608
    %v4649 = vmul.f32 %v4621, %v4591
    %v4650 = vmul.f32 %v4621, %v4592
    %v4651 = vmul.f32 %v4621, %v4593
    %v4652 = vmul.f32 %v4621, %v4594
    %v4653 = vmul.f32 %v4621, %v4595
    %v4654 = vmul.f32 %v4621, %v4596
    %v4655 = vmul.f32 %v4621, %v4597
    %v4656 = vmul.f32 %v4621, %v4598
    %v4657 = vmul.f32 %v4621, %v4599
    %v4667 = vrot.slane %v4649, 1
    %v4668 = vrot.slane %v4650, 1
    %v4669 = vsel %vm234, %v4667, %v4668
    %v4670 = vrot.slane %v4651, 1
    %v4671 = vsel %vm234, %v4668, %v4670
    %v4672 = vrot.slane %v4652, 1
    %v4673 = vsel %vm234, %v4670, %v4672
    %v4674 = vrot.slane %v4653, 1
    %v4675 = vsel %vm234, %v4672, %v4674
    %v4676 = vrot.slane %v4654, 1
    %v4677 = vsel %vm234, %v4674, %v4676
    %v4678 = vrot.slane %v4655, 1
    %v4679 = vsel %vm234, %v4676, %v4678
    %v4680 = vrot.slane %v4656, 1
    %v4681 = vsel %vm234, %v4678, %v4680
    %v4682 = vrot.slane %v4657, 1
    %v4683 = vsel %vm234, %v4680, %v4682
    %v4693 = vadd.f32 %v4640, %v4669
    %v4694 = vadd.f32 %v4641, %v4671
    %v4695 = vadd.f32 %v4642, %v4673
    %v4696 = vadd.f32 %v4643, %v4675
    %v4697 = vadd.f32 %v4644, %v4677
    %v4698 = vadd.f32 %v4645, %v4679
    %v4699 = vadd.f32 %v4646, %v4681
    %v4700 = vadd.f32 %v4647, %v4683
    %v4701 = vadd.f32 %v4648, %v4682
    %v4702 = vadd.f32 %v3803, %v4631
    %v4703 = vadd.f32 %v3804, %v4632
    %v4704 = vadd.f32 %v3805, %v4633
    %v4705 = vadd.f32 %v3806, %v4634
    %v4706 = vadd.f32 %v3807, %v4635
    %v4707 = vadd.f32 %v3808, %v4636
    %v4708 = vadd.f32 %v3809, %v4637
    %v4709 = vadd.f32 %v3810, %v4638
    %v4710 = vadd.f32 %v3811, %v4639
    %v4711 = vadd.f32 %v3812, %v4693
    %v4712 = vadd.f32 %v3813, %v4694
    %v4713 = vadd.f32 %v3814, %v4695
    %v4714 = vadd.f32 %v3815, %v4696
    %v4715 = vadd.f32 %v3816, %v4697
    %v4716 = vadd.f32 %v3817, %v4698
    %v4717 = vadd.f32 %v3818, %v4699
    %v4718 = vadd.f32 %v3819, %v4700
    %v4719 = vadd.f32 %v3820, %v4701
    %s4720 = sld [smem:[#allocation4 + $0x280]]
    %s4721 = sld [smem:[#allocation4 + $0x281]]
    %v4722 = vstv %s4720
    %v4723 = vmul.f32 %v4722, %v85
    %v4724 = vmul.f32 %v4722, %v86
    %v4725 = vmul.f32 %v4722, %v87
    %v4726 = vmul.f32 %v4722, %v88
    %v4727 = vmul.f32 %v4722, %v89
    %v4728 = vmul.f32 %v4722, %v90
    %v4729 = vmul.f32 %v4722, %v91
    %v4730 = vmul.f32 %v4722, %v92
    %v4731 = vmul.f32 %v4722, %v93
    %v4732 = vstv %s4721
    %v4733 = vmul.f32 %v4732, %v95
    %v4734 = vmul.f32 %v4732, %v96
    %v4735 = vmul.f32 %v4732, %v97
    %v4736 = vmul.f32 %v4732, %v98
    %v4737 = vmul.f32 %v4732, %v99
    %v4738 = vmul.f32 %v4732, %v100
    %v4739 = vmul.f32 %v4732, %v101
    %v4740 = vmul.f32 %v4732, %v102
    %v4741 = vmul.f32 %v4732, %v103
    %v4742 = vadd.f32 %v4723, %v4733
    %v4743 = vadd.f32 %v4724, %v4734
    %v4744 = vadd.f32 %v4725, %v4735
    %v4745 = vadd.f32 %v4726, %v4736
    %v4746 = vadd.f32 %v4727, %v4737
    %v4747 = vadd.f32 %v4728, %v4738
    %v4748 = vadd.f32 %v4729, %v4739
    %v4749 = vadd.f32 %v4730, %v4740
    %v4750 = vadd.f32 %v4731, %v4741
    %v4751 = vmul.f32 %v4722, %v95
    %v4752 = vmul.f32 %v4722, %v96
    %v4753 = vmul.f32 %v4722, %v97
    %v4754 = vmul.f32 %v4722, %v98
    %v4755 = vmul.f32 %v4722, %v99
    %v4756 = vmul.f32 %v4722, %v100
    %v4757 = vmul.f32 %v4722, %v101
    %v4758 = vmul.f32 %v4722, %v102
    %v4759 = vmul.f32 %v4722, %v103
    %v4760 = vmul.f32 %v4732, %v105
    %v4761 = vmul.f32 %v4732, %v106
    %v4762 = vmul.f32 %v4732, %v107
    %v4763 = vmul.f32 %v4732, %v108
    %v4764 = vmul.f32 %v4732, %v109
    %v4765 = vmul.f32 %v4732, %v110
    %v4766 = vmul.f32 %v4732, %v111
    %v4767 = vmul.f32 %v4732, %v112
    %v4768 = vmul.f32 %v4732, %v113
    %v4769 = vadd.f32 %v4751, %v4760
    %v4770 = vadd.f32 %v4752, %v4761
    %v4771 = vadd.f32 %v4753, %v4762
    %v4772 = vadd.f32 %v4754, %v4763
    %v4773 = vadd.f32 %v4755, %v4764
    %v4774 = vadd.f32 %v4756, %v4765
    %v4775 = vadd.f32 %v4757, %v4766
    %v4776 = vadd.f32 %v4758, %v4767
    %v4777 = vadd.f32 %v4759, %v4768
    %v4778 = vmul.f32 %v4722, %v105
    %v4779 = vmul.f32 %v4722, %v106
    %v4780 = vmul.f32 %v4722, %v107
    %v4781 = vmul.f32 %v4722, %v108
    %v4782 = vmul.f32 %v4722, %v109
    %v4783 = vmul.f32 %v4722, %v110
    %v4784 = vmul.f32 %v4722, %v111
    %v4785 = vmul.f32 %v4722, %v112
    %v4786 = vmul.f32 %v4722, %v113
    %v4787 = vmul.f32 %v4732, %v115
    %v4788 = vmul.f32 %v4732, %v116
    %v4789 = vmul.f32 %v4732, %v117
    %v4790 = vmul.f32 %v4732, %v118
    %v4791 = vmul.f32 %v4732, %v119
    %v4792 = vmul.f32 %v4732, %v120
    %v4793 = vmul.f32 %v4732, %v121
    %v4794 = vmul.f32 %v4732, %v122
    %v4795 = vmul.f32 %v4732, %v123
    %v4796 = vadd.f32 %v4778, %v4787
    %v4797 = vadd.f32 %v4779, %v4788
    %v4798 = vadd.f32 %v4780, %v4789
    %v4799 = vadd.f32 %v4781, %v4790
    %v4800 = vadd.f32 %v4782, %v4791
    %v4801 = vadd.f32 %v4783, %v4792
    %v4802 = vadd.f32 %v4784, %v4793
    %v4803 = vadd.f32 %v4785, %v4794
    %v4804 = vadd.f32 %v4786, %v4795
    %v4805 = vmul.f32 %v4722, %v115
    %v4806 = vmul.f32 %v4722, %v116
    %v4807 = vmul.f32 %v4722, %v117
    %v4808 = vmul.f32 %v4722, %v118
    %v4809 = vmul.f32 %v4722, %v119
    %v4810 = vmul.f32 %v4722, %v120
    %v4811 = vmul.f32 %v4722, %v121
    %v4812 = vmul.f32 %v4722, %v122
    %v4813 = vmul.f32 %v4722, %v123
    %v4814 = vmul.f32 %v4732, %v85
    %v4815 = vmul.f32 %v4732, %v86
    %v4816 = vmul.f32 %v4732, %v87
    %v4817 = vmul.f32 %v4732, %v88
    %v4818 = vmul.f32 %v4732, %v89
    %v4819 = vmul.f32 %v4732, %v90
    %v4820 = vmul.f32 %v4732, %v91
    %v4821 = vmul.f32 %v4732, %v92
    %v4822 = vmul.f32 %v4732, %v93
    %v4832 = vrot.slane %v4814, 1
    %v4833 = vrot.slane %v4815, 1
    %v4834 = vsel %vm234, %v4832, %v4833
    %v4835 = vrot.slane %v4816, 1
    %v4836 = vsel %vm234, %v4833, %v4835
    %v4837 = vrot.slane %v4817, 1
    %v4838 = vsel %vm234, %v4835, %v4837
    %v4839 = vrot.slane %v4818, 1
    %v4840 = vsel %vm234, %v4837, %v4839
    %v4841 = vrot.slane %v4819, 1
    %v4842 = vsel %vm234, %v4839, %v4841
    %v4843 = vrot.slane %v4820, 1
    %v4844 = vsel %vm234, %v4841, %v4843
    %v4845 = vrot.slane %v4821, 1
    %v4846 = vsel %vm234, %v4843, %v4845
    %v4847 = vrot.slane %v4822, 1
    %v4848 = vsel %vm234, %v4845, %v4847
    %v4858 = vadd.f32 %v4805, %v4834
    %v4859 = vadd.f32 %v4806, %v4836
    %v4860 = vadd.f32 %v4807, %v4838
    %v4861 = vadd.f32 %v4808, %v4840
    %v4862 = vadd.f32 %v4809, %v4842
    %v4863 = vadd.f32 %v4810, %v4844
    %v4864 = vadd.f32 %v4811, %v4846
    %v4865 = vadd.f32 %v4812, %v4848
    %v4866 = vadd.f32 %v4813, %v4847
    %s4867 = sld [smem:[#allocation4 + $0x282]]
    %s4868 = sld [smem:[#allocation4 + $0x283]]
    %v4869 = vstv %s4867
    %v4870 = vmul.f32 %v4869, %v273
    %v4871 = vmul.f32 %v4869, %v274
    %v4872 = vmul.f32 %v4869, %v275
    %v4873 = vmul.f32 %v4869, %v276
    %v4874 = vmul.f32 %v4869, %v277
    %v4875 = vmul.f32 %v4869, %v278
    %v4876 = vmul.f32 %v4869, %v279
    %v4877 = vmul.f32 %v4869, %v280
    %v4878 = vmul.f32 %v4869, %v281
    %v4879 = vstv %s4868
    %v4880 = vmul.f32 %v4879, %v283
    %v4881 = vmul.f32 %v4879, %v284
    %v4882 = vmul.f32 %v4879, %v285
    %v4883 = vmul.f32 %v4879, %v286
    %v4884 = vmul.f32 %v4879, %v287
    %v4885 = vmul.f32 %v4879, %v288
    %v4886 = vmul.f32 %v4879, %v289
    %v4887 = vmul.f32 %v4879, %v290
    %v4888 = vmul.f32 %v4879, %v291
    %v4889 = vadd.f32 %v4870, %v4880
    %v4890 = vadd.f32 %v4871, %v4881
    %v4891 = vadd.f32 %v4872, %v4882
    %v4892 = vadd.f32 %v4873, %v4883
    %v4893 = vadd.f32 %v4874, %v4884
    %v4894 = vadd.f32 %v4875, %v4885
    %v4895 = vadd.f32 %v4876, %v4886
    %v4896 = vadd.f32 %v4877, %v4887
    %v4897 = vadd.f32 %v4878, %v4888
    %v4898 = vmul.f32 %v4869, %v283
    %v4899 = vmul.f32 %v4869, %v284
    %v4900 = vmul.f32 %v4869, %v285
    %v4901 = vmul.f32 %v4869, %v286
    %v4902 = vmul.f32 %v4869, %v287
    %v4903 = vmul.f32 %v4869, %v288
    %v4904 = vmul.f32 %v4869, %v289
    %v4905 = vmul.f32 %v4869, %v290
    %v4906 = vmul.f32 %v4869, %v291
    %v4907 = vmul.f32 %v4879, %v293
    %v4908 = vmul.f32 %v4879, %v294
    %v4909 = vmul.f32 %v4879, %v295
    %v4910 = vmul.f32 %v4879, %v296
    %v4911 = vmul.f32 %v4879, %v297
    %v4912 = vmul.f32 %v4879, %v298
    %v4913 = vmul.f32 %v4879, %v299
    %v4914 = vmul.f32 %v4879, %v300
    %v4915 = vmul.f32 %v4879, %v301
    %v4916 = vadd.f32 %v4898, %v4907
    %v4917 = vadd.f32 %v4899, %v4908
    %v4918 = vadd.f32 %v4900, %v4909
    %v4919 = vadd.f32 %v4901, %v4910
    %v4920 = vadd.f32 %v4902, %v4911
    %v4921 = vadd.f32 %v4903, %v4912
    %v4922 = vadd.f32 %v4904, %v4913
    %v4923 = vadd.f32 %v4905, %v4914
    %v4924 = vadd.f32 %v4906, %v4915
    %v4925 = vmul.f32 %v4869, %v293
    %v4926 = vmul.f32 %v4869, %v294
    %v4927 = vmul.f32 %v4869, %v295
    %v4928 = vmul.f32 %v4869, %v296
    %v4929 = vmul.f32 %v4869, %v297
    %v4930 = vmul.f32 %v4869, %v298
    %v4931 = vmul.f32 %v4869, %v299
    %v4932 = vmul.f32 %v4869, %v300
    %v4933 = vmul.f32 %v4869, %v301
    %v4934 = vmul.f32 %v4879, %v303
    %v4935 = vmul.f32 %v4879, %v304
    %v4936 = vmul.f32 %v4879, %v305
    %v4937 = vmul.f32 %v4879, %v306
    %v4938 = vmul.f32 %v4879, %v307
    %v4939 = vmul.f32 %v4879, %v308
    %v4940 = vmul.f32 %v4879, %v309
    %v4941 = vmul.f32 %v4879, %v310
    %v4942 = vmul.f32 %v4879, %v311
    %v4943 = vadd.f32 %v4925, %v4934
    %v4944 = vadd.f32 %v4926, %v4935
    %v4945 = vadd.f32 %v4927, %v4936
    %v4946 = vadd.f32 %v4928, %v4937
    %v4947 = vadd.f32 %v4929, %v4938
    %v4948 = vadd.f32 %v4930, %v4939
    %v4949 = vadd.f32 %v4931, %v4940
    %v4950 = vadd.f32 %v4932, %v4941
    %v4951 = vadd.f32 %v4933, %v4942
    %v4952 = vmul.f32 %v4869, %v303
    %v4953 = vmul.f32 %v4869, %v304
    %v4954 = vmul.f32 %v4869, %v305
    %v4955 = vmul.f32 %v4869, %v306
    %v4956 = vmul.f32 %v4869, %v307
    %v4957 = vmul.f32 %v4869, %v308
    %v4958 = vmul.f32 %v4869, %v309
    %v4959 = vmul.f32 %v4869, %v310
    %v4960 = vmul.f32 %v4869, %v311
    %v4961 = vmul.f32 %v4879, %v273
    %v4962 = vmul.f32 %v4879, %v274
    %v4963 = vmul.f32 %v4879, %v275
    %v4964 = vmul.f32 %v4879, %v276
    %v4965 = vmul.f32 %v4879, %v277
    %v4966 = vmul.f32 %v4879, %v278
    %v4967 = vmul.f32 %v4879, %v279
    %v4968 = vmul.f32 %v4879, %v280
    %v4969 = vmul.f32 %v4879, %v281
    %v4979 = vrot.slane %v4961, 1
    %v4980 = vrot.slane %v4962, 1
    %v4981 = vsel %vm234, %v4979, %v4980
    %v4982 = vrot.slane %v4963, 1
    %v4983 = vsel %vm234, %v4980, %v4982
    %v4984 = vrot.slane %v4964, 1
    %v4985 = vsel %vm234, %v4982, %v4984
    %v4986 = vrot.slane %v4965, 1
    %v4987 = vsel %vm234, %v4984, %v4986
    %v4988 = vrot.slane %v4966, 1
    %v4989 = vsel %vm234, %v4986, %v4988
    %v4990 = vrot.slane %v4967, 1
    %v4991 = vsel %vm234, %v4988, %v4990
    %v4992 = vrot.slane %v4968, 1
    %v4993 = vsel %vm234, %v4990, %v4992
    %v4994 = vrot.slane %v4969, 1
    %v4995 = vsel %vm234, %v4992, %v4994
    %v5005 = vadd.f32 %v4952, %v4981
    %v5006 = vadd.f32 %v4953, %v4983
    %v5007 = vadd.f32 %v4954, %v4985
    %v5008 = vadd.f32 %v4955, %v4987
    %v5009 = vadd.f32 %v4956, %v4989
    %v5010 = vadd.f32 %v4957, %v4991
    %v5011 = vadd.f32 %v4958, %v4993
    %v5012 = vadd.f32 %v4959, %v4995
    %v5013 = vadd.f32 %v4960, %v4994
    %v5014 = vadd.f32 %v4742, %v4889
    %v5015 = vadd.f32 %v4743, %v4890
    %v5016 = vadd.f32 %v4744, %v4891
    %v5017 = vadd.f32 %v4745, %v4892
    %v5018 = vadd.f32 %v4746, %v4893
    %v5019 = vadd.f32 %v4747, %v4894
    %v5020 = vadd.f32 %v4748, %v4895
    %v5021 = vadd.f32 %v4749, %v4896
    %v5022 = vadd.f32 %v4750, %v4897
    %v5023 = vadd.f32 %v4769, %v4916
    %v5024 = vadd.f32 %v4770, %v4917
    %v5025 = vadd.f32 %v4771, %v4918
    %v5026 = vadd.f32 %v4772, %v4919
    %v5027 = vadd.f32 %v4773, %v4920
    %v5028 = vadd.f32 %v4774, %v4921
    %v5029 = vadd.f32 %v4775, %v4922
    %v5030 = vadd.f32 %v4776, %v4923
    %v5031 = vadd.f32 %v4777, %v4924
    %v5032 = vadd.f32 %v4796, %v4943
    %v5033 = vadd.f32 %v4797, %v4944
    %v5034 = vadd.f32 %v4798, %v4945
    %v5035 = vadd.f32 %v4799, %v4946
    %v5036 = vadd.f32 %v4800, %v4947
    %v5037 = vadd.f32 %v4801, %v4948
    %v5038 = vadd.f32 %v4802, %v4949
    %v5039 = vadd.f32 %v4803, %v4950
    %v5040 = vadd.f32 %v4804, %v4951
    %v5041 = vadd.f32 %v4858, %v5005
    %v5042 = vadd.f32 %v4859, %v5006
    %v5043 = vadd.f32 %v4860, %v5007
    %v5044 = vadd.f32 %v4861, %v5008
    %v5045 = vadd.f32 %v4862, %v5009
    %v5046 = vadd.f32 %v4863, %v5010
    %v5047 = vadd.f32 %v4864, %v5011
    %v5048 = vadd.f32 %v4865, %v5012
    %v5049 = vadd.f32 %v4866, %v5013
    %s5050 = sld [smem:[#allocation4 + $0x284]]
    %s5051 = sld [smem:[#allocation4 + $0x285]]
    %v5052 = vstv %s5050
    %v5053 = vmul.f32 %v5052, %v496
    %v5054 = vmul.f32 %v5052, %v497
    %v5055 = vmul.f32 %v5052, %v498
    %v5056 = vmul.f32 %v5052, %v499
    %v5057 = vmul.f32 %v5052, %v500
    %v5058 = vmul.f32 %v5052, %v501
    %v5059 = vmul.f32 %v5052, %v502
    %v5060 = vmul.f32 %v5052, %v503
    %v5061 = vmul.f32 %v5052, %v504
    %v5062 = vstv %s5051
    %v5063 = vmul.f32 %v5062, %v506
    %v5064 = vmul.f32 %v5062, %v507
    %v5065 = vmul.f32 %v5062, %v508
    %v5066 = vmul.f32 %v5062, %v509
    %v5067 = vmul.f32 %v5062, %v510
    %v5068 = vmul.f32 %v5062, %v511
    %v5069 = vmul.f32 %v5062, %v512
    %v5070 = vmul.f32 %v5062, %v513
    %v5071 = vmul.f32 %v5062, %v514
    %v5072 = vadd.f32 %v5053, %v5063
    %v5073 = vadd.f32 %v5054, %v5064
    %v5074 = vadd.f32 %v5055, %v5065
    %v5075 = vadd.f32 %v5056, %v5066
    %v5076 = vadd.f32 %v5057, %v5067
    %v5077 = vadd.f32 %v5058, %v5068
    %v5078 = vadd.f32 %v5059, %v5069
    %v5079 = vadd.f32 %v5060, %v5070
    %v5080 = vadd.f32 %v5061, %v5071
    %v5081 = vmul.f32 %v5052, %v506
    %v5082 = vmul.f32 %v5052, %v507
    %v5083 = vmul.f32 %v5052, %v508
    %v5084 = vmul.f32 %v5052, %v509
    %v5085 = vmul.f32 %v5052, %v510
    %v5086 = vmul.f32 %v5052, %v511
    %v5087 = vmul.f32 %v5052, %v512
    %v5088 = vmul.f32 %v5052, %v513
    %v5089 = vmul.f32 %v5052, %v514
    %v5090 = vmul.f32 %v5062, %v516
    %v5091 = vmul.f32 %v5062, %v517
    %v5092 = vmul.f32 %v5062, %v518
    %v5093 = vmul.f32 %v5062, %v519
    %v5094 = vmul.f32 %v5062, %v520
    %v5095 = vmul.f32 %v5062, %v521
    %v5096 = vmul.f32 %v5062, %v522
    %v5097 = vmul.f32 %v5062, %v523
    %v5098 = vmul.f32 %v5062, %v524
    %v5099 = vadd.f32 %v5081, %v5090
    %v5100 = vadd.f32 %v5082, %v5091
    %v5101 = vadd.f32 %v5083, %v5092
    %v5102 = vadd.f32 %v5084, %v5093
    %v5103 = vadd.f32 %v5085, %v5094
    %v5104 = vadd.f32 %v5086, %v5095
    %v5105 = vadd.f32 %v5087, %v5096
    %v5106 = vadd.f32 %v5088, %v5097
    %v5107 = vadd.f32 %v5089, %v5098
    %v5108 = vmul.f32 %v5052, %v516
    %v5109 = vmul.f32 %v5052, %v517
    %v5110 = vmul.f32 %v5052, %v518
    %v5111 = vmul.f32 %v5052, %v519
    %v5112 = vmul.f32 %v5052, %v520
    %v5113 = vmul.f32 %v5052, %v521
    %v5114 = vmul.f32 %v5052, %v522
    %v5115 = vmul.f32 %v5052, %v523
    %v5116 = vmul.f32 %v5052, %v524
    %v5117 = vmul.f32 %v5062, %v526
    %v5118 = vmul.f32 %v5062, %v527
    %v5119 = vmul.f32 %v5062, %v528
    %v5120 = vmul.f32 %v5062, %v529
    %v5121 = vmul.f32 %v5062, %v530
    %v5122 = vmul.f32 %v5062, %v531
    %v5123 = vmul.f32 %v5062, %v532
    %v5124 = vmul.f32 %v5062, %v533
    %v5125 = vmul.f32 %v5062, %v534
    %v5126 = vadd.f32 %v5108, %v5117
    %v5127 = vadd.f32 %v5109, %v5118
    %v5128 = vadd.f32 %v5110, %v5119
    %v5129 = vadd.f32 %v5111, %v5120
    %v5130 = vadd.f32 %v5112, %v5121
    %v5131 = vadd.f32 %v5113, %v5122
    %v5132 = vadd.f32 %v5114, %v5123
    %v5133 = vadd.f32 %v5115, %v5124
    %v5134 = vadd.f32 %v5116, %v5125
    %v5135 = vmul.f32 %v5052, %v526
    %v5136 = vmul.f32 %v5052, %v527
    %v5137 = vmul.f32 %v5052, %v528
    %v5138 = vmul.f32 %v5052, %v529
    %v5139 = vmul.f32 %v5052, %v530
    %v5140 = vmul.f32 %v5052, %v531
    %v5141 = vmul.f32 %v5052, %v532
    %v5142 = vmul.f32 %v5052, %v533
    %v5143 = vmul.f32 %v5052, %v534
    %v5144 = vmul.f32 %v5062, %v496
    %v5145 = vmul.f32 %v5062, %v497
    %v5146 = vmul.f32 %v5062, %v498
    %v5147 = vmul.f32 %v5062, %v499
    %v5148 = vmul.f32 %v5062, %v500
    %v5149 = vmul.f32 %v5062, %v501
    %v5150 = vmul.f32 %v5062, %v502
    %v5151 = vmul.f32 %v5062, %v503
    %v5152 = vmul.f32 %v5062, %v504
    %v5162 = vrot.slane %v5144, 1
    %v5163 = vrot.slane %v5145, 1
    %v5164 = vsel %vm234, %v5162, %v5163
    %v5165 = vrot.slane %v5146, 1
    %v5166 = vsel %vm234, %v5163, %v5165
    %v5167 = vrot.slane %v5147, 1
    %v5168 = vsel %vm234, %v5165, %v5167
    %v5169 = vrot.slane %v5148, 1
    %v5170 = vsel %vm234, %v5167, %v5169
    %v5171 = vrot.slane %v5149, 1
    %v5172 = vsel %vm234, %v5169, %v5171
    %v5173 = vrot.slane %v5150, 1
    %v5174 = vsel %vm234, %v5171, %v5173
    %v5175 = vrot.slane %v5151, 1
    %v5176 = vsel %vm234, %v5173, %v5175
    %v5177 = vrot.slane %v5152, 1
    %v5178 = vsel %vm234, %v5175, %v5177
    %v5188 = vadd.f32 %v5135, %v5164
    %v5189 = vadd.f32 %v5136, %v5166
    %v5190 = vadd.f32 %v5137, %v5168
    %v5191 = vadd.f32 %v5138, %v5170
    %v5192 = vadd.f32 %v5139, %v5172
    %v5193 = vadd.f32 %v5140, %v5174
    %v5194 = vadd.f32 %v5141, %v5176
    %v5195 = vadd.f32 %v5142, %v5178
    %v5196 = vadd.f32 %v5143, %v5177
    %v5197 = vadd.f32 %v5014, %v5072
    %v5198 = vadd.f32 %v5015, %v5073
    %v5199 = vadd.f32 %v5016, %v5074
    %v5200 = vadd.f32 %v5017, %v5075
    %v5201 = vadd.f32 %v5018, %v5076
    %v5202 = vadd.f32 %v5019, %v5077
    %v5203 = vadd.f32 %v5020, %v5078
    %v5204 = vadd.f32 %v5021, %v5079
    %v5205 = vadd.f32 %v5022, %v5080
    %v5206 = vadd.f32 %v5023, %v5099
    %v5207 = vadd.f32 %v5024, %v5100
    %v5208 = vadd.f32 %v5025, %v5101
    %v5209 = vadd.f32 %v5026, %v5102
    %v5210 = vadd.f32 %v5027, %v5103
    %v5211 = vadd.f32 %v5028, %v5104
    %v5212 = vadd.f32 %v5029, %v5105
    %v5213 = vadd.f32 %v5030, %v5106
    %v5214 = vadd.f32 %v5031, %v5107
    %v5215 = vadd.f32 %v5032, %v5126
    %v5216 = vadd.f32 %v5033, %v5127
    %v5217 = vadd.f32 %v5034, %v5128
    %v5218 = vadd.f32 %v5035, %v5129
    %v5219 = vadd.f32 %v5036, %v5130
    %v5220 = vadd.f32 %v5037, %v5131
    %v5221 = vadd.f32 %v5038, %v5132
    %v5222 = vadd.f32 %v5039, %v5133
    %v5223 = vadd.f32 %v5040, %v5134
    %v5224 = vadd.f32 %v5041, %v5188
    %v5225 = vadd.f32 %v5042, %v5189
    %v5226 = vadd.f32 %v5043, %v5190
    %v5227 = vadd.f32 %v5044, %v5191
    %v5228 = vadd.f32 %v5045, %v5192
    %v5229 = vadd.f32 %v5046, %v5193
    %v5230 = vadd.f32 %v5047, %v5194
    %v5231 = vadd.f32 %v5048, %v5195
    %v5232 = vadd.f32 %v5049, %v5196
    %s5233 = sld [smem:[#allocation4 + $0x286]]
    %s5234 = sld [smem:[#allocation4 + $0x287]]
    %v5235 = vstv %s5233
    %v5236 = vmul.f32 %v5235, %v719
    %v5237 = vmul.f32 %v5235, %v720
    %v5238 = vmul.f32 %v5235, %v721
    %v5239 = vmul.f32 %v5235, %v722
    %v5240 = vmul.f32 %v5235, %v723
    %v5241 = vmul.f32 %v5235, %v724
    %v5242 = vmul.f32 %v5235, %v725
    %v5243 = vmul.f32 %v5235, %v726
    %v5244 = vmul.f32 %v5235, %v727
    %v5245 = vstv %s5234
    %v5246 = vmul.f32 %v5245, %v729
    %v5247 = vmul.f32 %v5245, %v730
    %v5248 = vmul.f32 %v5245, %v731
    %v5249 = vmul.f32 %v5245, %v732
    %v5250 = vmul.f32 %v5245, %v733
    %v5251 = vmul.f32 %v5245, %v734
    %v5252 = vmul.f32 %v5245, %v735
    %v5253 = vmul.f32 %v5245, %v736
    %v5254 = vmul.f32 %v5245, %v737
    %v5255 = vadd.f32 %v5236, %v5246
    %v5256 = vadd.f32 %v5237, %v5247
    %v5257 = vadd.f32 %v5238, %v5248
    %v5258 = vadd.f32 %v5239, %v5249
    %v5259 = vadd.f32 %v5240, %v5250
    %v5260 = vadd.f32 %v5241, %v5251
    %v5261 = vadd.f32 %v5242, %v5252
    %v5262 = vadd.f32 %v5243, %v5253
    %v5263 = vadd.f32 %v5244, %v5254
    %v5264 = vmul.f32 %v5235, %v729
    %v5265 = vmul.f32 %v5235, %v730
    %v5266 = vmul.f32 %v5235, %v731
    %v5267 = vmul.f32 %v5235, %v732
    %v5268 = vmul.f32 %v5235, %v733
    %v5269 = vmul.f32 %v5235, %v734
    %v5270 = vmul.f32 %v5235, %v735
    %v5271 = vmul.f32 %v5235, %v736
    %v5272 = vmul.f32 %v5235, %v737
    %v5273 = vmul.f32 %v5245, %v739
    %v5274 = vmul.f32 %v5245, %v740
    %v5275 = vmul.f32 %v5245, %v741
    %v5276 = vmul.f32 %v5245, %v742
    %v5277 = vmul.f32 %v5245, %v743
    %v5278 = vmul.f32 %v5245, %v744
    %v5279 = vmul.f32 %v5245, %v745
    %v5280 = vmul.f32 %v5245, %v746
    %v5281 = vmul.f32 %v5245, %v747
    %v5282 = vadd.f32 %v5264, %v5273
    %v5283 = vadd.f32 %v5265, %v5274
    %v5284 = vadd.f32 %v5266, %v5275
    %v5285 = vadd.f32 %v5267, %v5276
    %v5286 = vadd.f32 %v5268, %v5277
    %v5287 = vadd.f32 %v5269, %v5278
    %v5288 = vadd.f32 %v5270, %v5279
    %v5289 = vadd.f32 %v5271, %v5280
    %v5290 = vadd.f32 %v5272, %v5281
    %v5291 = vmul.f32 %v5235, %v739
    %v5292 = vmul.f32 %v5235, %v740
    %v5293 = vmul.f32 %v5235, %v741
    %v5294 = vmul.f32 %v5235, %v742
    %v5295 = vmul.f32 %v5235, %v743
    %v5296 = vmul.f32 %v5235, %v744
    %v5297 = vmul.f32 %v5235, %v745
    %v5298 = vmul.f32 %v5235, %v746
    %v5299 = vmul.f32 %v5235, %v747
    %v5300 = vmul.f32 %v5245, %v749
    %v5301 = vmul.f32 %v5245, %v750
    %v5302 = vmul.f32 %v5245, %v751
    %v5303 = vmul.f32 %v5245, %v752
    %v5304 = vmul.f32 %v5245, %v753
    %v5305 = vmul.f32 %v5245, %v754
    %v5306 = vmul.f32 %v5245, %v755
    %v5307 = vmul.f32 %v5245, %v756
    %v5308 = vmul.f32 %v5245, %v757
    %v5309 = vadd.f32 %v5291, %v5300
    %v5310 = vadd.f32 %v5292, %v5301
    %v5311 = vadd.f32 %v5293, %v5302
    %v5312 = vadd.f32 %v5294, %v5303
    %v5313 = vadd.f32 %v5295, %v5304
    %v5314 = vadd.f32 %v5296, %v5305
    %v5315 = vadd.f32 %v5297, %v5306
    %v5316 = vadd.f32 %v5298, %v5307
    %v5317 = vadd.f32 %v5299, %v5308
    %v5318 = vmul.f32 %v5235, %v749
    %v5319 = vmul.f32 %v5235, %v750
    %v5320 = vmul.f32 %v5235, %v751
    %v5321 = vmul.f32 %v5235, %v752
    %v5322 = vmul.f32 %v5235, %v753
    %v5323 = vmul.f32 %v5235, %v754
    %v5324 = vmul.f32 %v5235, %v755
    %v5325 = vmul.f32 %v5235, %v756
    %v5326 = vmul.f32 %v5235, %v757
    %v5327 = vmul.f32 %v5245, %v719
    %v5328 = vmul.f32 %v5245, %v720
    %v5329 = vmul.f32 %v5245, %v721
    %v5330 = vmul.f32 %v5245, %v722
    %v5331 = vmul.f32 %v5245, %v723
    %v5332 = vmul.f32 %v5245, %v724
    %v5333 = vmul.f32 %v5245, %v725
    %v5334 = vmul.f32 %v5245, %v726
    %v5335 = vmul.f32 %v5245, %v727
    %v5345 = vrot.slane %v5327, 1
    %v5346 = vrot.slane %v5328, 1
    %v5347 = vsel %vm234, %v5345, %v5346
    %v5348 = vrot.slane %v5329, 1
    %v5349 = vsel %vm234, %v5346, %v5348
    %v5350 = vrot.slane %v5330, 1
    %v5351 = vsel %vm234, %v5348, %v5350
    %v5352 = vrot.slane %v5331, 1
    %v5353 = vsel %vm234, %v5350, %v5352
    %v5354 = vrot.slane %v5332, 1
    %v5355 = vsel %vm234, %v5352, %v5354
    %v5356 = vrot.slane %v5333, 1
    %v5357 = vsel %vm234, %v5354, %v5356
    %v5358 = vrot.slane %v5334, 1
    %v5359 = vsel %vm234, %v5356, %v5358
    %v5360 = vrot.slane %v5335, 1
    %v5361 = vsel %vm234, %v5358, %v5360
    %v5371 = vadd.f32 %v5318, %v5347
    %v5372 = vadd.f32 %v5319, %v5349
    %v5373 = vadd.f32 %v5320, %v5351
    %v5374 = vadd.f32 %v5321, %v5353
    %v5375 = vadd.f32 %v5322, %v5355
    %v5376 = vadd.f32 %v5323, %v5357
    %v5377 = vadd.f32 %v5324, %v5359
    %v5378 = vadd.f32 %v5325, %v5361
    %v5379 = vadd.f32 %v5326, %v5360
    %v5380 = vadd.f32 %v5197, %v5255
    %v5381 = vadd.f32 %v5198, %v5256
    %v5382 = vadd.f32 %v5199, %v5257
    %v5383 = vadd.f32 %v5200, %v5258
    %v5384 = vadd.f32 %v5201, %v5259
    %v5385 = vadd.f32 %v5202, %v5260
    %v5386 = vadd.f32 %v5203, %v5261
    %v5387 = vadd.f32 %v5204, %v5262
    %v5388 = vadd.f32 %v5205, %v5263
    %v5389 = vadd.f32 %v5206, %v5282
    %v5390 = vadd.f32 %v5207, %v5283
    %v5391 = vadd.f32 %v5208, %v5284
    %v5392 = vadd.f32 %v5209, %v5285
    %v5393 = vadd.f32 %v5210, %v5286
    %v5394 = vadd.f32 %v5211, %v5287
    %v5395 = vadd.f32 %v5212, %v5288
    %v5396 = vadd.f32 %v5213, %v5289
    %v5397 = vadd.f32 %v5214, %v5290
    %v5398 = vadd.f32 %v5215, %v5309
    %v5399 = vadd.f32 %v5216, %v5310
    %v5400 = vadd.f32 %v5217, %v5311
    %v5401 = vadd.f32 %v5218, %v5312
    %v5402 = vadd.f32 %v5219, %v5313
    %v5403 = vadd.f32 %v5220, %v5314
    %v5404 = vadd.f32 %v5221, %v5315
    %v5405 = vadd.f32 %v5222, %v5316
    %v5406 = vadd.f32 %v5223, %v5317
    %v5407 = vadd.f32 %v5224, %v5371
    %v5408 = vadd.f32 %v5225, %v5372
    %v5409 = vadd.f32 %v5226, %v5373
    %v5410 = vadd.f32 %v5227, %v5374
    %v5411 = vadd.f32 %v5228, %v5375
    %v5412 = vadd.f32 %v5229, %v5376
    %v5413 = vadd.f32 %v5230, %v5377
    %v5414 = vadd.f32 %v5231, %v5378
    %v5415 = vadd.f32 %v5232, %v5379
    %s5416 = sld [smem:[#allocation6 + $0x5]]
    %v5417 = vstv %s5416
    %v5418 = vadd.f32 %v5380, %v5417
    %v5419 = vadd.f32 %v5381, %v5417
    %v5420 = vadd.f32 %v5382, %v5417
    %v5421 = vadd.f32 %v5383, %v5417
    %v5422 = vadd.f32 %v5384, %v5417
    %v5423 = vadd.f32 %v5385, %v5417
    %v5424 = vadd.f32 %v5386, %v5417
    %v5425 = vadd.f32 %v5387, %v5417
    %v5426 = vadd.f32 %v5388, %v5417
    %v5427 = vmax.f32 %v5418, 0.0
    %v5428 = vmax.f32 %v5419, 0.0
    %v5429 = vmax.f32 %v5420, 0.0
    %v5430 = vmax.f32 %v5421, 0.0
    %v5431 = vmax.f32 %v5422, 0.0
    %v5432 = vmax.f32 %v5423, 0.0
    %v5433 = vmax.f32 %v5424, 0.0
    %v5434 = vmax.f32 %v5425, 0.0
    %v5435 = vmax.f32 %v5426, 0.0
    %v5436 = vadd.f32 %v5389, %v5417
    %v5437 = vadd.f32 %v5390, %v5417
    %v5438 = vadd.f32 %v5391, %v5417
    %v5439 = vadd.f32 %v5392, %v5417
    %v5440 = vadd.f32 %v5393, %v5417
    %v5441 = vadd.f32 %v5394, %v5417
    %v5442 = vadd.f32 %v5395, %v5417
    %v5443 = vadd.f32 %v5396, %v5417
    %v5444 = vadd.f32 %v5397, %v5417
    %v5445 = vmax.f32 %v5436, 0.0
    %v5446 = vmax.f32 %v5437, 0.0
    %v5447 = vmax.f32 %v5438, 0.0
    %v5448 = vmax.f32 %v5439, 0.0
    %v5449 = vmax.f32 %v5440, 0.0
    %v5450 = vmax.f32 %v5441, 0.0
    %v5451 = vmax.f32 %v5442, 0.0
    %v5452 = vmax.f32 %v5443, 0.0
    %v5453 = vmax.f32 %v5444, 0.0
    %v5454 = vadd.f32 %v5398, %v5417
    %v5455 = vadd.f32 %v5399, %v5417
    %v5456 = vadd.f32 %v5400, %v5417
    %v5457 = vadd.f32 %v5401, %v5417
    %v5458 = vadd.f32 %v5402, %v5417
    %v5459 = vadd.f32 %v5403, %v5417
    %v5460 = vadd.f32 %v5404, %v5417
    %v5461 = vadd.f32 %v5405, %v5417
    %v5462 = vadd.f32 %v5406, %v5417
    %v5463 = vmax.f32 %v5454, 0.0
    %v5464 = vmax.f32 %v5455, 0.0
    %v5465 = vmax.f32 %v5456, 0.0
    %v5466 = vmax.f32 %v5457, 0.0
    %v5467 = vmax.f32 %v5458, 0.0
    %v5468 = vmax.f32 %v5459, 0.0
    %v5469 = vmax.f32 %v5460, 0.0
    %v5470 = vmax.f32 %v5461, 0.0
    %v5471 = vmax.f32 %v5462, 0.0
    %v5472 = vadd.f32 %v5407, %v5417
    %v5473 = vadd.f32 %v5408, %v5417
    %v5474 = vadd.f32 %v5409, %v5417
    %v5475 = vadd.f32 %v5410, %v5417
    %v5476 = vadd.f32 %v5411, %v5417
    %v5477 = vadd.f32 %v5412, %v5417
    %v5478 = vadd.f32 %v5413, %v5417
    %v5479 = vadd.f32 %v5414, %v5417
    %v5480 = vadd.f32 %v5415, %v5417
    %v5481 = vmax.f32 %v5472, 0.0
    %v5482 = vmax.f32 %v5473, 0.0
    %v5483 = vmax.f32 %v5474, 0.0
    %v5484 = vmax.f32 %v5475, 0.0
    %v5485 = vmax.f32 %v5476, 0.0
    %v5486 = vmax.f32 %v5477, 0.0
    %v5487 = vmax.f32 %v5478, 0.0
    %v5488 = vmax.f32 %v5479, 0.0
    %v5489 = vmax.f32 %v5480, 0.0
    %v5490 = vmax.f32 %v5427, %v5445
    %v5491 = vmax.f32 %v5428, %v5446
    %v5492 = vmax.f32 %v5429, %v5447
    %v5493 = vmax.f32 %v5430, %v5448
    %v5494 = vmax.f32 %v5431, %v5449
    %v5495 = vmax.f32 %v5432, %v5450
    %v5496 = vmax.f32 %v5433, %v5451
    %v5497 = vmax.f32 %v5434, %v5452
    %v5498 = vmax.f32 %v5435, %v5453
    %v5499 = vmax.f32 %v5463, %v5481
    %v5500 = vmax.f32 %v5464, %v5482
    %v5501 = vmax.f32 %v5465, %v5483
    %v5502 = vmax.f32 %v5466, %v5484
    %v5503 = vmax.f32 %v5467, %v5485
    %v5504 = vmax.f32 %v5468, %v5486
    %v5505 = vmax.f32 %v5469, %v5487
    %v5506 = vmax.f32 %v5470, %v5488
    %v5507 = vmax.f32 %v5471, %v5489
    %s5508 = sld [smem:[#allocation8 + $0x280]]
    %s5509 = sld [smem:[#allocation8 + $0x281]]
    %v5510 = vstv %s5508
    %v5511 = vmul.f32 %v5510, %v5490
    %v5512 = vmul.f32 %v5510, %v5491
    %v5513 = vmul.f32 %v5510, %v5492
    %v5514 = vmul.f32 %v5510, %v5493
    %v5515 = vmul.f32 %v5510, %v5494
    %v5516 = vmul.f32 %v5510, %v5495
    %v5517 = vmul.f32 %v5510, %v5496
    %v5518 = vmul.f32 %v5510, %v5497
    %v5519 = vmul.f32 %v5510, %v5498
    %v5520 = vstv %s5509
    %v5521 = vmul.f32 %v5520, %v5499
    %v5522 = vmul.f32 %v5520, %v5500
    %v5523 = vmul.f32 %v5520, %v5501
    %v5524 = vmul.f32 %v5520, %v5502
    %v5525 = vmul.f32 %v5520, %v5503
    %v5526 = vmul.f32 %v5520, %v5504
    %v5527 = vmul.f32 %v5520, %v5505
    %v5528 = vmul.f32 %v5520, %v5506
    %v5529 = vmul.f32 %v5520, %v5507
    %v5530 = vadd.f32 %v5511, %v5521
    %v5531 = vadd.f32 %v5512, %v5522
    %v5532 = vadd.f32 %v5513, %v5523
    %v5533 = vadd.f32 %v5514, %v5524
    %v5534 = vadd.f32 %v5515, %v5525
    %v5535 = vadd.f32 %v5516, %v5526
    %v5536 = vadd.f32 %v5517, %v5527
    %v5537 = vadd.f32 %v5518, %v5528
    %v5538 = vadd.f32 %v5519, %v5529
    %v5539 = vmul.f32 %v5510, %v5499
    %v5540 = vmul.f32 %v5510, %v5500
    %v5541 = vmul.f32 %v5510, %v5501
    %v5542 = vmul.f32 %v5510, %v5502
    %v5543 = vmul.f32 %v5510, %v5503
    %v5544 = vmul.f32 %v5510, %v5504
    %v5545 = vmul.f32 %v5510, %v5505
    %v5546 = vmul.f32 %v5510, %v5506
    %v5547 = vmul.f32 %v5510, %v5507
    %v5548 = vmul.f32 %v5520, %v5490
    %v5549 = vmul.f32 %v5520, %v5491
    %v5550 = vmul.f32 %v5520, %v5492
    %v5551 = vmul.f32 %v5520, %v5493
    %v5552 = vmul.f32 %v5520, %v5494
    %v5553 = vmul.f32 %v5520, %v5495
    %v5554 = vmul.f32 %v5520, %v5496
    %v5555 = vmul.f32 %v5520, %v5497
    %v5556 = vmul.f32 %v5520, %v5498
    %v5566 = vrot.slane %v5548, 1
    %v5567 = vrot.slane %v5549, 1
    %v5568 = vsel %vm234, %v5566, %v5567
    %v5569 = vrot.slane %v5550, 1
    %v5570 = vsel %vm234, %v5567, %v5569
    %v5571 = vrot.slane %v5551, 1
    %v5572 = vsel %vm234, %v5569, %v5571
    %v5573 = vrot.slane %v5552, 1
    %v5574 = vsel %vm234, %v5571, %v5573
    %v5575 = vrot.slane %v5553, 1
    %v5576 = vsel %vm234, %v5573, %v5575
    %v5577 = vrot.slane %v5554, 1
    %v5578 = vsel %vm234, %v5575, %v5577
    %v5579 = vrot.slane %v5555, 1
    %v5580 = vsel %vm234, %v5577, %v5579
    %v5581 = vrot.slane %v5556, 1
    %v5582 = vsel %vm234, %v5579, %v5581
    %v5592 = vadd.f32 %v5539, %v5568
    %v5593 = vadd.f32 %v5540, %v5570
    %v5594 = vadd.f32 %v5541, %v5572
    %v5595 = vadd.f32 %v5542, %v5574
    %v5596 = vadd.f32 %v5543, %v5576
    %v5597 = vadd.f32 %v5544, %v5578
    %v5598 = vadd.f32 %v5545, %v5580
    %v5599 = vadd.f32 %v5546, %v5582
    %v5600 = vadd.f32 %v5547, %v5581
    %v5601 = vadd.f32 %v4702, %v5530
    %v5602 = vadd.f32 %v4703, %v5531
    %v5603 = vadd.f32 %v4704, %v5532
    %v5604 = vadd.f32 %v4705, %v5533
    %v5605 = vadd.f32 %v4706, %v5534
    %v5606 = vadd.f32 %v4707, %v5535
    %v5607 = vadd.f32 %v4708, %v5536
    %v5608 = vadd.f32 %v4709, %v5537
    %v5609 = vadd.f32 %v4710, %v5538
    %v5610 = vadd.f32 %v4711, %v5592
    %v5611 = vadd.f32 %v4712, %v5593
    %v5612 = vadd.f32 %v4713, %v5594
    %v5613 = vadd.f32 %v4714, %v5595
    %v5614 = vadd.f32 %v4715, %v5596
    %v5615 = vadd.f32 %v4716, %v5597
    %v5616 = vadd.f32 %v4717, %v5598
    %v5617 = vadd.f32 %v4718, %v5599
    %v5618 = vadd.f32 %v4719, %v5600
    %s5619 = sld [smem:[#allocation4 + $0x300]]
    %s5620 = sld [smem:[#allocation4 + $0x301]]
    %v5621 = vstv %s5619
    %v5622 = vmul.f32 %v5621, %v85
    %v5623 = vmul.f32 %v5621, %v86
    %v5624 = vmul.f32 %v5621, %v87
    %v5625 = vmul.f32 %v5621, %v88
    %v5626 = vmul.f32 %v5621, %v89
    %v5627 = vmul.f32 %v5621, %v90
    %v5628 = vmul.f32 %v5621, %v91
    %v5629 = vmul.f32 %v5621, %v92
    %v5630 = vmul.f32 %v5621, %v93
    %v5631 = vstv %s5620
    %v5632 = vmul.f32 %v5631, %v95
    %v5633 = vmul.f32 %v5631, %v96
    %v5634 = vmul.f32 %v5631, %v97
    %v5635 = vmul.f32 %v5631, %v98
    %v5636 = vmul.f32 %v5631, %v99
    %v5637 = vmul.f32 %v5631, %v100
    %v5638 = vmul.f32 %v5631, %v101
    %v5639 = vmul.f32 %v5631, %v102
    %v5640 = vmul.f32 %v5631, %v103
    %v5641 = vadd.f32 %v5622, %v5632
    %v5642 = vadd.f32 %v5623, %v5633
    %v5643 = vadd.f32 %v5624, %v5634
    %v5644 = vadd.f32 %v5625, %v5635
    %v5645 = vadd.f32 %v5626, %v5636
    %v5646 = vadd.f32 %v5627, %v5637
    %v5647 = vadd.f32 %v5628, %v5638
    %v5648 = vadd.f32 %v5629, %v5639
    %v5649 = vadd.f32 %v5630, %v5640
    %v5650 = vmul.f32 %v5621, %v95
    %v5651 = vmul.f32 %v5621, %v96
    %v5652 = vmul.f32 %v5621, %v97
    %v5653 = vmul.f32 %v5621, %v98
    %v5654 = vmul.f32 %v5621, %v99
    %v5655 = vmul.f32 %v5621, %v100
    %v5656 = vmul.f32 %v5621, %v101
    %v5657 = vmul.f32 %v5621, %v102
    %v5658 = vmul.f32 %v5621, %v103
    %v5659 = vmul.f32 %v5631, %v105
    %v5660 = vmul.f32 %v5631, %v106
    %v5661 = vmul.f32 %v5631, %v107
    %v5662 = vmul.f32 %v5631, %v108
    %v5663 = vmul.f32 %v5631, %v109
    %v5664 = vmul.f32 %v5631, %v110
    %v5665 = vmul.f32 %v5631, %v111
    %v5666 = vmul.f32 %v5631, %v112
    %v5667 = vmul.f32 %v5631, %v113
    %v5668 = vadd.f32 %v5650, %v5659
    %v5669 = vadd.f32 %v5651, %v5660
    %v5670 = vadd.f32 %v5652, %v5661
    %v5671 = vadd.f32 %v5653, %v5662
    %v5672 = vadd.f32 %v5654, %v5663
    %v5673 = vadd.f32 %v5655, %v5664
    %v5674 = vadd.f32 %v5656, %v5665
    %v5675 = vadd.f32 %v5657, %v5666
    %v5676 = vadd.f32 %v5658, %v5667
    %v5677 = vmul.f32 %v5621, %v105
    %v5678 = vmul.f32 %v5621, %v106
    %v5679 = vmul.f32 %v5621, %v107
    %v5680 = vmul.f32 %v5621, %v108
    %v5681 = vmul.f32 %v5621, %v109
    %v5682 = vmul.f32 %v5621, %v110
    %v5683 = vmul.f32 %v5621, %v111
    %v5684 = vmul.f32 %v5621, %v112
    %v5685 = vmul.f32 %v5621, %v113
    %v5686 = vmul.f32 %v5631, %v115
    %v5687 = vmul.f32 %v5631, %v116
    %v5688 = vmul.f32 %v5631, %v117
    %v5689 = vmul.f32 %v5631, %v118
    %v5690 = vmul.f32 %v5631, %v119
    %v5691 = vmul.f32 %v5631, %v120
    %v5692 = vmul.f32 %v5631, %v121
    %v5693 = vmul.f32 %v5631, %v122
    %v5694 = vmul.f32 %v5631, %v123
    %v5695 = vadd.f32 %v5677, %v5686
    %v5696 = vadd.f32 %v5678, %v5687
    %v5697 = vadd.f32 %v5679, %v5688
    %v5698 = vadd.f32 %v5680, %v5689
    %v5699 = vadd.f32 %v5681, %v5690
    %v5700 = vadd.f32 %v5682, %v5691
    %v5701 = vadd.f32 %v5683, %v5692
    %v5702 = vadd.f32 %v5684, %v5693
    %v5703 = vadd.f32 %v5685, %v5694
    %v5704 = vmul.f32 %v5621, %v115
    %v5705 = vmul.f32 %v5621, %v116
    %v5706 = vmul.f32 %v5621, %v117
    %v5707 = vmul.f32 %v5621, %v118
    %v5708 = vmul.f32 %v5621, %v119
    %v5709 = vmul.f32 %v5621, %v120
    %v5710 = vmul.f32 %v5621, %v121
    %v5711 = vmul.f32 %v5621, %v122
    %v5712 = vmul.f32 %v5621, %v123
    %v5713 = vmul.f32 %v5631, %v85
    %v5714 = vmul.f32 %v5631, %v86
    %v5715 = vmul.f32 %v5631, %v87
    %v5716 = vmul.f32 %v5631, %v88
    %v5717 = vmul.f32 %v5631, %v89
    %v5718 = vmul.f32 %v5631, %v90
    %v5719 = vmul.f32 %v5631, %v91
    %v5720 = vmul.f32 %v5631, %v92
    %v5721 = vmul.f32 %v5631, %v93
    %v5731 = vrot.slane %v5713, 1
    %v5732 = vrot.slane %v5714, 1
    %v5733 = vsel %vm234, %v5731, %v5732
    %v5734 = vrot.slane %v5715, 1
    %v5735 = vsel %vm234, %v5732, %v5734
    %v5736 = vrot.slane %v5716, 1
    %v5737 = vsel %vm234, %v5734, %v5736
    %v5738 = vrot.slane %v5717, 1
    %v5739 = vsel %vm234, %v5736, %v5738
    %v5740 = vrot.slane %v5718, 1
    %v5741 = vsel %vm234, %v5738, %v5740
    %v5742 = vrot.slane %v5719, 1
    %v5743 = vsel %vm234, %v5740, %v5742
    %v5744 = vrot.slane %v5720, 1
    %v5745 = vsel %vm234, %v5742, %v5744
    %v5746 = vrot.slane %v5721, 1
    %v5747 = vsel %vm234, %v5744, %v5746
    %v5757 = vadd.f32 %v5704, %v5733
    %v5758 = vadd.f32 %v5705, %v5735
    %v5759 = vadd.f32 %v5706, %v5737
    %v5760 = vadd.f32 %v5707, %v5739
    %v5761 = vadd.f32 %v5708, %v5741
    %v5762 = vadd.f32 %v5709, %v5743
    %v5763 = vadd.f32 %v5710, %v5745
    %v5764 = vadd.f32 %v5711, %v5747
    %v5765 = vadd.f32 %v5712, %v5746
    %s5766 = sld [smem:[#allocation4 + $0x302]]
    %s5767 = sld [smem:[#allocation4 + $0x303]]
    %v5768 = vstv %s5766
    %v5769 = vmul.f32 %v5768, %v273
    %v5770 = vmul.f32 %v5768, %v274
    %v5771 = vmul.f32 %v5768, %v275
    %v5772 = vmul.f32 %v5768, %v276
    %v5773 = vmul.f32 %v5768, %v277
    %v5774 = vmul.f32 %v5768, %v278
    %v5775 = vmul.f32 %v5768, %v279
    %v5776 = vmul.f32 %v5768, %v280
    %v5777 = vmul.f32 %v5768, %v281
    %v5778 = vstv %s5767
    %v5779 = vmul.f32 %v5778, %v283
    %v5780 = vmul.f32 %v5778, %v284
    %v5781 = vmul.f32 %v5778, %v285
    %v5782 = vmul.f32 %v5778, %v286
    %v5783 = vmul.f32 %v5778, %v287
    %v5784 = vmul.f32 %v5778, %v288
    %v5785 = vmul.f32 %v5778, %v289
    %v5786 = vmul.f32 %v5778, %v290
    %v5787 = vmul.f32 %v5778, %v291
    %v5788 = vadd.f32 %v5769, %v5779
    %v5789 = vadd.f32 %v5770, %v5780
    %v5790 = vadd.f32 %v5771, %v5781
    %v5791 = vadd.f32 %v5772, %v5782
    %v5792 = vadd.f32 %v5773, %v5783
    %v5793 = vadd.f32 %v5774, %v5784
    %v5794 = vadd.f32 %v5775, %v5785
    %v5795 = vadd.f32 %v5776, %v5786
    %v5796 = vadd.f32 %v5777, %v5787
    %v5797 = vmul.f32 %v5768, %v283
    %v5798 = vmul.f32 %v5768, %v284
    %v5799 = vmul.f32 %v5768, %v285
    %v5800 = vmul.f32 %v5768, %v286
    %v5801 = vmul.f32 %v5768, %v287
    %v5802 = vmul.f32 %v5768, %v288
    %v5803 = vmul.f32 %v5768, %v289
    %v5804 = vmul.f32 %v5768, %v290
    %v5805 = vmul.f32 %v5768, %v291
    %v5806 = vmul.f32 %v5778, %v293
    %v5807 = vmul.f32 %v5778, %v294
    %v5808 = vmul.f32 %v5778, %v295
    %v5809 = vmul.f32 %v5778, %v296
    %v5810 = vmul.f32 %v5778, %v297
    %v5811 = vmul.f32 %v5778, %v298
    %v5812 = vmul.f32 %v5778, %v299
    %v5813 = vmul.f32 %v5778, %v300
    %v5814 = vmul.f32 %v5778, %v301
    %v5815 = vadd.f32 %v5797, %v5806
    %v5816 = vadd.f32 %v5798, %v5807
    %v5817 = vadd.f32 %v5799, %v5808
    %v5818 = vadd.f32 %v5800, %v5809
    %v5819 = vadd.f32 %v5801, %v5810
    %v5820 = vadd.f32 %v5802, %v5811
    %v5821 = vadd.f32 %v5803, %v5812
    %v5822 = vadd.f32 %v5804, %v5813
    %v5823 = vadd.f32 %v5805, %v5814
    %v5824 = vmul.f32 %v5768, %v293
    %v5825 = vmul.f32 %v5768, %v294
    %v5826 = vmul.f32 %v5768, %v295
    %v5827 = vmul.f32 %v5768, %v296
    %v5828 = vmul.f32 %v5768, %v297
    %v5829 = vmul.f32 %v5768, %v298
    %v5830 = vmul.f32 %v5768, %v299
    %v5831 = vmul.f32 %v5768, %v300
    %v5832 = vmul.f32 %v5768, %v301
    %v5833 = vmul.f32 %v5778, %v303
    %v5834 = vmul.f32 %v5778, %v304
    %v5835 = vmul.f32 %v5778, %v305
    %v5836 = vmul.f32 %v5778, %v306
    %v5837 = vmul.f32 %v5778, %v307
    %v5838 = vmul.f32 %v5778, %v308
    %v5839 = vmul.f32 %v5778, %v309
    %v5840 = vmul.f32 %v5778, %v310
    %v5841 = vmul.f32 %v5778, %v311
    %v5842 = vadd.f32 %v5824, %v5833
    %v5843 = vadd.f32 %v5825, %v5834
    %v5844 = vadd.f32 %v5826, %v5835
    %v5845 = vadd.f32 %v5827, %v5836
    %v5846 = vadd.f32 %v5828, %v5837
    %v5847 = vadd.f32 %v5829, %v5838
    %v5848 = vadd.f32 %v5830, %v5839
    %v5849 = vadd.f32 %v5831, %v5840
    %v5850 = vadd.f32 %v5832, %v5841
    %v5851 = vmul.f32 %v5768, %v303
    %v5852 = vmul.f32 %v5768, %v304
    %v5853 = vmul.f32 %v5768, %v305
    %v5854 = vmul.f32 %v5768, %v306
    %v5855 = vmul.f32 %v5768, %v307
    %v5856 = vmul.f32 %v5768, %v308
    %v5857 = vmul.f32 %v5768, %v309
    %v5858 = vmul.f32 %v5768, %v310
    %v5859 = vmul.f32 %v5768, %v311
    %v5860 = vmul.f32 %v5778, %v273
    %v5861 = vmul.f32 %v5778, %v274
    %v5862 = vmul.f32 %v5778, %v275
    %v5863 = vmul.f32 %v5778, %v276
    %v5864 = vmul.f32 %v5778, %v277
    %v5865 = vmul.f32 %v5778, %v278
    %v5866 = vmul.f32 %v5778, %v279
    %v5867 = vmul.f32 %v5778, %v280
    %v5868 = vmul.f32 %v5778, %v281
    %v5878 = vrot.slane %v5860, 1
    %v5879 = vrot.slane %v5861, 1
    %v5880 = vsel %vm234, %v5878, %v5879
    %v5881 = vrot.slane %v5862, 1
    %v5882 = vsel %vm234, %v5879, %v5881
    %v5883 = vrot.slane %v5863, 1
    %v5884 = vsel %vm234, %v5881, %v5883
    %v5885 = vrot.slane %v5864, 1
    %v5886 = vsel %vm234, %v5883, %v5885
    %v5887 = vrot.slane %v5865, 1
    %v5888 = vsel %vm234, %v5885, %v5887
    %v5889 = vrot.slane %v5866, 1
    %v5890 = vsel %vm234, %v5887, %v5889
    %v5891 = vrot.slane %v5867, 1
    %v5892 = vsel %vm234, %v5889, %v5891
    %v5893 = vrot.slane %v5868, 1
    %v5894 = vsel %vm234, %v5891, %v5893
    %v5904 = vadd.f32 %v5851, %v5880
    %v5905 = vadd.f32 %v5852, %v5882
    %v5906 = vadd.f32 %v5853, %v5884
    %v5907 = vadd.f32 %v5854, %v5886
    %v5908 = vadd.f32 %v5855, %v5888
    %v5909 = vadd.f32 %v5856, %v5890
    %v5910 = vadd.f32 %v5857, %v5892
    %v5911 = vadd.f32 %v5858, %v5894
    %v5912 = vadd.f32 %v5859, %v5893
    %v5913 = vadd.f32 %v5641, %v5788
    %v5914 = vadd.f32 %v5642, %v5789
    %v5915 = vadd.f32 %v5643, %v5790
    %v5916 = vadd.f32 %v5644, %v5791
    %v5917 = vadd.f32 %v5645, %v5792
    %v5918 = vadd.f32 %v5646, %v5793
    %v5919 = vadd.f32 %v5647, %v5794
    %v5920 = vadd.f32 %v5648, %v5795
    %v5921 = vadd.f32 %v5649, %v5796
    %v5922 = vadd.f32 %v5668, %v5815
    %v5923 = vadd.f32 %v5669, %v5816
    %v5924 = vadd.f32 %v5670, %v5817
    %v5925 = vadd.f32 %v5671, %v5818
    %v5926 = vadd.f32 %v5672, %v5819
    %v5927 = vadd.f32 %v5673, %v5820
    %v5928 = vadd.f32 %v5674, %v5821
    %v5929 = vadd.f32 %v5675, %v5822
    %v5930 = vadd.f32 %v5676, %v5823
    %v5931 = vadd.f32 %v5695, %v5842
    %v5932 = vadd.f32 %v5696, %v5843
    %v5933 = vadd.f32 %v5697, %v5844
    %v5934 = vadd.f32 %v5698, %v5845
    %v5935 = vadd.f32 %v5699, %v5846
    %v5936 = vadd.f32 %v5700, %v5847
    %v5937 = vadd.f32 %v5701, %v5848
    %v5938 = vadd.f32 %v5702, %v5849
    %v5939 = vadd.f32 %v5703, %v5850
    %v5940 = vadd.f32 %v5757, %v5904
    %v5941 = vadd.f32 %v5758, %v5905
    %v5942 = vadd.f32 %v5759, %v5906
    %v5943 = vadd.f32 %v5760, %v5907
    %v5944 = vadd.f32 %v5761, %v5908
    %v5945 = vadd.f32 %v5762, %v5909
    %v5946 = vadd.f32 %v5763, %v5910
    %v5947 = vadd.f32 %v5764, %v5911
    %v5948 = vadd.f32 %v5765, %v5912
    %s5949 = sld [smem:[#allocation4 + $0x304]]
    %s5950 = sld [smem:[#allocation4 + $0x305]]
    %v5951 = vstv %s5949
    %v5952 = vmul.f32 %v5951, %v496
    %v5953 = vmul.f32 %v5951, %v497
    %v5954 = vmul.f32 %v5951, %v498
    %v5955 = vmul.f32 %v5951, %v499
    %v5956 = vmul.f32 %v5951, %v500
    %v5957 = vmul.f32 %v5951, %v501
    %v5958 = vmul.f32 %v5951, %v502
    %v5959 = vmul.f32 %v5951, %v503
    %v5960 = vmul.f32 %v5951, %v504
    %v5961 = vstv %s5950
    %v5962 = vmul.f32 %v5961, %v506
    %v5963 = vmul.f32 %v5961, %v507
    %v5964 = vmul.f32 %v5961, %v508
    %v5965 = vmul.f32 %v5961, %v509
    %v5966 = vmul.f32 %v5961, %v510
    %v5967 = vmul.f32 %v5961, %v511
    %v5968 = vmul.f32 %v5961, %v512
    %v5969 = vmul.f32 %v5961, %v513
    %v5970 = vmul.f32 %v5961, %v514
    %v5971 = vadd.f32 %v5952, %v5962
    %v5972 = vadd.f32 %v5953, %v5963
    %v5973 = vadd.f32 %v5954, %v5964
    %v5974 = vadd.f32 %v5955, %v5965
    %v5975 = vadd.f32 %v5956, %v5966
    %v5976 = vadd.f32 %v5957, %v5967
    %v5977 = vadd.f32 %v5958, %v5968
    %v5978 = vadd.f32 %v5959, %v5969
    %v5979 = vadd.f32 %v5960, %v5970
    %v5980 = vmul.f32 %v5951, %v506
    %v5981 = vmul.f32 %v5951, %v507
    %v5982 = vmul.f32 %v5951, %v508
    %v5983 = vmul.f32 %v5951, %v509
    %v5984 = vmul.f32 %v5951, %v510
    %v5985 = vmul.f32 %v5951, %v511
    %v5986 = vmul.f32 %v5951, %v512
    %v5987 = vmul.f32 %v5951, %v513
    %v5988 = vmul.f32 %v5951, %v514
    %v5989 = vmul.f32 %v5961, %v516
    %v5990 = vmul.f32 %v5961, %v517
    %v5991 = vmul.f32 %v5961, %v518
    %v5992 = vmul.f32 %v5961, %v519
    %v5993 = vmul.f32 %v5961, %v520
    %v5994 = vmul.f32 %v5961, %v521
    %v5995 = vmul.f32 %v5961, %v522
    %v5996 = vmul.f32 %v5961, %v523
    %v5997 = vmul.f32 %v5961, %v524
    %v5998 = vadd.f32 %v5980, %v5989
    %v5999 = vadd.f32 %v5981, %v5990
    %v6000 = vadd.f32 %v5982, %v5991
    %v6001 = vadd.f32 %v5983, %v5992
    %v6002 = vadd.f32 %v5984, %v5993
    %v6003 = vadd.f32 %v5985, %v5994
    %v6004 = vadd.f32 %v5986, %v5995
    %v6005 = vadd.f32 %v5987, %v5996
    %v6006 = vadd.f32 %v5988, %v5997
    %v6007 = vmul.f32 %v5951, %v516
    %v6008 = vmul.f32 %v5951, %v517
    %v6009 = vmul.f32 %v5951, %v518
    %v6010 = vmul.f32 %v5951, %v519
    %v6011 = vmul.f32 %v5951, %v520
    %v6012 = vmul.f32 %v5951, %v521
    %v6013 = vmul.f32 %v5951, %v522
    %v6014 = vmul.f32 %v5951, %v523
    %v6015 = vmul.f32 %v5951, %v524
    %v6016 = vmul.f32 %v5961, %v526
    %v6017 = vmul.f32 %v5961, %v527
    %v6018 = vmul.f32 %v5961, %v528
    %v6019 = vmul.f32 %v5961, %v529
    %v6020 = vmul.f32 %v5961, %v530
    %v6021 = vmul.f32 %v5961, %v531
    %v6022 = vmul.f32 %v5961, %v532
    %v6023 = vmul.f32 %v5961, %v533
    %v6024 = vmul.f32 %v5961, %v534
    %v6025 = vadd.f32 %v6007, %v6016
    %v6026 = vadd.f32 %v6008, %v6017
    %v6027 = vadd.f32 %v6009, %v6018
    %v6028 = vadd.f32 %v6010, %v6019
    %v6029 = vadd.f32 %v6011, %v6020
    %v6030 = vadd.f32 %v6012, %v6021
    %v6031 = vadd.f32 %v6013, %v6022
    %v6032 = vadd.f32 %v6014, %v6023
    %v6033 = vadd.f32 %v6015, %v6024
    %v6034 = vmul.f32 %v5951, %v526
    %v6035 = vmul.f32 %v5951, %v527
    %v6036 = vmul.f32 %v5951, %v528
    %v6037 = vmul.f32 %v5951, %v529
    %v6038 = vmul.f32 %v5951, %v530
    %v6039 = vmul.f32 %v5951, %v531
    %v6040 = vmul.f32 %v5951, %v532
    %v6041 = vmul.f32 %v5951, %v533
    %v6042 = vmul.f32 %v5951, %v534
    %v6043 = vmul.f32 %v5961, %v496
    %v6044 = vmul.f32 %v5961, %v497
    %v6045 = vmul.f32 %v5961, %v498
    %v6046 = vmul.f32 %v5961, %v499
    %v6047 = vmul.f32 %v5961, %v500
    %v6048 = vmul.f32 %v5961, %v501
    %v6049 = vmul.f32 %v5961, %v502
    %v6050 = vmul.f32 %v5961, %v503
    %v6051 = vmul.f32 %v5961, %v504
    %v6061 = vrot.slane %v6043, 1
    %v6062 = vrot.slane %v6044, 1
    %v6063 = vsel %vm234, %v6061, %v6062
    %v6064 = vrot.slane %v6045, 1
    %v6065 = vsel %vm234, %v6062, %v6064
    %v6066 = vrot.slane %v6046, 1
    %v6067 = vsel %vm234, %v6064, %v6066
    %v6068 = vrot.slane %v6047, 1
    %v6069 = vsel %vm234, %v6066, %v6068
    %v6070 = vrot.slane %v6048, 1
    %v6071 = vsel %vm234, %v6068, %v6070
    %v6072 = vrot.slane %v6049, 1
    %v6073 = vsel %vm234, %v6070, %v6072
    %v6074 = vrot.slane %v6050, 1
    %v6075 = vsel %vm234, %v6072, %v6074
    %v6076 = vrot.slane %v6051, 1
    %v6077 = vsel %vm234, %v6074, %v6076
    %v6087 = vadd.f32 %v6034, %v6063
    %v6088 = vadd.f32 %v6035, %v6065
    %v6089 = vadd.f32 %v6036, %v6067
    %v6090 = vadd.f32 %v6037, %v6069
    %v6091 = vadd.f32 %v6038, %v6071
    %v6092 = vadd.f32 %v6039, %v6073
    %v6093 = vadd.f32 %v6040, %v6075
    %v6094 = vadd.f32 %v6041, %v6077
    %v6095 = vadd.f32 %v6042, %v6076
    %v6096 = vadd.f32 %v5913, %v5971
    %v6097 = vadd.f32 %v5914, %v5972
    %v6098 = vadd.f32 %v5915, %v5973
    %v6099 = vadd.f32 %v5916, %v5974
    %v6100 = vadd.f32 %v5917, %v5975
    %v6101 = vadd.f32 %v5918, %v5976
    %v6102 = vadd.f32 %v5919, %v5977
    %v6103 = vadd.f32 %v5920, %v5978
    %v6104 = vadd.f32 %v5921, %v5979
    %v6105 = vadd.f32 %v5922, %v5998
    %v6106 = vadd.f32 %v5923, %v5999
    %v6107 = vadd.f32 %v5924, %v6000
    %v6108 = vadd.f32 %v5925, %v6001
    %v6109 = vadd.f32 %v5926, %v6002
    %v6110 = vadd.f32 %v5927, %v6003
    %v6111 = vadd.f32 %v5928, %v6004
    %v6112 = vadd.f32 %v5929, %v6005
    %v6113 = vadd.f32 %v5930, %v6006
    %v6114 = vadd.f32 %v5931, %v6025
    %v6115 = vadd.f32 %v5932, %v6026
    %v6116 = vadd.f32 %v5933, %v6027
    %v6117 = vadd.f32 %v5934, %v6028
    %v6118 = vadd.f32 %v5935, %v6029
    %v6119 = vadd.f32 %v5936, %v6030
    %v6120 = vadd.f32 %v5937, %v6031
    %v6121 = vadd.f32 %v5938, %v6032
    %v6122 = vadd.f32 %v5939, %v6033
    %v6123 = vadd.f32 %v5940, %v6087
    %v6124 = vadd.f32 %v5941, %v6088
    %v6125 = vadd.f32 %v5942, %v6089
    %v6126 = vadd.f32 %v5943, %v6090
    %v6127 = vadd.f32 %v5944, %v6091
    %v6128 = vadd.f32 %v5945, %v6092
    %v6129 = vadd.f32 %v5946, %v6093
    %v6130 = vadd.f32 %v5947, %v6094
    %v6131 = vadd.f32 %v5948, %v6095
    %s6132 = sld [smem:[#allocation4 + $0x306]]
    %s6133 = sld [smem:[#allocation4 + $0x307]]
    %v6134 = vstv %s6132
    %v6135 = vmul.f32 %v6134, %v719
    %v6136 = vmul.f32 %v6134, %v720
    %v6137 = vmul.f32 %v6134, %v721
    %v6138 = vmul.f32 %v6134, %v722
    %v6139 = vmul.f32 %v6134, %v723
    %v6140 = vmul.f32 %v6134, %v724
    %v6141 = vmul.f32 %v6134, %v725
    %v6142 = vmul.f32 %v6134, %v726
    %v6143 = vmul.f32 %v6134, %v727
    %v6144 = vstv %s6133
    %v6145 = vmul.f32 %v6144, %v729
    %v6146 = vmul.f32 %v6144, %v730
    %v6147 = vmul.f32 %v6144, %v731
    %v6148 = vmul.f32 %v6144, %v732
    %v6149 = vmul.f32 %v6144, %v733
    %v6150 = vmul.f32 %v6144, %v734
    %v6151 = vmul.f32 %v6144, %v735
    %v6152 = vmul.f32 %v6144, %v736
    %v6153 = vmul.f32 %v6144, %v737
    %v6154 = vadd.f32 %v6135, %v6145
    %v6155 = vadd.f32 %v6136, %v6146
    %v6156 = vadd.f32 %v6137, %v6147
    %v6157 = vadd.f32 %v6138, %v6148
    %v6158 = vadd.f32 %v6139, %v6149
    %v6159 = vadd.f32 %v6140, %v6150
    %v6160 = vadd.f32 %v6141, %v6151
    %v6161 = vadd.f32 %v6142, %v6152
    %v6162 = vadd.f32 %v6143, %v6153
    %v6163 = vmul.f32 %v6134, %v729
    %v6164 = vmul.f32 %v6134, %v730
    %v6165 = vmul.f32 %v6134, %v731
    %v6166 = vmul.f32 %v6134, %v732
    %v6167 = vmul.f32 %v6134, %v733
    %v6168 = vmul.f32 %v6134, %v734
    %v6169 = vmul.f32 %v6134, %v735
    %v6170 = vmul.f32 %v6134, %v736
    %v6171 = vmul.f32 %v6134, %v737
    %v6172 = vmul.f32 %v6144, %v739
    %v6173 = vmul.f32 %v6144, %v740
    %v6174 = vmul.f32 %v6144, %v741
    %v6175 = vmul.f32 %v6144, %v742
    %v6176 = vmul.f32 %v6144, %v743
    %v6177 = vmul.f32 %v6144, %v744
    %v6178 = vmul.f32 %v6144, %v745
    %v6179 = vmul.f32 %v6144, %v746
    %v6180 = vmul.f32 %v6144, %v747
    %v6181 = vadd.f32 %v6163, %v6172
    %v6182 = vadd.f32 %v6164, %v6173
    %v6183 = vadd.f32 %v6165, %v6174
    %v6184 = vadd.f32 %v6166, %v6175
    %v6185 = vadd.f32 %v6167, %v6176
    %v6186 = vadd.f32 %v6168, %v6177
    %v6187 = vadd.f32 %v6169, %v6178
    %v6188 = vadd.f32 %v6170, %v6179
    %v6189 = vadd.f32 %v6171, %v6180
    %v6190 = vmul.f32 %v6134, %v739
    %v6191 = vmul.f32 %v6134, %v740
    %v6192 = vmul.f32 %v6134, %v741
    %v6193 = vmul.f32 %v6134, %v742
    %v6194 = vmul.f32 %v6134, %v743
    %v6195 = vmul.f32 %v6134, %v744
    %v6196 = vmul.f32 %v6134, %v745
    %v6197 = vmul.f32 %v6134, %v746
    %v6198 = vmul.f32 %v6134, %v747
    %v6199 = vmul.f32 %v6144, %v749
    %v6200 = vmul.f32 %v6144, %v750
    %v6201 = vmul.f32 %v6144, %v751
    %v6202 = vmul.f32 %v6144, %v752
    %v6203 = vmul.f32 %v6144, %v753
    %v6204 = vmul.f32 %v6144, %v754
    %v6205 = vmul.f32 %v6144, %v755
    %v6206 = vmul.f32 %v6144, %v756
    %v6207 = vmul.f32 %v6144, %v757
    %v6208 = vadd.f32 %v6190, %v6199
    %v6209 = vadd.f32 %v6191, %v6200
    %v6210 = vadd.f32 %v6192, %v6201
    %v6211 = vadd.f32 %v6193, %v6202
    %v6212 = vadd.f32 %v6194, %v6203
    %v6213 = vadd.f32 %v6195, %v6204
    %v6214 = vadd.f32 %v6196, %v6205
    %v6215 = vadd.f32 %v6197, %v6206
    %v6216 = vadd.f32 %v6198, %v6207
    %v6217 = vmul.f32 %v6134, %v749
    %v6218 = vmul.f32 %v6134, %v750
    %v6219 = vmul.f32 %v6134, %v751
    %v6220 = vmul.f32 %v6134, %v752
    %v6221 = vmul.f32 %v6134, %v753
    %v6222 = vmul.f32 %v6134, %v754
    %v6223 = vmul.f32 %v6134, %v755
    %v6224 = vmul.f32 %v6134, %v756
    %v6225 = vmul.f32 %v6134, %v757
    %v6226 = vmul.f32 %v6144, %v719
    %v6227 = vmul.f32 %v6144, %v720
    %v6228 = vmul.f32 %v6144, %v721
    %v6229 = vmul.f32 %v6144, %v722
    %v6230 = vmul.f32 %v6144, %v723
    %v6231 = vmul.f32 %v6144, %v724
    %v6232 = vmul.f32 %v6144, %v725
    %v6233 = vmul.f32 %v6144, %v726
    %v6234 = vmul.f32 %v6144, %v727
    %v6244 = vrot.slane %v6226, 1
    %v6245 = vrot.slane %v6227, 1
    %v6246 = vsel %vm234, %v6244, %v6245
    %v6247 = vrot.slane %v6228, 1
    %v6248 = vsel %vm234, %v6245, %v6247
    %v6249 = vrot.slane %v6229, 1
    %v6250 = vsel %vm234, %v6247, %v6249
    %v6251 = vrot.slane %v6230, 1
    %v6252 = vsel %vm234, %v6249, %v6251
    %v6253 = vrot.slane %v6231, 1
    %v6254 = vsel %vm234, %v6251, %v6253
    %v6255 = vrot.slane %v6232, 1
    %v6256 = vsel %vm234, %v6253, %v6255
    %v6257 = vrot.slane %v6233, 1
    %v6258 = vsel %vm234, %v6255, %v6257
    %v6259 = vrot.slane %v6234, 1
    %v6260 = vsel %vm234, %v6257, %v6259
    %v6270 = vadd.f32 %v6217, %v6246
    %v6271 = vadd.f32 %v6218, %v6248
    %v6272 = vadd.f32 %v6219, %v6250
    %v6273 = vadd.f32 %v6220, %v6252
    %v6274 = vadd.f32 %v6221, %v6254
    %v6275 = vadd.f32 %v6222, %v6256
    %v6276 = vadd.f32 %v6223, %v6258
    %v6277 = vadd.f32 %v6224, %v6260
    %v6278 = vadd.f32 %v6225, %v6259
    %v6279 = vadd.f32 %v6096, %v6154
    %v6280 = vadd.f32 %v6097, %v6155
    %v6281 = vadd.f32 %v6098, %v6156
    %v6282 = vadd.f32 %v6099, %v6157
    %v6283 = vadd.f32 %v6100, %v6158
    %v6284 = vadd.f32 %v6101, %v6159
    %v6285 = vadd.f32 %v6102, %v6160
    %v6286 = vadd.f32 %v6103, %v6161
    %v6287 = vadd.f32 %v6104, %v6162
    %v6288 = vadd.f32 %v6105, %v6181
    %v6289 = vadd.f32 %v6106, %v6182
    %v6290 = vadd.f32 %v6107, %v6183
    %v6291 = vadd.f32 %v6108, %v6184
    %v6292 = vadd.f32 %v6109, %v6185
    %v6293 = vadd.f32 %v6110, %v6186
    %v6294 = vadd.f32 %v6111, %v6187
    %v6295 = vadd.f32 %v6112, %v6188
    %v6296 = vadd.f32 %v6113, %v6189
    %v6297 = vadd.f32 %v6114, %v6208
    %v6298 = vadd.f32 %v6115, %v6209
    %v6299 = vadd.f32 %v6116, %v6210
    %v6300 = vadd.f32 %v6117, %v6211
    %v6301 = vadd.f32 %v6118, %v6212
    %v6302 = vadd.f32 %v6119, %v6213
    %v6303 = vadd.f32 %v6120, %v6214
    %v6304 = vadd.f32 %v6121, %v6215
    %v6305 = vadd.f32 %v6122, %v6216
    %v6306 = vadd.f32 %v6123, %v6270
    %v6307 = vadd.f32 %v6124, %v6271
    %v6308 = vadd.f32 %v6125, %v6272
    %v6309 = vadd.f32 %v6126, %v6273
    %v6310 = vadd.f32 %v6127, %v6274
    %v6311 = vadd.f32 %v6128, %v6275
    %v6312 = vadd.f32 %v6129, %v6276
    %v6313 = vadd.f32 %v6130, %v6277
    %v6314 = vadd.f32 %v6131, %v6278
    %s6315 = sld [smem:[#allocation6 + $0x6]]
    %v6316 = vstv %s6315
    %v6317 = vadd.f32 %v6279, %v6316
    %v6318 = vadd.f32 %v6280, %v6316
    %v6319 = vadd.f32 %v6281, %v6316
    %v6320 = vadd.f32 %v6282, %v6316
    %v6321 = vadd.f32 %v6283, %v6316
    %v6322 = vadd.f32 %v6284, %v6316
    %v6323 = vadd.f32 %v6285, %v6316
    %v6324 = vadd.f32 %v6286, %v6316
    %v6325 = vadd.f32 %v6287, %v6316
    %v6326 = vmax.f32 %v6317, 0.0
    %v6327 = vmax.f32 %v6318, 0.0
    %v6328 = vmax.f32 %v6319, 0.0
    %v6329 = vmax.f32 %v6320, 0.0
    %v6330 = vmax.f32 %v6321, 0.0
    %v6331 = vmax.f32 %v6322, 0.0
    %v6332 = vmax.f32 %v6323, 0.0
    %v6333 = vmax.f32 %v6324, 0.0
    %v6334 = vmax.f32 %v6325, 0.0
    %v6335 = vadd.f32 %v6288, %v6316
    %v6336 = vadd.f32 %v6289, %v6316
    %v6337 = vadd.f32 %v6290, %v6316
    %v6338 = vadd.f32 %v6291, %v6316
    %v6339 = vadd.f32 %v6292, %v6316
    %v6340 = vadd.f32 %v6293, %v6316
    %v6341 = vadd.f32 %v6294, %v6316
    %v6342 = vadd.f32 %v6295, %v6316
    %v6343 = vadd.f32 %v6296, %v6316
    %v6344 = vmax.f32 %v6335, 0.0
    %v6345 = vmax.f32 %v6336, 0.0
    %v6346 = vmax.f32 %v6337, 0.0
    %v6347 = vmax.f32 %v6338, 0.0
    %v6348 = vmax.f32 %v6339, 0.0
    %v6349 = vmax.f32 %v6340, 0.0
    %v6350 = vmax.f32 %v6341, 0.0
    %v6351 = vmax.f32 %v6342, 0.0
    %v6352 = vmax.f32 %v6343, 0.0
    %v6353 = vadd.f32 %v6297, %v6316
    %v6354 = vadd.f32 %v6298, %v6316
    %v6355 = vadd.f32 %v6299, %v6316
    %v6356 = vadd.f32 %v6300, %v6316
    %v6357 = vadd.f32 %v6301, %v6316
    %v6358 = vadd.f32 %v6302, %v6316
    %v6359 = vadd.f32 %v6303, %v6316
    %v6360 = vadd.f32 %v6304, %v6316
    %v6361 = vadd.f32 %v6305, %v6316
    %v6362 = vmax.f32 %v6353, 0.0
    %v6363 = vmax.f32 %v6354, 0.0
    %v6364 = vmax.f32 %v6355, 0.0
    %v6365 = vmax.f32 %v6356, 0.0
    %v6366 = vmax.f32 %v6357, 0.0
    %v6367 = vmax.f32 %v6358, 0.0
    %v6368 = vmax.f32 %v6359, 0.0
    %v6369 = vmax.f32 %v6360, 0.0
    %v6370 = vmax.f32 %v6361, 0.0
    %v6371 = vadd.f32 %v6306, %v6316
    %v6372 = vadd.f32 %v6307, %v6316
    %v6373 = vadd.f32 %v6308, %v6316
    %v6374 = vadd.f32 %v6309, %v6316
    %v6375 = vadd.f32 %v6310, %v6316
    %v6376 = vadd.f32 %v6311, %v6316
    %v6377 = vadd.f32 %v6312, %v6316
    %v6378 = vadd.f32 %v6313, %v6316
    %v6379 = vadd.f32 %v6314, %v6316
    %v6380 = vmax.f32 %v6371, 0.0
    %v6381 = vmax.f32 %v6372, 0.0
    %v6382 = vmax.f32 %v6373, 0.0
    %v6383 = vmax.f32 %v6374, 0.0
    %v6384 = vmax.f32 %v6375, 0.0
    %v6385 = vmax.f32 %v6376, 0.0
    %v6386 = vmax.f32 %v6377, 0.0
    %v6387 = vmax.f32 %v6378, 0.0
    %v6388 = vmax.f32 %v6379, 0.0
    %v6389 = vmax.f32 %v6326, %v6344
    %v6390 = vmax.f32 %v6327, %v6345
    %v6391 = vmax.f32 %v6328, %v6346
    %v6392 = vmax.f32 %v6329, %v6347
    %v6393 = vmax.f32 %v6330, %v6348
    %v6394 = vmax.f32 %v6331, %v6349
    %v6395 = vmax.f32 %v6332, %v6350
    %v6396 = vmax.f32 %v6333, %v6351
    %v6397 = vmax.f32 %v6334, %v6352
    %v6398 = vmax.f32 %v6362, %v6380
    %v6399 = vmax.f32 %v6363, %v6381
    %v6400 = vmax.f32 %v6364, %v6382
    %v6401 = vmax.f32 %v6365, %v6383
    %v6402 = vmax.f32 %v6366, %v6384
    %v6403 = vmax.f32 %v6367, %v6385
    %v6404 = vmax.f32 %v6368, %v6386
    %v6405 = vmax.f32 %v6369, %v6387
    %v6406 = vmax.f32 %v6370, %v6388
    %s6407 = sld [smem:[#allocation8 + $0x300]]
    %s6408 = sld [smem:[#allocation8 + $0x301]]
    %v6409 = vstv %s6407
    %v6410 = vmul.f32 %v6409, %v6389
    %v6411 = vmul.f32 %v6409, %v6390
    %v6412 = vmul.f32 %v6409, %v6391
    %v6413 = vmul.f32 %v6409, %v6392
    %v6414 = vmul.f32 %v6409, %v6393
    %v6415 = vmul.f32 %v6409, %v6394
    %v6416 = vmul.f32 %v6409, %v6395
    %v6417 = vmul.f32 %v6409, %v6396
    %v6418 = vmul.f32 %v6409, %v6397
    %v6419 = vstv %s6408
    %v6420 = vmul.f32 %v6419, %v6398
    %v6421 = vmul.f32 %v6419, %v6399
    %v6422 = vmul.f32 %v6419, %v6400
    %v6423 = vmul.f32 %v6419, %v6401
    %v6424 = vmul.f32 %v6419, %v6402
    %v6425 = vmul.f32 %v6419, %v6403
    %v6426 = vmul.f32 %v6419, %v6404
    %v6427 = vmul.f32 %v6419, %v6405
    %v6428 = vmul.f32 %v6419, %v6406
    %v6429 = vadd.f32 %v6410, %v6420
    %v6430 = vadd.f32 %v6411, %v6421
    %v6431 = vadd.f32 %v6412, %v6422
    %v6432 = vadd.f32 %v6413, %v6423
    %v6433 = vadd.f32 %v6414, %v6424
    %v6434 = vadd.f32 %v6415, %v6425
    %v6435 = vadd.f32 %v6416, %v6426
    %v6436 = vadd.f32 %v6417, %v6427
    %v6437 = vadd.f32 %v6418, %v6428
    %v6438 = vmul.f32 %v6409, %v6398
    %v6439 = vmul.f32 %v6409, %v6399
    %v6440 = vmul.f32 %v6409, %v6400
    %v6441 = vmul.f32 %v6409, %v6401
    %v6442 = vmul.f32 %v6409, %v6402
    %v6443 = vmul.f32 %v6409, %v6403
    %v6444 = vmul.f32 %v6409, %v6404
    %v6445 = vmul.f32 %v6409, %v6405
    %v6446 = vmul.f32 %v6409, %v6406
    %v6447 = vmul.f32 %v6419, %v6389
    %v6448 = vmul.f32 %v6419, %v6390
    %v6449 = vmul.f32 %v6419, %v6391
    %v6450 = vmul.f32 %v6419, %v6392
    %v6451 = vmul.f32 %v6419, %v6393
    %v6452 = vmul.f32 %v6419, %v6394
    %v6453 = vmul.f32 %v6419, %v6395
    %v6454 = vmul.f32 %v6419, %v6396
    %v6455 = vmul.f32 %v6419, %v6397
    %v6465 = vrot.slane %v6447, 1
    %v6466 = vrot.slane %v6448, 1
    %v6467 = vsel %vm234, %v6465, %v6466
    %v6468 = vrot.slane %v6449, 1
    %v6469 = vsel %vm234, %v6466, %v6468
    %v6470 = vrot.slane %v6450, 1
    %v6471 = vsel %vm234, %v6468, %v6470
    %v6472 = vrot.slane %v6451, 1
    %v6473 = vsel %vm234, %v6470, %v6472
    %v6474 = vrot.slane %v6452, 1
    %v6475 = vsel %vm234, %v6472, %v6474
    %v6476 = vrot.slane %v6453, 1
    %v6477 = vsel %vm234, %v6474, %v6476
    %v6478 = vrot.slane %v6454, 1
    %v6479 = vsel %vm234, %v6476, %v6478
    %v6480 = vrot.slane %v6455, 1
    %v6481 = vsel %vm234, %v6478, %v6480
    %v6491 = vadd.f32 %v6438, %v6467
    %v6492 = vadd.f32 %v6439, %v6469
    %v6493 = vadd.f32 %v6440, %v6471
    %v6494 = vadd.f32 %v6441, %v6473
    %v6495 = vadd.f32 %v6442, %v6475
    %v6496 = vadd.f32 %v6443, %v6477
    %v6497 = vadd.f32 %v6444, %v6479
    %v6498 = vadd.f32 %v6445, %v6481
    %v6499 = vadd.f32 %v6446, %v6480
    %v6500 = vadd.f32 %v5601, %v6429
    %v6501 = vadd.f32 %v5602, %v6430
    %v6502 = vadd.f32 %v5603, %v6431
    %v6503 = vadd.f32 %v5604, %v6432
    %v6504 = vadd.f32 %v5605, %v6433
    %v6505 = vadd.f32 %v5606, %v6434
    %v6506 = vadd.f32 %v5607, %v6435
    %v6507 = vadd.f32 %v5608, %v6436
    %v6508 = vadd.f32 %v5609, %v6437
    %v6509 = vadd.f32 %v5610, %v6491
    %v6510 = vadd.f32 %v5611, %v6492
    %v6511 = vadd.f32 %v5612, %v6493
    %v6512 = vadd.f32 %v5613, %v6494
    %v6513 = vadd.f32 %v5614, %v6495
    %v6514 = vadd.f32 %v5615, %v6496
    %v6515 = vadd.f32 %v5616, %v6497
    %v6516 = vadd.f32 %v5617, %v6498
    %v6517 = vadd.f32 %v5618, %v6499
    %s6518 = sld [smem:[#allocation4 + $0x380]]
    %s6519 = sld [smem:[#allocation4 + $0x381]]
    %v6520 = vstv %s6518
    %v6521 = vmul.f32 %v6520, %v85
    %v6522 = vmul.f32 %v6520, %v86
    %v6523 = vmul.f32 %v6520, %v87
    %v6524 = vmul.f32 %v6520, %v88
    %v6525 = vmul.f32 %v6520, %v89
    %v6526 = vmul.f32 %v6520, %v90
    %v6527 = vmul.f32 %v6520, %v91
    %v6528 = vmul.f32 %v6520, %v92
    %v6529 = vmul.f32 %v6520, %v93
    %v6530 = vstv %s6519
    %v6531 = vmul.f32 %v6530, %v95
    %v6532 = vmul.f32 %v6530, %v96
    %v6533 = vmul.f32 %v6530, %v97
    %v6534 = vmul.f32 %v6530, %v98
    %v6535 = vmul.f32 %v6530, %v99
    %v6536 = vmul.f32 %v6530, %v100
    %v6537 = vmul.f32 %v6530, %v101
    %v6538 = vmul.f32 %v6530, %v102
    %v6539 = vmul.f32 %v6530, %v103
    %v6540 = vadd.f32 %v6521, %v6531
    %v6541 = vadd.f32 %v6522, %v6532
    %v6542 = vadd.f32 %v6523, %v6533
    %v6543 = vadd.f32 %v6524, %v6534
    %v6544 = vadd.f32 %v6525, %v6535
    %v6545 = vadd.f32 %v6526, %v6536
    %v6546 = vadd.f32 %v6527, %v6537
    %v6547 = vadd.f32 %v6528, %v6538
    %v6548 = vadd.f32 %v6529, %v6539
    %v6549 = vmul.f32 %v6520, %v95
    %v6550 = vmul.f32 %v6520, %v96
    %v6551 = vmul.f32 %v6520, %v97
    %v6552 = vmul.f32 %v6520, %v98
    %v6553 = vmul.f32 %v6520, %v99
    %v6554 = vmul.f32 %v6520, %v100
    %v6555 = vmul.f32 %v6520, %v101
    %v6556 = vmul.f32 %v6520, %v102
    %v6557 = vmul.f32 %v6520, %v103
    %v6558 = vmul.f32 %v6530, %v105
    %v6559 = vmul.f32 %v6530, %v106
    %v6560 = vmul.f32 %v6530, %v107
    %v6561 = vmul.f32 %v6530, %v108
    %v6562 = vmul.f32 %v6530, %v109
    %v6563 = vmul.f32 %v6530, %v110
    %v6564 = vmul.f32 %v6530, %v111
    %v6565 = vmul.f32 %v6530, %v112
    %v6566 = vmul.f32 %v6530, %v113
    %v6567 = vadd.f32 %v6549, %v6558
    %v6568 = vadd.f32 %v6550, %v6559
    %v6569 = vadd.f32 %v6551, %v6560
    %v6570 = vadd.f32 %v6552, %v6561
    %v6571 = vadd.f32 %v6553, %v6562
    %v6572 = vadd.f32 %v6554, %v6563
    %v6573 = vadd.f32 %v6555, %v6564
    %v6574 = vadd.f32 %v6556, %v6565
    %v6575 = vadd.f32 %v6557, %v6566
    %v6576 = vmul.f32 %v6520, %v105
    %v6577 = vmul.f32 %v6520, %v106
    %v6578 = vmul.f32 %v6520, %v107
    %v6579 = vmul.f32 %v6520, %v108
    %v6580 = vmul.f32 %v6520, %v109
    %v6581 = vmul.f32 %v6520, %v110
    %v6582 = vmul.f32 %v6520, %v111
    %v6583 = vmul.f32 %v6520, %v112
    %v6584 = vmul.f32 %v6520, %v113
    %v6585 = vmul.f32 %v6530, %v115
    %v6586 = vmul.f32 %v6530, %v116
    %v6587 = vmul.f32 %v6530, %v117
    %v6588 = vmul.f32 %v6530, %v118
    %v6589 = vmul.f32 %v6530, %v119
    %v6590 = vmul.f32 %v6530, %v120
    %v6591 = vmul.f32 %v6530, %v121
    %v6592 = vmul.f32 %v6530, %v122
    %v6593 = vmul.f32 %v6530, %v123
    %v6594 = vadd.f32 %v6576, %v6585
    %v6595 = vadd.f32 %v6577, %v6586
    %v6596 = vadd.f32 %v6578, %v6587
    %v6597 = vadd.f32 %v6579, %v6588
    %v6598 = vadd.f32 %v6580, %v6589
    %v6599 = vadd.f32 %v6581, %v6590
    %v6600 = vadd.f32 %v6582, %v6591
    %v6601 = vadd.f32 %v6583, %v6592
    %v6602 = vadd.f32 %v6584, %v6593
    %v6603 = vmul.f32 %v6520, %v115
    %v6604 = vmul.f32 %v6520, %v116
    %v6605 = vmul.f32 %v6520, %v117
    %v6606 = vmul.f32 %v6520, %v118
    %v6607 = vmul.f32 %v6520, %v119
    %v6608 = vmul.f32 %v6520, %v120
    %v6609 = vmul.f32 %v6520, %v121
    %v6610 = vmul.f32 %v6520, %v122
    %v6611 = vmul.f32 %v6520, %v123
    %v6612 = vmul.f32 %v6530, %v85
    %v6613 = vmul.f32 %v6530, %v86
    %v6614 = vmul.f32 %v6530, %v87
    %v6615 = vmul.f32 %v6530, %v88
    %v6616 = vmul.f32 %v6530, %v89
    %v6617 = vmul.f32 %v6530, %v90
    %v6618 = vmul.f32 %v6530, %v91
    %v6619 = vmul.f32 %v6530, %v92
    %v6620 = vmul.f32 %v6530, %v93
    %v6630 = vrot.slane %v6612, 1
    %v6631 = vrot.slane %v6613, 1
    %v6632 = vsel %vm234, %v6630, %v6631
    %v6633 = vrot.slane %v6614, 1
    %v6634 = vsel %vm234, %v6631, %v6633
    %v6635 = vrot.slane %v6615, 1
    %v6636 = vsel %vm234, %v6633, %v6635
    %v6637 = vrot.slane %v6616, 1
    %v6638 = vsel %vm234, %v6635, %v6637
    %v6639 = vrot.slane %v6617, 1
    %v6640 = vsel %vm234, %v6637, %v6639
    %v6641 = vrot.slane %v6618, 1
    %v6642 = vsel %vm234, %v6639, %v6641
    %v6643 = vrot.slane %v6619, 1
    %v6644 = vsel %vm234, %v6641, %v6643
    %v6645 = vrot.slane %v6620, 1
    %v6646 = vsel %vm234, %v6643, %v6645
    %v6656 = vadd.f32 %v6603, %v6632
    %v6657 = vadd.f32 %v6604, %v6634
    %v6658 = vadd.f32 %v6605, %v6636
    %v6659 = vadd.f32 %v6606, %v6638
    %v6660 = vadd.f32 %v6607, %v6640
    %v6661 = vadd.f32 %v6608, %v6642
    %v6662 = vadd.f32 %v6609, %v6644
    %v6663 = vadd.f32 %v6610, %v6646
    %v6664 = vadd.f32 %v6611, %v6645
    %s6665 = sld [smem:[#allocation4 + $0x382]]
    %s6666 = sld [smem:[#allocation4 + $0x383]]
    %v6667 = vstv %s6665
    %v6668 = vmul.f32 %v6667, %v273
    %v6669 = vmul.f32 %v6667, %v274
    %v6670 = vmul.f32 %v6667, %v275
    %v6671 = vmul.f32 %v6667, %v276
    %v6672 = vmul.f32 %v6667, %v277
    %v6673 = vmul.f32 %v6667, %v278
    %v6674 = vmul.f32 %v6667, %v279
    %v6675 = vmul.f32 %v6667, %v280
    %v6676 = vmul.f32 %v6667, %v281
    %v6677 = vstv %s6666
    %v6678 = vmul.f32 %v6677, %v283
    %v6679 = vmul.f32 %v6677, %v284
    %v6680 = vmul.f32 %v6677, %v285
    %v6681 = vmul.f32 %v6677, %v286
    %v6682 = vmul.f32 %v6677, %v287
    %v6683 = vmul.f32 %v6677, %v288
    %v6684 = vmul.f32 %v6677, %v289
    %v6685 = vmul.f32 %v6677, %v290
    %v6686 = vmul.f32 %v6677, %v291
    %v6687 = vadd.f32 %v6668, %v6678
    %v6688 = vadd.f32 %v6669, %v6679
    %v6689 = vadd.f32 %v6670, %v6680
    %v6690 = vadd.f32 %v6671, %v6681
    %v6691 = vadd.f32 %v6672, %v6682
    %v6692 = vadd.f32 %v6673, %v6683
    %v6693 = vadd.f32 %v6674, %v6684
    %v6694 = vadd.f32 %v6675, %v6685
    %v6695 = vadd.f32 %v6676, %v6686
    %v6696 = vmul.f32 %v6667, %v283
    %v6697 = vmul.f32 %v6667, %v284
    %v6698 = vmul.f32 %v6667, %v285
    %v6699 = vmul.f32 %v6667, %v286
    %v6700 = vmul.f32 %v6667, %v287
    %v6701 = vmul.f32 %v6667, %v288
    %v6702 = vmul.f32 %v6667, %v289
    %v6703 = vmul.f32 %v6667, %v290
    %v6704 = vmul.f32 %v6667, %v291
    %v6705 = vmul.f32 %v6677, %v293
    %v6706 = vmul.f32 %v6677, %v294
    %v6707 = vmul.f32 %v6677, %v295
    %v6708 = vmul.f32 %v6677, %v296
    %v6709 = vmul.f32 %v6677, %v297
    %v6710 = vmul.f32 %v6677, %v298
    %v6711 = vmul.f32 %v6677, %v299
    %v6712 = vmul.f32 %v6677, %v300
    %v6713 = vmul.f32 %v6677, %v301
    %v6714 = vadd.f32 %v6696, %v6705
    %v6715 = vadd.f32 %v6697, %v6706
    %v6716 = vadd.f32 %v6698, %v6707
    %v6717 = vadd.f32 %v6699, %v6708
    %v6718 = vadd.f32 %v6700, %v6709
    %v6719 = vadd.f32 %v6701, %v6710
    %v6720 = vadd.f32 %v6702, %v6711
    %v6721 = vadd.f32 %v6703, %v6712
    %v6722 = vadd.f32 %v6704, %v6713
    %v6723 = vmul.f32 %v6667, %v293
    %v6724 = vmul.f32 %v6667, %v294
    %v6725 = vmul.f32 %v6667, %v295
    %v6726 = vmul.f32 %v6667, %v296
    %v6727 = vmul.f32 %v6667, %v297
    %v6728 = vmul.f32 %v6667, %v298
    %v6729 = vmul.f32 %v6667, %v299
    %v6730 = vmul.f32 %v6667, %v300
    %v6731 = vmul.f32 %v6667, %v301
    %v6732 = vmul.f32 %v6677, %v303
    %v6733 = vmul.f32 %v6677, %v304
    %v6734 = vmul.f32 %v6677, %v305
    %v6735 = vmul.f32 %v6677, %v306
    %v6736 = vmul.f32 %v6677, %v307
    %v6737 = vmul.f32 %v6677, %v308
    %v6738 = vmul.f32 %v6677, %v309
    %v6739 = vmul.f32 %v6677, %v310
    %v6740 = vmul.f32 %v6677, %v311
    %v6741 = vadd.f32 %v6723, %v6732
    %v6742 = vadd.f32 %v6724, %v6733
    %v6743 = vadd.f32 %v6725, %v6734
    %v6744 = vadd.f32 %v6726, %v6735
    %v6745 = vadd.f32 %v6727, %v6736
    %v6746 = vadd.f32 %v6728, %v6737
    %v6747 = vadd.f32 %v6729, %v6738
    %v6748 = vadd.f32 %v6730, %v6739
    %v6749 = vadd.f32 %v6731, %v6740
    %v6750 = vmul.f32 %v6667, %v303
    %v6751 = vmul.f32 %v6667, %v304
    %v6752 = vmul.f32 %v6667, %v305
    %v6753 = vmul.f32 %v6667, %v306
    %v6754 = vmul.f32 %v6667, %v307
    %v6755 = vmul.f32 %v6667, %v308
    %v6756 = vmul.f32 %v6667, %v309
    %v6757 = vmul.f32 %v6667, %v310
    %v6758 = vmul.f32 %v6667, %v311
    %v6759 = vmul.f32 %v6677, %v273
    %v6760 = vmul.f32 %v6677, %v274
    %v6761 = vmul.f32 %v6677, %v275
    %v6762 = vmul.f32 %v6677, %v276
    %v6763 = vmul.f32 %v6677, %v277
    %v6764 = vmul.f32 %v6677, %v278
    %v6765 = vmul.f32 %v6677, %v279
    %v6766 = vmul.f32 %v6677, %v280
    %v6767 = vmul.f32 %v6677, %v281
    %v6777 = vrot.slane %v6759, 1
    %v6778 = vrot.slane %v6760, 1
    %v6779 = vsel %vm234, %v6777, %v6778
    %v6780 = vrot.slane %v6761, 1
    %v6781 = vsel %vm234, %v6778, %v6780
    %v6782 = vrot.slane %v6762, 1
    %v6783 = vsel %vm234, %v6780, %v6782
    %v6784 = vrot.slane %v6763, 1
    %v6785 = vsel %vm234, %v6782, %v6784
    %v6786 = vrot.slane %v6764, 1
    %v6787 = vsel %vm234, %v6784, %v6786
    %v6788 = vrot.slane %v6765, 1
    %v6789 = vsel %vm234, %v6786, %v6788
    %v6790 = vrot.slane %v6766, 1
    %v6791 = vsel %vm234, %v6788, %v6790
    %v6792 = vrot.slane %v6767, 1
    %v6793 = vsel %vm234, %v6790, %v6792
    %v6803 = vadd.f32 %v6750, %v6779
    %v6804 = vadd.f32 %v6751, %v6781
    %v6805 = vadd.f32 %v6752, %v6783
    %v6806 = vadd.f32 %v6753, %v6785
    %v6807 = vadd.f32 %v6754, %v6787
    %v6808 = vadd.f32 %v6755, %v6789
    %v6809 = vadd.f32 %v6756, %v6791
    %v6810 = vadd.f32 %v6757, %v6793
    %v6811 = vadd.f32 %v6758, %v6792
    %v6812 = vadd.f32 %v6540, %v6687
    %v6813 = vadd.f32 %v6541, %v6688
    %v6814 = vadd.f32 %v6542, %v6689
    %v6815 = vadd.f32 %v6543, %v6690
    %v6816 = vadd.f32 %v6544, %v6691
    %v6817 = vadd.f32 %v6545, %v6692
    %v6818 = vadd.f32 %v6546, %v6693
    %v6819 = vadd.f32 %v6547, %v6694
    %v6820 = vadd.f32 %v6548, %v6695
    %v6821 = vadd.f32 %v6567, %v6714
    %v6822 = vadd.f32 %v6568, %v6715
    %v6823 = vadd.f32 %v6569, %v6716
    %v6824 = vadd.f32 %v6570, %v6717
    %v6825 = vadd.f32 %v6571, %v6718
    %v6826 = vadd.f32 %v6572, %v6719
    %v6827 = vadd.f32 %v6573, %v6720
    %v6828 = vadd.f32 %v6574, %v6721
    %v6829 = vadd.f32 %v6575, %v6722
    %v6830 = vadd.f32 %v6594, %v6741
    %v6831 = vadd.f32 %v6595, %v6742
    %v6832 = vadd.f32 %v6596, %v6743
    %v6833 = vadd.f32 %v6597, %v6744
    %v6834 = vadd.f32 %v6598, %v6745
    %v6835 = vadd.f32 %v6599, %v6746
    %v6836 = vadd.f32 %v6600, %v6747
    %v6837 = vadd.f32 %v6601, %v6748
    %v6838 = vadd.f32 %v6602, %v6749
    %v6839 = vadd.f32 %v6656, %v6803
    %v6840 = vadd.f32 %v6657, %v6804
    %v6841 = vadd.f32 %v6658, %v6805
    %v6842 = vadd.f32 %v6659, %v6806
    %v6843 = vadd.f32 %v6660, %v6807
    %v6844 = vadd.f32 %v6661, %v6808
    %v6845 = vadd.f32 %v6662, %v6809
    %v6846 = vadd.f32 %v6663, %v6810
    %v6847 = vadd.f32 %v6664, %v6811
    %s6848 = sld [smem:[#allocation4 + $0x384]]
    %s6849 = sld [smem:[#allocation4 + $0x385]]
    %v6850 = vstv %s6848
    %v6851 = vmul.f32 %v6850, %v496
    %v6852 = vmul.f32 %v6850, %v497
    %v6853 = vmul.f32 %v6850, %v498
    %v6854 = vmul.f32 %v6850, %v499
    %v6855 = vmul.f32 %v6850, %v500
    %v6856 = vmul.f32 %v6850, %v501
    %v6857 = vmul.f32 %v6850, %v502
    %v6858 = vmul.f32 %v6850, %v503
    %v6859 = vmul.f32 %v6850, %v504
    %v6860 = vstv %s6849
    %v6861 = vmul.f32 %v6860, %v506
    %v6862 = vmul.f32 %v6860, %v507
    %v6863 = vmul.f32 %v6860, %v508
    %v6864 = vmul.f32 %v6860, %v509
    %v6865 = vmul.f32 %v6860, %v510
    %v6866 = vmul.f32 %v6860, %v511
    %v6867 = vmul.f32 %v6860, %v512
    %v6868 = vmul.f32 %v6860, %v513
    %v6869 = vmul.f32 %v6860, %v514
    %v6870 = vadd.f32 %v6851, %v6861
    %v6871 = vadd.f32 %v6852, %v6862
    %v6872 = vadd.f32 %v6853, %v6863
    %v6873 = vadd.f32 %v6854, %v6864
    %v6874 = vadd.f32 %v6855, %v6865
    %v6875 = vadd.f32 %v6856, %v6866
    %v6876 = vadd.f32 %v6857, %v6867
    %v6877 = vadd.f32 %v6858, %v6868
    %v6878 = vadd.f32 %v6859, %v6869
    %v6879 = vmul.f32 %v6850, %v506
    %v6880 = vmul.f32 %v6850, %v507
    %v6881 = vmul.f32 %v6850, %v508
    %v6882 = vmul.f32 %v6850, %v509
    %v6883 = vmul.f32 %v6850, %v510
    %v6884 = vmul.f32 %v6850, %v511
    %v6885 = vmul.f32 %v6850, %v512
    %v6886 = vmul.f32 %v6850, %v513
    %v6887 = vmul.f32 %v6850, %v514
    %v6888 = vmul.f32 %v6860, %v516
    %v6889 = vmul.f32 %v6860, %v517
    %v6890 = vmul.f32 %v6860, %v518
    %v6891 = vmul.f32 %v6860, %v519
    %v6892 = vmul.f32 %v6860, %v520
    %v6893 = vmul.f32 %v6860, %v521
    %v6894 = vmul.f32 %v6860, %v522
    %v6895 = vmul.f32 %v6860, %v523
    %v6896 = vmul.f32 %v6860, %v524
    %v6897 = vadd.f32 %v6879, %v6888
    %v6898 = vadd.f32 %v6880, %v6889
    %v6899 = vadd.f32 %v6881, %v6890
    %v6900 = vadd.f32 %v6882, %v6891
    %v6901 = vadd.f32 %v6883, %v6892
    %v6902 = vadd.f32 %v6884, %v6893
    %v6903 = vadd.f32 %v6885, %v6894
    %v6904 = vadd.f32 %v6886, %v6895
    %v6905 = vadd.f32 %v6887, %v6896
    %v6906 = vmul.f32 %v6850, %v516
    %v6907 = vmul.f32 %v6850, %v517
    %v6908 = vmul.f32 %v6850, %v518
    %v6909 = vmul.f32 %v6850, %v519
    %v6910 = vmul.f32 %v6850, %v520
    %v6911 = vmul.f32 %v6850, %v521
    %v6912 = vmul.f32 %v6850, %v522
    %v6913 = vmul.f32 %v6850, %v523
    %v6914 = vmul.f32 %v6850, %v524
    %v6915 = vmul.f32 %v6860, %v526
    %v6916 = vmul.f32 %v6860, %v527
    %v6917 = vmul.f32 %v6860, %v528
    %v6918 = vmul.f32 %v6860, %v529
    %v6919 = vmul.f32 %v6860, %v530
    %v6920 = vmul.f32 %v6860, %v531
    %v6921 = vmul.f32 %v6860, %v532
    %v6922 = vmul.f32 %v6860, %v533
    %v6923 = vmul.f32 %v6860, %v534
    %v6924 = vadd.f32 %v6906, %v6915
    %v6925 = vadd.f32 %v6907, %v6916
    %v6926 = vadd.f32 %v6908, %v6917
    %v6927 = vadd.f32 %v6909, %v6918
    %v6928 = vadd.f32 %v6910, %v6919
    %v6929 = vadd.f32 %v6911, %v6920
    %v6930 = vadd.f32 %v6912, %v6921
    %v6931 = vadd.f32 %v6913, %v6922
    %v6932 = vadd.f32 %v6914, %v6923
    %v6933 = vmul.f32 %v6850, %v526
    %v6934 = vmul.f32 %v6850, %v527
    %v6935 = vmul.f32 %v6850, %v528
    %v6936 = vmul.f32 %v6850, %v529
    %v6937 = vmul.f32 %v6850, %v530
    %v6938 = vmul.f32 %v6850, %v531
    %v6939 = vmul.f32 %v6850, %v532
    %v6940 = vmul.f32 %v6850, %v533
    %v6941 = vmul.f32 %v6850, %v534
    %v6942 = vmul.f32 %v6860, %v496
    %v6943 = vmul.f32 %v6860, %v497
    %v6944 = vmul.f32 %v6860, %v498
    %v6945 = vmul.f32 %v6860, %v499
    %v6946 = vmul.f32 %v6860, %v500
    %v6947 = vmul.f32 %v6860, %v501
    %v6948 = vmul.f32 %v6860, %v502
    %v6949 = vmul.f32 %v6860, %v503
    %v6950 = vmul.f32 %v6860, %v504
    %v6960 = vrot.slane %v6942, 1
    %v6961 = vrot.slane %v6943, 1
    %v6962 = vsel %vm234, %v6960, %v6961
    %v6963 = vrot.slane %v6944, 1
    %v6964 = vsel %vm234, %v6961, %v6963
    %v6965 = vrot.slane %v6945, 1
    %v6966 = vsel %vm234, %v6963, %v6965
    %v6967 = vrot.slane %v6946, 1
    %v6968 = vsel %vm234, %v6965, %v6967
    %v6969 = vrot.slane %v6947, 1
    %v6970 = vsel %vm234, %v6967, %v6969
    %v6971 = vrot.slane %v6948, 1
    %v6972 = vsel %vm234, %v6969, %v6971
    %v6973 = vrot.slane %v6949, 1
    %v6974 = vsel %vm234, %v6971, %v6973
    %v6975 = vrot.slane %v6950, 1
    %v6976 = vsel %vm234, %v6973, %v6975
    %v6986 = vadd.f32 %v6933, %v6962
    %v6987 = vadd.f32 %v6934, %v6964
    %v6988 = vadd.f32 %v6935, %v6966
    %v6989 = vadd.f32 %v6936, %v6968
    %v6990 = vadd.f32 %v6937, %v6970
    %v6991 = vadd.f32 %v6938, %v6972
    %v6992 = vadd.f32 %v6939, %v6974
    %v6993 = vadd.f32 %v6940, %v6976
    %v6994 = vadd.f32 %v6941, %v6975
    %v6995 = vadd.f32 %v6812, %v6870
    %v6996 = vadd.f32 %v6813, %v6871
    %v6997 = vadd.f32 %v6814, %v6872
    %v6998 = vadd.f32 %v6815, %v6873
    %v6999 = vadd.f32 %v6816, %v6874
    %v7000 = vadd.f32 %v6817, %v6875
    %v7001 = vadd.f32 %v6818, %v6876
    %v7002 = vadd.f32 %v6819, %v6877
    %v7003 = vadd.f32 %v6820, %v6878
    %v7004 = vadd.f32 %v6821, %v6897
    %v7005 = vadd.f32 %v6822, %v6898
    %v7006 = vadd.f32 %v6823, %v6899
    %v7007 = vadd.f32 %v6824, %v6900
    %v7008 = vadd.f32 %v6825, %v6901
    %v7009 = vadd.f32 %v6826, %v6902
    %v7010 = vadd.f32 %v6827, %v6903
    %v7011 = vadd.f32 %v6828, %v6904
    %v7012 = vadd.f32 %v6829, %v6905
    %v7013 = vadd.f32 %v6830, %v6924
    %v7014 = vadd.f32 %v6831, %v6925
    %v7015 = vadd.f32 %v6832, %v6926
    %v7016 = vadd.f32 %v6833, %v6927
    %v7017 = vadd.f32 %v6834, %v6928
    %v7018 = vadd.f32 %v6835, %v6929
    %v7019 = vadd.f32 %v6836, %v6930
    %v7020 = vadd.f32 %v6837, %v6931
    %v7021 = vadd.f32 %v6838, %v6932
    %v7022 = vadd.f32 %v6839, %v6986
    %v7023 = vadd.f32 %v6840, %v6987
    %v7024 = vadd.f32 %v6841, %v6988
    %v7025 = vadd.f32 %v6842, %v6989
    %v7026 = vadd.f32 %v6843, %v6990
    %v7027 = vadd.f32 %v6844, %v6991
    %v7028 = vadd.f32 %v6845, %v6992
    %v7029 = vadd.f32 %v6846, %v6993
    %v7030 = vadd.f32 %v6847, %v6994
    %s7031 = sld [smem:[#allocation4 + $0x386]]
    %s7032 = sld [smem:[#allocation4 + $0x387]]
    %v7033 = vstv %s7031
    %v7034 = vmul.f32 %v7033, %v719
    %v7035 = vmul.f32 %v7033, %v720
    %v7036 = vmul.f32 %v7033, %v721
    %v7037 = vmul.f32 %v7033, %v722
    %v7038 = vmul.f32 %v7033, %v723
    %v7039 = vmul.f32 %v7033, %v724
    %v7040 = vmul.f32 %v7033, %v725
    %v7041 = vmul.f32 %v7033, %v726
    %v7042 = vmul.f32 %v7033, %v727
    %v7043 = vstv %s7032
    %v7044 = vmul.f32 %v7043, %v729
    %v7045 = vmul.f32 %v7043, %v730
    %v7046 = vmul.f32 %v7043, %v731
    %v7047 = vmul.f32 %v7043, %v732
    %v7048 = vmul.f32 %v7043, %v733
    %v7049 = vmul.f32 %v7043, %v734
    %v7050 = vmul.f32 %v7043, %v735
    %v7051 = vmul.f32 %v7043, %v736
    %v7052 = vmul.f32 %v7043, %v737
    %v7053 = vadd.f32 %v7034, %v7044
    %v7054 = vadd.f32 %v7035, %v7045
    %v7055 = vadd.f32 %v7036, %v7046
    %v7056 = vadd.f32 %v7037, %v7047
    %v7057 = vadd.f32 %v7038, %v7048
    %v7058 = vadd.f32 %v7039, %v7049
    %v7059 = vadd.f32 %v7040, %v7050
    %v7060 = vadd.f32 %v7041, %v7051
    %v7061 = vadd.f32 %v7042, %v7052
    %v7062 = vmul.f32 %v7033, %v729
    %v7063 = vmul.f32 %v7033, %v730
    %v7064 = vmul.f32 %v7033, %v731
    %v7065 = vmul.f32 %v7033, %v732
    %v7066 = vmul.f32 %v7033, %v733
    %v7067 = vmul.f32 %v7033, %v734
    %v7068 = vmul.f32 %v7033, %v735
    %v7069 = vmul.f32 %v7033, %v736
    %v7070 = vmul.f32 %v7033, %v737
    %v7071 = vmul.f32 %v7043, %v739
    %v7072 = vmul.f32 %v7043, %v740
    %v7073 = vmul.f32 %v7043, %v741
    %v7074 = vmul.f32 %v7043, %v742
    %v7075 = vmul.f32 %v7043, %v743
    %v7076 = vmul.f32 %v7043, %v744
    %v7077 = vmul.f32 %v7043, %v745
    %v7078 = vmul.f32 %v7043, %v746
    %v7079 = vmul.f32 %v7043, %v747
    %v7080 = vadd.f32 %v7062, %v7071
    %v7081 = vadd.f32 %v7063, %v7072
    %v7082 = vadd.f32 %v7064, %v7073
    %v7083 = vadd.f32 %v7065, %v7074
    %v7084 = vadd.f32 %v7066, %v7075
    %v7085 = vadd.f32 %v7067, %v7076
    %v7086 = vadd.f32 %v7068, %v7077
    %v7087 = vadd.f32 %v7069, %v7078
    %v7088 = vadd.f32 %v7070, %v7079
    %v7089 = vmul.f32 %v7033, %v739
    %v7090 = vmul.f32 %v7033, %v740
    %v7091 = vmul.f32 %v7033, %v741
    %v7092 = vmul.f32 %v7033, %v742
    %v7093 = vmul.f32 %v7033, %v743
    %v7094 = vmul.f32 %v7033, %v744
    %v7095 = vmul.f32 %v7033, %v745
    %v7096 = vmul.f32 %v7033, %v746
    %v7097 = vmul.f32 %v7033, %v747
    %v7098 = vmul.f32 %v7043, %v749
    %v7099 = vmul.f32 %v7043, %v750
    %v7100 = vmul.f32 %v7043, %v751
    %v7101 = vmul.f32 %v7043, %v752
    %v7102 = vmul.f32 %v7043, %v753
    %v7103 = vmul.f32 %v7043, %v754
    %v7104 = vmul.f32 %v7043, %v755
    %v7105 = vmul.f32 %v7043, %v756
    %v7106 = vmul.f32 %v7043, %v757
    %v7107 = vadd.f32 %v7089, %v7098
    %v7108 = vadd.f32 %v7090, %v7099
    %v7109 = vadd.f32 %v7091, %v7100
    %v7110 = vadd.f32 %v7092, %v7101
    %v7111 = vadd.f32 %v7093, %v7102
    %v7112 = vadd.f32 %v7094, %v7103
    %v7113 = vadd.f32 %v7095, %v7104
    %v7114 = vadd.f32 %v7096, %v7105
    %v7115 = vadd.f32 %v7097, %v7106
    %v7116 = vmul.f32 %v7033, %v749
    %v7117 = vmul.f32 %v7033, %v750
    %v7118 = vmul.f32 %v7033, %v751
    %v7119 = vmul.f32 %v7033, %v752
    %v7120 = vmul.f32 %v7033, %v753
    %v7121 = vmul.f32 %v7033, %v754
    %v7122 = vmul.f32 %v7033, %v755
    %v7123 = vmul.f32 %v7033, %v756
    %v7124 = vmul.f32 %v7033, %v757
    %v7125 = vmul.f32 %v7043, %v719
    %v7126 = vmul.f32 %v7043, %v720
    %v7127 = vmul.f32 %v7043, %v721
    %v7128 = vmul.f32 %v7043, %v722
    %v7129 = vmul.f32 %v7043, %v723
    %v7130 = vmul.f32 %v7043, %v724
    %v7131 = vmul.f32 %v7043, %v725
    %v7132 = vmul.f32 %v7043, %v726
    %v7133 = vmul.f32 %v7043, %v727
    %v7143 = vrot.slane %v7125, 1
    %v7144 = vrot.slane %v7126, 1
    %v7145 = vsel %vm234, %v7143, %v7144
    %v7146 = vrot.slane %v7127, 1
    %v7147 = vsel %vm234, %v7144, %v7146
    %v7148 = vrot.slane %v7128, 1
    %v7149 = vsel %vm234, %v7146, %v7148
    %v7150 = vrot.slane %v7129, 1
    %v7151 = vsel %vm234, %v7148, %v7150
    %v7152 = vrot.slane %v7130, 1
    %v7153 = vsel %vm234, %v7150, %v7152
    %v7154 = vrot.slane %v7131, 1
    %v7155 = vsel %vm234, %v7152, %v7154
    %v7156 = vrot.slane %v7132, 1
    %v7157 = vsel %vm234, %v7154, %v7156
    %v7158 = vrot.slane %v7133, 1
    %v7159 = vsel %vm234, %v7156, %v7158
    %v7169 = vadd.f32 %v7116, %v7145
    %v7170 = vadd.f32 %v7117, %v7147
    %v7171 = vadd.f32 %v7118, %v7149
    %v7172 = vadd.f32 %v7119, %v7151
    %v7173 = vadd.f32 %v7120, %v7153
    %v7174 = vadd.f32 %v7121, %v7155
    %v7175 = vadd.f32 %v7122, %v7157
    %v7176 = vadd.f32 %v7123, %v7159
    %v7177 = vadd.f32 %v7124, %v7158
    %v7178 = vadd.f32 %v6995, %v7053
    %v7179 = vadd.f32 %v6996, %v7054
    %v7180 = vadd.f32 %v6997, %v7055
    %v7181 = vadd.f32 %v6998, %v7056
    %v7182 = vadd.f32 %v6999, %v7057
    %v7183 = vadd.f32 %v7000, %v7058
    %v7184 = vadd.f32 %v7001, %v7059
    %v7185 = vadd.f32 %v7002, %v7060
    %v7186 = vadd.f32 %v7003, %v7061
    %v7187 = vadd.f32 %v7004, %v7080
    %v7188 = vadd.f32 %v7005, %v7081
    %v7189 = vadd.f32 %v7006, %v7082
    %v7190 = vadd.f32 %v7007, %v7083
    %v7191 = vadd.f32 %v7008, %v7084
    %v7192 = vadd.f32 %v7009, %v7085
    %v7193 = vadd.f32 %v7010, %v7086
    %v7194 = vadd.f32 %v7011, %v7087
    %v7195 = vadd.f32 %v7012, %v7088
    %v7196 = vadd.f32 %v7013, %v7107
    %v7197 = vadd.f32 %v7014, %v7108
    %v7198 = vadd.f32 %v7015, %v7109
    %v7199 = vadd.f32 %v7016, %v7110
    %v7200 = vadd.f32 %v7017, %v7111
    %v7201 = vadd.f32 %v7018, %v7112
    %v7202 = vadd.f32 %v7019, %v7113
    %v7203 = vadd.f32 %v7020, %v7114
    %v7204 = vadd.f32 %v7021, %v7115
    %v7205 = vadd.f32 %v7022, %v7169
    %v7206 = vadd.f32 %v7023, %v7170
    %v7207 = vadd.f32 %v7024, %v7171
    %v7208 = vadd.f32 %v7025, %v7172
    %v7209 = vadd.f32 %v7026, %v7173
    %v7210 = vadd.f32 %v7027, %v7174
    %v7211 = vadd.f32 %v7028, %v7175
    %v7212 = vadd.f32 %v7029, %v7176
    %v7213 = vadd.f32 %v7030, %v7177
    %s7214 = sld [smem:[#allocation6 + $0x7]]
    %v7215 = vstv %s7214
    %v7216 = vadd.f32 %v7178, %v7215
    %v7217 = vadd.f32 %v7179, %v7215
    %v7218 = vadd.f32 %v7180, %v7215
    %v7219 = vadd.f32 %v7181, %v7215
    %v7220 = vadd.f32 %v7182, %v7215
    %v7221 = vadd.f32 %v7183, %v7215
    %v7222 = vadd.f32 %v7184, %v7215
    %v7223 = vadd.f32 %v7185, %v7215
    %v7224 = vadd.f32 %v7186, %v7215
    %v7225 = vmax.f32 %v7216, 0.0
    %v7226 = vmax.f32 %v7217, 0.0
    %v7227 = vmax.f32 %v7218, 0.0
    %v7228 = vmax.f32 %v7219, 0.0
    %v7229 = vmax.f32 %v7220, 0.0
    %v7230 = vmax.f32 %v7221, 0.0
    %v7231 = vmax.f32 %v7222, 0.0
    %v7232 = vmax.f32 %v7223, 0.0
    %v7233 = vmax.f32 %v7224, 0.0
    %v7234 = vadd.f32 %v7187, %v7215
    %v7235 = vadd.f32 %v7188, %v7215
    %v7236 = vadd.f32 %v7189, %v7215
    %v7237 = vadd.f32 %v7190, %v7215
    %v7238 = vadd.f32 %v7191, %v7215
    %v7239 = vadd.f32 %v7192, %v7215
    %v7240 = vadd.f32 %v7193, %v7215
    %v7241 = vadd.f32 %v7194, %v7215
    %v7242 = vadd.f32 %v7195, %v7215
    %v7243 = vmax.f32 %v7234, 0.0
    %v7244 = vmax.f32 %v7235, 0.0
    %v7245 = vmax.f32 %v7236, 0.0
    %v7246 = vmax.f32 %v7237, 0.0
    %v7247 = vmax.f32 %v7238, 0.0
    %v7248 = vmax.f32 %v7239, 0.0
    %v7249 = vmax.f32 %v7240, 0.0
    %v7250 = vmax.f32 %v7241, 0.0
    %v7251 = vmax.f32 %v7242, 0.0
    %v7252 = vadd.f32 %v7196, %v7215
    %v7253 = vadd.f32 %v7197, %v7215
    %v7254 = vadd.f32 %v7198, %v7215
    %v7255 = vadd.f32 %v7199, %v7215
    %v7256 = vadd.f32 %v7200, %v7215
    %v7257 = vadd.f32 %v7201, %v7215
    %v7258 = vadd.f32 %v7202, %v7215
    %v7259 = vadd.f32 %v7203, %v7215
    %v7260 = vadd.f32 %v7204, %v7215
    %v7261 = vmax.f32 %v7252, 0.0
    %v7262 = vmax.f32 %v7253, 0.0
    %v7263 = vmax.f32 %v7254, 0.0
    %v7264 = vmax.f32 %v7255, 0.0
    %v7265 = vmax.f32 %v7256, 0.0
    %v7266 = vmax.f32 %v7257, 0.0
    %v7267 = vmax.f32 %v7258, 0.0
    %v7268 = vmax.f32 %v7259, 0.0
    %v7269 = vmax.f32 %v7260, 0.0
    %v7270 = vadd.f32 %v7205, %v7215
    %v7271 = vadd.f32 %v7206, %v7215
    %v7272 = vadd.f32 %v7207, %v7215
    %v7273 = vadd.f32 %v7208, %v7215
    %v7274 = vadd.f32 %v7209, %v7215
    %v7275 = vadd.f32 %v7210, %v7215
    %v7276 = vadd.f32 %v7211, %v7215
    %v7277 = vadd.f32 %v7212, %v7215
    %v7278 = vadd.f32 %v7213, %v7215
    %v7279 = vmax.f32 %v7270, 0.0
    %v7280 = vmax.f32 %v7271, 0.0
    %v7281 = vmax.f32 %v7272, 0.0
    %v7282 = vmax.f32 %v7273, 0.0
    %v7283 = vmax.f32 %v7274, 0.0
    %v7284 = vmax.f32 %v7275, 0.0
    %v7285 = vmax.f32 %v7276, 0.0
    %v7286 = vmax.f32 %v7277, 0.0
    %v7287 = vmax.f32 %v7278, 0.0
    %v7288 = vmax.f32 %v7225, %v7243
    %v7289 = vmax.f32 %v7226, %v7244
    %v7290 = vmax.f32 %v7227, %v7245
    %v7291 = vmax.f32 %v7228, %v7246
    %v7292 = vmax.f32 %v7229, %v7247
    %v7293 = vmax.f32 %v7230, %v7248
    %v7294 = vmax.f32 %v7231, %v7249
    %v7295 = vmax.f32 %v7232, %v7250
    %v7296 = vmax.f32 %v7233, %v7251
    %v7297 = vmax.f32 %v7261, %v7279
    %v7298 = vmax.f32 %v7262, %v7280
    %v7299 = vmax.f32 %v7263, %v7281
    %v7300 = vmax.f32 %v7264, %v7282
    %v7301 = vmax.f32 %v7265, %v7283
    %v7302 = vmax.f32 %v7266, %v7284
    %v7303 = vmax.f32 %v7267, %v7285
    %v7304 = vmax.f32 %v7268, %v7286
    %v7305 = vmax.f32 %v7269, %v7287
    %s7306 = sld [smem:[#allocation8 + $0x380]]
    %s7307 = sld [smem:[#allocation8 + $0x381]]
    %v7308 = vstv %s7306
    %v7309 = vmul.f32 %v7308, %v7288
    %v7310 = vmul.f32 %v7308, %v7289
    %v7311 = vmul.f32 %v7308, %v7290
    %v7312 = vmul.f32 %v7308, %v7291
    %v7313 = vmul.f32 %v7308, %v7292
    %v7314 = vmul.f32 %v7308, %v7293
    %v7315 = vmul.f32 %v7308, %v7294
    %v7316 = vmul.f32 %v7308, %v7295
    %v7317 = vmul.f32 %v7308, %v7296
    %v7318 = vstv %s7307
    %v7319 = vmul.f32 %v7318, %v7297
    %v7320 = vmul.f32 %v7318, %v7298
    %v7321 = vmul.f32 %v7318, %v7299
    %v7322 = vmul.f32 %v7318, %v7300
    %v7323 = vmul.f32 %v7318, %v7301
    %v7324 = vmul.f32 %v7318, %v7302
    %v7325 = vmul.f32 %v7318, %v7303
    %v7326 = vmul.f32 %v7318, %v7304
    %v7327 = vmul.f32 %v7318, %v7305
    %v7328 = vadd.f32 %v7309, %v7319
    %v7329 = vadd.f32 %v7310, %v7320
    %v7330 = vadd.f32 %v7311, %v7321
    %v7331 = vadd.f32 %v7312, %v7322
    %v7332 = vadd.f32 %v7313, %v7323
    %v7333 = vadd.f32 %v7314, %v7324
    %v7334 = vadd.f32 %v7315, %v7325
    %v7335 = vadd.f32 %v7316, %v7326
    %v7336 = vadd.f32 %v7317, %v7327
    %v7337 = vmul.f32 %v7308, %v7297
    %v7338 = vmul.f32 %v7308, %v7298
    %v7339 = vmul.f32 %v7308, %v7299
    %v7340 = vmul.f32 %v7308, %v7300
    %v7341 = vmul.f32 %v7308, %v7301
    %v7342 = vmul.f32 %v7308, %v7302
    %v7343 = vmul.f32 %v7308, %v7303
    %v7344 = vmul.f32 %v7308, %v7304
    %v7345 = vmul.f32 %v7308, %v7305
    %v7346 = vmul.f32 %v7318, %v7288
    %v7347 = vmul.f32 %v7318, %v7289
    %v7348 = vmul.f32 %v7318, %v7290
    %v7349 = vmul.f32 %v7318, %v7291
    %v7350 = vmul.f32 %v7318, %v7292
    %v7351 = vmul.f32 %v7318, %v7293
    %v7352 = vmul.f32 %v7318, %v7294
    %v7353 = vmul.f32 %v7318, %v7295
    %v7354 = vmul.f32 %v7318, %v7296
    %v7364 = vrot.slane %v7346, 1
    %v7365 = vrot.slane %v7347, 1
    %v7366 = vsel %vm234, %v7364, %v7365
    %v7367 = vrot.slane %v7348, 1
    %v7368 = vsel %vm234, %v7365, %v7367
    %v7369 = vrot.slane %v7349, 1
    %v7370 = vsel %vm234, %v7367, %v7369
    %v7371 = vrot.slane %v7350, 1
    %v7372 = vsel %vm234, %v7369, %v7371
    %v7373 = vrot.slane %v7351, 1
    %v7374 = vsel %vm234, %v7371, %v7373
    %v7375 = vrot.slane %v7352, 1
    %v7376 = vsel %vm234, %v7373, %v7375
    %v7377 = vrot.slane %v7353, 1
    %v7378 = vsel %vm234, %v7375, %v7377
    %v7379 = vrot.slane %v7354, 1
    %v7380 = vsel %vm234, %v7377, %v7379
    %v7390 = vadd.f32 %v7337, %v7366
    %v7391 = vadd.f32 %v7338, %v7368
    %v7392 = vadd.f32 %v7339, %v7370
    %v7393 = vadd.f32 %v7340, %v7372
    %v7394 = vadd.f32 %v7341, %v7374
    %v7395 = vadd.f32 %v7342, %v7376
    %v7396 = vadd.f32 %v7343, %v7378
    %v7397 = vadd.f32 %v7344, %v7380
    %v7398 = vadd.f32 %v7345, %v7379
    %v7399 = vadd.f32 %v6500, %v7328
    %v7400 = vadd.f32 %v6501, %v7329
    %v7401 = vadd.f32 %v6502, %v7330
    %v7402 = vadd.f32 %v6503, %v7331
    %v7403 = vadd.f32 %v6504, %v7332
    %v7404 = vadd.f32 %v6505, %v7333
    %v7405 = vadd.f32 %v6506, %v7334
    %v7406 = vadd.f32 %v6507, %v7335
    %v7407 = vadd.f32 %v6508, %v7336
    %v7408 = vadd.f32 %v6509, %v7390
    %v7409 = vadd.f32 %v6510, %v7391
    %v7410 = vadd.f32 %v6511, %v7392
    %v7411 = vadd.f32 %v6512, %v7393
    %v7412 = vadd.f32 %v6513, %v7394
    %v7413 = vadd.f32 %v6514, %v7395
    %v7414 = vadd.f32 %v6515, %v7396
    %v7415 = vadd.f32 %v6516, %v7397
    %v7416 = vadd.f32 %v6517, %v7398
    %s7417 = sld [smem:[#allocation2]]
    %v7418 = vstv %s7417
    %v7419 = vadd.f32 %v7399, %v7418
    %v7420 = vadd.f32 %v7400, %v7418
    %v7421 = vadd.f32 %v7401, %v7418
    %v7422 = vadd.f32 %v7402, %v7418
    %v7423 = vadd.f32 %v7403, %v7418
    %v7424 = vadd.f32 %v7404, %v7418
    %v7425 = vadd.f32 %v7405, %v7418
    %v7426 = vadd.f32 %v7406, %v7418
    %v7427 = vadd.f32 %v7407, %v7418
    %v7428 = vmax.f32 %v7419, 0.0
    %v7429 = vmax.f32 %v7420, 0.0
    %v7430 = vmax.f32 %v7421, 0.0
    %v7431 = vmax.f32 %v7422, 0.0
    %v7432 = vmax.f32 %v7423, 0.0
    %v7433 = vmax.f32 %v7424, 0.0
    %v7434 = vmax.f32 %v7425, 0.0
    %v7435 = vmax.f32 %v7426, 0.0
    %v7436 = vmax.f32 %v7427, 0.0
    %v7437 = vadd.f32 %v7408, %v7418
    %v7438 = vadd.f32 %v7409, %v7418
    %v7439 = vadd.f32 %v7410, %v7418
    %v7440 = vadd.f32 %v7411, %v7418
    %v7441 = vadd.f32 %v7412, %v7418
    %v7442 = vadd.f32 %v7413, %v7418
    %v7443 = vadd.f32 %v7414, %v7418
    %v7444 = vadd.f32 %v7415, %v7418
    %v7445 = vadd.f32 %v7416, %v7418
    %v7446 = vmax.f32 %v7437, 0.0
    %v7447 = vmax.f32 %v7438, 0.0
    %v7448 = vmax.f32 %v7439, 0.0
    %v7449 = vmax.f32 %v7440, 0.0
    %v7450 = vmax.f32 %v7441, 0.0
    %v7451 = vmax.f32 %v7442, 0.0
    %v7452 = vmax.f32 %v7443, 0.0
    %v7453 = vmax.f32 %v7444, 0.0
    %v7454 = vmax.f32 %v7445, 0.0
    %v7455 = vmax.f32 %v7428, %v7446
    %v7456 = vmax.f32 %v7429, %v7447
    %v7457 = vmax.f32 %v7430, %v7448
    %v7458 = vmax.f32 %v7431, %v7449
    %v7459 = vmax.f32 %v7432, %v7450
    %v7460 = vmax.f32 %v7433, %v7451
    %v7461 = vmax.f32 %v7434, %v7452
    %v7462 = vmax.f32 %v7435, %v7453
    %v7463 = vmax.f32 %v7436, %v7454
    %v7464 = vld [vmem:[%s5] sm:$0xff]
    %v7465 = vld [vmem:[%s5 + $0x8] sm:$0xff]
    %v7466 = vld [vmem:[%s5 + $0x10] sm:$0xff]
    %v7467 = vld [vmem:[%s5 + $0x18] sm:$0xff]
    %v7468 = vld [vmem:[%s5 + $0x20] sm:$0xff]
    %v7469 = vld [vmem:[%s5 + $0x28] sm:$0xff]
    %v7470 = vld [vmem:[%s5 + $0x30] sm:$0xff]
    %v7471 = vld [vmem:[%s5 + $0x38] sm:$0xf]
    %v7472 = vld [vmem:[%s6] sm:$0xff]
    %v7473 = vld [vmem:[%s6 + $0x8] sm:$0xff]
    %v7474 = vld [vmem:[%s6 + $0x10] sm:$0xff]
    %v7475 = vld [vmem:[%s6 + $0x18] sm:$0xff]
    %v7476 = vld [vmem:[%s6 + $0x20] sm:$0xff]
    %v7477 = vld [vmem:[%s6 + $0x28] sm:$0xff]
    %v7478 = vld [vmem:[%s6 + $0x30] sm:$0xff]
    %v7479 = vld [vmem:[%s6 + $0x38] sm:$0xf]
    %7481 = vset.pattern.permute.xlu0 0
    %7482 = vperm.xlu0 %7481, %v7472
    %v7483 = vpop.permute.xlu0 %7482
    %7486 = vset.pattern.permute.xlu0 0
    %7487 = vperm.xlu0 %7486, %v7473
    %v7488 = vpop.permute.xlu0 %7487
    %7491 = vset.pattern.permute.xlu0 0
    %7492 = vperm.xlu0 %7491, %v7474
    %v7493 = vpop.permute.xlu0 %7492
    %7496 = vset.pattern.permute.xlu0 0
    %7497 = vperm.xlu0 %7496, %v7475
    %v7498 = vpop.permute.xlu0 %7497
    %7501 = vset.pattern.permute.xlu0 0
    %7502 = vperm.xlu0 %7501, %v7476
    %v7503 = vpop.permute.xlu0 %7502
    %7506 = vset.pattern.permute.xlu0 0
    %7507 = vperm.xlu0 %7506, %v7477
    %v7508 = vpop.permute.xlu0 %7507
    %7511 = vset.pattern.permute.xlu0 0
    %7512 = vperm.xlu0 %7511, %v7478
    %v7513 = vpop.permute.xlu0 %7512
    %7516 = vset.pattern.permute.xlu0 0
    %7517 = vperm.xlu0 %7516, %v7479
    %v7518 = vpop.permute.xlu0 %7517
    %vm7520 = vcmask 580608
    %v7522 = vsel %vm7520, %v7464, 0
    %v7525 = vsel %vm7520, %v7465, 0
    %v7528 = vsel %vm7520, %v7466, 0
    %v7531 = vsel %vm7520, %v7467, 0
    %v7534 = vsel %vm7520, %v7468, 0
    %v7537 = vsel %vm7520, %v7469, 0
    %v7540 = vsel %vm7520, %v7470, 0
    %v7543 = vsel %vm7520, %v7471, 0
    %v7546 = vsel %vm234, %v7463, 0
    %7548 = vmatprep.subr.mxu0 0.0
    %7549 = vmatpush1.msra.mxu0 %v7455
    %7550 = vmatprep.subr.mxu0 0.0
    %7551 = vmatpush1.msra.mxu0 %v7456
    %7552 = vmatprep.subr.mxu0 0.0
    %7553 = vmatpush1.msra.mxu0 %v7457
    %7554 = vmatprep.subr.mxu0 0.0
    %7555 = vmatpush1.msra.mxu0 %v7458
    %7556 = vmatprep.subr.mxu0 0.0
    %7557 = vmatpush1.msra.mxu0 %v7459
    %7558 = vmatprep.subr.mxu0 0.0
    %7559 = vmatpush1.msra.mxu0 %v7460
    %7560 = vmatprep.subr.mxu0 0.0
    %7561 = vmatpush1.msra.mxu0 %v7461
    %7562 = vmatprep.subr.mxu0 0.0
    %7563 = vmatpush1.msra.mxu0 %v7462
    %7564 = vmatprep.subr.mxu0 0.0
    %7565 = vmatpush1.msra.mxu0 %v7546
    %7566 = vmatprep.subr.mxu0 0.0
    %7567 = vmatpush1.msra.mxu0 0.0
    %7568 = vmatprep.subr.mxu0 0.0
    %7569 = vmatpush1.msra.mxu0 0.0
    %7570 = vmatprep.subr.mxu0 0.0
    %7571 = vmatpush1.msra.mxu0 0.0
    %7572 = vmatprep.subr.mxu0 0.0
    %7573 = vmatpush1.msra.mxu0 0.0
    %7574 = vmatprep.subr.mxu0 0.0
    %7575 = vmatpush1.msra.mxu0 0.0
    %7576 = vmatprep.subr.mxu0 0.0
    %7577 = vmatpush1.msra.mxu0 0.0
    %7578 = vmatprep.subr.mxu0 0.0
    %7579 = vmatpush1.msra.mxu0 0.0
    %7580 = vmatprep.subr.mxu0 0.0
    %7581 = vmatpush1.msra.mxu0 0.0
    %7582 = vmatprep.subr.mxu0 0.0
    %7583 = vmatpush1.msra.mxu0 0.0
    %7584 = vmatprep.subr.mxu0 0.0
    %7585 = vmatpush1.msra.mxu0 0.0
    %7586 = vmatprep.subr.mxu0 0.0
    %7587 = vmatpush1.msra.mxu0 0.0
    %7588 = vmatprep.subr.mxu0 0.0
    %7589 = vmatpush1.msra.mxu0 0.0
    %7590 = vmatprep.subr.mxu0 0.0
    %7591 = vmatpush1.msra.mxu0 0.0
    %7592 = vmatprep.subr.mxu0 0.0
    %7593 = vmatpush1.msra.mxu0 0.0
    %7594 = vmatprep.subr.mxu0 0.0
    %7595 = vmatpush1.msra.mxu0 0.0
    %7596 = vmatprep.subr.mxu0 0.0
    %7597 = vmatpush1.msra.mxu0 0.0
    %7598 = vmatprep.subr.mxu0 0.0
    %7599 = vmatpush1.msra.mxu0 0.0
    %7600 = vmatprep.subr.mxu0 0.0
    %7601 = vmatpush1.msra.mxu0 0.0
    %7602 = vmatprep.subr.mxu0 0.0
    %7603 = vmatpush1.msra.mxu0 0.0
    %7604 = vmatprep.subr.mxu0 0.0
    %7605 = vmatpush1.msra.mxu0 0.0
    %7606 = vmatprep.subr.mxu0 0.0
    %7607 = vmatpush1.msra.mxu0 0.0
    %7608 = vmatprep.subr.mxu0 0.0
    %7609 = vmatpush1.msra.mxu0 0.0
    %7610 = vmatprep.subr.mxu0 0.0
    %7611 = vmatpush1.msra.mxu0 0.0
    %7612 = vmatprep.mubr.f32.mxu0 0.0
    %7613 = vmatmul.mubr.f32.gmra.mrb[0].mxu0 %v7522
    %v7614 = vpop.f32.mrb[0].mxu0
    %v7615 = vadd.f32 %v7483, %v7614
    %v7616 = vpop.f32.mrb[0].mxu0
    %7617 = vmatprep.mubr.f32.mxu0 0.0
    %7618 = vmatmul.mubr.f32.gmra.mrb[0].mxu0 %v7525
    %v7619 = vpop.f32.mrb[0].mxu0
    %v7620 = vadd.f32 %v7488, %v7619
    %v7621 = vpop.f32.mrb[0].mxu0
    %7622 = vmatprep.mubr.f32.mxu0 0.0
    %7623 = vmatmul.mubr.f32.gmra.mrb[0].mxu0 %v7528
    %v7624 = vpop.f32.mrb[0].mxu0
    %v7625 = vadd.f32 %v7493, %v7624
    %v7626 = vpop.f32.mrb[0].mxu0
    %7627 = vmatprep.mubr.f32.mxu0 0.0
    %7628 = vmatmul.mubr.f32.gmra.mrb[0].mxu0 %v7531
    %v7629 = vpop.f32.mrb[0].mxu0
    %v7630 = vadd.f32 %v7498, %v7629
    %v7631 = vpop.f32.mrb[0].mxu0
    %7632 = vmatprep.mubr.f32.mxu0 0.0
    %7633 = vmatmul.mubr.f32.gmra.mrb[0].mxu0 %v7534
    %v7634 = vpop.f32.mrb[0].mxu0
    %v7635 = vadd.f32 %v7503, %v7634
    %v7636 = vpop.f32.mrb[0].mxu0
    %7637 = vmatprep.mubr.f32.mxu0 0.0
    %7638 = vmatmul.mubr.f32.gmra.mrb[0].mxu0 %v7537
    %v7639 = vpop.f32.mrb[0].mxu0
    %v7640 = vadd.f32 %v7508, %v7639
    %v7641 = vpop.f32.mrb[0].mxu0
    %7642 = vmatprep.mubr.f32.mxu0 0.0
    %7643 = vmatmul.mubr.f32.gmra.mrb[0].mxu0 %v7540
    %v7644 = vpop.f32.mrb[0].mxu0
    %v7645 = vadd.f32 %v7513, %v7644
    %v7646 = vpop.f32.mrb[0].mxu0
    %7647 = vmatprep.mubr.f32.mxu0 0.0
    %7648 = vmatmul.mubr.f32.gmra.mrb[0].mxu0 %v7543
    %v7649 = vpop.f32.mrb[0].mxu0
    %v7650 = vadd.f32 %v7518, %v7649
    %v7651 = vpop.f32.mrb[0].mxu0
    %7652 = vdwg.mxu0
    %v7653 = vmax.f32 %v7615, 0.0
    %v7654 = vmax.f32 %v7620, 0.0
    %v7655 = vmax.f32 %v7625, 0.0
    %v7656 = vmax.f32 %v7630, 0.0
    %v7657 = vmax.f32 %v7635, 0.0
    %v7658 = vmax.f32 %v7640, 0.0
    %v7659 = vmax.f32 %v7645, 0.0
    %v7660 = vmax.f32 %v7650, 0.0
    %v7661 = vld [vmem:[%s7] sm:$0xff]
    %v7662 = vld [vmem:[%s7 + $0x8] sm:$0xff]
    %v7663 = vld [vmem:[%s7 + $0x10] sm:$0xff]
    %v7664 = vld [vmem:[%s7 + $0x18] sm:$0xff]
    %v7665 = vld [vmem:[%s7 + $0x20] sm:$0xff]
    %v7666 = vld [vmem:[%s8] sm:$0xff]
    %v7667 = vld [vmem:[%s8 + $0x8] sm:$0xff]
    %v7668 = vld [vmem:[%s8 + $0x10] sm:$0xff]
    %v7669 = vld [vmem:[%s8 + $0x18] sm:$0xff]
    %v7670 = vld [vmem:[%s8 + $0x20] sm:$0xff]
    %7672 = vset.pattern.permute.xlu0 0
    %7673 = vperm.xlu0 %7672, %v7666
    %v7674 = vpop.permute.xlu0 %7673
    %7677 = vset.pattern.permute.xlu0 0
    %7678 = vperm.xlu0 %7677, %v7667
    %v7679 = vpop.permute.xlu0 %7678
    %7682 = vset.pattern.permute.xlu0 0
    %7683 = vperm.xlu0 %7682, %v7668
    %v7684 = vpop.permute.xlu0 %7683
    %7687 = vset.pattern.permute.xlu0 0
    %7688 = vperm.xlu0 %7687, %v7669
    %v7689 = vpop.permute.xlu0 %7688
    %7692 = vset.pattern.permute.xlu0 0
    %7693 = vperm.xlu0 %7692, %v7670
    %v7694 = vpop.permute.xlu0 %7693
    %vm7696 = vcmask 490496
    %v7698 = vsel %vm7696, %v7661, 0
    %v7701 = vsel %vm7696, %v7662, 0
    %v7704 = vsel %vm7696, %v7663, 0
    %v7707 = vsel %vm7696, %v7664, 0
    %v7710 = vsel %vm7696, %v7665, 0
    %vm7712 = vcmask 1043456
    %v7714 = vsel %vm7712, %v7660, 0
    %7716 = vmatprep.subr.mxu0 0.0
    %7717 = vmatpush1.msra.mxu0 %v7653
    %7718 = vmatprep.subr.mxu0 0.0
    %7719 = vmatpush1.msra.mxu0 %v7654
    %7720 = vmatprep.subr.mxu0 0.0
    %7721 = vmatpush1.msra.mxu0 %v7655
    %7722 = vmatprep.subr.mxu0 0.0
    %7723 = vmatpush1.msra.mxu0 %v7656
    %7724 = vmatprep.subr.mxu0 0.0
    %7725 = vmatpush1.msra.mxu0 %v7657
    %7726 = vmatprep.subr.mxu0 0.0
    %7727 = vmatpush1.msra.mxu0 %v7658
    %7728 = vmatprep.subr.mxu0 0.0
    %7729 = vmatpush1.msra.mxu0 %v7659
    %7730 = vmatprep.subr.mxu0 0.0
    %7731 = vmatpush1.msra.mxu0 %v7714
    %7732 = vmatprep.subr.mxu0 0.0
    %7733 = vmatpush1.msra.mxu0 0.0
    %7734 = vmatprep.subr.mxu0 0.0
    %7735 = vmatpush1.msra.mxu0 0.0
    %7736 = vmatprep.subr.mxu0 0.0
    %7737 = vmatpush1.msra.mxu0 0.0
    %7738 = vmatprep.subr.mxu0 0.0
    %7739 = vmatpush1.msra.mxu0 0.0
    %7740 = vmatprep.subr.mxu0 0.0
    %7741 = vmatpush1.msra.mxu0 0.0
    %7742 = vmatprep.subr.mxu0 0.0
    %7743 = vmatpush1.msra.mxu0 0.0
    %7744 = vmatprep.subr.mxu0 0.0
    %7745 = vmatpush1.msra.mxu0 0.0
    %7746 = vmatprep.subr.mxu0 0.0
    %7747 = vmatpush1.msra.mxu0 0.0
    %7748 = vmatprep.subr.mxu0 0.0
    %7749 = vmatpush1.msra.mxu0 0.0
    %7750 = vmatprep.subr.mxu0 0.0
    %7751 = vmatpush1.msra.mxu0 0.0
    %7752 = vmatprep.subr.mxu0 0.0
    %7753 = vmatpush1.msra.mxu0 0.0
    %7754 = vmatprep.subr.mxu0 0.0
    %7755 = vmatpush1.msra.mxu0 0.0
    %7756 = vmatprep.subr.mxu0 0.0
    %7757 = vmatpush1.msra.mxu0 0.0
    %7758 = vmatprep.subr.mxu0 0.0
    %7759 = vmatpush1.msra.mxu0 0.0
    %7760 = vmatprep.subr.mxu0 0.0
    %7761 = vmatpush1.msra.mxu0 0.0
    %7762 = vmatprep.subr.mxu0 0.0
    %7763 = vmatpush1.msra.mxu0 0.0
    %7764 = vmatprep.subr.mxu0 0.0
    %7765 = vmatpush1.msra.mxu0 0.0
    %7766 = vmatprep.subr.mxu0 0.0
    %7767 = vmatpush1.msra.mxu0 0.0
    %7768 = vmatprep.subr.mxu0 0.0
    %7769 = vmatpush1.msra.mxu0 0.0
    %7770 = vmatprep.subr.mxu0 0.0
    %7771 = vmatpush1.msra.mxu0 0.0
    %7772 = vmatprep.subr.mxu0 0.0
    %7773 = vmatpush1.msra.mxu0 0.0
    %7774 = vmatprep.subr.mxu0 0.0
    %7775 = vmatpush1.msra.mxu0 0.0
    %7776 = vmatprep.subr.mxu0 0.0
    %7777 = vmatpush1.msra.mxu0 0.0
    %7778 = vmatprep.subr.mxu0 0.0
    %7779 = vmatpush1.msra.mxu0 0.0
    %7780 = vmatprep.mubr.f32.mxu0 0.0
    %7781 = vmatmul.mubr.f32.gmra.mrb[0].mxu0 %v7698
    %v7782 = vpop.f32.mrb[0].mxu0
    %v7783 = vadd.f32 %v7674, %v7782
    %v7784 = vpop.f32.mrb[0].mxu0
    %7785 = vmatprep.mubr.f32.mxu0 0.0
    %7786 = vmatmul.mubr.f32.gmra.mrb[0].mxu0 %v7701
    %v7787 = vpop.f32.mrb[0].mxu0
    %v7788 = vadd.f32 %v7679, %v7787
    %v7789 = vpop.f32.mrb[0].mxu0
    %7790 = vmatprep.mubr.f32.mxu0 0.0
    %7791 = vmatmul.mubr.f32.gmra.mrb[0].mxu0 %v7704
    %v7792 = vpop.f32.mrb[0].mxu0
    %v7793 = vadd.f32 %v7684, %v7792
    %v7794 = vpop.f32.mrb[0].mxu0
    %7795 = vmatprep.mubr.f32.mxu0 0.0
    %7796 = vmatmul.mubr.f32.gmra.mrb[0].mxu0 %v7707
    %v7797 = vpop.f32.mrb[0].mxu0
    %v7798 = vadd.f32 %v7689, %v7797
    %v7799 = vpop.f32.mrb[0].mxu0
    %7800 = vmatprep.mubr.f32.mxu0 0.0
    %7801 = vmatmul.mubr.f32.gmra.mrb[0].mxu0 %v7710
    %v7802 = vpop.f32.mrb[0].mxu0
    %v7803 = vadd.f32 %v7694, %v7802
    %v7804 = vpop.f32.mrb[0].mxu0
    %7805 = vdwg.mxu0
    %v7806 = vmax.f32 %v7783, 0.0
    %v7807 = vmax.f32 %v7788, 0.0
    %v7808 = vmax.f32 %v7793, 0.0
    %v7809 = vmax.f32 %v7798, 0.0
    %v7810 = vmax.f32 %v7803, 0.0
    %v7811 = vld [vmem:[%s9] sm:$0xff]
    %v7812 = vld [vmem:[%s9 + $0x8] sm:$0xff]
    %v7813 = vld [vmem:[%s9 + $0x10] sm:$0xf]
    %v7814 = vld [vmem:[%s10] sm:$0xff]
    %v7815 = vld [vmem:[%s10 + $0x8] sm:$0xff]
    %v7816 = vld [vmem:[%s10 + $0x10] sm:$0xf]
    %7818 = vset.pattern.permute.xlu0 0
    %7819 = vperm.xlu0 %7818, %v7814
    %v7820 = vpop.permute.xlu0 %7819
    %7823 = vset.pattern.permute.xlu0 0
    %7824 = vperm.xlu0 %7823, %v7815
    %v7825 = vpop.permute.xlu0 %7824
    %7828 = vset.pattern.permute.xlu0 0
    %7829 = vperm.xlu0 %7828, %v7816
    %v7830 = vpop.permute.xlu0 %7829
    %vm7832 = vcmask 326656
    %v7834 = vsel %vm7832, %v7811, 0
    %v7837 = vsel %vm7832, %v7812, 0
    %v7840 = vsel %vm7832, %v7813, 0
    %7842 = vmatprep.subr.mxu0 0.0
    %7843 = vmatpush1.msra.mxu0 %v7806
    %7844 = vmatprep.subr.mxu0 0.0
    %7845 = vmatpush1.msra.mxu0 %v7807
    %7846 = vmatprep.subr.mxu0 0.0
    %7847 = vmatpush1.msra.mxu0 %v7808
    %7848 = vmatprep.subr.mxu0 0.0
    %7849 = vmatpush1.msra.mxu0 %v7809
    %7850 = vmatprep.subr.mxu0 0.0
    %7851 = vmatpush1.msra.mxu0 %v7810
    %7852 = vmatprep.subr.mxu0 0.0
    %7853 = vmatpush1.msra.mxu0 0.0
    %7854 = vmatprep.subr.mxu0 0.0
    %7855 = vmatpush1.msra.mxu0 0.0
    %7856 = vmatprep.subr.mxu0 0.0
    %7857 = vmatpush1.msra.mxu0 0.0
    %7858 = vmatprep.subr.mxu0 0.0
    %7859 = vmatpush1.msra.mxu0 0.0
    %7860 = vmatprep.subr.mxu0 0.0
    %7861 = vmatpush1.msra.mxu0 0.0
    %7862 = vmatprep.subr.mxu0 0.0
    %7863 = vmatpush1.msra.mxu0 0.0
    %7864 = vmatprep.subr.mxu0 0.0
    %7865 = vmatpush1.msra.mxu0 0.0
    %7866 = vmatprep.subr.mxu0 0.0
    %7867 = vmatpush1.msra.mxu0 0.0
    %7868 = vmatprep.subr.mxu0 0.0
    %7869 = vmatpush1.msra.mxu0 0.0
    %7870 = vmatprep.subr.mxu0 0.0
    %7871 = vmatpush1.msra.mxu0 0.0
    %7872 = vmatprep.subr.mxu0 0.0
    %7873 = vmatpush1.msra.mxu0 0.0
    %7874 = vmatprep.subr.mxu0 0.0
    %7875 = vmatpush1.msra.mxu0 0.0
    %7876 = vmatprep.subr.mxu0 0.0
    %7877 = vmatpush1.msra.mxu0 0.0
    %7878 = vmatprep.subr.mxu0 0.0
    %7879 = vmatpush1.msra.mxu0 0.0
    %7880 = vmatprep.subr.mxu0 0.0
    %7881 = vmatpush1.msra.mxu0 0.0
    %7882 = vmatprep.subr.mxu0 0.0
    %7883 = vmatpush1.msra.mxu0 0.0
    %7884 = vmatprep.subr.mxu0 0.0
    %7885 = vmatpush1.msra.mxu0 0.0
    %7886 = vmatprep.subr.mxu0 0.0
    %7887 = vmatpush1.msra.mxu0 0.0
    %7888 = vmatprep.subr.mxu0 0.0
    %7889 = vmatpush1.msra.mxu0 0.0
    %7890 = vmatprep.subr.mxu0 0.0
    %7891 = vmatpush1.msra.mxu0 0.0
    %7892 = vmatprep.subr.mxu0 0.0
    %7893 = vmatpush1.msra.mxu0 0.0
    %7894 = vmatprep.subr.mxu0 0.0
    %7895 = vmatpush1.msra.mxu0 0.0
    %7896 = vmatprep.subr.mxu0 0.0
    %7897 = vmatpush1.msra.mxu0 0.0
    %7898 = vmatprep.subr.mxu0 0.0
    %7899 = vmatpush1.msra.mxu0 0.0
    %7900 = vmatprep.subr.mxu0 0.0
    %7901 = vmatpush1.msra.mxu0 0.0
    %7902 = vmatprep.subr.mxu0 0.0
    %7903 = vmatpush1.msra.mxu0 0.0
    %7904 = vmatprep.subr.mxu0 0.0
    %7905 = vmatpush1.msra.mxu0 0.0
    %7906 = vmatprep.mubr.f32.mxu0 0.0
    %7907 = vmatmul.mubr.f32.gmra.mrb[0].mxu0 %v7834
    %v7908 = vpop.f32.mrb[0].mxu0
    %v7909 = vadd.f32 %v7820, %v7908
    %v7910 = vpop.f32.mrb[0].mxu0
    %7911 = vmatprep.mubr.f32.mxu0 0.0
    %7912 = vmatmul.mubr.f32.gmra.mrb[0].mxu0 %v7837
    %v7913 = vpop.f32.mrb[0].mxu0
    %v7914 = vadd.f32 %v7825, %v7913
    %v7915 = vpop.f32.mrb[0].mxu0
    %7916 = vmatprep.mubr.f32.mxu0 0.0
    %7917 = vmatmul.mubr.f32.gmra.mrb[0].mxu0 %v7840
    %v7918 = vpop.f32.mrb[0].mxu0
    %v7919 = vadd.f32 %v7830, %v7918
    %v7920 = vpop.f32.mrb[0].mxu0
    %7921 = vdwg.mxu0
    %v7922 = vmax.f32 %v7909, 0.0
    %v7923 = vmax.f32 %v7914, 0.0
    %v7924 = vmax.f32 %v7919, 0.0
    %v7925 = vld [vmem:[%s11] sm:$0x1]
    %v7926 = vld [vmem:[#allocation3] sm:$0x1]
    %7928 = vset.pattern.permute.xlu0 0
    %7929 = vperm.xlu0 %7928, %v7926
    %v7930 = vpop.permute.xlu0 %7929
    %v7932 = vlaneseq
    %v7933 = vshrl.u32 %v7932, 7
    %v7934 = vsub.s32 0, %v7933
    %v7935 = vrot.slane %v7930, %v7934
    %vm7936 = vcmask 162816
    %v7938 = vsel %vm7936, %v7925, 0
    %v7941 = vsel %vm7712, %v7924, 0
    %7943 = vmatprep.subr.mxu0 0.0
    %7944 = vmatpush1.msra.mxu0 %v7922
    %7945 = vmatprep.subr.mxu0 0.0
    %7946 = vmatpush1.msra.mxu0 %v7923
    %7947 = vmatprep.subr.mxu0 0.0
    %7948 = vmatpush1.msra.mxu0 %v7941
    %7949 = vmatprep.subr.mxu0 0.0
    %7950 = vmatpush1.msra.mxu0 0.0
    %7951 = vmatprep.subr.mxu0 0.0
    %7952 = vmatpush1.msra.mxu0 0.0
    %7953 = vmatprep.subr.mxu0 0.0
    %7954 = vmatpush1.msra.mxu0 0.0
    %7955 = vmatprep.subr.mxu0 0.0
    %7956 = vmatpush1.msra.mxu0 0.0
    %7957 = vmatprep.subr.mxu0 0.0
    %7958 = vmatpush1.msra.mxu0 0.0
    %7959 = vmatprep.subr.mxu0 0.0
    %7960 = vmatpush1.msra.mxu0 0.0
    %7961 = vmatprep.subr.mxu0 0.0
    %7962 = vmatpush1.msra.mxu0 0.0
    %7963 = vmatprep.subr.mxu0 0.0
    %7964 = vmatpush1.msra.mxu0 0.0
    %7965 = vmatprep.subr.mxu0 0.0
    %7966 = vmatpush1.msra.mxu0 0.0
    %7967 = vmatprep.subr.mxu0 0.0
    %7968 = vmatpush1.msra.mxu0 0.0
    %7969 = vmatprep.subr.mxu0 0.0
    %7970 = vmatpush1.msra.mxu0 0.0
    %7971 = vmatprep.subr.mxu0 0.0
    %7972 = vmatpush1.msra.mxu0 0.0
    %7973 = vmatprep.subr.mxu0 0.0
    %7974 = vmatpush1.msra.mxu0 0.0
    %7975 = vmatprep.subr.mxu0 0.0
    %7976 = vmatpush1.msra.mxu0 0.0
    %7977 = vmatprep.subr.mxu0 0.0
    %7978 = vmatpush1.msra.mxu0 0.0
    %7979 = vmatprep.subr.mxu0 0.0
    %7980 = vmatpush1.msra.mxu0 0.0
    %7981 = vmatprep.subr.mxu0 0.0
    %7982 = vmatpush1.msra.mxu0 0.0
    %7983 = vmatprep.subr.mxu0 0.0
    %7984 = vmatpush1.msra.mxu0 0.0
    %7985 = vmatprep.subr.mxu0 0.0
    %7986 = vmatpush1.msra.mxu0 0.0
    %7987 = vmatprep.subr.mxu0 0.0
    %7988 = vmatpush1.msra.mxu0 0.0
    %7989 = vmatprep.subr.mxu0 0.0
    %7990 = vmatpush1.msra.mxu0 0.0
    %7991 = vmatprep.subr.mxu0 0.0
    %7992 = vmatpush1.msra.mxu0 0.0
    %7993 = vmatprep.subr.mxu0 0.0
    %7994 = vmatpush1.msra.mxu0 0.0
    %7995 = vmatprep.subr.mxu0 0.0
    %7996 = vmatpush1.msra.mxu0 0.0
    %7997 = vmatprep.subr.mxu0 0.0
    %7998 = vmatpush1.msra.mxu0 0.0
    %7999 = vmatprep.subr.mxu0 0.0
    %8000 = vmatpush1.msra.mxu0 0.0
    %8001 = vmatprep.subr.mxu0 0.0
    %8002 = vmatpush1.msra.mxu0 0.0
    %8003 = vmatprep.subr.mxu0 0.0
    %8004 = vmatpush1.msra.mxu0 0.0
    %8005 = vmatprep.subr.mxu0 0.0
    %8006 = vmatpush1.msra.mxu0 0.0
    %8007 = vmatprep.mubr.f32.mxu0 0.0
    %8008 = vmatmul.mubr.f32.gmra.mrb[0].mxu0 %v7938
    %v8009 = vpop.f32.mrb[0].mxu0
    %v8010 = vadd.f32 %v7935, %v8009
    %v8011 = vpop.f32.mrb[0].mxu0
    %8012 = vdwg.mxu0
    %8013 = vst [vmem:[%s13] sm:$0x1] %v8010
    // Predicated region
    $region66: #{cnn_forward.1} parent=1 // pred_check
      _
    $region67: #{cnn_forward.1} parent=1 // pred_check_branch
      %8015 = sbr.rel (0) target = $region69
    $region68: #{cnn_forward.1} parent=1 // pred_region
      _
    $region69: #{cnn_forward.1} parent=1 // pred_fallthru
      _
    // Predicated region
    $region70: #{cnn_forward.1} parent=1 // pred_check
      _
    $region71: #{cnn_forward.1} parent=1 // pred_check_branch
      %8017 = sbr.rel (0) target = $region73
    $region72: #{cnn_forward.1} parent=1 // pred_region
      _
    $region73: #{cnn_forward.1} parent=1 // pred_fallthru
      _
    %8018 = vsyncpa [#allocation5], 1
    %8019 = vsyncpa [#allocation7], 1

</llo_original>
